<compile_context>
chip_gen: v7x
topology: tpu7x:2x2x1
jax: 0.10.0
libtpu: 0.0.40
codegen_flags: <defaults>
</compile_context>

<pallas_src>
import functools

import jax
import jax.numpy as jnp
from jax.experimental import pallas as pl
from jax.experimental.pallas import tpu as pltpu

BN_EPS = 1e-5
USE_BF16_MATMUL = True     # bf16 operands (f32 accumulation) for the 64->128 / 128->1024 matmuls
POINT_TILE = 256           # points per grid step in the fused point pipeline


def _round_up(x, m):
    return ((x + m - 1) // m) * m


# ---------------------------------------------------------------------------
# Pallas kernels
# ---------------------------------------------------------------------------
def _point_pipeline_kernel(x_ref, w1_ref, s1_ref, w2_ref, s2_ref, w3_ref, s3_ref,
                           o_ref, *, relu3):
    """Fused per-point MLP (3->64->128->1024) + running max over the points axis.

    Grid = (B, n_tiles).  o_ref is the (1, 1024) per-batch max accumulator; it is
    resident across the (last, 'arbitrary') tile axis."""
    n = pl.program_id(1)

    @pl.when(n == 0)
    def _init():
        o_ref[...] = jnp.full(o_ref.shape, -jnp.inf, jnp.float32)

    x = x_ref[...]                                                        # (tn, 3) f32
    h = jnp.dot(x, w1_ref[...], preferred_element_type=jnp.float32) + s1_ref[...]
    h = jnp.maximum(h, 0.0)                                               # (tn, 64)
    h = jnp.dot(h.astype(w2_ref.dtype), w2_ref[...],
                preferred_element_type=jnp.float32) + s2_ref[...]
    h = jnp.maximum(h, 0.0)                                               # (tn, 128)
    h = jnp.dot(h.astype(w3_ref.dtype), w3_ref[...],
                preferred_element_type=jnp.float32) + s3_ref[...]         # (tn, 1024)
    if relu3:
        h = jnp.maximum(h, 0.0)

    tile_max = jnp.max(h, axis=0, keepdims=True)                          # (1, 1024)
    o_ref[...] = jnp.maximum(o_ref[...], tile_max)


def _stn_head_kernel(g_ref, w1_ref, s1_ref, w2_ref, s2_ref, w3_ref, b3_ref, o_ref):
    # fused fc1->bn4->relu -> fc2->bn5->relu -> fc3 (+identity folded into b3)
    h = jnp.maximum(
        jnp.dot(g_ref[...], w1_ref[...], preferred_element_type=jnp.float32) + s1_ref[...], 0.0)
    h = jnp.maximum(
        jnp.dot(h, w2_ref[...], preferred_element_type=jnp.float32) + s2_ref[...], 0.0)
    o_ref[...] = jnp.dot(h, w3_ref[...], preferred_element_type=jnp.float32) + b3_ref[...]


def _cls_head_kernel(g_ref, w1_ref, s1_ref, w2_ref, s2_ref, w3_ref, b3_ref, o_ref):
    # fused fc1->bn1->relu -> fc2->bn2->relu -> fc3 -> log_softmax
    h = jnp.maximum(
        jnp.dot(g_ref[...], w1_ref[...], preferred_element_type=jnp.float32) + s1_ref[...], 0.0)
    # TODO(synk): Dropout(p=0.3) is identity in eval mode; training-mode RNG mask not implemented.
    h = jnp.maximum(
        jnp.dot(h, w2_ref[...], preferred_element_type=jnp.float32) + s2_ref[...], 0.0)
    logits = jnp.dot(h, w3_ref[...], preferred_element_type=jnp.float32) + b3_ref[...]
    z = logits - jnp.max(logits, axis=1, keepdims=True)
    o_ref[...] = z - jnp.log(jnp.sum(jnp.exp(z), axis=1, keepdims=True))


# ---------------------------------------------------------------------------
# Pallas wrappers
# ---------------------------------------------------------------------------
def point_pipeline_max(x_bnc, w1, s1, w2, s2, w3, s3, *, relu3):
    """x_bnc: (B, N, 3).  w1: (1,3,C1) shared or (B,3,C1) per-batch.  Returns (B, C3)."""
    B, N, _ = x_bnc.shape
    C1, C2, C3 = w1.shape[-1], w2.shape[-1], w3.shape[-1]

    tn = min(POINT_TILE, _round_up(N, 8))
    Np = _round_up(N, tn)
    if Np != N:
        # pad with copies of the last point: duplicates cannot change the max
        x_bnc = jnp.pad(x_bnc, ((0, 0), (0, Np - N), (0, 0)), mode="edge")
    nt = Np // tn

    if w1.shape[0] == 1:
        w1_map = lambda b, n: (0, 0, 0)          # shared conv1 weight
    else:
        w1_map = lambda b, n: (b, 0, 0)          # per-batch (STN-folded) conv1 weight

    kernel = functools.partial(_point_pipeline_kernel, relu3=relu3)
    out = pl.pallas_call(
        kernel,
        out_shape=jax.ShapeDtypeStruct((B, 1, C3), jnp.float32),
        grid=(B, nt),
        in_specs=[
            pl.BlockSpec((None, tn, 3), lambda b, n: (b, n, 0)),
            pl.BlockSpec((None, 3, C1), w1_map),
            pl.BlockSpec((1, C1), lambda b, n: (0, 0)),
            pl.BlockSpec((C1, C2), lambda b, n: (0, 0)),
            pl.BlockSpec((1, C2), lambda b, n: (0, 0)),
            pl.BlockSpec((C2, C3), lambda b, n: (0, 0)),
            pl.BlockSpec((1, C3), lambda b, n: (0, 0)),
        ],
        out_specs=pl.BlockSpec((None, 1, C3), lambda b, n: (b, 0, 0)),
        compiler_params=pltpu.CompilerParams(
            dimension_semantics=("parallel", "arbitrary"),
            vmem_limit_bytes=32 * 1024 * 1024,
        ),
    )(x_bnc, w1, s1, w2, s2, w3, s3)
    return out.reshape(B, C3)


def _head_call(kernel, g, w1, s1, w2, s2, w3, b3, out_dim):
    """Single-launch fused FC head: all weights live in VMEM, no intermediates in HBM."""
    B = g.shape[0]

    def full_spec(a):
        nd = a.ndim
        return pl.BlockSpec(a.shape, lambda i, _nd=nd: (0,) * _nd)

    return pl.pallas_call(
        kernel,
        out_shape=jax.ShapeDtypeStruct((B, out_dim), jnp.float32),
        grid=(1,),
        in_specs=[full_spec(g), full_spec(w1), full_spec(s1),
                  full_spec(w2), full_spec(s2), full_spec(w3), full_spec(b3)],
        out_specs=pl.BlockSpec((B, out_dim), lambda i: (0, 0)),
        compiler_params=pltpu.CompilerParams(dimension_semantics=("arbitrary",)),
    )(g, w1, s1, w2, s2, w3, b3)


# ---------------------------------------------------------------------------
# Deterministic parameter construction (bias + eval-mode BN pre-folded)
# ---------------------------------------------------------------------------
def _linear_params(key, cin, cout):
    kw, kb = jax.random.split(key)
    w = 0.1 * jax.random.normal(kw, (cin, cout), jnp.float32)
    b = 0.1 * jax.random.normal(kb, (cout,), jnp.float32)
    return w, b


def _bn_params(key, c):
    kg, kb, km, kv = jax.random.split(key, 4)
    gamma = 1.0 + 0.1 * jax.random.normal(kg, (c,), jnp.float32)
    beta = 0.1 * jax.random.normal(kb, (c,), jnp.float32)
    mean = 0.1 * jax.random.normal(km, (c,), jnp.float32)
    var = jax.random.uniform(kv, (c,), jnp.float32, 0.5, 1.5)
    scale = gamma / jnp.sqrt(var + BN_EPS)       # eval-mode BN -> per-channel affine
    shift = beta - mean * scale
    return scale, shift


def _fold_linear_bn(lin_key, bn_key, cin, cout):
    """y = relu?((x@w + b)*scale + shift)  ->  y = relu?(x@w_f + s_f)."""
    w, b = _linear_params(lin_key, cin, cout)
    scale, shift = _bn_params(bn_key, cout)
    w_f = w * scale[None, :]
    s_f = (b * scale + shift).reshape(1, cout)
    return w_f, s_f


def make_params(key, k=2):
    keys = jax.random.split(key, 22)
    ki = iter(keys)
    wdt = jnp.bfloat16 if USE_BF16_MATMUL else jnp.float32
    p = {}

    # ---- STN3d ----
    w, s = _fold_linear_bn(next(ki), next(ki), 3, 64)
    p["stn_w1"], p["stn_s1"] = w.reshape(1, 3, 64), s
    w, s = _fold_linear_bn(next(ki), next(ki), 64, 128)
    p["stn_w2"], p["stn_s2"] = w.astype(wdt), s
    w, s = _fold_linear_bn(next(ki), next(ki), 128, 1024)
    p["stn_w3"], p["stn_s3"] = w.astype(wdt), s
    w, s = _fold_linear_bn(next(ki), next(ki), 1024, 512)
    p["stn_w4"], p["stn_s4"] = w, s
    w, s = _fold_linear_bn(next(ki), next(ki), 512, 256)
    p["stn_w5"], p["stn_s5"] = w, s
    w, b = _linear_params(next(ki), 256, 9)
    p["stn_w6"] = w
    p["stn_b6"] = (b + jnp.eye(3, dtype=jnp.float32).reshape(-1)).reshape(1, 9)  # identity folded

    # ---- PointNetfeat ----
    w, s = _fold_linear_bn(next(ki), next(ki), 3, 64)
    p["feat_w1"], p["feat_s1"] = w, s            # (3,64); STN 3x3 folded in per-batch at fwd time
    w, s = _fold_linear_bn(next(ki), next(ki), 64, 128)
    p["feat_w2"], p["feat_s2"] = w.astype(wdt), s
    w, s = _fold_linear_bn(next(ki), next(ki), 128, 1024)
    p["feat_w3"], p["feat_s3"] = w.astype(wdt), s

    # ---- classification head ----
    w, s = _fold_linear_bn(next(ki), next(ki), 1024, 512)
    p["cls_w1"], p["cls_s1"] = w, s
    w, s = _fold_linear_bn(next(ki), next(ki), 512, 256)
    p["cls_w2"], p["cls_s2"] = w, s
    w, b = _linear_params(next(ki), 256, k)
    p["cls_w3"], p["cls_b3"] = w, b.reshape(1, k)
    return p


# ---------------------------------------------------------------------------
# Model forward (glue in plain JAX, hot paths in Pallas)
# ---------------------------------------------------------------------------
def stn3d_forward(x_bnc, p):
    """x_bnc: (B, N, 3) -> trans (B, 3, 3)."""
    B = x_bnc.shape[0]
    g = point_pipeline_max(x_bnc, p["stn_w1"], p["stn_s1"], p["stn_w2"], p["stn_s2"],
                           p["stn_w3"], p["stn_s3"], relu3=True)          # (B, 1024)
    t9 = _head_call(_stn_head_kernel, g, p["stn_w4"], p["stn_s4"],
                    p["stn_w5"], p["stn_s5"], p["stn_w6"], p["stn_b6"], 9)  # (B, 9) incl. identity
    return t9.reshape(B, 3, 3)


def pointnetfeat_forward(x_bnc, p):
    """x_bnc: (B, N, 3) -> global feature (B, 1024), trans (B, 3, 3)."""
    trans = stn3d_forward(x_bnc, p)
    # Fold the 3x3 STN transform into the (BN-folded) conv1 weight -> per-batch weight.
    # (x @ trans) @ W1 == x @ (trans @ W1); replaces the old lane-3 bmm kernel entirely.
    w1b = jnp.einsum("bij,jc->bic", trans, p["feat_w1"])                  # (B, 3, 64)
    g = point_pipeline_max(x_bnc, w1b, p["feat_s1"], p["feat_w2"], p["feat_s2"],
                           p["feat_w3"], p["feat_s3"], relu3=False)       # (B, 1024)
    return g, trans


def pointnet_cls_forward(x_bcn, p):
    """x_bcn: (B, 3, N) as in PyTorch.  Returns (log_probs, trans, trans_feat)."""
    x_bnc = jnp.transpose(x_bcn, (0, 2, 1)).astype(jnp.float32)           # channels-last
    g, trans = pointnetfeat_forward(x_bnc, p)
    k = p["cls_w3"].shape[1]
    log_probs = _head_call(_cls_head_kernel, g, p["cls_w1"], p["cls_s1"],
                           p["cls_w2"], p["cls_s2"], p["cls_w3"], p["cls_b3"], k)
    trans_feat = None  # feature_transform=False
    return log_probs, trans, trans_feat


# ---------------------------------------------------------------------------
if __name__ == "__main__":
    B, C, N = 2, 3, 128
    K_CLASSES = 2

    params = make_params(jax.random.PRNGKey(42), k=K_CLASSES)
    x = jax.random.normal(jax.random.PRNGKey(0), (B, C, N), jnp.float32)

    fwd = jax.jit(pointnet_cls_forward)
    log_probs, trans, trans_feat = fwd(x, params)
    jax.block_until_ready(log_probs)
    jax.block_until_ready(trans)

    assert log_probs.shape == (B, K_CLASSES)
    assert trans.shape == (B, 3, 3)
    assert bool(jnp.all(jnp.isfinite(log_probs)))
    # rows of log_softmax should sum (in prob space) to ~1
    assert jnp.allclose(jnp.sum(jnp.exp(log_probs), axis=1), 1.0, atol=1e-4)

    print("KERNEL_OK")
</pallas_src>

<mosaic_0001>
module attributes {stable_mosaic.version = 11 : i64} {
  func.func @_point_pipeline_kernel(%arg0: i32, %arg1: i32, %arg2: memref<1x128x3xf32, #tpu.memory_space<vmem>>, %arg3: memref<1x3x64xf32, #tpu.memory_space<vmem>>, %arg4: memref<1x64xf32, #tpu.memory_space<vmem>>, %arg5: memref<64x128xbf16, #tpu.memory_space<vmem>>, %arg6: memref<1x128xf32, #tpu.memory_space<vmem>>, %arg7: memref<128x1024xbf16, #tpu.memory_space<vmem>>, %arg8: memref<1x1024xf32, #tpu.memory_space<vmem>>, %arg9: memref<1x1x1024xf32, #tpu.memory_space<vmem>>) attributes {dimension_semantics = [#tpu.dimension_semantics<parallel>, #tpu.dimension_semantics<arbitrary>], iteration_bounds = array<i64: 2, 1>, scalar_prefetch = 0 : i64, scratch_operands = 0 : i64, tpu.core_type = #tpu.core_type<tc>, window_params = [{transform_indices = @transform_0, window_bounds = array<i64: 1, 128, 3>}, {pipeline_mode = #tpu.pipeline_mode<synchronous>, transform_indices = @transform_1, window_bounds = array<i64: 1, 3, 64>}, {pipeline_mode = #tpu.pipeline_mode<synchronous>, transform_indices = @transform_2, window_bounds = array<i64: 1, 64>}, {pipeline_mode = #tpu.pipeline_mode<synchronous>, transform_indices = @transform_3, window_bounds = array<i64: 64, 128>}, {pipeline_mode = #tpu.pipeline_mode<synchronous>, transform_indices = @transform_4, window_bounds = array<i64: 1, 128>}, {pipeline_mode = #tpu.pipeline_mode<synchronous>, transform_indices = @transform_5, window_bounds = array<i64: 128, 1024>}, {pipeline_mode = #tpu.pipeline_mode<synchronous>, transform_indices = @transform_6, window_bounds = array<i64: 1, 1024>}, {transform_indices = @transform_7, window_bounds = array<i64: 1, 1, 1024>}]} {
    %c0_i32 = arith.constant 0 : i32
    %0 = arith.cmpi eq, %arg1, %c0_i32 : i32
    %1 = arith.extui %0 : i1 to i32
    %c0_i32_0 = arith.constant 0 : i32
    %2 = arith.cmpi ne, %1, %c0_i32_0 : i32
    scf.if %2 {
      %cst_28 = arith.constant 0xFF800000 : f32
      %37 = vector.broadcast %cst_28 : f32 to vector<1x1024xf32>
      %c0_29 = arith.constant 0 : index
      %c0_30 = arith.constant 0 : index
      %c0_31 = arith.constant 0 : index
      %38 = vector.load %arg9[%c0_29, %c0_30, %c0_31] : memref<1x1x1024xf32, #tpu.memory_space<vmem>>, vector<1x1x1024xf32>
      %39 = vector.shape_cast %38 : vector<1x1x1024xf32> to vector<1x1024xf32>
      %40 = vector.shape_cast %37 : vector<1x1024xf32> to vector<1x1x1024xf32>
      tpu.vector_store %arg9[%c0_29, %c0_30, %c0_31], %40 {strides = array<i32>} : memref<1x1x1024xf32, #tpu.memory_space<vmem>>, vector<1x1x1024xf32>,
    } else {
    }
    %c0 = arith.constant 0 : index
    %c0_1 = arith.constant 0 : index
    %c0_2 = arith.constant 0 : index
    %3 = vector.load %arg2[%c0, %c0_1, %c0_2] : memref<1x128x3xf32, #tpu.memory_space<vmem>>, vector<1x128x3xf32>
    %4 = vector.shape_cast %3 : vector<1x128x3xf32> to vector<128x3xf32>
    %c0_3 = arith.constant 0 : index
    %c0_4 = arith.constant 0 : index
    %c0_5 = arith.constant 0 : index
    %5 = vector.load %arg3[%c0_3, %c0_4, %c0_5] : memref<1x3x64xf32, #tpu.memory_space<vmem>>, vector<1x3x64xf32>
    %6 = vector.shape_cast %5 : vector<1x3x64xf32> to vector<3x64xf32>
    %cst = arith.constant dense<0.000000e+00> : vector<128x64xf32>
    %7 = tpu.matmul %4, %6, %cst {dimension_numbers = #tpu.dot_dimension_numbers<[1], [0], [0], [1], [0, 0, 1, 1], [], []>} : vector<128x3xf32>, vector<3x64xf32>, vector<128x64xf32> -> vector<128x64xf32>
    %c0_6 = arith.constant 0 : index
    %c0_7 = arith.constant 0 : index
    %8 = vector.load %arg4[%c0_6, %c0_7] : memref<1x64xf32, #tpu.memory_space<vmem>>, vector<1x64xf32>
    %9 = vector.broadcast %8 : vector<1x64xf32> to vector<128x64xf32>
    %10 = arith.addf %7, %9 : vector<128x64xf32>
    %cst_8 = arith.constant 0.000000e+00 : f32
    %11 = vector.broadcast %cst_8 : f32 to vector<128x64xf32>
    %12 = arith.maximumf %10, %11 : vector<128x64xf32>
    %13 = arith.truncf %12 : vector<128x64xf32> to vector<128x64xbf16>
    %c0_9 = arith.constant 0 : index
    %c0_10 = arith.constant 0 : index
    %14 = vector.load %arg5[%c0_9, %c0_10] : memref<64x128xbf16, #tpu.memory_space<vmem>>, vector<64x128xbf16>
    %cst_11 = arith.constant dense<0.000000e+00> : vector<128x128xf32>
    %15 = tpu.matmul %13, %14, %cst_11 {dimension_numbers = #tpu.dot_dimension_numbers<[1], [0], [0], [1], [0, 0, 1, 1], [], []>} : vector<128x64xbf16>, vector<64x128xbf16>, vector<128x128xf32> -> vector<128x128xf32>
    %c0_12 = arith.constant 0 : index
    %c0_13 = arith.constant 0 : index
    %16 = vector.load %arg6[%c0_12, %c0_13] : memref<1x128xf32, #tpu.memory_space<vmem>>, vector<1x128xf32>
    %17 = vector.broadcast %16 : vector<1x128xf32> to vector<128x128xf32>
    %18 = arith.addf %15, %17 : vector<128x128xf32>
    %cst_14 = arith.constant 0.000000e+00 : f32
    %19 = vector.broadcast %cst_14 : f32 to vector<128x128xf32>
    %20 = arith.maximumf %18, %19 : vector<128x128xf32>
    %21 = arith.truncf %20 : vector<128x128xf32> to vector<128x128xbf16>
    %c0_15 = arith.constant 0 : index
    %c0_16 = arith.constant 0 : index
    %22 = vector.load %arg7[%c0_15, %c0_16] : memref<128x1024xbf16, #tpu.memory_space<vmem>>, vector<128x1024xbf16>
    %cst_17 = arith.constant dense<0.000000e+00> : vector<128x1024xf32>
    %23 = tpu.matmul %21, %22, %cst_17 {dimension_numbers = #tpu.dot_dimension_numbers<[1], [0], [0], [1], [0, 0, 1, 1], [], []>} : vector<128x128xbf16>, vector<128x1024xbf16>, vector<128x1024xf32> -> vector<128x1024xf32>
    %c0_18 = arith.constant 0 : index
    %c0_19 = arith.constant 0 : index
    %24 = vector.load %arg8[%c0_18, %c0_19] : memref<1x1024xf32, #tpu.memory_space<vmem>>, vector<1x1024xf32>
    %25 = vector.broadcast %24 : vector<1x1024xf32> to vector<128x1024xf32>
    %26 = arith.addf %23, %25 : vector<128x1024xf32>
    %cst_20 = arith.constant 0.000000e+00 : f32
    %27 = vector.broadcast %cst_20 : f32 to vector<128x1024xf32>
    %28 = arith.maximumf %26, %27 : vector<128x1024xf32>
    %cst_21 = arith.constant dense<0xFF800000> : vector<1024xf32>
    %29 = vector.multi_reduction <maximumf>, %28, %cst_21 [0] : vector<128x1024xf32> to vector<1024xf32>
    %30 = vector.shape_cast %29 : vector<1024xf32> to vector<1x1024xf32>
    %c0_22 = arith.constant 0 : index
    %c0_23 = arith.constant 0 : index
    %c0_24 = arith.constant 0 : index
    %31 = vector.load %arg9[%c0_22, %c0_23, %c0_24] : memref<1x1x1024xf32, #tpu.memory_space<vmem>>, vector<1x1x1024xf32>
    %32 = vector.shape_cast %31 : vector<1x1x1024xf32> to vector<1x1024xf32>
    %33 = arith.maximumf %32, %30 : vector<1x1024xf32>
    %c0_25 = arith.constant 0 : index
    %c0_26 = arith.constant 0 : index
    %c0_27 = arith.constant 0 : index
    %34 = vector.load %arg9[%c0_25, %c0_26, %c0_27] : memref<1x1x1024xf32, #tpu.memory_space<vmem>>, vector<1x1x1024xf32>
    %35 = vector.shape_cast %34 : vector<1x1x1024xf32> to vector<1x1024xf32>
    %36 = vector.shape_cast %33 : vector<1x1024xf32> to vector<1x1x1024xf32>
    tpu.vector_store %arg9[%c0_25, %c0_26, %c0_27], %36 {strides = array<i32>} : memref<1x1x1024xf32, #tpu.memory_space<vmem>>, vector<1x1x1024xf32>,
    return
  }
  func.func @transform_0(%arg0: i32, %arg1: i32) -> (i32, i32, i32) {
    %c0_i32 = arith.constant 0 : i32
    %c0_i32_0 = arith.constant 0 : i32
    return %arg0, %arg1, %c0_i32 : i32, i32, i32
  }
  func.func @transform_1(%arg0: i32, %arg1: i32) -> (i32, i32, i32) {
    %c0_i32 = arith.constant 0 : i32
    %c0_i32_0 = arith.constant 0 : i32
    %c0_i32_1 = arith.constant 0 : i32
    %c0_i32_2 = arith.constant 0 : i32
    return %c0_i32, %c0_i32_0, %c0_i32_1 : i32, i32, i32
  }
  func.func @transform_2(%arg0: i32, %arg1: i32) -> (i32, i32) {
    %c0_i32 = arith.constant 0 : i32
    %c0_i32_0 = arith.constant 0 : i32
    %c0_i32_1 = arith.constant 0 : i32
    return %c0_i32, %c0_i32_0 : i32, i32
  }
  func.func @transform_3(%arg0: i32, %arg1: i32) -> (i32, i32) {
    %c0_i32 = arith.constant 0 : i32
    %c0_i32_0 = arith.constant 0 : i32
    %c0_i32_1 = arith.constant 0 : i32
    return %c0_i32, %c0_i32_0 : i32, i32
  }
  func.func @transform_4(%arg0: i32, %arg1: i32) -> (i32, i32) {
    %c0_i32 = arith.constant 0 : i32
    %c0_i32_0 = arith.constant 0 : i32
    %c0_i32_1 = arith.constant 0 : i32
    return %c0_i32, %c0_i32_0 : i32, i32
  }
  func.func @transform_5(%arg0: i32, %arg1: i32) -> (i32, i32) {
    %c0_i32 = arith.constant 0 : i32
    %c0_i32_0 = arith.constant 0 : i32
    %c0_i32_1 = arith.constant 0 : i32
    return %c0_i32, %c0_i32_0 : i32, i32
  }
  func.func @transform_6(%arg0: i32, %arg1: i32) -> (i32, i32) {
    %c0_i32 = arith.constant 0 : i32
    %c0_i32_0 = arith.constant 0 : i32
    %c0_i32_1 = arith.constant 0 : i32
    return %c0_i32, %c0_i32_0 : i32, i32
  }
  func.func @transform_7(%arg0: i32, %arg1: i32) -> (i32, i32, i32) {
    %c0_i32 = arith.constant 0 : i32
    %c0_i32_0 = arith.constant 0 : i32
    %c0_i32_1 = arith.constant 0 : i32
    return %arg0, %c0_i32, %c0_i32_0 : i32, i32, i32
  }
}

module attributes {stable_mosaic.version = 11 : i64} {
  func.func @_stn_head_kernel(%arg0: i32, %arg1: memref<2x1024xf32, #tpu.memory_space<vmem>>, %arg2: memref<1024x512xf32, #tpu.memory_space<vmem>>, %arg3: memref<1x512xf32, #tpu.memory_space<vmem>>, %arg4: memref<512x256xf32, #tpu.memory_space<vmem>>, %arg5: memref<1x256xf32, #tpu.memory_space<vmem>>, %arg6: memref<256x9xf32, #tpu.memory_space<vmem>>, %arg7: memref<1x9xf32, #tpu.memory_space<vmem>>, %arg8: memref<2x9xf32, #tpu.memory_space<vmem>>) attributes {dimension_semantics = [#tpu.dimension_semantics<arbitrary>], iteration_bounds = array<i64: 1>, scalar_prefetch = 0 : i64, scratch_operands = 0 : i64, tpu.core_type = #tpu.core_type<tc>, window_params = [{pipeline_mode = #tpu.pipeline_mode<synchronous>, transform_indices = @transform_0, window_bounds = array<i64: 2, 1024>}, {pipeline_mode = #tpu.pipeline_mode<synchronous>, transform_indices = @transform_1, window_bounds = array<i64: 1024, 512>}, {pipeline_mode = #tpu.pipeline_mode<synchronous>, transform_indices = @transform_2, window_bounds = array<i64: 1, 512>}, {pipeline_mode = #tpu.pipeline_mode<synchronous>, transform_indices = @transform_3, window_bounds = array<i64: 512, 256>}, {pipeline_mode = #tpu.pipeline_mode<synchronous>, transform_indices = @transform_4, window_bounds = array<i64: 1, 256>}, {pipeline_mode = #tpu.pipeline_mode<synchronous>, transform_indices = @transform_5, window_bounds = array<i64: 256, 9>}, {pipeline_mode = #tpu.pipeline_mode<synchronous>, transform_indices = @transform_6, window_bounds = array<i64: 1, 9>}, {pipeline_mode = #tpu.pipeline_mode<synchronous>, transform_indices = @transform_7, window_bounds = array<i64: 2, 9>}]} {
    %c0 = arith.constant 0 : index
    %c0_0 = arith.constant 0 : index
    %0 = vector.load %arg1[%c0, %c0_0] : memref<2x1024xf32, #tpu.memory_space<vmem>>, vector<2x1024xf32>
    %c0_1 = arith.constant 0 : index
    %c0_2 = arith.constant 0 : index
    %1 = vector.load %arg2[%c0_1, %c0_2] : memref<1024x512xf32, #tpu.memory_space<vmem>>, vector<1024x512xf32>
    %cst = arith.constant dense<0.000000e+00> : vector<2x512xf32>
    %2 = tpu.matmul %0, %1, %cst {dimension_numbers = #tpu.dot_dimension_numbers<[1], [0], [0], [1], [0, 0, 1, 1], [], []>} : vector<2x1024xf32>, vector<1024x512xf32>, vector<2x512xf32> -> vector<2x512xf32>
    %c0_3 = arith.constant 0 : index
    %c0_4 = arith.constant 0 : index
    %3 = vector.load %arg3[%c0_3, %c0_4] : memref<1x512xf32, #tpu.memory_space<vmem>>, vector<1x512xf32>
    %4 = vector.broadcast %3 : vector<1x512xf32> to vector<2x512xf32>
    %5 = arith.addf %2, %4 : vector<2x512xf32>
    %cst_5 = arith.constant 0.000000e+00 : f32
    %6 = vector.broadcast %cst_5 : f32 to vector<2x512xf32>
    %7 = arith.maximumf %5, %6 : vector<2x512xf32>
    %c0_6 = arith.constant 0 : index
    %c0_7 = arith.constant 0 : index
    %8 = vector.load %arg4[%c0_6, %c0_7] : memref<512x256xf32, #tpu.memory_space<vmem>>, vector<512x256xf32>
    %cst_8 = arith.constant dense<0.000000e+00> : vector<2x256xf32>
    %9 = tpu.matmul %7, %8, %cst_8 {dimension_numbers = #tpu.dot_dimension_numbers<[1], [0], [0], [1], [0, 0, 1, 1], [], []>} : vector<2x512xf32>, vector<512x256xf32>, vector<2x256xf32> -> vector<2x256xf32>
    %c0_9 = arith.constant 0 : index
    %c0_10 = arith.constant 0 : index
    %10 = vector.load %arg5[%c0_9, %c0_10] : memref<1x256xf32, #tpu.memory_space<vmem>>, vector<1x256xf32>
    %11 = vector.broadcast %10 : vector<1x256xf32> to vector<2x256xf32>
    %12 = arith.addf %9, %11 : vector<2x256xf32>
    %cst_11 = arith.constant 0.000000e+00 : f32
    %13 = vector.broadcast %cst_11 : f32 to vector<2x256xf32>
    %14 = arith.maximumf %12, %13 : vector<2x256xf32>
    %c0_12 = arith.constant 0 : index
    %c0_13 = arith.constant 0 : index
    %15 = vector.load %arg6[%c0_12, %c0_13] : memref<256x9xf32, #tpu.memory_space<vmem>>, vector<256x9xf32>
    %cst_14 = arith.constant dense<0.000000e+00> : vector<2x9xf32>
    %16 = tpu.matmul %14, %15, %cst_14 {dimension_numbers = #tpu.dot_dimension_numbers<[1], [0], [0], [1], [0, 0, 1, 1], [], []>} : vector<2x256xf32>, vector<256x9xf32>, vector<2x9xf32> -> vector<2x9xf32>
    %c0_15 = arith.constant 0 : index
    %c0_16 = arith.constant 0 : index
    %17 = vector.load %arg7[%c0_15, %c0_16] : memref<1x9xf32, #tpu.memory_space<vmem>>, vector<1x9xf32>
    %18 = vector.broadcast %17 : vector<1x9xf32> to vector<2x9xf32>
    %19 = arith.addf %16, %18 : vector<2x9xf32>
    %c0_17 = arith.constant 0 : index
    %c0_18 = arith.constant 0 : index
    %20 = vector.load %arg8[%c0_17, %c0_18] : memref<2x9xf32, #tpu.memory_space<vmem>>, vector<2x9xf32>
    tpu.vector_store %arg8[%c0_17, %c0_18], %19 {strides = array<i32>} : memref<2x9xf32, #tpu.memory_space<vmem>>, vector<2x9xf32>,
    return
  }
  func.func @transform_0(%arg0: i32) -> (i32, i32) {
    %c0_i32 = arith.constant 0 : i32
    %c0_i32_0 = arith.constant 0 : i32
    %c0_i32_1 = arith.constant 0 : i32
    return %c0_i32, %c0_i32_0 : i32, i32
  }
  func.func @transform_1(%arg0: i32) -> (i32, i32) {
    %c0_i32 = arith.constant 0 : i32
    %c0_i32_0 = arith.constant 0 : i32
    %c0_i32_1 = arith.constant 0 : i32
    return %c0_i32, %c0_i32_0 : i32, i32
  }
  func.func @transform_2(%arg0: i32) -> (i32, i32) {
    %c0_i32 = arith.constant 0 : i32
    %c0_i32_0 = arith.constant 0 : i32
    %c0_i32_1 = arith.constant 0 : i32
    return %c0_i32, %c0_i32_0 : i32, i32
  }
  func.func @transform_3(%arg0: i32) -> (i32, i32) {
    %c0_i32 = arith.constant 0 : i32
    %c0_i32_0 = arith.constant 0 : i32
    %c0_i32_1 = arith.constant 0 : i32
    return %c0_i32, %c0_i32_0 : i32, i32
  }
  func.func @transform_4(%arg0: i32) -> (i32, i32) {
    %c0_i32 = arith.constant 0 : i32
    %c0_i32_0 = arith.constant 0 : i32
    %c0_i32_1 = arith.constant 0 : i32
    return %c0_i32, %c0_i32_0 : i32, i32
  }
  func.func @transform_5(%arg0: i32) -> (i32, i32) {
    %c0_i32 = arith.constant 0 : i32
    %c0_i32_0 = arith.constant 0 : i32
    %c0_i32_1 = arith.constant 0 : i32
    return %c0_i32, %c0_i32_0 : i32, i32
  }
  func.func @transform_6(%arg0: i32) -> (i32, i32) {
    %c0_i32 = arith.constant 0 : i32
    %c0_i32_0 = arith.constant 0 : i32
    %c0_i32_1 = arith.constant 0 : i32
    return %c0_i32, %c0_i32_0 : i32, i32
  }
  func.func @transform_7(%arg0: i32) -> (i32, i32) {
    %c0_i32 = arith.constant 0 : i32
    %c0_i32_0 = arith.constant 0 : i32
    %c0_i32_1 = arith.constant 0 : i32
    return %c0_i32, %c0_i32_0 : i32, i32
  }
}

module attributes {stable_mosaic.version = 11 : i64} {
  func.func @_point_pipeline_kernel(%arg0: i32, %arg1: i32, %arg2: memref<1x128x3xf32, #tpu.memory_space<vmem>>, %arg3: memref<1x3x64xf32, #tpu.memory_space<vmem>>, %arg4: memref<1x64xf32, #tpu.memory_space<vmem>>, %arg5: memref<64x128xbf16, #tpu.memory_space<vmem>>, %arg6: memref<1x128xf32, #tpu.memory_space<vmem>>, %arg7: memref<128x1024xbf16, #tpu.memory_space<vmem>>, %arg8: memref<1x1024xf32, #tpu.memory_space<vmem>>, %arg9: memref<1x1x1024xf32, #tpu.memory_space<vmem>>) attributes {dimension_semantics = [#tpu.dimension_semantics<parallel>, #tpu.dimension_semantics<arbitrary>], iteration_bounds = array<i64: 2, 1>, scalar_prefetch = 0 : i64, scratch_operands = 0 : i64, tpu.core_type = #tpu.core_type<tc>, window_params = [{transform_indices = @transform_0, window_bounds = array<i64: 1, 128, 3>}, {transform_indices = @transform_1, window_bounds = array<i64: 1, 3, 64>}, {pipeline_mode = #tpu.pipeline_mode<synchronous>, transform_indices = @transform_2, window_bounds = array<i64: 1, 64>}, {pipeline_mode = #tpu.pipeline_mode<synchronous>, transform_indices = @transform_3, window_bounds = array<i64: 64, 128>}, {pipeline_mode = #tpu.pipeline_mode<synchronous>, transform_indices = @transform_4, window_bounds = array<i64: 1, 128>}, {pipeline_mode = #tpu.pipeline_mode<synchronous>, transform_indices = @transform_5, window_bounds = array<i64: 128, 1024>}, {pipeline_mode = #tpu.pipeline_mode<synchronous>, transform_indices = @transform_6, window_bounds = array<i64: 1, 1024>}, {transform_indices = @transform_7, window_bounds = array<i64: 1, 1, 1024>}]} {
    %c0_i32 = arith.constant 0 : i32
    %0 = arith.cmpi eq, %arg1, %c0_i32 : i32
    %1 = arith.extui %0 : i1 to i32
    %c0_i32_0 = arith.constant 0 : i32
    %2 = arith.cmpi ne, %1, %c0_i32_0 : i32
    scf.if %2 {
      %cst_27 = arith.constant 0xFF800000 : f32
      %35 = vector.broadcast %cst_27 : f32 to vector<1x1024xf32>
      %c0_28 = arith.constant 0 : index
      %c0_29 = arith.constant 0 : index
      %c0_30 = arith.constant 0 : index
      %36 = vector.load %arg9[%c0_28, %c0_29, %c0_30] : memref<1x1x1024xf32, #tpu.memory_space<vmem>>, vector<1x1x1024xf32>
      %37 = vector.shape_cast %36 : vector<1x1x1024xf32> to vector<1x1024xf32>
      %38 = vector.shape_cast %35 : vector<1x1024xf32> to vector<1x1x1024xf32>
      tpu.vector_store %arg9[%c0_28, %c0_29, %c0_30], %38 {strides = array<i32>} : memref<1x1x1024xf32, #tpu.memory_space<vmem>>, vector<1x1x1024xf32>,
    } else {
    }
    %c0 = arith.constant 0 : index
    %c0_1 = arith.constant 0 : index
    %c0_2 = arith.constant 0 : index
    %3 = vector.load %arg2[%c0, %c0_1, %c0_2] : memref<1x128x3xf32, #tpu.memory_space<vmem>>, vector<1x128x3xf32>
    %4 = vector.shape_cast %3 : vector<1x128x3xf32> to vector<128x3xf32>
    %c0_3 = arith.constant 0 : index
    %c0_4 = arith.constant 0 : index
    %c0_5 = arith.constant 0 : index
    %5 = vector.load %arg3[%c0_3, %c0_4, %c0_5] : memref<1x3x64xf32, #tpu.memory_space<vmem>>, vector<1x3x64xf32>
    %6 = vector.shape_cast %5 : vector<1x3x64xf32> to vector<3x64xf32>
    %cst = arith.constant dense<0.000000e+00> : vector<128x64xf32>
    %7 = tpu.matmul %4, %6, %cst {dimension_numbers = #tpu.dot_dimension_numbers<[1], [0], [0], [1], [0, 0, 1, 1], [], []>} : vector<128x3xf32>, vector<3x64xf32>, vector<128x64xf32> -> vector<128x64xf32>
    %c0_6 = arith.constant 0 : index
    %c0_7 = arith.constant 0 : index
    %8 = vector.load %arg4[%c0_6, %c0_7] : memref<1x64xf32, #tpu.memory_space<vmem>>, vector<1x64xf32>
    %9 = vector.broadcast %8 : vector<1x64xf32> to vector<128x64xf32>
    %10 = arith.addf %7, %9 : vector<128x64xf32>
    %cst_8 = arith.constant 0.000000e+00 : f32
    %11 = vector.broadcast %cst_8 : f32 to vector<128x64xf32>
    %12 = arith.maximumf %10, %11 : vector<128x64xf32>
    %13 = arith.truncf %12 : vector<128x64xf32> to vector<128x64xbf16>
    %c0_9 = arith.constant 0 : index
    %c0_10 = arith.constant 0 : index
    %14 = vector.load %arg5[%c0_9, %c0_10] : memref<64x128xbf16, #tpu.memory_space<vmem>>, vector<64x128xbf16>
    %cst_11 = arith.constant dense<0.000000e+00> : vector<128x128xf32>
    %15 = tpu.matmul %13, %14, %cst_11 {dimension_numbers = #tpu.dot_dimension_numbers<[1], [0], [0], [1], [0, 0, 1, 1], [], []>} : vector<128x64xbf16>, vector<64x128xbf16>, vector<128x128xf32> -> vector<128x128xf32>
    %c0_12 = arith.constant 0 : index
    %c0_13 = arith.constant 0 : index
    %16 = vector.load %arg6[%c0_12, %c0_13] : memref<1x128xf32, #tpu.memory_space<vmem>>, vector<1x128xf32>
    %17 = vector.broadcast %16 : vector<1x128xf32> to vector<128x128xf32>
    %18 = arith.addf %15, %17 : vector<128x128xf32>
    %cst_14 = arith.constant 0.000000e+00 : f32
    %19 = vector.broadcast %cst_14 : f32 to vector<128x128xf32>
    %20 = arith.maximumf %18, %19 : vector<128x128xf32>
    %21 = arith.truncf %20 : vector<128x128xf32> to vector<128x128xbf16>
    %c0_15 = arith.constant 0 : index
    %c0_16 = arith.constant 0 : index
    %22 = vector.load %arg7[%c0_15, %c0_16] : memref<128x1024xbf16, #tpu.memory_space<vmem>>, vector<128x1024xbf16>
    %cst_17 = arith.constant dense<0.000000e+00> : vector<128x1024xf32>
    %23 = tpu.matmul %21, %22, %cst_17 {dimension_numbers = #tpu.dot_dimension_numbers<[1], [0], [0], [1], [0, 0, 1, 1], [], []>} : vector<128x128xbf16>, vector<128x1024xbf16>, vector<128x1024xf32> -> vector<128x1024xf32>
    %c0_18 = arith.constant 0 : index
    %c0_19 = arith.constant 0 : index
    %24 = vector.load %arg8[%c0_18, %c0_19] : memref<1x1024xf32, #tpu.memory_space<vmem>>, vector<1x1024xf32>
    %25 = vector.broadcast %24 : vector<1x1024xf32> to vector<128x1024xf32>
    %26 = arith.addf %23, %25 : vector<128x1024xf32>
    %cst_20 = arith.constant dense<0xFF800000> : vector<1024xf32>
    %27 = vector.multi_reduction <maximumf>, %26, %cst_20 [0] : vector<128x1024xf32> to vector<1024xf32>
    %28 = vector.shape_cast %27 : vector<1024xf32> to vector<1x1024xf32>
    %c0_21 = arith.constant 0 : index
    %c0_22 = arith.constant 0 : index
    %c0_23 = arith.constant 0 : index
    %29 = vector.load %arg9[%c0_21, %c0_22, %c0_23] : memref<1x1x1024xf32, #tpu.memory_space<vmem>>, vector<1x1x1024xf32>
    %30 = vector.shape_cast %29 : vector<1x1x1024xf32> to vector<1x1024xf32>
    %31 = arith.maximumf %30, %28 : vector<1x1024xf32>
    %c0_24 = arith.constant 0 : index
    %c0_25 = arith.constant 0 : index
    %c0_26 = arith.constant 0 : index
    %32 = vector.load %arg9[%c0_24, %c0_25, %c0_26] : memref<1x1x1024xf32, #tpu.memory_space<vmem>>, vector<1x1x1024xf32>
    %33 = vector.shape_cast %32 : vector<1x1x1024xf32> to vector<1x1024xf32>
    %34 = vector.shape_cast %31 : vector<1x1024xf32> to vector<1x1x1024xf32>
    tpu.vector_store %arg9[%c0_24, %c0_25, %c0_26], %34 {strides = array<i32>} : memref<1x1x1024xf32, #tpu.memory_space<vmem>>, vector<1x1x1024xf32>,
    return
  }
  func.func @transform_0(%arg0: i32, %arg1: i32) -> (i32, i32, i32) {
    %c0_i32 = arith.constant 0 : i32
    %c0_i32_0 = arith.constant 0 : i32
    return %arg0, %arg1, %c0_i32 : i32, i32, i32
  }
  func.func @transform_1(%arg0: i32, %arg1: i32) -> (i32, i32, i32) {
    %c0_i32 = arith.constant 0 : i32
    %c0_i32_0 = arith.constant 0 : i32
    %c0_i32_1 = arith.constant 0 : i32
    return %arg0, %c0_i32, %c0_i32_0 : i32, i32, i32
  }
  func.func @transform_2(%arg0: i32, %arg1: i32) -> (i32, i32) {
    %c0_i32 = arith.constant 0 : i32
    %c0_i32_0 = arith.constant 0 : i32
    %c0_i32_1 = arith.constant 0 : i32
    return %c0_i32, %c0_i32_0 : i32, i32
  }
  func.func @transform_3(%arg0: i32, %arg1: i32) -> (i32, i32) {
    %c0_i32 = arith.constant 0 : i32
    %c0_i32_0 = arith.constant 0 : i32
    %c0_i32_1 = arith.constant 0 : i32
    return %c0_i32, %c0_i32_0 : i32, i32
  }
  func.func @transform_4(%arg0: i32, %arg1: i32) -> (i32, i32) {
    %c0_i32 = arith.constant 0 : i32
    %c0_i32_0 = arith.constant 0 : i32
    %c0_i32_1 = arith.constant 0 : i32
    return %c0_i32, %c0_i32_0 : i32, i32
  }
  func.func @transform_5(%arg0: i32, %arg1: i32) -> (i32, i32) {
    %c0_i32 = arith.constant 0 : i32
    %c0_i32_0 = arith.constant 0 : i32
    %c0_i32_1 = arith.constant 0 : i32
    return %c0_i32, %c0_i32_0 : i32, i32
  }
  func.func @transform_6(%arg0: i32, %arg1: i32) -> (i32, i32) {
    %c0_i32 = arith.constant 0 : i32
    %c0_i32_0 = arith.constant 0 : i32
    %c0_i32_1 = arith.constant 0 : i32
    return %c0_i32, %c0_i32_0 : i32, i32
  }
  func.func @transform_7(%arg0: i32, %arg1: i32) -> (i32, i32, i32) {
    %c0_i32 = arith.constant 0 : i32
    %c0_i32_0 = arith.constant 0 : i32
    %c0_i32_1 = arith.constant 0 : i32
    return %arg0, %c0_i32, %c0_i32_0 : i32, i32, i32
  }
}

module attributes {stable_mosaic.version = 11 : i64} {
  func.func @_cls_head_kernel(%arg0: i32, %arg1: memref<2x1024xf32, #tpu.memory_space<vmem>>, %arg2: memref<1024x512xf32, #tpu.memory_space<vmem>>, %arg3: memref<1x512xf32, #tpu.memory_space<vmem>>, %arg4: memref<512x256xf32, #tpu.memory_space<vmem>>, %arg5: memref<1x256xf32, #tpu.memory_space<vmem>>, %arg6: memref<256x2xf32, #tpu.memory_space<vmem>>, %arg7: memref<1x2xf32, #tpu.memory_space<vmem>>, %arg8: memref<2x2xf32, #tpu.memory_space<vmem>>) attributes {dimension_semantics = [#tpu.dimension_semantics<arbitrary>], iteration_bounds = array<i64: 1>, scalar_prefetch = 0 : i64, scratch_operands = 0 : i64, tpu.core_type = #tpu.core_type<tc>, window_params = [{pipeline_mode = #tpu.pipeline_mode<synchronous>, transform_indices = @transform_0, window_bounds = array<i64: 2, 1024>}, {pipeline_mode = #tpu.pipeline_mode<synchronous>, transform_indices = @transform_1, window_bounds = array<i64: 1024, 512>}, {pipeline_mode = #tpu.pipeline_mode<synchronous>, transform_indices = @transform_2, window_bounds = array<i64: 1, 512>}, {pipeline_mode = #tpu.pipeline_mode<synchronous>, transform_indices = @transform_3, window_bounds = array<i64: 512, 256>}, {pipeline_mode = #tpu.pipeline_mode<synchronous>, transform_indices = @transform_4, window_bounds = array<i64: 1, 256>}, {pipeline_mode = #tpu.pipeline_mode<synchronous>, transform_indices = @transform_5, window_bounds = array<i64: 256, 2>}, {pipeline_mode = #tpu.pipeline_mode<synchronous>, transform_indices = @transform_6, window_bounds = array<i64: 1, 2>}, {pipeline_mode = #tpu.pipeline_mode<synchronous>, transform_indices = @transform_7, window_bounds = array<i64: 2, 2>}]} {
    %c0 = arith.constant 0 : index
    %c0_0 = arith.constant 0 : index
    %0 = vector.load %arg1[%c0, %c0_0] : memref<2x1024xf32, #tpu.memory_space<vmem>>, vector<2x1024xf32>
    %c0_1 = arith.constant 0 : index
    %c0_2 = arith.constant 0 : index
    %1 = vector.load %arg2[%c0_1, %c0_2] : memref<1024x512xf32, #tpu.memory_space<vmem>>, vector<1024x512xf32>
    %cst = arith.constant dense<0.000000e+00> : vector<2x512xf32>
    %2 = tpu.matmul %0, %1, %cst {dimension_numbers = #tpu.dot_dimension_numbers<[1], [0], [0], [1], [0, 0, 1, 1], [], []>} : vector<2x1024xf32>, vector<1024x512xf32>, vector<2x512xf32> -> vector<2x512xf32>
    %c0_3 = arith.constant 0 : index
    %c0_4 = arith.constant 0 : index
    %3 = vector.load %arg3[%c0_3, %c0_4] : memref<1x512xf32, #tpu.memory_space<vmem>>, vector<1x512xf32>
    %4 = vector.broadcast %3 : vector<1x512xf32> to vector<2x512xf32>
    %5 = arith.addf %2, %4 : vector<2x512xf32>
    %cst_5 = arith.constant 0.000000e+00 : f32
    %6 = vector.broadcast %cst_5 : f32 to vector<2x512xf32>
    %7 = arith.maximumf %5, %6 : vector<2x512xf32>
    %c0_6 = arith.constant 0 : index
    %c0_7 = arith.constant 0 : index
    %8 = vector.load %arg4[%c0_6, %c0_7] : memref<512x256xf32, #tpu.memory_space<vmem>>, vector<512x256xf32>
    %cst_8 = arith.constant dense<0.000000e+00> : vector<2x256xf32>
    %9 = tpu.matmul %7, %8, %cst_8 {dimension_numbers = #tpu.dot_dimension_numbers<[1], [0], [0], [1], [0, 0, 1, 1], [], []>} : vector<2x512xf32>, vector<512x256xf32>, vector<2x256xf32> -> vector<2x256xf32>
    %c0_9 = arith.constant 0 : index
    %c0_10 = arith.constant 0 : index
    %10 = vector.load %arg5[%c0_9, %c0_10] : memref<1x256xf32, #tpu.memory_space<vmem>>, vector<1x256xf32>
    %11 = vector.broadcast %10 : vector<1x256xf32> to vector<2x256xf32>
    %12 = arith.addf %9, %11 : vector<2x256xf32>
    %cst_11 = arith.constant 0.000000e+00 : f32
    %13 = vector.broadcast %cst_11 : f32 to vector<2x256xf32>
    %14 = arith.maximumf %12, %13 : vector<2x256xf32>
    %c0_12 = arith.constant 0 : index
    %c0_13 = arith.constant 0 : index
    %15 = vector.load %arg6[%c0_12, %c0_13] : memref<256x2xf32, #tpu.memory_space<vmem>>, vector<256x2xf32>
    %cst_14 = arith.constant dense<0.000000e+00> : vector<2x2xf32>
    %16 = tpu.matmul %14, %15, %cst_14 {dimension_numbers = #tpu.dot_dimension_numbers<[1], [0], [0], [1], [0, 0, 1, 1], [], []>} : vector<2x256xf32>, vector<256x2xf32>, vector<2x2xf32> -> vector<2x2xf32>
    %c0_15 = arith.constant 0 : index
    %c0_16 = arith.constant 0 : index
    %17 = vector.load %arg7[%c0_15, %c0_16] : memref<1x2xf32, #tpu.memory_space<vmem>>, vector<1x2xf32>
    %18 = vector.broadcast %17 : vector<1x2xf32> to vector<2x2xf32>
    %19 = arith.addf %16, %18 : vector<2x2xf32>
    %cst_17 = arith.constant dense<0xFF800000> : vector<2xf32>
    %20 = vector.multi_reduction <maximumf>, %19, %cst_17 [1] : vector<2x2xf32> to vector<2xf32>
    %21 = vector.shape_cast %20 : vector<2xf32> to vector<2x1xf32>
    %22 = vector.broadcast %21 : vector<2x1xf32> to vector<2x2xf32>
    %23 = arith.subf %19, %22 : vector<2x2xf32>
    %24 = math.exp %23 : vector<2x2xf32>
    %cst_18 = arith.constant dense<0.000000e+00> : vector<2xf32>
    %25 = vector.multi_reduction <add>, %24, %cst_18 [1] : vector<2x2xf32> to vector<2xf32>
    %26 = vector.shape_cast %25 : vector<2xf32> to vector<2x1xf32>
    %27 = math.log %26 : vector<2x1xf32>
    %28 = vector.broadcast %27 : vector<2x1xf32> to vector<2x2xf32>
    %29 = arith.subf %23, %28 : vector<2x2xf32>
    %c0_19 = arith.constant 0 : index
    %c0_20 = arith.constant 0 : index
    %30 = vector.load %arg8[%c0_19, %c0_20] : memref<2x2xf32, #tpu.memory_space<vmem>>, vector<2x2xf32>
    tpu.vector_store %arg8[%c0_19, %c0_20], %29 {strides = array<i32>} : memref<2x2xf32, #tpu.memory_space<vmem>>, vector<2x2xf32>,
    return
  }
  func.func @transform_0(%arg0: i32) -> (i32, i32) {
    %c0_i32 = arith.constant 0 : i32
    %c0_i32_0 = arith.constant 0 : i32
    %c0_i32_1 = arith.constant 0 : i32
    return %c0_i32, %c0_i32_0 : i32, i32
  }
  func.func @transform_1(%arg0: i32) -> (i32, i32) {
    %c0_i32 = arith.constant 0 : i32
    %c0_i32_0 = arith.constant 0 : i32
    %c0_i32_1 = arith.constant 0 : i32
    return %c0_i32, %c0_i32_0 : i32, i32
  }
  func.func @transform_2(%arg0: i32) -> (i32, i32) {
    %c0_i32 = arith.constant 0 : i32
    %c0_i32_0 = arith.constant 0 : i32
    %c0_i32_1 = arith.constant 0 : i32
    return %c0_i32, %c0_i32_0 : i32, i32
  }
  func.func @transform_3(%arg0: i32) -> (i32, i32) {
    %c0_i32 = arith.constant 0 : i32
    %c0_i32_0 = arith.constant 0 : i32
    %c0_i32_1 = arith.constant 0 : i32
    return %c0_i32, %c0_i32_0 : i32, i32
  }
  func.func @transform_4(%arg0: i32) -> (i32, i32) {
    %c0_i32 = arith.constant 0 : i32
    %c0_i32_0 = arith.constant 0 : i32
    %c0_i32_1 = arith.constant 0 : i32
    return %c0_i32, %c0_i32_0 : i32, i32
  }
  func.func @transform_5(%arg0: i32) -> (i32, i32) {
    %c0_i32 = arith.constant 0 : i32
    %c0_i32_0 = arith.constant 0 : i32
    %c0_i32_1 = arith.constant 0 : i32
    return %c0_i32, %c0_i32_0 : i32, i32
  }
  func.func @transform_6(%arg0: i32) -> (i32, i32) {
    %c0_i32 = arith.constant 0 : i32
    %c0_i32_0 = arith.constant 0 : i32
    %c0_i32_1 = arith.constant 0 : i32
    return %c0_i32, %c0_i32_0 : i32, i32
  }
  func.func @transform_7(%arg0: i32) -> (i32, i32) {
    %c0_i32 = arith.constant 0 : i32
    %c0_i32_0 = arith.constant 0 : i32
    %c0_i32_1 = arith.constant 0 : i32
    return %c0_i32, %c0_i32_0 : i32, i32
  }
}

</mosaic_0001>

<llo_original>
// kernel: pointnet_cls_forward.4
$region0: #{pointnet_cls_forward.4}
  #allocation0 [shape = 'u32[]', space=smem, size = 0x4, offset = 0x4, fixed_abs, tag = 'smem constant byte address 0x4 - core index']
  #allocation1 [shape = 'u32[144,128]{1,0:T(1,128)}', space=vmem, size = 0x12000, scoped, tag = 'internal scratch']
  %s0 = inlined_call_operand.vmem [shape: f32[2,128,3], index: 0, kind: input, shape index: {}]
  %s1 = inlined_call_operand.vmem [shape: f32[1,3,64], index: 1, kind: input, shape index: {}]
  %s2 = inlined_call_operand.hbm [shape: f32[1,64], index: 2, kind: input, shape index: {}]
  %s3 = inlined_call_operand.hbm [shape: bf16[64,128], index: 3, kind: input, shape index: {}]
  %s4 = inlined_call_operand.hbm [shape: f32[1,128], index: 4, kind: input, shape index: {}]
  %s5 = inlined_call_operand.hbm [shape: bf16[128,1024], index: 5, kind: input, shape index: {}]
  %s6 = inlined_call_operand.hbm [shape: f32[1,1024], index: 6, kind: input, shape index: {}]
  %s7 = inlined_call_operand.vmem [shape: f32[2,1,1024], index: 7, kind: output, shape index: {}]
  %s8 = sld [smem:[#allocation0]]
  $region85: #{pointnet_cls_forward.4} parent=0
    _
  %s10 = ssub.s32 1, %s8
  %s11 = scalar_select 0, %s10, %s8
  $region1: #{pointnet_cls_forward.4} parent=0
    #allocation2 [shape = 'u8[512]{0}', space=vmem, size = 0x400, scoped, tag = 'input window, operand 2, single buffered']
    #allocation3 [shape = 's32[2]{0}', space=sflag, size = 0x8, scoped, tag = 'scoped memory for pointnet_cls_forward.4']
    #allocation4 [shape = 'u8[16384]{0}', space=vmem, size = 0x4000, scoped, tag = 'input window, operand 3, single buffered']
    #allocation5 [shape = 's32[1]{0}', space=sflag, size = 0x4, scoped, tag = 'scoped memory for pointnet_cls_forward.4']
    #allocation6 [shape = 'u8[512]{0}', space=vmem, size = 0x400, scoped, tag = 'input window, operand 4, single buffered']
    #allocation7 [shape = 'u8[262144]{0}', space=vmem, size = 0x40000, scoped, tag = 'input window, operand 5, single buffered']
    #allocation8 [shape = 's32[1]{0}', space=sflag, size = 0x4, scoped, tag = 'scoped memory for pointnet_cls_forward.4']
    #allocation9 [shape = 'u8[4096]{0}', space=vmem, size = 0x1000, scoped, tag = 'input window, operand 6, single buffered']
    %12 = vsyncpa [#allocation3], 0
    %13 = vsyncpa [#allocation5], 0
    %14 = vsyncpa [#allocation8], 0
    loop: start=0, step=1, limit=4
    $region2: #{pointnet_cls_forward.4} parent=1 // loop_pre_header
      _
    $region3: #{pointnet_cls_forward.4} parent=1 // loop_header
      %s16 = sphi 0, %s20
      %p17 = scmp.ge.s32.totalorder %s16, 4
      %s23 = sphi 0, %s35
      %s24 = sphi 0, %s31
      %s25 = sphi 0, %s23
      %s26 = sphi 0, %s24
      %s27 = sphi 0, %s25
      %s28 = sphi 0, %s26
      %s40 = sphi 0, %s42
      %s43 = sphi 0, %s40
      %s44 = sphi 0, %s43
      %s60 = sphi 0, %s44
      %s64 = sphi 0, %s64
      %s66 = sphi 0, %s64
      %s67 = sphi 0, %s66
      %s81 = sphi 0, %s67
      %s85 = sphi 0, %s85
      %s87 = sphi 0, %s85
      %s88 = sphi 0, %s87
      %s102 = sphi 0, %s88
      %s106 = sphi 0, %s106
      %s108 = sphi 0, %s106
      %s109 = sphi 0, %s108
      %s123 = sphi 0, %s109
      %s127 = sphi 0, %s127
      %s129 = sphi 0, %s127
      %s130 = sphi 0, %s129
      %s144 = sphi 0, %s130
      %s148 = sphi 0, %s148
      %s150 = sphi 0, %s148
      %s151 = sphi 0, %s150
      %s165 = sphi 0, %s151
      %s169 = sphi 0, %s169
      %s171 = sphi 0, %s169
      %s172 = sphi 0, %s171
      %s186 = sphi 0, %s172
      %s192 = sphi 0, %s194
      %s195 = sphi 0, %s192
      %s196 = sphi 0, %s195
      %s212 = sphi 0, %s196
    $region4: #{pointnet_cls_forward.4} parent=1 // loop_header_branch
      %19 = sbr.rel (%p17) target = $region8
    $region5: #{pointnet_cls_forward.4} parent=1 // loop_body
      %s21 = ssub.s32 %s16, 1
      %s22 = ssub.s32 %s16, 2
      %s29 = sadd.s32 1, %s24
      %p30 = scmp.ge.s32.totalorder %s29, 1
      %s31 = scalar_select %p30, 0, %s29
      %s32 = sadd.s32 1, %s23
      %s33 = scalar_select %p30, %s32, %s23
      %p34 = scmp.ge.s32.totalorder %s33, 2
      %s35 = scalar_select %p34, 0, %s33
      %s36 = ssub.s32 %s23, %s35
      %s37 = ssub.s32 %s24, %s31
      %s38 = sor.u32 %s36, %s37
      %p39 = scmp.eq.s32.totalorder %s38, 0
      %s41 = sadd.s32 %s40, 1
      %s42 = scalar_select %p39, %s40, %s41
      %p45 = pneg %p39
      %p46 = scmp.eq.s32.totalorder %s16, 1
      %p47 = por %p45, %p46
      %p48 = scmp.ne.s32.totalorder %s40, %s43
      %p49 = scmp.eq.s32.totalorder %s16, 0
      %p50 = por %p48, %p49
      %p51 = scmp.ne.s32.totalorder %s40, %s43
      %p52 = scmp.eq.s32.totalorder %s21, 1
      %p53 = por %p51, %p52
      %p54 = scmp.ne.s32.totalorder %s43, %s44
      %p55 = scmp.eq.s32.totalorder %s21, 0
      %p56 = por %p54, %p55
      %p57 = scmp.ne.s32.totalorder %s43, %s44
      %p58 = scmp.eq.s32.totalorder %s22, 1
      %p59 = por %p57, %p58
      %p61 = scmp.ne.s32.totalorder %s44, %s60
      %p62 = scmp.eq.s32.totalorder %s22, 0
      %p63 = por %p61, %p62
      %s65 = sadd.s32 %s64, 1
      %p68 = scmp.eq.s32.totalorder %s16, 1
      %p69 = scmp.ne.s32.totalorder %s64, %s66
      %p70 = scmp.eq.s32.totalorder %s16, 0
      %p71 = por %p69, %p70
      %p72 = scmp.ne.s32.totalorder %s64, %s66
      %p73 = scmp.eq.s32.totalorder %s21, 1
      %p74 = por %p72, %p73
      %p75 = scmp.ne.s32.totalorder %s66, %s67
      %p76 = scmp.eq.s32.totalorder %s21, 0
      %p77 = por %p75, %p76
      %p78 = scmp.ne.s32.totalorder %s66, %s67
      %p79 = scmp.eq.s32.totalorder %s22, 1
      %p80 = por %p78, %p79
      %p82 = scmp.ne.s32.totalorder %s67, %s81
      %p83 = scmp.eq.s32.totalorder %s22, 0
      %p84 = por %p82, %p83
      %s86 = sadd.s32 %s85, 1
      %p89 = scmp.eq.s32.totalorder %s16, 1
      %p90 = scmp.ne.s32.totalorder %s85, %s87
      %p91 = scmp.eq.s32.totalorder %s16, 0
      %p92 = por %p90, %p91
      %p93 = scmp.ne.s32.totalorder %s85, %s87
      %p94 = scmp.eq.s32.totalorder %s21, 1
      %p95 = por %p93, %p94
      %p96 = scmp.ne.s32.totalorder %s87, %s88
      %p97 = scmp.eq.s32.totalorder %s21, 0
      %p98 = por %p96, %p97
      %p99 = scmp.ne.s32.totalorder %s87, %s88
      %p100 = scmp.eq.s32.totalorder %s22, 1
      %p101 = por %p99, %p100
      %p103 = scmp.ne.s32.totalorder %s88, %s102
      %p104 = scmp.eq.s32.totalorder %s22, 0
      %p105 = por %p103, %p104
      %s107 = sadd.s32 %s106, 1
      %p110 = scmp.eq.s32.totalorder %s16, 1
      %p111 = scmp.ne.s32.totalorder %s106, %s108
      %p112 = scmp.eq.s32.totalorder %s16, 0
      %p113 = por %p111, %p112
      %p114 = scmp.ne.s32.totalorder %s106, %s108
      %p115 = scmp.eq.s32.totalorder %s21, 1
      %p116 = por %p114, %p115
      %p117 = scmp.ne.s32.totalorder %s108, %s109
      %p118 = scmp.eq.s32.totalorder %s21, 0
      %p119 = por %p117, %p118
      %p120 = scmp.ne.s32.totalorder %s108, %s109
      %p121 = scmp.eq.s32.totalorder %s22, 1
      %p122 = por %p120, %p121
      %p124 = scmp.ne.s32.totalorder %s109, %s123
      %p125 = scmp.eq.s32.totalorder %s22, 0
      %p126 = por %p124, %p125
      %s128 = sadd.s32 %s127, 1
      %p131 = scmp.eq.s32.totalorder %s16, 1
      %p132 = scmp.ne.s32.totalorder %s127, %s129
      %p133 = scmp.eq.s32.totalorder %s16, 0
      %p134 = por %p132, %p133
      %p135 = scmp.ne.s32.totalorder %s127, %s129
      %p136 = scmp.eq.s32.totalorder %s21, 1
      %p137 = por %p135, %p136
      %p138 = scmp.ne.s32.totalorder %s129, %s130
      %p139 = scmp.eq.s32.totalorder %s21, 0
      %p140 = por %p138, %p139
      %p141 = scmp.ne.s32.totalorder %s129, %s130
      %p142 = scmp.eq.s32.totalorder %s22, 1
      %p143 = por %p141, %p142
      %p145 = scmp.ne.s32.totalorder %s130, %s144
      %p146 = scmp.eq.s32.totalorder %s22, 0
      %p147 = por %p145, %p146
      %s149 = sadd.s32 %s148, 1
      %p152 = scmp.eq.s32.totalorder %s16, 1
      %p153 = scmp.ne.s32.totalorder %s148, %s150
      %p154 = scmp.eq.s32.totalorder %s16, 0
      %p155 = por %p153, %p154
      %p156 = scmp.ne.s32.totalorder %s148, %s150
      %p157 = scmp.eq.s32.totalorder %s21, 1
      %p158 = por %p156, %p157
      %p159 = scmp.ne.s32.totalorder %s150, %s151
      %p160 = scmp.eq.s32.totalorder %s21, 0
      %p161 = por %p159, %p160
      %p162 = scmp.ne.s32.totalorder %s150, %s151
      %p163 = scmp.eq.s32.totalorder %s22, 1
      %p164 = por %p162, %p163
      %p166 = scmp.ne.s32.totalorder %s151, %s165
      %p167 = scmp.eq.s32.totalorder %s22, 0
      %p168 = por %p166, %p167
      %s170 = sadd.s32 %s169, 1
      %p173 = scmp.eq.s32.totalorder %s16, 1
      %p174 = scmp.ne.s32.totalorder %s169, %s171
      %p175 = scmp.eq.s32.totalorder %s16, 0
      %p176 = por %p174, %p175
      %p177 = scmp.ne.s32.totalorder %s169, %s171
      %p178 = scmp.eq.s32.totalorder %s21, 1
      %p179 = por %p177, %p178
      %p180 = scmp.ne.s32.totalorder %s171, %s172
      %p181 = scmp.eq.s32.totalorder %s21, 0
      %p182 = por %p180, %p181
      %p183 = scmp.ne.s32.totalorder %s171, %s172
      %p184 = scmp.eq.s32.totalorder %s22, 1
      %p185 = por %p183, %p184
      %p187 = scmp.ne.s32.totalorder %s172, %s186
      %p188 = scmp.eq.s32.totalorder %s22, 0
      %p189 = por %p187, %p188
      %s190 = ssub.s32 %s23, %s35
      %p191 = scmp.eq.s32.totalorder %s190, 0
      %s193 = sadd.s32 %s192, 1
      %s194 = scalar_select %p191, %s192, %s193
      %p197 = pneg %p191
      %p198 = scmp.eq.s32.totalorder %s16, 1
      %p199 = por %p197, %p198
      %p200 = scmp.ne.s32.totalorder %s192, %s195
      %p201 = scmp.eq.s32.totalorder %s16, 0
      %p202 = por %p200, %p201
      %p203 = scmp.ne.s32.totalorder %s192, %s195
      %p204 = scmp.eq.s32.totalorder %s21, 1
      %p205 = por %p203, %p204
      %p206 = scmp.ne.s32.totalorder %s195, %s196
      %p207 = scmp.eq.s32.totalorder %s21, 0
      %p208 = por %p206, %p207
      %p209 = scmp.ne.s32.totalorder %s195, %s196
      %p210 = scmp.eq.s32.totalorder %s22, 1
      %p211 = por %p209, %p210
      %p213 = scmp.ne.s32.totalorder %s196, %s212
      %p214 = scmp.eq.s32.totalorder %s22, 0
      %p215 = por %p213, %p214
      %p216 = scmp.le.s32.totalorder 1, %s16
      %p217 = scmp.lt.s32.totalorder %s16, 3
      %p218 = pnand %p216, %p217
      %p219 = pneg %p218
      // Predicated region
      $region9: #{pointnet_cls_forward.4} parent=5 // pred_check
        _
      $region10: #{pointnet_cls_forward.4} parent=5 // pred_check_branch
        %221 = sbr.rel (%p218) target = $region12
      $region11: #{pointnet_cls_forward.4} parent=5 // pred_region
        %s222 = ssub.s32 %s16, 1
        // Predicated region
        $region13: #{pointnet_cls_forward.4} parent=11 // pred_check
          %p223 = pneg %p77
        $region14: #{pointnet_cls_forward.4} parent=11 // pred_check_branch
          %225 = sbr.rel (%p223) target = $region16
        $region15: #{pointnet_cls_forward.4} parent=11 // pred_region
          _
        $region16: #{pointnet_cls_forward.4} parent=11 // pred_fallthru
          _
        // Predicated region
        $region17: #{pointnet_cls_forward.4} parent=11 // pred_check
          %p226 = pneg %p98
        $region18: #{pointnet_cls_forward.4} parent=11 // pred_check_branch
          %228 = sbr.rel (%p226) target = $region20
        $region19: #{pointnet_cls_forward.4} parent=11 // pred_region
          %s230 = ssub.s32 16, 16
          %231 = vsyncadd [#allocation3], %s230
          %s233 = sshll.u32 [#allocation2], 4
          %s234 = int_to_ptr.vmem [resolvable:$true] %s233
          %236 = dma.hbm_to_vmem [thread:$0]  %s2, 16, %s234, [#allocation3]
        $region20: #{pointnet_cls_forward.4} parent=11 // pred_fallthru
          _
        // Predicated region
        $region21: #{pointnet_cls_forward.4} parent=11 // pred_check
          %p237 = pneg %p119
        $region22: #{pointnet_cls_forward.4} parent=11 // pred_check_branch
          %239 = sbr.rel (%p237) target = $region24
        $region23: #{pointnet_cls_forward.4} parent=11 // pred_region
          %s241 = ssub.s32 512, 512
          %242 = vsyncadd [#allocation5], %s241
          %s243 = sshll.u32 [#allocation4], 4
          %s244 = int_to_ptr.vmem [resolvable:$true] %s243
          %249 = dma.hbm_to_vmem [thread:$0]  %s3, 512, %s244, [#allocation5], 64, 64, 4
        $region24: #{pointnet_cls_forward.4} parent=11 // pred_fallthru
          _
        // Predicated region
        $region25: #{pointnet_cls_forward.4} parent=11 // pred_check
          %p250 = pneg %p140
        $region26: #{pointnet_cls_forward.4} parent=11 // pred_check_branch
          %252 = sbr.rel (%p250) target = $region28
        $region27: #{pointnet_cls_forward.4} parent=11 // pred_region
          %s254 = ssub.s32 16, 16
          %255 = vsyncadd [#allocation5], %s254
          %s257 = sshll.u32 [#allocation6], 4
          %s258 = int_to_ptr.vmem [resolvable:$true] %s257
          %260 = dma.hbm_to_vmem [thread:$0]  %s4, 16, %s258, [#allocation5]
        $region28: #{pointnet_cls_forward.4} parent=11 // pred_fallthru
          _
        // Predicated region
        $region29: #{pointnet_cls_forward.4} parent=11 // pred_check
          %p261 = pneg %p161
        $region30: #{pointnet_cls_forward.4} parent=11 // pred_check_branch
          %263 = sbr.rel (%p261) target = $region32
        $region31: #{pointnet_cls_forward.4} parent=11 // pred_region
          %s265 = ssub.s32 8192, 8192
          %266 = vsyncadd [#allocation8], %s265
          %s267 = sshll.u32 [#allocation7], 4
          %s268 = int_to_ptr.vmem [resolvable:$true] %s267
          %273 = dma.hbm_to_vmem [thread:$0]  %s5, 8192, %s268, [#allocation8], 512, 512, 32
        $region32: #{pointnet_cls_forward.4} parent=11 // pred_fallthru
          _
        // Predicated region
        $region33: #{pointnet_cls_forward.4} parent=11 // pred_check
          %p274 = pneg %p182
        $region34: #{pointnet_cls_forward.4} parent=11 // pred_check_branch
          %276 = sbr.rel (%p274) target = $region36
        $region35: #{pointnet_cls_forward.4} parent=11 // pred_region
          %s278 = ssub.s32 128, 128
          %279 = vsyncadd [#allocation8], %s278
          %s281 = sshll.u32 [#allocation9], 4
          %s282 = int_to_ptr.vmem [resolvable:$true] %s281
          %284 = dma.hbm_to_vmem [thread:$0]  %s6, 128, %s282, [#allocation8]
        $region36: #{pointnet_cls_forward.4} parent=11 // pred_fallthru
          _
      $region12: #{pointnet_cls_forward.4} parent=5 // pred_fallthru
        _
      %p285 = scmp.lt.s32.totalorder %s16, 2
      // Predicated region
      $region37: #{pointnet_cls_forward.4} parent=5 // pred_check
        %p286 = pneg %p285
      $region38: #{pointnet_cls_forward.4} parent=5 // pred_check_branch
        %288 = sbr.rel (%p286) target = $region40
      $region39: #{pointnet_cls_forward.4} parent=5 // pred_region
        // Predicated region
        $region41: #{pointnet_cls_forward.4} parent=39 // pred_check
          %p289 = pneg %p50
        $region42: #{pointnet_cls_forward.4} parent=39 // pred_check_branch
          %291 = sbr.rel (%p289) target = $region44
        $region43: #{pointnet_cls_forward.4} parent=39 // pred_region
          %s292 = smul.u32 16, %s24
          %p293 = scmp.lt.s32.totalorder %s23, 1
          %s294 = scalar_select %p293, %s23, 1
          %p295 = scmp.lt.s32.totalorder %s292, 15
          %s296 = scalar_select %p295, %s292, 15
          %s297 = smul.addr %s294, 16
          %s298 = sadd.s32 %s296, %s297
          %s299 = smul.addr %s298, 8
          %s300 = scalar_lea.vmem %s0, %s299
          %s301 = smul.u32 16, %s24
        $region44: #{pointnet_cls_forward.4} parent=39 // pred_fallthru
          _
      $region40: #{pointnet_cls_forward.4} parent=5 // pred_fallthru
        _
      %p302 = scmp.le.s32.totalorder 1, %s16
      %p303 = scmp.lt.s32.totalorder %s16, 3
      %p304 = pnand %p302, %p303
      %p305 = pneg %p304
      // Predicated region
      $region45: #{pointnet_cls_forward.4} parent=5 // pred_check
        _
      $region46: #{pointnet_cls_forward.4} parent=5 // pred_check_branch
        %307 = sbr.rel (%p304) target = $region48
      $region47: #{pointnet_cls_forward.4} parent=5 // pred_region
        %s308 = ssub.s32 %s16, 1
        // Predicated region
        $region49: #{pointnet_cls_forward.4} parent=47 // pred_check
          %p309 = pneg %p98
        $region50: #{pointnet_cls_forward.4} parent=47 // pred_check_branch
          %311 = sbr.rel (%p309) target = $region52
        $region51: #{pointnet_cls_forward.4} parent=47 // pred_region
          %312 = dma.done [#allocation3], 16
        $region52: #{pointnet_cls_forward.4} parent=47 // pred_fallthru
          _
        // Predicated region
        $region53: #{pointnet_cls_forward.4} parent=47 // pred_check
          %p313 = pneg %p119
        $region54: #{pointnet_cls_forward.4} parent=47 // pred_check_branch
          %315 = sbr.rel (%p313) target = $region56
        $region55: #{pointnet_cls_forward.4} parent=47 // pred_region
          %316 = dma.done [#allocation5], 512
        $region56: #{pointnet_cls_forward.4} parent=47 // pred_fallthru
          _
        // Predicated region
        $region57: #{pointnet_cls_forward.4} parent=47 // pred_check
          %p317 = pneg %p140
        $region58: #{pointnet_cls_forward.4} parent=47 // pred_check_branch
          %319 = sbr.rel (%p317) target = $region60
        $region59: #{pointnet_cls_forward.4} parent=47 // pred_region
          %320 = dma.done [#allocation5], 16
        $region60: #{pointnet_cls_forward.4} parent=47 // pred_fallthru
          _
        // Predicated region
        $region61: #{pointnet_cls_forward.4} parent=47 // pred_check
          %p321 = pneg %p161
        $region62: #{pointnet_cls_forward.4} parent=47 // pred_check_branch
          %323 = sbr.rel (%p321) target = $region64
        $region63: #{pointnet_cls_forward.4} parent=47 // pred_region
          %324 = dma.done [#allocation8], 8192
        $region64: #{pointnet_cls_forward.4} parent=47 // pred_fallthru
          _
        // Predicated region
        $region65: #{pointnet_cls_forward.4} parent=47 // pred_check
          %p325 = pneg %p182
        $region66: #{pointnet_cls_forward.4} parent=47 // pred_check_branch
          %327 = sbr.rel (%p325) target = $region68
        $region67: #{pointnet_cls_forward.4} parent=47 // pred_region
          %328 = dma.done [#allocation8], 128
        $region68: #{pointnet_cls_forward.4} parent=47 // pred_fallthru
          _
        %s329 = smul.u32 16, %s26
        %p330 = scmp.lt.s32.totalorder %s25, 1
        %s331 = scalar_select %p330, %s25, 1
        %p332 = scmp.lt.s32.totalorder %s329, 15
        %s333 = scalar_select %p332, %s329, 15
        %s334 = smul.addr %s331, 16
        %s335 = sadd.s32 %s333, %s334
        %s336 = smul.addr %s335, 8
        %s337 = scalar_lea.vmem %s0, %s336
        %p338 = pneg %p56
        %p339 = pneg %p53
        %p340 = pneg %p77
        %p341 = pneg %p74
        %p342 = pneg %p98
        %p343 = pneg %p95
        %p344 = pneg %p119
        %p345 = pneg %p116
        %p346 = pneg %p140
        %p347 = pneg %p137
        %p348 = pneg %p161
        %p349 = pneg %p158
        %p350 = pneg %p182
        %p351 = pneg %p179
        %p352 = pneg %p208
        %p353 = pneg %p205
        %p354 = scmp.lt.s32.totalorder %s25, 1
        %s355 = scalar_select %p354, %s25, 1
        %s356 = smul.addr %s355, 8
        %s357 = scalar_lea.vmem %s7, %s356
        %s358 = smul.u32 16, %s26
        %p359 = scmp.lt.s32.totalorder %s25, 1
        %s360 = scalar_select %p359, %s25, 1
        %p361 = scmp.lt.s32.totalorder %s358, 15
        %s362 = scalar_select %p361, %s358, 15
        %s363 = smul.addr %s360, 16
        %s364 = sadd.s32 %s362, %s363
        %s365 = smul.addr %s364, 8
        %s366 = scalar_lea.vmem %s0, %s365
        %s367 = smul.u32 16, %s26
        %p368 = scmp.lt.s32.totalorder %s25, 1
        %s369 = scalar_select %p368, %s25, 1
        %s370 = smul.addr %s369, 8
        %s371 = scalar_lea.vmem %s7, %s370
        %p373 = scmp.eq.s32.totalorder %s26, 0
        // Predicated region
        $region69: #{pointnet_cls_forward.4} parent=47 // pred_check
          %p374 = pneg %p373
        $region70: #{pointnet_cls_forward.4} parent=47 // pred_check_branch
          %376 = sbr.rel (%p374) target = $region72
        $region71: #{pointnet_cls_forward.4} parent=47 // pred_region
          %377 = vst [vmem:[%s371] sm:$0xff] -inf
        $region72: #{pointnet_cls_forward.4} parent=47 // pred_fallthru
          _
        %v378 = vld [vmem:[%s366] sm:$0xff]
        %v379 = vld [vmem:[%s366 + $0x8] sm:$0xff]
        %v380 = vld [vmem:[%s366 + $0x10] sm:$0xff]
        %v381 = vld [vmem:[%s366 + $0x18] sm:$0xff]
        %v382 = vld [vmem:[%s366 + $0x20] sm:$0xff]
        %v383 = vld [vmem:[%s366 + $0x28] sm:$0xff]
        %v384 = vld [vmem:[%s366 + $0x30] sm:$0xff]
        %v385 = vld [vmem:[%s366 + $0x38] sm:$0xff]
        %v386 = vld [vmem:[%s366 + $0x40] sm:$0xff]
        %v387 = vld [vmem:[%s366 + $0x48] sm:$0xff]
        %v388 = vld [vmem:[%s366 + $0x50] sm:$0xff]
        %v389 = vld [vmem:[%s366 + $0x58] sm:$0xff]
        %v390 = vld [vmem:[%s366 + $0x60] sm:$0xff]
        %v391 = vld [vmem:[%s366 + $0x68] sm:$0xff]
        %v392 = vld [vmem:[%s366 + $0x70] sm:$0xff]
        %v393 = vld [vmem:[%s366 + $0x78] sm:$0xff]
        %v394 = vld [vmem:[%s1] sm:$0x7]
        %v395 = vld [vmem:[#allocation2] sm:$0x1]
        %v397 = vlaneseq
        %v398 = vshrl.u32 %v397, 7
        %v399 = vsub.s32 0, %v398
        %v400 = vrot.slane %v395, %v399
        %vm402 = vcmask 23552
        %v404 = vsel %vm402, %v378, 0
        %v407 = vsel %vm402, %v379, 0
        %v410 = vsel %vm402, %v380, 0
        %v413 = vsel %vm402, %v381, 0
        %v416 = vsel %vm402, %v382, 0
        %v419 = vsel %vm402, %v383, 0
        %v422 = vsel %vm402, %v384, 0
        %v425 = vsel %vm402, %v385, 0
        %v428 = vsel %vm402, %v386, 0
        %v431 = vsel %vm402, %v387, 0
        %v434 = vsel %vm402, %v388, 0
        %v437 = vsel %vm402, %v389, 0
        %v440 = vsel %vm402, %v390, 0
        %v443 = vsel %vm402, %v391, 0
        %v446 = vsel %vm402, %v392, 0
        %v449 = vsel %vm402, %v393, 0
        %vm451 = vcmask 1042432
        %v453 = vsel %vm451, %v394, 0
        %455 = vmatprep.subr.mxu0 0.0
        %456 = vmatpush1.msra.mxu0 %v453
        %457 = vmatprep.subr.mxu0 0.0
        %458 = vmatpush1.msra.mxu0 0.0
        %459 = vmatprep.subr.mxu0 0.0
        %460 = vmatpush1.msra.mxu0 0.0
        %461 = vmatprep.subr.mxu0 0.0
        %462 = vmatpush1.msra.mxu0 0.0
        %463 = vmatprep.subr.mxu0 0.0
        %464 = vmatpush1.msra.mxu0 0.0
        %465 = vmatprep.subr.mxu0 0.0
        %466 = vmatpush1.msra.mxu0 0.0
        %467 = vmatprep.subr.mxu0 0.0
        %468 = vmatpush1.msra.mxu0 0.0
        %469 = vmatprep.subr.mxu0 0.0
        %470 = vmatpush1.msra.mxu0 0.0
        %471 = vmatprep.subr.mxu0 0.0
        %472 = vmatpush1.msra.mxu0 0.0
        %473 = vmatprep.subr.mxu0 0.0
        %474 = vmatpush1.msra.mxu0 0.0
        %475 = vmatprep.subr.mxu0 0.0
        %476 = vmatpush1.msra.mxu0 0.0
        %477 = vmatprep.subr.mxu0 0.0
        %478 = vmatpush1.msra.mxu0 0.0
        %479 = vmatprep.subr.mxu0 0.0
        %480 = vmatpush1.msra.mxu0 0.0
        %481 = vmatprep.subr.mxu0 0.0
        %482 = vmatpush1.msra.mxu0 0.0
        %483 = vmatprep.subr.mxu0 0.0
        %484 = vmatpush1.msra.mxu0 0.0
        %485 = vmatprep.subr.mxu0 0.0
        %486 = vmatpush1.msra.mxu0 0.0
        %487 = vmatprep.subr.mxu0 0.0
        %488 = vmatpush1.msra.mxu0 0.0
        %489 = vmatprep.subr.mxu0 0.0
        %490 = vmatpush1.msra.mxu0 0.0
        %491 = vmatprep.subr.mxu0 0.0
        %492 = vmatpush1.msra.mxu0 0.0
        %493 = vmatprep.subr.mxu0 0.0
        %494 = vmatpush1.msra.mxu0 0.0
        %495 = vmatprep.subr.mxu0 0.0
        %496 = vmatpush1.msra.mxu0 0.0
        %497 = vmatprep.subr.mxu0 0.0
        %498 = vmatpush1.msra.mxu0 0.0
        %499 = vmatprep.subr.mxu0 0.0
        %500 = vmatpush1.msra.mxu0 0.0
        %501 = vmatprep.subr.mxu0 0.0
        %502 = vmatpush1.msra.mxu0 0.0
        %503 = vmatprep.subr.mxu0 0.0
        %504 = vmatpush1.msra.mxu0 0.0
        %505 = vmatprep.subr.mxu0 0.0
        %506 = vmatpush1.msra.mxu0 0.0
        %507 = vmatprep.subr.mxu0 0.0
        %508 = vmatpush1.msra.mxu0 0.0
        %509 = vmatprep.subr.mxu0 0.0
        %510 = vmatpush1.msra.mxu0 0.0
        %511 = vmatprep.subr.mxu0 0.0
        %512 = vmatpush1.msra.mxu0 0.0
        %513 = vmatprep.subr.mxu0 0.0
        %514 = vmatpush1.msra.mxu0 0.0
        %515 = vmatprep.subr.mxu0 0.0
        %516 = vmatpush1.msra.mxu0 0.0
        %517 = vmatprep.subr.mxu0 0.0
        %518 = vmatpush1.msra.mxu0 0.0
        %519 = vmatprep.mubr.f32.mxu0 0.0
        %520 = vmatmul.mubr.f32.gmra.mrb[0].mxu0 %v404
        %v521 = vpop.f32.mrb[0].mxu0
        %v522 = vadd.f32 %v400, %v521
        %v523 = vpop.f32.mrb[0].mxu0
        %524 = vmatprep.mubr.f32.mxu0 0.0
        %525 = vmatmul.mubr.f32.gmra.mrb[0].mxu0 %v407
        %v526 = vpop.f32.mrb[0].mxu0
        %v527 = vadd.f32 %v400, %v526
        %v528 = vpop.f32.mrb[0].mxu0
        %529 = vmatprep.mubr.f32.mxu0 0.0
        %530 = vmatmul.mubr.f32.gmra.mrb[0].mxu0 %v410
        %v531 = vpop.f32.mrb[0].mxu0
        %v532 = vadd.f32 %v400, %v531
        %v533 = vpop.f32.mrb[0].mxu0
        %534 = vmatprep.mubr.f32.mxu0 0.0
        %535 = vmatmul.mubr.f32.gmra.mrb[0].mxu0 %v413
        %v536 = vpop.f32.mrb[0].mxu0
        %v537 = vadd.f32 %v400, %v536
        %v538 = vpop.f32.mrb[0].mxu0
        %539 = vmatprep.mubr.f32.mxu0 0.0
        %540 = vmatmul.mubr.f32.gmra.mrb[0].mxu0 %v416
        %v541 = vpop.f32.mrb[0].mxu0
        %v542 = vadd.f32 %v400, %v541
        %v543 = vpop.f32.mrb[0].mxu0
        %544 = vmatprep.mubr.f32.mxu0 0.0
        %545 = vmatmul.mubr.f32.gmra.mrb[0].mxu0 %v419
        %v546 = vpop.f32.mrb[0].mxu0
        %v547 = vadd.f32 %v400, %v546
        %v548 = vpop.f32.mrb[0].mxu0
        %549 = vmatprep.mubr.f32.mxu0 0.0
        %550 = vmatmul.mubr.f32.gmra.mrb[0].mxu0 %v422
        %v551 = vpop.f32.mrb[0].mxu0
        %v552 = vadd.f32 %v400, %v551
        %v553 = vpop.f32.mrb[0].mxu0
        %554 = vmatprep.mubr.f32.mxu0 0.0
        %555 = vmatmul.mubr.f32.gmra.mrb[0].mxu0 %v425
        %v556 = vpop.f32.mrb[0].mxu0
        %v557 = vadd.f32 %v400, %v556
        %v558 = vpop.f32.mrb[0].mxu0
        %559 = vmatprep.mubr.f32.mxu0 0.0
        %560 = vmatmul.mubr.f32.gmra.mrb[0].mxu0 %v428
        %v561 = vpop.f32.mrb[0].mxu0
        %v562 = vadd.f32 %v400, %v561
        %v563 = vpop.f32.mrb[0].mxu0
        %564 = vmatprep.mubr.f32.mxu0 0.0
        %565 = vmatmul.mubr.f32.gmra.mrb[0].mxu0 %v431
        %v566 = vpop.f32.mrb[0].mxu0
        %v567 = vadd.f32 %v400, %v566
        %v568 = vpop.f32.mrb[0].mxu0
        %569 = vmatprep.mubr.f32.mxu0 0.0
        %570 = vmatmul.mubr.f32.gmra.mrb[0].mxu0 %v434
        %v571 = vpop.f32.mrb[0].mxu0
        %v572 = vadd.f32 %v400, %v571
        %v573 = vpop.f32.mrb[0].mxu0
        %574 = vmatprep.mubr.f32.mxu0 0.0
        %575 = vmatmul.mubr.f32.gmra.mrb[0].mxu0 %v437
        %v576 = vpop.f32.mrb[0].mxu0
        %v577 = vadd.f32 %v400, %v576
        %v578 = vpop.f32.mrb[0].mxu0
        %579 = vmatprep.mubr.f32.mxu0 0.0
        %580 = vmatmul.mubr.f32.gmra.mrb[0].mxu0 %v440
        %v581 = vpop.f32.mrb[0].mxu0
        %v582 = vadd.f32 %v400, %v581
        %v583 = vpop.f32.mrb[0].mxu0
        %584 = vmatprep.mubr.f32.mxu0 0.0
        %585 = vmatmul.mubr.f32.gmra.mrb[0].mxu0 %v443
        %v586 = vpop.f32.mrb[0].mxu0
        %v587 = vadd.f32 %v400, %v586
        %v588 = vpop.f32.mrb[0].mxu0
        %589 = vmatprep.mubr.f32.mxu0 0.0
        %590 = vmatmul.mubr.f32.gmra.mrb[0].mxu0 %v446
        %v591 = vpop.f32.mrb[0].mxu0
        %v592 = vadd.f32 %v400, %v591
        %v593 = vpop.f32.mrb[0].mxu0
        %594 = vmatprep.mubr.f32.mxu0 0.0
        %595 = vmatmul.mubr.f32.gmra.mrb[0].mxu0 %v449
        %v596 = vpop.f32.mrb[0].mxu0
        %v597 = vadd.f32 %v400, %v596
        %v598 = vpop.f32.mrb[0].mxu0
        %599 = vdwg.mxu0
        %v600 = vmax.f32 %v522, 0.0
        %v601 = vmax.f32 %v527, 0.0
        %v602 = vmax.f32 %v532, 0.0
        %v603 = vmax.f32 %v537, 0.0
        %v604 = vmax.f32 %v542, 0.0
        %v605 = vmax.f32 %v547, 0.0
        %v606 = vmax.f32 %v552, 0.0
        %v607 = vmax.f32 %v557, 0.0
        %v608 = vmax.f32 %v562, 0.0
        %v609 = vmax.f32 %v567, 0.0
        %v610 = vmax.f32 %v572, 0.0
        %v611 = vmax.f32 %v577, 0.0
        %v612 = vmax.f32 %v582, 0.0
        %v613 = vmax.f32 %v587, 0.0
        %v614 = vmax.f32 %v592, 0.0
        %v615 = vmax.f32 %v597, 0.0
        %v616 = vpack.c.bf16 %v601, %v600
        %v617 = vpack.c.bf16 %v603, %v602
        %v618 = vpack.c.bf16 %v605, %v604
        %v619 = vpack.c.bf16 %v607, %v606
        %v620 = vpack.c.bf16 %v609, %v608
        %v621 = vpack.c.bf16 %v611, %v610
        %v622 = vpack.c.bf16 %v613, %v612
        %v623 = vpack.c.bf16 %v615, %v614
        %v624 = vld [vmem:[#allocation4] sm:$0xf]
        %v625 = vld [vmem:[#allocation4 + $0x4] sm:$0xf]
        %v626 = vld [vmem:[#allocation4 + $0x8] sm:$0xf]
        %v627 = vld [vmem:[#allocation4 + $0xc] sm:$0xf]
        %v628 = vld [vmem:[#allocation4 + $0x10] sm:$0xf]
        %v629 = vld [vmem:[#allocation4 + $0x14] sm:$0xf]
        %v630 = vld [vmem:[#allocation4 + $0x18] sm:$0xf]
        %v631 = vld [vmem:[#allocation4 + $0x1c] sm:$0xf]
        %v632 = vld [vmem:[#allocation6] sm:$0x1]
        %v634 = vlaneseq
        %v635 = vshrl.u32 %v634, 7
        %v636 = vsub.s32 0, %v635
        %v637 = vrot.slane %v632, %v636
        %v647 = vunpack.c.l.b16 %v624
        %v648 = vunpack.c.l.b16 %v625
        %v649 = vunpack.c.l.b16 %v626
        %v650 = vunpack.c.l.b16 %v627
        %v651 = vunpack.c.l.b16 %v628
        %v652 = vunpack.c.l.b16 %v629
        %v653 = vunpack.c.l.b16 %v630
        %v654 = vunpack.c.l.b16 %v631
        %v655 = vpack.c.b16 %v648, %v647
        %v656 = vpack.c.b16 %v650, %v649
        %v657 = vpack.c.b16 %v652, %v651
        %v658 = vpack.c.b16 %v654, %v653
        %vm663 = vcmask 523264
        %v665 = vsel %vm663, %v616, 0
        %v668 = vsel %vm663, %v617, 0
        %v671 = vsel %vm663, %v618, 0
        %v674 = vsel %vm663, %v619, 0
        %v677 = vsel %vm663, %v620, 0
        %v680 = vsel %vm663, %v621, 0
        %v683 = vsel %vm663, %v622, 0
        %v686 = vsel %vm663, %v623, 0
        %688 = vmatprep.subr.bf16.mxu0 0
        %689 = vmatpush1.bf16.msra.mxu0 %v655
        %690 = vmatprep.subr.bf16.mxu0 0
        %691 = vmatpush1.bf16.msra.mxu0 %v656
        %692 = vmatprep.subr.bf16.mxu0 0
        %693 = vmatpush1.bf16.msra.mxu0 %v657
        %694 = vmatprep.subr.bf16.mxu0 0
        %695 = vmatpush1.bf16.msra.mxu0 %v658
        %696 = vmatprep.subr.bf16.mxu0 0
        %697 = vmatpush1.bf16.msra.mxu0 0
        %698 = vmatprep.subr.bf16.mxu0 0
        %699 = vmatpush1.bf16.msra.mxu0 0
        %700 = vmatprep.subr.bf16.mxu0 0
        %701 = vmatpush1.bf16.msra.mxu0 0
        %702 = vmatprep.subr.bf16.mxu0 0
        %703 = vmatpush1.bf16.msra.mxu0 0
        %704 = vmatprep.subr.bf16.mxu0 0
        %705 = vmatpush1.bf16.msra.mxu0 0
        %706 = vmatprep.subr.bf16.mxu0 0
        %707 = vmatpush1.bf16.msra.mxu0 0
        %708 = vmatprep.subr.bf16.mxu0 0
        %709 = vmatpush1.bf16.msra.mxu0 0
        %710 = vmatprep.subr.bf16.mxu0 0
        %711 = vmatpush1.bf16.msra.mxu0 0
        %712 = vmatprep.subr.bf16.mxu0 0
        %713 = vmatpush1.bf16.msra.mxu0 0
        %714 = vmatprep.subr.bf16.mxu0 0
        %715 = vmatpush1.bf16.msra.mxu0 0
        %716 = vmatprep.subr.bf16.mxu0 0
        %717 = vmatpush1.bf16.msra.mxu0 0
        %718 = vmatprep.subr.bf16.mxu0 0
        %719 = vmatpush1.bf16.msra.mxu0 0
        %720 = vmatprep.mubr.bf16.mxu0 0
        %721 = vmatmul.mubr.bf16.gmra.mrb[0].mxu0 %v665
        %v722 = vpop.f32.mrb[0].mxu0
        %v723 = vadd.f32 %v637, %v722
        %v724 = vpop.f32.mrb[0].mxu0
        %v725 = vpop.f32.mrb[0].mxu0
        %v726 = vadd.f32 %v637, %v725
        %v727 = vpop.f32.mrb[0].mxu0
        %728 = vmatprep.mubr.bf16.mxu0 0
        %729 = vmatmul.mubr.bf16.gmra.mrb[0].mxu0 %v668
        %v730 = vpop.f32.mrb[0].mxu0
        %v731 = vadd.f32 %v637, %v730
        %v732 = vpop.f32.mrb[0].mxu0
        %v733 = vpop.f32.mrb[0].mxu0
        %v734 = vadd.f32 %v637, %v733
        %v735 = vpop.f32.mrb[0].mxu0
        %736 = vmatprep.mubr.bf16.mxu0 0
        %737 = vmatmul.mubr.bf16.gmra.mrb[0].mxu0 %v671
        %v738 = vpop.f32.mrb[0].mxu0
        %v739 = vadd.f32 %v637, %v738
        %v740 = vpop.f32.mrb[0].mxu0
        %v741 = vpop.f32.mrb[0].mxu0
        %v742 = vadd.f32 %v637, %v741
        %v743 = vpop.f32.mrb[0].mxu0
        %744 = vmatprep.mubr.bf16.mxu0 0
        %745 = vmatmul.mubr.bf16.gmra.mrb[0].mxu0 %v674
        %v746 = vpop.f32.mrb[0].mxu0
        %v747 = vadd.f32 %v637, %v746
        %v748 = vpop.f32.mrb[0].mxu0
        %v749 = vpop.f32.mrb[0].mxu0
        %v750 = vadd.f32 %v637, %v749
        %v751 = vpop.f32.mrb[0].mxu0
        %752 = vmatprep.mubr.bf16.mxu0 0
        %753 = vmatmul.mubr.bf16.gmra.mrb[0].mxu0 %v677
        %v754 = vpop.f32.mrb[0].mxu0
        %v755 = vadd.f32 %v637, %v754
        %v756 = vpop.f32.mrb[0].mxu0
        %v757 = vpop.f32.mrb[0].mxu0
        %v758 = vadd.f32 %v637, %v757
        %v759 = vpop.f32.mrb[0].mxu0
        %760 = vmatprep.mubr.bf16.mxu0 0
        %761 = vmatmul.mubr.bf16.gmra.mrb[0].mxu0 %v680
        %v762 = vpop.f32.mrb[0].mxu0
        %v763 = vadd.f32 %v637, %v762
        %v764 = vpop.f32.mrb[0].mxu0
        %v765 = vpop.f32.mrb[0].mxu0
        %v766 = vadd.f32 %v637, %v765
        %v767 = vpop.f32.mrb[0].mxu0
        %768 = vmatprep.mubr.bf16.mxu0 0
        %769 = vmatmul.mubr.bf16.gmra.mrb[0].mxu0 %v683
        %v770 = vpop.f32.mrb[0].mxu0
        %v771 = vadd.f32 %v637, %v770
        %v772 = vpop.f32.mrb[0].mxu0
        %v773 = vpop.f32.mrb[0].mxu0
        %v774 = vadd.f32 %v637, %v773
        %v775 = vpop.f32.mrb[0].mxu0
        %776 = vmatprep.mubr.bf16.mxu0 0
        %777 = vmatmul.mubr.bf16.gmra.mrb[0].mxu0 %v686
        %v778 = vpop.f32.mrb[0].mxu0
        %v779 = vadd.f32 %v637, %v778
        %v780 = vpop.f32.mrb[0].mxu0
        %v781 = vpop.f32.mrb[0].mxu0
        %v782 = vadd.f32 %v637, %v781
        %v783 = vpop.f32.mrb[0].mxu0
        %784 = vdwg.mxu0
        %v785 = vmax.f32 %v723, 0.0
        %v786 = vmax.f32 %v726, 0.0
        %v787 = vmax.f32 %v731, 0.0
        %v788 = vmax.f32 %v734, 0.0
        %v789 = vmax.f32 %v739, 0.0
        %v790 = vmax.f32 %v742, 0.0
        %v791 = vmax.f32 %v747, 0.0
        %v792 = vmax.f32 %v750, 0.0
        %v793 = vmax.f32 %v755, 0.0
        %v794 = vmax.f32 %v758, 0.0
        %v795 = vmax.f32 %v763, 0.0
        %v796 = vmax.f32 %v766, 0.0
        %v797 = vmax.f32 %v771, 0.0
        %v798 = vmax.f32 %v774, 0.0
        %v799 = vmax.f32 %v779, 0.0
        %v800 = vmax.f32 %v782, 0.0
        %v801 = vpack.c.bf16 %v786, %v785
        %v802 = vpack.c.bf16 %v788, %v787
        %v803 = vpack.c.bf16 %v790, %v789
        %v804 = vpack.c.bf16 %v792, %v791
        %v805 = vpack.c.bf16 %v794, %v793
        %v806 = vpack.c.bf16 %v796, %v795
        %v807 = vpack.c.bf16 %v798, %v797
        %v808 = vpack.c.bf16 %v800, %v799
        %v809 = vld [vmem:[#allocation7] sm:$0xff]
        %v810 = vld [vmem:[#allocation7 + $0x8] sm:$0xff]
        %v811 = vld [vmem:[#allocation7 + $0x10] sm:$0xff]
        %v812 = vld [vmem:[#allocation7 + $0x18] sm:$0xff]
        %v813 = vld [vmem:[#allocation7 + $0x20] sm:$0xff]
        %v814 = vld [vmem:[#allocation7 + $0x28] sm:$0xff]
        %v815 = vld [vmem:[#allocation7 + $0x30] sm:$0xff]
        %v816 = vld [vmem:[#allocation7 + $0x38] sm:$0xff]
        %v817 = vld [vmem:[#allocation7 + $0x40] sm:$0xff]
        %v818 = vld [vmem:[#allocation7 + $0x48] sm:$0xff]
        %v819 = vld [vmem:[#allocation7 + $0x50] sm:$0xff]
        %v820 = vld [vmem:[#allocation7 + $0x58] sm:$0xff]
        %v821 = vld [vmem:[#allocation7 + $0x60] sm:$0xff]
        %v822 = vld [vmem:[#allocation7 + $0x68] sm:$0xff]
        %v823 = vld [vmem:[#allocation7 + $0x70] sm:$0xff]
        %v824 = vld [vmem:[#allocation7 + $0x78] sm:$0xff]
        %v825 = vld [vmem:[#allocation7 + $0x80] sm:$0xff]
        %v826 = vld [vmem:[#allocation7 + $0x88] sm:$0xff]
        %v827 = vld [vmem:[#allocation7 + $0x90] sm:$0xff]
        %v828 = vld [vmem:[#allocation7 + $0x98] sm:$0xff]
        %v829 = vld [vmem:[#allocation7 + $0xa0] sm:$0xff]
        %v830 = vld [vmem:[#allocation7 + $0xa8] sm:$0xff]
        %v831 = vld [vmem:[#allocation7 + $0xb0] sm:$0xff]
        %v832 = vld [vmem:[#allocation7 + $0xb8] sm:$0xff]
        %v833 = vld [vmem:[#allocation7 + $0xc0] sm:$0xff]
        %v834 = vld [vmem:[#allocation7 + $0xc8] sm:$0xff]
        %v835 = vld [vmem:[#allocation7 + $0xd0] sm:$0xff]
        %v836 = vld [vmem:[#allocation7 + $0xd8] sm:$0xff]
        %v837 = vld [vmem:[#allocation7 + $0xe0] sm:$0xff]
        %v838 = vld [vmem:[#allocation7 + $0xe8] sm:$0xff]
        %v839 = vld [vmem:[#allocation7 + $0xf0] sm:$0xff]
        %v840 = vld [vmem:[#allocation7 + $0xf8] sm:$0xff]
        %v841 = vld [vmem:[#allocation7 + $0x100] sm:$0xff]
        %v842 = vld [vmem:[#allocation7 + $0x108] sm:$0xff]
        %v843 = vld [vmem:[#allocation7 + $0x110] sm:$0xff]
        %v844 = vld [vmem:[#allocation7 + $0x118] sm:$0xff]
        %v845 = vld [vmem:[#allocation7 + $0x120] sm:$0xff]
        %v846 = vld [vmem:[#allocation7 + $0x128] sm:$0xff]
        %v847 = vld [vmem:[#allocation7 + $0x130] sm:$0xff]
        %v848 = vld [vmem:[#allocation7 + $0x138] sm:$0xff]
        %v849 = vld [vmem:[#allocation7 + $0x140] sm:$0xff]
        %v850 = vld [vmem:[#allocation7 + $0x148] sm:$0xff]
        %v851 = vld [vmem:[#allocation7 + $0x150] sm:$0xff]
        %v852 = vld [vmem:[#allocation7 + $0x158] sm:$0xff]
        %v853 = vld [vmem:[#allocation7 + $0x160] sm:$0xff]
        %v854 = vld [vmem:[#allocation7 + $0x168] sm:$0xff]
        %v855 = vld [vmem:[#allocation7 + $0x170] sm:$0xff]
        %v856 = vld [vmem:[#allocation7 + $0x178] sm:$0xff]
        %v857 = vld [vmem:[#allocation7 + $0x180] sm:$0xff]
        %v858 = vld [vmem:[#allocation7 + $0x188] sm:$0xff]
        %v859 = vld [vmem:[#allocation7 + $0x190] sm:$0xff]
        %v860 = vld [vmem:[#allocation7 + $0x198] sm:$0xff]
        %v861 = vld [vmem:[#allocation7 + $0x1a0] sm:$0xff]
        %v862 = vld [vmem:[#allocation7 + $0x1a8] sm:$0xff]
        %v863 = vld [vmem:[#allocation7 + $0x1b0] sm:$0xff]
        %v864 = vld [vmem:[#allocation7 + $0x1b8] sm:$0xff]
        %v865 = vld [vmem:[#allocation7 + $0x1c0] sm:$0xff]
        %v866 = vld [vmem:[#allocation7 + $0x1c8] sm:$0xff]
        %v867 = vld [vmem:[#allocation7 + $0x1d0] sm:$0xff]
        %v868 = vld [vmem:[#allocation7 + $0x1d8] sm:$0xff]
        %v869 = vld [vmem:[#allocation7 + $0x1e0] sm:$0xff]
        %v870 = vld [vmem:[#allocation7 + $0x1e8] sm:$0xff]
        %v871 = vld [vmem:[#allocation7 + $0x1f0] sm:$0xff]
        %v872 = vld [vmem:[#allocation7 + $0x1f8] sm:$0xff]
        %v873 = vld [vmem:[#allocation9] sm:$0xff]
        %v875 = vlaneseq
        %v876 = vshrl.u32 %v875, 7
        %v877 = vsub.s32 0, %v876
        %v878 = vrot.slane %v873, %v877
        %v879 = vlaneseq
        %v880 = vshrl.u32 %v879, 7
        %v881 = vsub.s32 1, %v880
        %v882 = vrot.slane %v873, %v881
        %v883 = vlaneseq
        %v884 = vshrl.u32 %v883, 7
        %v885 = vsub.s32 2, %v884
        %v886 = vrot.slane %v873, %v885
        %v887 = vlaneseq
        %v888 = vshrl.u32 %v887, 7
        %v889 = vsub.s32 3, %v888
        %v890 = vrot.slane %v873, %v889
        %v891 = vlaneseq
        %v892 = vshrl.u32 %v891, 7
        %v893 = vsub.s32 4, %v892
        %v894 = vrot.slane %v873, %v893
        %v895 = vlaneseq
        %v896 = vshrl.u32 %v895, 7
        %v897 = vsub.s32 5, %v896
        %v898 = vrot.slane %v873, %v897
        %v899 = vlaneseq
        %v900 = vshrl.u32 %v899, 7
        %v901 = vsub.s32 6, %v900
        %v902 = vrot.slane %v873, %v901
        %v903 = vlaneseq
        %v904 = vshrl.u32 %v903, 7
        %v905 = vsub.s32 7, %v904
        %v906 = vrot.slane %v873, %v905
        %v979 = vunpack.c.l.b16 %v809
        %v980 = vunpack.c.h.b16 %v809
        %v981 = vunpack.c.l.b16 %v810
        %v982 = vunpack.c.h.b16 %v810
        %v983 = vunpack.c.l.b16 %v811
        %v984 = vunpack.c.h.b16 %v811
        %v985 = vunpack.c.l.b16 %v812
        %v986 = vunpack.c.h.b16 %v812
        %v987 = vunpack.c.l.b16 %v813
        %v988 = vunpack.c.h.b16 %v813
        %v989 = vunpack.c.l.b16 %v814
        %v990 = vunpack.c.h.b16 %v814
        %v991 = vunpack.c.l.b16 %v815
        %v992 = vunpack.c.h.b16 %v815
        %v993 = vunpack.c.l.b16 %v816
        %v994 = vunpack.c.h.b16 %v816
        %v995 = vunpack.c.l.b16 %v817
        %v996 = vunpack.c.h.b16 %v817
        %v997 = vunpack.c.l.b16 %v818
        %v998 = vunpack.c.h.b16 %v818
        %v999 = vunpack.c.l.b16 %v819
        %v1000 = vunpack.c.h.b16 %v819
        %v1001 = vunpack.c.l.b16 %v820
        %v1002 = vunpack.c.h.b16 %v820
        %v1003 = vunpack.c.l.b16 %v821
        %v1004 = vunpack.c.h.b16 %v821
        %v1005 = vunpack.c.l.b16 %v822
        %v1006 = vunpack.c.h.b16 %v822
        %v1007 = vunpack.c.l.b16 %v823
        %v1008 = vunpack.c.h.b16 %v823
        %v1009 = vunpack.c.l.b16 %v824
        %v1010 = vunpack.c.h.b16 %v824
        %v1011 = vunpack.c.l.b16 %v825
        %v1012 = vunpack.c.h.b16 %v825
        %v1013 = vunpack.c.l.b16 %v826
        %v1014 = vunpack.c.h.b16 %v826
        %v1015 = vunpack.c.l.b16 %v827
        %v1016 = vunpack.c.h.b16 %v827
        %v1017 = vunpack.c.l.b16 %v828
        %v1018 = vunpack.c.h.b16 %v828
        %v1019 = vunpack.c.l.b16 %v829
        %v1020 = vunpack.c.h.b16 %v829
        %v1021 = vunpack.c.l.b16 %v830
        %v1022 = vunpack.c.h.b16 %v830
        %v1023 = vunpack.c.l.b16 %v831
        %v1024 = vunpack.c.h.b16 %v831
        %v1025 = vunpack.c.l.b16 %v832
        %v1026 = vunpack.c.h.b16 %v832
        %v1027 = vunpack.c.l.b16 %v833
        %v1028 = vunpack.c.h.b16 %v833
        %v1029 = vunpack.c.l.b16 %v834
        %v1030 = vunpack.c.h.b16 %v834
        %v1031 = vunpack.c.l.b16 %v835
        %v1032 = vunpack.c.h.b16 %v835
        %v1033 = vunpack.c.l.b16 %v836
        %v1034 = vunpack.c.h.b16 %v836
        %v1035 = vunpack.c.l.b16 %v837
        %v1036 = vunpack.c.h.b16 %v837
        %v1037 = vunpack.c.l.b16 %v838
        %v1038 = vunpack.c.h.b16 %v838
        %v1039 = vunpack.c.l.b16 %v839
        %v1040 = vunpack.c.h.b16 %v839
        %v1041 = vunpack.c.l.b16 %v840
        %v1042 = vunpack.c.h.b16 %v840
        %v1043 = vunpack.c.l.b16 %v841
        %v1044 = vunpack.c.h.b16 %v841
        %v1045 = vunpack.c.l.b16 %v842
        %v1046 = vunpack.c.h.b16 %v842
        %v1047 = vunpack.c.l.b16 %v843
        %v1048 = vunpack.c.h.b16 %v843
        %v1049 = vunpack.c.l.b16 %v844
        %v1050 = vunpack.c.h.b16 %v844
        %v1051 = vunpack.c.l.b16 %v845
        %v1052 = vunpack.c.h.b16 %v845
        %v1053 = vunpack.c.l.b16 %v846
        %v1054 = vunpack.c.h.b16 %v846
        %v1055 = vunpack.c.l.b16 %v847
        %v1056 = vunpack.c.h.b16 %v847
        %v1057 = vunpack.c.l.b16 %v848
        %v1058 = vunpack.c.h.b16 %v848
        %v1059 = vunpack.c.l.b16 %v849
        %v1060 = vunpack.c.h.b16 %v849
        %v1061 = vunpack.c.l.b16 %v850
        %v1062 = vunpack.c.h.b16 %v850
        %v1063 = vunpack.c.l.b16 %v851
        %v1064 = vunpack.c.h.b16 %v851
        %v1065 = vunpack.c.l.b16 %v852
        %v1066 = vunpack.c.h.b16 %v852
        %v1067 = vunpack.c.l.b16 %v853
        %v1068 = vunpack.c.h.b16 %v853
        %v1069 = vunpack.c.l.b16 %v854
        %v1070 = vunpack.c.h.b16 %v854
        %v1071 = vunpack.c.l.b16 %v855
        %v1072 = vunpack.c.h.b16 %v855
        %v1073 = vunpack.c.l.b16 %v856
        %v1074 = vunpack.c.h.b16 %v856
        %v1075 = vunpack.c.l.b16 %v857
        %v1076 = vunpack.c.h.b16 %v857
        %v1077 = vunpack.c.l.b16 %v858
        %v1078 = vunpack.c.h.b16 %v858
        %v1079 = vunpack.c.l.b16 %v859
        %v1080 = vunpack.c.h.b16 %v859
        %v1081 = vunpack.c.l.b16 %v860
        %v1082 = vunpack.c.h.b16 %v860
        %v1083 = vunpack.c.l.b16 %v861
        %v1084 = vunpack.c.h.b16 %v861
        %v1085 = vunpack.c.l.b16 %v862
        %v1086 = vunpack.c.h.b16 %v862
        %v1087 = vunpack.c.l.b16 %v863
        %v1088 = vunpack.c.h.b16 %v863
        %v1089 = vunpack.c.l.b16 %v864
        %v1090 = vunpack.c.h.b16 %v864
        %v1091 = vunpack.c.l.b16 %v865
        %v1092 = vunpack.c.h.b16 %v865
        %v1093 = vunpack.c.l.b16 %v866
        %v1094 = vunpack.c.h.b16 %v866
        %v1095 = vunpack.c.l.b16 %v867
        %v1096 = vunpack.c.h.b16 %v867
        %v1097 = vunpack.c.l.b16 %v868
        %v1098 = vunpack.c.h.b16 %v868
        %v1099 = vunpack.c.l.b16 %v869
        %v1100 = vunpack.c.h.b16 %v869
        %v1101 = vunpack.c.l.b16 %v870
        %v1102 = vunpack.c.h.b16 %v870
        %v1103 = vunpack.c.l.b16 %v871
        %v1104 = vunpack.c.h.b16 %v871
        %v1105 = vunpack.c.l.b16 %v872
        %v1106 = vunpack.c.h.b16 %v872
        %v1107 = vpack.c.b16 %v987, %v979
        %v1108 = vpack.c.b16 %v988, %v980
        %v1109 = vpack.c.b16 %v989, %v981
        %v1110 = vpack.c.b16 %v990, %v982
        %v1111 = vpack.c.b16 %v991, %v983
        %v1112 = vpack.c.b16 %v992, %v984
        %v1113 = vpack.c.b16 %v993, %v985
        %v1114 = vpack.c.b16 %v994, %v986
        %v1115 = vpack.c.b16 %v1003, %v995
        %v1116 = vpack.c.b16 %v1004, %v996
        %v1117 = vpack.c.b16 %v1005, %v997
        %v1118 = vpack.c.b16 %v1006, %v998
        %v1119 = vpack.c.b16 %v1007, %v999
        %v1120 = vpack.c.b16 %v1008, %v1000
        %v1121 = vpack.c.b16 %v1009, %v1001
        %v1122 = vpack.c.b16 %v1010, %v1002
        %v1123 = vpack.c.b16 %v1019, %v1011
        %v1124 = vpack.c.b16 %v1020, %v1012
        %v1125 = vpack.c.b16 %v1021, %v1013
        %v1126 = vpack.c.b16 %v1022, %v1014
        %v1127 = vpack.c.b16 %v1023, %v1015
        %v1128 = vpack.c.b16 %v1024, %v1016
        %v1129 = vpack.c.b16 %v1025, %v1017
        %v1130 = vpack.c.b16 %v1026, %v1018
        %v1131 = vpack.c.b16 %v1035, %v1027
        %v1132 = vpack.c.b16 %v1036, %v1028
        %v1133 = vpack.c.b16 %v1037, %v1029
        %v1134 = vpack.c.b16 %v1038, %v1030
        %v1135 = vpack.c.b16 %v1039, %v1031
        %v1136 = vpack.c.b16 %v1040, %v1032
        %v1137 = vpack.c.b16 %v1041, %v1033
        %v1138 = vpack.c.b16 %v1042, %v1034
        %v1139 = vpack.c.b16 %v1051, %v1043
        %v1140 = vpack.c.b16 %v1052, %v1044
        %v1141 = vpack.c.b16 %v1053, %v1045
        %v1142 = vpack.c.b16 %v1054, %v1046
        %v1143 = vpack.c.b16 %v1055, %v1047
        %v1144 = vpack.c.b16 %v1056, %v1048
        %v1145 = vpack.c.b16 %v1057, %v1049
        %v1146 = vpack.c.b16 %v1058, %v1050
        %v1147 = vpack.c.b16 %v1067, %v1059
        %v1148 = vpack.c.b16 %v1068, %v1060
        %v1149 = vpack.c.b16 %v1069, %v1061
        %v1150 = vpack.c.b16 %v1070, %v1062
        %v1151 = vpack.c.b16 %v1071, %v1063
        %v1152 = vpack.c.b16 %v1072, %v1064
        %v1153 = vpack.c.b16 %v1073, %v1065
        %v1154 = vpack.c.b16 %v1074, %v1066
        %v1155 = vpack.c.b16 %v1083, %v1075
        %v1156 = vpack.c.b16 %v1084, %v1076
        %v1157 = vpack.c.b16 %v1085, %v1077
        %v1158 = vpack.c.b16 %v1086, %v1078
        %v1159 = vpack.c.b16 %v1087, %v1079
        %v1160 = vpack.c.b16 %v1088, %v1080
        %v1161 = vpack.c.b16 %v1089, %v1081
        %v1162 = vpack.c.b16 %v1090, %v1082
        %v1163 = vpack.c.b16 %v1099, %v1091
        %v1164 = vpack.c.b16 %v1100, %v1092
        %v1165 = vpack.c.b16 %v1101, %v1093
        %v1166 = vpack.c.b16 %v1102, %v1094
        %v1167 = vpack.c.b16 %v1103, %v1095
        %v1168 = vpack.c.b16 %v1104, %v1096
        %v1169 = vpack.c.b16 %v1105, %v1097
        %v1170 = vpack.c.b16 %v1106, %v1098
        %1235 = vmatprep.subr.bf16.mxu0 %v1108
        %1236 = vmatpush1.bf16.msra.mxu0 %v1107
        %1237 = vmatprep.subr.bf16.mxu0 %v1116
        %1238 = vmatpush1.bf16.msra.mxu0 %v1115
        %1239 = vmatprep.subr.bf16.mxu0 %v1124
        %1240 = vmatpush1.bf16.msra.mxu0 %v1123
        %1241 = vmatprep.subr.bf16.mxu0 %v1132
        %1242 = vmatpush1.bf16.msra.mxu0 %v1131
        %1243 = vmatprep.subr.bf16.mxu0 %v1140
        %1244 = vmatpush1.bf16.msra.mxu0 %v1139
        %1245 = vmatprep.subr.bf16.mxu0 %v1148
        %1246 = vmatpush1.bf16.msra.mxu0 %v1147
        %1247 = vmatprep.subr.bf16.mxu0 %v1156
        %1248 = vmatpush1.bf16.msra.mxu0 %v1155
        %1249 = vmatprep.subr.bf16.mxu0 %v1164
        %1250 = vmatpush1.bf16.msra.mxu0 %v1163
        %1251 = vmatprep.subr.bf16.mxu0 0
        %1252 = vmatpush1.bf16.msra.mxu0 0
        %1253 = vmatprep.subr.bf16.mxu0 0
        %1254 = vmatpush1.bf16.msra.mxu0 0
        %1255 = vmatprep.subr.bf16.mxu0 0
        %1256 = vmatpush1.bf16.msra.mxu0 0
        %1257 = vmatprep.subr.bf16.mxu0 0
        %1258 = vmatpush1.bf16.msra.mxu0 0
        %1259 = vmatprep.subr.bf16.mxu0 0
        %1260 = vmatpush1.bf16.msra.mxu0 0
        %1261 = vmatprep.subr.bf16.mxu0 0
        %1262 = vmatpush1.bf16.msra.mxu0 0
        %1263 = vmatprep.subr.bf16.mxu0 0
        %1264 = vmatpush1.bf16.msra.mxu0 0
        %1265 = vmatprep.subr.bf16.mxu0 0
        %1266 = vmatpush1.bf16.msra.mxu0 0
        %1267 = vmatprep.mubr.bf16.mxu0 0
        %1268 = vmatmul.mubr.bf16.gmra.mrb[0].mxu0 %v801
        %v1269 = vpop.f32.mrb[0].mxu0
        %v1270 = vadd.f32 %v878, %v1269
        %v1271 = vpop.f32.mrb[0].mxu0
        %v1272 = vadd.f32 %v882, %v1271
        %v1273 = vpop.f32.mrb[0].mxu0
        %v1274 = vadd.f32 %v878, %v1273
        %v1275 = vpop.f32.mrb[0].mxu0
        %v1276 = vadd.f32 %v882, %v1275
        %1277 = vmatprep.mubr.bf16.mxu0 0
        %1278 = vmatmul.mubr.bf16.gmra.mrb[0].mxu0 %v802
        %v1279 = vpop.f32.mrb[0].mxu0
        %v1280 = vadd.f32 %v878, %v1279
        %v1281 = vpop.f32.mrb[0].mxu0
        %v1282 = vadd.f32 %v882, %v1281
        %v1283 = vpop.f32.mrb[0].mxu0
        %v1284 = vadd.f32 %v878, %v1283
        %v1285 = vpop.f32.mrb[0].mxu0
        %v1286 = vadd.f32 %v882, %v1285
        %1287 = vmatprep.mubr.bf16.mxu0 0
        %1288 = vmatmul.mubr.bf16.gmra.mrb[0].mxu0 %v803
        %v1289 = vpop.f32.mrb[0].mxu0
        %v1290 = vadd.f32 %v878, %v1289
        %v1291 = vpop.f32.mrb[0].mxu0
        %v1292 = vadd.f32 %v882, %v1291
        %v1293 = vpop.f32.mrb[0].mxu0
        %v1294 = vadd.f32 %v878, %v1293
        %v1295 = vpop.f32.mrb[0].mxu0
        %v1296 = vadd.f32 %v882, %v1295
        %1297 = vmatprep.mubr.bf16.mxu0 0
        %1298 = vmatmul.mubr.bf16.gmra.mrb[0].mxu0 %v804
        %v1299 = vpop.f32.mrb[0].mxu0
        %v1300 = vadd.f32 %v878, %v1299
        %v1301 = vpop.f32.mrb[0].mxu0
        %v1302 = vadd.f32 %v882, %v1301
        %v1303 = vpop.f32.mrb[0].mxu0
        %v1304 = vadd.f32 %v878, %v1303
        %v1305 = vpop.f32.mrb[0].mxu0
        %v1306 = vadd.f32 %v882, %v1305
        %1307 = vmatprep.mubr.bf16.mxu0 0
        %1308 = vmatmul.mubr.bf16.gmra.mrb[0].mxu0 %v805
        %v1309 = vpop.f32.mrb[0].mxu0
        %v1310 = vadd.f32 %v878, %v1309
        %v1311 = vpop.f32.mrb[0].mxu0
        %v1312 = vadd.f32 %v882, %v1311
        %v1313 = vpop.f32.mrb[0].mxu0
        %v1314 = vadd.f32 %v878, %v1313
        %v1315 = vpop.f32.mrb[0].mxu0
        %v1316 = vadd.f32 %v882, %v1315
        %1317 = vmatprep.mubr.bf16.mxu0 0
        %1318 = vmatmul.mubr.bf16.gmra.mrb[0].mxu0 %v806
        %v1319 = vpop.f32.mrb[0].mxu0
        %v1320 = vadd.f32 %v878, %v1319
        %v1321 = vpop.f32.mrb[0].mxu0
        %v1322 = vadd.f32 %v882, %v1321
        %v1323 = vpop.f32.mrb[0].mxu0
        %v1324 = vadd.f32 %v878, %v1323
        %v1325 = vpop.f32.mrb[0].mxu0
        %v1326 = vadd.f32 %v882, %v1325
        %1327 = vmatprep.mubr.bf16.mxu0 0
        %1328 = vmatmul.mubr.bf16.gmra.mrb[0].mxu0 %v807
        %v1329 = vpop.f32.mrb[0].mxu0
        %v1330 = vadd.f32 %v878, %v1329
        %v1331 = vpop.f32.mrb[0].mxu0
        %v1332 = vadd.f32 %v882, %v1331
        %v1333 = vpop.f32.mrb[0].mxu0
        %v1334 = vadd.f32 %v878, %v1333
        %v1335 = vpop.f32.mrb[0].mxu0
        %v1336 = vadd.f32 %v882, %v1335
        %1337 = vmatprep.mubr.bf16.mxu0 0
        %1338 = vmatmul.mubr.bf16.gmra.mrb[0].mxu0 %v808
        %v1339 = vpop.f32.mrb[0].mxu0
        %v1340 = vadd.f32 %v878, %v1339
        %v1341 = vpop.f32.mrb[0].mxu0
        %v1342 = vadd.f32 %v882, %v1341
        %v1343 = vpop.f32.mrb[0].mxu0
        %v1344 = vadd.f32 %v878, %v1343
        %v1345 = vpop.f32.mrb[0].mxu0
        %v1346 = vadd.f32 %v882, %v1345
        %1347 = vdwg.mxu0
        %1348 = vmatprep.subr.bf16.mxu0 %v1110
        %1349 = vmatpush1.bf16.msra.mxu0 %v1109
        %1350 = vmatprep.subr.bf16.mxu0 %v1118
        %1351 = vmatpush1.bf16.msra.mxu0 %v1117
        %1352 = vmatprep.subr.bf16.mxu0 %v1126
        %1353 = vmatpush1.bf16.msra.mxu0 %v1125
        %1354 = vmatprep.subr.bf16.mxu0 %v1134
        %1355 = vmatpush1.bf16.msra.mxu0 %v1133
        %1356 = vmatprep.subr.bf16.mxu0 %v1142
        %1357 = vmatpush1.bf16.msra.mxu0 %v1141
        %1358 = vmatprep.subr.bf16.mxu0 %v1150
        %1359 = vmatpush1.bf16.msra.mxu0 %v1149
        %1360 = vmatprep.subr.bf16.mxu0 %v1158
        %1361 = vmatpush1.bf16.msra.mxu0 %v1157
        %1362 = vmatprep.subr.bf16.mxu0 %v1166
        %1363 = vmatpush1.bf16.msra.mxu0 %v1165
        %1364 = vmatprep.subr.bf16.mxu0 0
        %1365 = vmatpush1.bf16.msra.mxu0 0
        %1366 = vmatprep.subr.bf16.mxu0 0
        %1367 = vmatpush1.bf16.msra.mxu0 0
        %1368 = vmatprep.subr.bf16.mxu0 0
        %1369 = vmatpush1.bf16.msra.mxu0 0
        %1370 = vmatprep.subr.bf16.mxu0 0
        %1371 = vmatpush1.bf16.msra.mxu0 0
        %1372 = vmatprep.subr.bf16.mxu0 0
        %1373 = vmatpush1.bf16.msra.mxu0 0
        %1374 = vmatprep.subr.bf16.mxu0 0
        %1375 = vmatpush1.bf16.msra.mxu0 0
        %1376 = vmatprep.subr.bf16.mxu0 0
        %1377 = vmatpush1.bf16.msra.mxu0 0
        %1378 = vmatprep.subr.bf16.mxu0 0
        %1379 = vmatpush1.bf16.msra.mxu0 0
        %1380 = vmatprep.mubr.bf16.mxu0 0
        %1381 = vmatmul.mubr.bf16.gmra.mrb[0].mxu0 %v801
        %v1382 = vpop.f32.mrb[0].mxu0
        %v1383 = vadd.f32 %v886, %v1382
        %v1384 = vpop.f32.mrb[0].mxu0
        %v1385 = vadd.f32 %v890, %v1384
        %v1386 = vpop.f32.mrb[0].mxu0
        %v1387 = vadd.f32 %v886, %v1386
        %v1388 = vpop.f32.mrb[0].mxu0
        %v1389 = vadd.f32 %v890, %v1388
        %1390 = vmatprep.mubr.bf16.mxu0 0
        %1391 = vmatmul.mubr.bf16.gmra.mrb[0].mxu0 %v802
        %v1392 = vpop.f32.mrb[0].mxu0
        %v1393 = vadd.f32 %v886, %v1392
        %v1394 = vpop.f32.mrb[0].mxu0
        %v1395 = vadd.f32 %v890, %v1394
        %v1396 = vpop.f32.mrb[0].mxu0
        %v1397 = vadd.f32 %v886, %v1396
        %v1398 = vpop.f32.mrb[0].mxu0
        %v1399 = vadd.f32 %v890, %v1398
        %1400 = vmatprep.mubr.bf16.mxu0 0
        %1401 = vmatmul.mubr.bf16.gmra.mrb[0].mxu0 %v803
        %v1402 = vpop.f32.mrb[0].mxu0
        %v1403 = vadd.f32 %v886, %v1402
        %v1404 = vpop.f32.mrb[0].mxu0
        %v1405 = vadd.f32 %v890, %v1404
        %v1406 = vpop.f32.mrb[0].mxu0
        %v1407 = vadd.f32 %v886, %v1406
        %v1408 = vpop.f32.mrb[0].mxu0
        %v1409 = vadd.f32 %v890, %v1408
        %1410 = vmatprep.mubr.bf16.mxu0 0
        %1411 = vmatmul.mubr.bf16.gmra.mrb[0].mxu0 %v804
        %v1412 = vpop.f32.mrb[0].mxu0
        %v1413 = vadd.f32 %v886, %v1412
        %v1414 = vpop.f32.mrb[0].mxu0
        %v1415 = vadd.f32 %v890, %v1414
        %v1416 = vpop.f32.mrb[0].mxu0
        %v1417 = vadd.f32 %v886, %v1416
        %v1418 = vpop.f32.mrb[0].mxu0
        %v1419 = vadd.f32 %v890, %v1418
        %1420 = vmatprep.mubr.bf16.mxu0 0
        %1421 = vmatmul.mubr.bf16.gmra.mrb[0].mxu0 %v805
        %v1422 = vpop.f32.mrb[0].mxu0
        %v1423 = vadd.f32 %v886, %v1422
        %v1424 = vpop.f32.mrb[0].mxu0
        %v1425 = vadd.f32 %v890, %v1424
        %v1426 = vpop.f32.mrb[0].mxu0
        %v1427 = vadd.f32 %v886, %v1426
        %v1428 = vpop.f32.mrb[0].mxu0
        %v1429 = vadd.f32 %v890, %v1428
        %1430 = vmatprep.mubr.bf16.mxu0 0
        %1431 = vmatmul.mubr.bf16.gmra.mrb[0].mxu0 %v806
        %v1432 = vpop.f32.mrb[0].mxu0
        %v1433 = vadd.f32 %v886, %v1432
        %v1434 = vpop.f32.mrb[0].mxu0
        %v1435 = vadd.f32 %v890, %v1434
        %v1436 = vpop.f32.mrb[0].mxu0
        %v1437 = vadd.f32 %v886, %v1436
        %v1438 = vpop.f32.mrb[0].mxu0
        %v1439 = vadd.f32 %v890, %v1438
        %1440 = vmatprep.mubr.bf16.mxu0 0
        %1441 = vmatmul.mubr.bf16.gmra.mrb[0].mxu0 %v807
        %v1442 = vpop.f32.mrb[0].mxu0
        %v1443 = vadd.f32 %v886, %v1442
        %v1444 = vpop.f32.mrb[0].mxu0
        %v1445 = vadd.f32 %v890, %v1444
        %v1446 = vpop.f32.mrb[0].mxu0
        %v1447 = vadd.f32 %v886, %v1446
        %v1448 = vpop.f32.mrb[0].mxu0
        %v1449 = vadd.f32 %v890, %v1448
        %1450 = vmatprep.mubr.bf16.mxu0 0
        %1451 = vmatmul.mubr.bf16.gmra.mrb[0].mxu0 %v808
        %v1452 = vpop.f32.mrb[0].mxu0
        %v1453 = vadd.f32 %v886, %v1452
        %v1454 = vpop.f32.mrb[0].mxu0
        %v1455 = vadd.f32 %v890, %v1454
        %v1456 = vpop.f32.mrb[0].mxu0
        %v1457 = vadd.f32 %v886, %v1456
        %v1458 = vpop.f32.mrb[0].mxu0
        %v1459 = vadd.f32 %v890, %v1458
        %1460 = vdwg.mxu0
        %1461 = vmatprep.subr.bf16.mxu0 %v1112
        %1462 = vmatpush1.bf16.msra.mxu0 %v1111
        %1463 = vmatprep.subr.bf16.mxu0 %v1120
        %1464 = vmatpush1.bf16.msra.mxu0 %v1119
        %1465 = vmatprep.subr.bf16.mxu0 %v1128
        %1466 = vmatpush1.bf16.msra.mxu0 %v1127
        %1467 = vmatprep.subr.bf16.mxu0 %v1136
        %1468 = vmatpush1.bf16.msra.mxu0 %v1135
        %1469 = vmatprep.subr.bf16.mxu0 %v1144
        %1470 = vmatpush1.bf16.msra.mxu0 %v1143
        %1471 = vmatprep.subr.bf16.mxu0 %v1152
        %1472 = vmatpush1.bf16.msra.mxu0 %v1151
        %1473 = vmatprep.subr.bf16.mxu0 %v1160
        %1474 = vmatpush1.bf16.msra.mxu0 %v1159
        %1475 = vmatprep.subr.bf16.mxu0 %v1168
        %1476 = vmatpush1.bf16.msra.mxu0 %v1167
        %1477 = vmatprep.subr.bf16.mxu0 0
        %1478 = vmatpush1.bf16.msra.mxu0 0
        %1479 = vmatprep.subr.bf16.mxu0 0
        %1480 = vmatpush1.bf16.msra.mxu0 0
        %1481 = vmatprep.subr.bf16.mxu0 0
        %1482 = vmatpush1.bf16.msra.mxu0 0
        %1483 = vmatprep.subr.bf16.mxu0 0
        %1484 = vmatpush1.bf16.msra.mxu0 0
        %1485 = vmatprep.subr.bf16.mxu0 0
        %1486 = vmatpush1.bf16.msra.mxu0 0
        %1487 = vmatprep.subr.bf16.mxu0 0
        %1488 = vmatpush1.bf16.msra.mxu0 0
        %1489 = vmatprep.subr.bf16.mxu0 0
        %1490 = vmatpush1.bf16.msra.mxu0 0
        %1491 = vmatprep.subr.bf16.mxu0 0
        %1492 = vmatpush1.bf16.msra.mxu0 0
        %1493 = vmatprep.mubr.bf16.mxu0 0
        %1494 = vmatmul.mubr.bf16.gmra.mrb[0].mxu0 %v801
        %v1495 = vpop.f32.mrb[0].mxu0
        %v1496 = vadd.f32 %v894, %v1495
        %v1497 = vpop.f32.mrb[0].mxu0
        %v1498 = vadd.f32 %v898, %v1497
        %v1499 = vpop.f32.mrb[0].mxu0
        %v1500 = vadd.f32 %v894, %v1499
        %v1501 = vpop.f32.mrb[0].mxu0
        %v1502 = vadd.f32 %v898, %v1501
        %1503 = vmatprep.mubr.bf16.mxu0 0
        %1504 = vmatmul.mubr.bf16.gmra.mrb[0].mxu0 %v802
        %v1505 = vpop.f32.mrb[0].mxu0
        %v1506 = vadd.f32 %v894, %v1505
        %v1507 = vpop.f32.mrb[0].mxu0
        %v1508 = vadd.f32 %v898, %v1507
        %v1509 = vpop.f32.mrb[0].mxu0
        %v1510 = vadd.f32 %v894, %v1509
        %v1511 = vpop.f32.mrb[0].mxu0
        %v1512 = vadd.f32 %v898, %v1511
        %1513 = vmatprep.mubr.bf16.mxu0 0
        %1514 = vmatmul.mubr.bf16.gmra.mrb[0].mxu0 %v803
        %v1515 = vpop.f32.mrb[0].mxu0
        %v1516 = vadd.f32 %v894, %v1515
        %v1517 = vpop.f32.mrb[0].mxu0
        %v1518 = vadd.f32 %v898, %v1517
        %v1519 = vpop.f32.mrb[0].mxu0
        %v1520 = vadd.f32 %v894, %v1519
        %v1521 = vpop.f32.mrb[0].mxu0
        %v1522 = vadd.f32 %v898, %v1521
        %1523 = vmatprep.mubr.bf16.mxu0 0
        %1524 = vmatmul.mubr.bf16.gmra.mrb[0].mxu0 %v804
        %v1525 = vpop.f32.mrb[0].mxu0
        %v1526 = vadd.f32 %v894, %v1525
        %v1527 = vpop.f32.mrb[0].mxu0
        %v1528 = vadd.f32 %v898, %v1527
        %v1529 = vpop.f32.mrb[0].mxu0
        %v1530 = vadd.f32 %v894, %v1529
        %v1531 = vpop.f32.mrb[0].mxu0
        %v1532 = vadd.f32 %v898, %v1531
        %1533 = vmatprep.mubr.bf16.mxu0 0
        %1534 = vmatmul.mubr.bf16.gmra.mrb[0].mxu0 %v805
        %v1535 = vpop.f32.mrb[0].mxu0
        %v1536 = vadd.f32 %v894, %v1535
        %v1537 = vpop.f32.mrb[0].mxu0
        %v1538 = vadd.f32 %v898, %v1537
        %v1539 = vpop.f32.mrb[0].mxu0
        %v1540 = vadd.f32 %v894, %v1539
        %v1541 = vpop.f32.mrb[0].mxu0
        %v1542 = vadd.f32 %v898, %v1541
        %1543 = vmatprep.mubr.bf16.mxu0 0
        %1544 = vmatmul.mubr.bf16.gmra.mrb[0].mxu0 %v806
        %v1545 = vpop.f32.mrb[0].mxu0
        %v1546 = vadd.f32 %v894, %v1545
        %v1547 = vpop.f32.mrb[0].mxu0
        %v1548 = vadd.f32 %v898, %v1547
        %v1549 = vpop.f32.mrb[0].mxu0
        %v1550 = vadd.f32 %v894, %v1549
        %v1551 = vpop.f32.mrb[0].mxu0
        %v1552 = vadd.f32 %v898, %v1551
        %1553 = vmatprep.mubr.bf16.mxu0 0
        %1554 = vmatmul.mubr.bf16.gmra.mrb[0].mxu0 %v807
        %v1555 = vpop.f32.mrb[0].mxu0
        %v1556 = vadd.f32 %v894, %v1555
        %v1557 = vpop.f32.mrb[0].mxu0
        %v1558 = vadd.f32 %v898, %v1557
        %v1559 = vpop.f32.mrb[0].mxu0
        %v1560 = vadd.f32 %v894, %v1559
        %v1561 = vpop.f32.mrb[0].mxu0
        %v1562 = vadd.f32 %v898, %v1561
        %1563 = vmatprep.mubr.bf16.mxu0 0
        %1564 = vmatmul.mubr.bf16.gmra.mrb[0].mxu0 %v808
        %v1565 = vpop.f32.mrb[0].mxu0
        %v1566 = vadd.f32 %v894, %v1565
        %v1567 = vpop.f32.mrb[0].mxu0
        %v1568 = vadd.f32 %v898, %v1567
        %v1569 = vpop.f32.mrb[0].mxu0
        %v1570 = vadd.f32 %v894, %v1569
        %v1571 = vpop.f32.mrb[0].mxu0
        %v1572 = vadd.f32 %v898, %v1571
        %1573 = vdwg.mxu0
        %1574 = vmatprep.subr.bf16.mxu0 %v1114
        %1575 = vmatpush1.bf16.msra.mxu0 %v1113
        %1576 = vmatprep.subr.bf16.mxu0 %v1122
        %1577 = vmatpush1.bf16.msra.mxu0 %v1121
        %1578 = vmatprep.subr.bf16.mxu0 %v1130
        %1579 = vmatpush1.bf16.msra.mxu0 %v1129
        %1580 = vmatprep.subr.bf16.mxu0 %v1138
        %1581 = vmatpush1.bf16.msra.mxu0 %v1137
        %1582 = vmatprep.subr.bf16.mxu0 %v1146
        %1583 = vmatpush1.bf16.msra.mxu0 %v1145
        %1584 = vmatprep.subr.bf16.mxu0 %v1154
        %1585 = vmatpush1.bf16.msra.mxu0 %v1153
        %1586 = vmatprep.subr.bf16.mxu0 %v1162
        %1587 = vmatpush1.bf16.msra.mxu0 %v1161
        %1588 = vmatprep.subr.bf16.mxu0 %v1170
        %1589 = vmatpush1.bf16.msra.mxu0 %v1169
        %1590 = vmatprep.subr.bf16.mxu0 0
        %1591 = vmatpush1.bf16.msra.mxu0 0
        %1592 = vmatprep.subr.bf16.mxu0 0
        %1593 = vmatpush1.bf16.msra.mxu0 0
        %1594 = vmatprep.subr.bf16.mxu0 0
        %1595 = vmatpush1.bf16.msra.mxu0 0
        %1596 = vmatprep.subr.bf16.mxu0 0
        %1597 = vmatpush1.bf16.msra.mxu0 0
        %1598 = vmatprep.subr.bf16.mxu0 0
        %1599 = vmatpush1.bf16.msra.mxu0 0
        %1600 = vmatprep.subr.bf16.mxu0 0
        %1601 = vmatpush1.bf16.msra.mxu0 0
        %1602 = vmatprep.subr.bf16.mxu0 0
        %1603 = vmatpush1.bf16.msra.mxu0 0
        %1604 = vmatprep.subr.bf16.mxu0 0
        %1605 = vmatpush1.bf16.msra.mxu0 0
        %1606 = vmatprep.mubr.bf16.mxu0 0
        %1607 = vmatmul.mubr.bf16.gmra.mrb[0].mxu0 %v801
        %v1608 = vpop.f32.mrb[0].mxu0
        %v1609 = vadd.f32 %v902, %v1608
        %v1610 = vpop.f32.mrb[0].mxu0
        %v1611 = vadd.f32 %v906, %v1610
        %v1612 = vpop.f32.mrb[0].mxu0
        %v1613 = vadd.f32 %v902, %v1612
        %v1614 = vpop.f32.mrb[0].mxu0
        %v1615 = vadd.f32 %v906, %v1614
        %1616 = vmatprep.mubr.bf16.mxu0 0
        %1617 = vmatmul.mubr.bf16.gmra.mrb[0].mxu0 %v802
        %v1618 = vpop.f32.mrb[0].mxu0
        %v1619 = vadd.f32 %v902, %v1618
        %v1620 = vpop.f32.mrb[0].mxu0
        %v1621 = vadd.f32 %v906, %v1620
        %v1622 = vpop.f32.mrb[0].mxu0
        %v1623 = vadd.f32 %v902, %v1622
        %v1624 = vpop.f32.mrb[0].mxu0
        %v1625 = vadd.f32 %v906, %v1624
        %1626 = vmatprep.mubr.bf16.mxu0 0
        %1627 = vmatmul.mubr.bf16.gmra.mrb[0].mxu0 %v803
        %v1628 = vpop.f32.mrb[0].mxu0
        %v1629 = vadd.f32 %v902, %v1628
        %v1630 = vpop.f32.mrb[0].mxu0
        %v1631 = vadd.f32 %v906, %v1630
        %v1632 = vpop.f32.mrb[0].mxu0
        %v1633 = vadd.f32 %v902, %v1632
        %v1634 = vpop.f32.mrb[0].mxu0
        %v1635 = vadd.f32 %v906, %v1634
        %1636 = vmatprep.mubr.bf16.mxu0 0
        %1637 = vmatmul.mubr.bf16.gmra.mrb[0].mxu0 %v804
        %v1638 = vpop.f32.mrb[0].mxu0
        %v1639 = vadd.f32 %v902, %v1638
        %v1640 = vpop.f32.mrb[0].mxu0
        %v1641 = vadd.f32 %v906, %v1640
        %v1642 = vpop.f32.mrb[0].mxu0
        %v1643 = vadd.f32 %v902, %v1642
        %v1644 = vpop.f32.mrb[0].mxu0
        %v1645 = vadd.f32 %v906, %v1644
        %1646 = vmatprep.mubr.bf16.mxu0 0
        %1647 = vmatmul.mubr.bf16.gmra.mrb[0].mxu0 %v805
        %v1648 = vpop.f32.mrb[0].mxu0
        %v1649 = vadd.f32 %v902, %v1648
        %v1650 = vpop.f32.mrb[0].mxu0
        %v1651 = vadd.f32 %v906, %v1650
        %v1652 = vpop.f32.mrb[0].mxu0
        %v1653 = vadd.f32 %v902, %v1652
        %v1654 = vpop.f32.mrb[0].mxu0
        %v1655 = vadd.f32 %v906, %v1654
        %1656 = vmatprep.mubr.bf16.mxu0 0
        %1657 = vmatmul.mubr.bf16.gmra.mrb[0].mxu0 %v806
        %v1658 = vpop.f32.mrb[0].mxu0
        %v1659 = vadd.f32 %v902, %v1658
        %v1660 = vpop.f32.mrb[0].mxu0
        %v1661 = vadd.f32 %v906, %v1660
        %v1662 = vpop.f32.mrb[0].mxu0
        %v1663 = vadd.f32 %v902, %v1662
        %v1664 = vpop.f32.mrb[0].mxu0
        %v1665 = vadd.f32 %v906, %v1664
        %1666 = vmatprep.mubr.bf16.mxu0 0
        %1667 = vmatmul.mubr.bf16.gmra.mrb[0].mxu0 %v807
        %v1668 = vpop.f32.mrb[0].mxu0
        %v1669 = vadd.f32 %v902, %v1668
        %v1670 = vpop.f32.mrb[0].mxu0
        %v1671 = vadd.f32 %v906, %v1670
        %v1672 = vpop.f32.mrb[0].mxu0
        %v1673 = vadd.f32 %v902, %v1672
        %v1674 = vpop.f32.mrb[0].mxu0
        %v1675 = vadd.f32 %v906, %v1674
        %1676 = vmatprep.mubr.bf16.mxu0 0
        %1677 = vmatmul.mubr.bf16.gmra.mrb[0].mxu0 %v808
        %v1678 = vpop.f32.mrb[0].mxu0
        %v1679 = vadd.f32 %v902, %v1678
        %v1680 = vpop.f32.mrb[0].mxu0
        %v1681 = vadd.f32 %v906, %v1680
        %v1682 = vpop.f32.mrb[0].mxu0
        %v1683 = vadd.f32 %v902, %v1682
        %v1684 = vpop.f32.mrb[0].mxu0
        %v1685 = vadd.f32 %v906, %v1684
        %1686 = vdwg.mxu0
        %v1687 = vmax.f32 %v1270, 0.0
        %v1688 = vmax.f32 %v1272, 0.0
        %v1689 = vmax.f32 %v1383, 0.0
        %v1690 = vmax.f32 %v1385, 0.0
        %v1691 = vmax.f32 %v1496, 0.0
        %v1692 = vmax.f32 %v1498, 0.0
        %v1693 = vmax.f32 %v1609, 0.0
        %v1694 = vmax.f32 %v1611, 0.0
        %v1695 = vmax.f32 %v1274, 0.0
        %v1696 = vmax.f32 %v1276, 0.0
        %v1697 = vmax.f32 %v1387, 0.0
        %v1698 = vmax.f32 %v1389, 0.0
        %v1699 = vmax.f32 %v1500, 0.0
        %v1700 = vmax.f32 %v1502, 0.0
        %v1701 = vmax.f32 %v1613, 0.0
        %v1702 = vmax.f32 %v1615, 0.0
        %v1703 = vmax.f32 %v1280, 0.0
        %v1704 = vmax.f32 %v1282, 0.0
        %v1705 = vmax.f32 %v1393, 0.0
        %v1706 = vmax.f32 %v1395, 0.0
        %v1707 = vmax.f32 %v1506, 0.0
        %v1708 = vmax.f32 %v1508, 0.0
        %v1709 = vmax.f32 %v1619, 0.0
        %v1710 = vmax.f32 %v1621, 0.0
        %v1711 = vmax.f32 %v1284, 0.0
        %v1712 = vmax.f32 %v1286, 0.0
        %v1713 = vmax.f32 %v1397, 0.0
        %v1714 = vmax.f32 %v1399, 0.0
        %v1715 = vmax.f32 %v1510, 0.0
        %v1716 = vmax.f32 %v1512, 0.0
        %v1717 = vmax.f32 %v1623, 0.0
        %v1718 = vmax.f32 %v1625, 0.0
        %v1719 = vmax.f32 %v1290, 0.0
        %v1720 = vmax.f32 %v1292, 0.0
        %v1721 = vmax.f32 %v1403, 0.0
        %v1722 = vmax.f32 %v1405, 0.0
        %v1723 = vmax.f32 %v1516, 0.0
        %v1724 = vmax.f32 %v1518, 0.0
        %v1725 = vmax.f32 %v1629, 0.0
        %v1726 = vmax.f32 %v1631, 0.0
        %v1727 = vmax.f32 %v1294, 0.0
        %v1728 = vmax.f32 %v1296, 0.0
        %v1729 = vmax.f32 %v1407, 0.0
        %v1730 = vmax.f32 %v1409, 0.0
        %v1731 = vmax.f32 %v1520, 0.0
        %v1732 = vmax.f32 %v1522, 0.0
        %v1733 = vmax.f32 %v1633, 0.0
        %v1734 = vmax.f32 %v1635, 0.0
        %v1735 = vmax.f32 %v1300, 0.0
        %v1736 = vmax.f32 %v1302, 0.0
        %v1737 = vmax.f32 %v1413, 0.0
        %v1738 = vmax.f32 %v1415, 0.0
        %v1739 = vmax.f32 %v1526, 0.0
        %v1740 = vmax.f32 %v1528, 0.0
        %v1741 = vmax.f32 %v1639, 0.0
        %v1742 = vmax.f32 %v1641, 0.0
        %v1743 = vmax.f32 %v1304, 0.0
        %v1744 = vmax.f32 %v1306, 0.0
        %v1745 = vmax.f32 %v1417, 0.0
        %v1746 = vmax.f32 %v1419, 0.0
        %v1747 = vmax.f32 %v1530, 0.0
        %v1748 = vmax.f32 %v1532, 0.0
        %v1749 = vmax.f32 %v1643, 0.0
        %v1750 = vmax.f32 %v1645, 0.0
        %v1751 = vmax.f32 %v1310, 0.0
        %v1752 = vmax.f32 %v1312, 0.0
        %v1753 = vmax.f32 %v1423, 0.0
        %v1754 = vmax.f32 %v1425, 0.0
        %v1755 = vmax.f32 %v1536, 0.0
        %v1756 = vmax.f32 %v1538, 0.0
        %v1757 = vmax.f32 %v1649, 0.0
        %v1758 = vmax.f32 %v1651, 0.0
        %v1759 = vmax.f32 %v1314, 0.0
        %v1760 = vmax.f32 %v1316, 0.0
        %v1761 = vmax.f32 %v1427, 0.0
        %v1762 = vmax.f32 %v1429, 0.0
        %v1763 = vmax.f32 %v1540, 0.0
        %v1764 = vmax.f32 %v1542, 0.0
        %v1765 = vmax.f32 %v1653, 0.0
        %v1766 = vmax.f32 %v1655, 0.0
        %v1767 = vmax.f32 %v1320, 0.0
        %v1768 = vmax.f32 %v1322, 0.0
        %v1769 = vmax.f32 %v1433, 0.0
        %v1770 = vmax.f32 %v1435, 0.0
        %v1771 = vmax.f32 %v1546, 0.0
        %v1772 = vmax.f32 %v1548, 0.0
        %v1773 = vmax.f32 %v1659, 0.0
        %v1774 = vmax.f32 %v1661, 0.0
        %v1775 = vmax.f32 %v1324, 0.0
        %v1776 = vmax.f32 %v1326, 0.0
        %v1777 = vmax.f32 %v1437, 0.0
        %v1778 = vmax.f32 %v1439, 0.0
        %v1779 = vmax.f32 %v1550, 0.0
        %v1780 = vmax.f32 %v1552, 0.0
        %v1781 = vmax.f32 %v1663, 0.0
        %v1782 = vmax.f32 %v1665, 0.0
        %v1783 = vmax.f32 %v1330, 0.0
        %v1784 = vmax.f32 %v1332, 0.0
        %v1785 = vmax.f32 %v1443, 0.0
        %v1786 = vmax.f32 %v1445, 0.0
        %v1787 = vmax.f32 %v1556, 0.0
        %v1788 = vmax.f32 %v1558, 0.0
        %v1789 = vmax.f32 %v1669, 0.0
        %v1790 = vmax.f32 %v1671, 0.0
        %v1791 = vmax.f32 %v1334, 0.0
        %v1792 = vmax.f32 %v1336, 0.0
        %v1793 = vmax.f32 %v1447, 0.0
        %v1794 = vmax.f32 %v1449, 0.0
        %v1795 = vmax.f32 %v1560, 0.0
        %v1796 = vmax.f32 %v1562, 0.0
        %v1797 = vmax.f32 %v1673, 0.0
        %v1798 = vmax.f32 %v1675, 0.0
        %v1799 = vmax.f32 %v1340, 0.0
        %v1800 = vmax.f32 %v1342, 0.0
        %v1801 = vmax.f32 %v1453, 0.0
        %v1802 = vmax.f32 %v1455, 0.0
        %v1803 = vmax.f32 %v1566, 0.0
        %v1804 = vmax.f32 %v1568, 0.0
        %v1805 = vmax.f32 %v1679, 0.0
        %v1806 = vmax.f32 %v1681, 0.0
        %v1807 = vmax.f32 %v1344, 0.0
        %v1808 = vmax.f32 %v1346, 0.0
        %v1809 = vmax.f32 %v1457, 0.0
        %v1810 = vmax.f32 %v1459, 0.0
        %v1811 = vmax.f32 %v1570, 0.0
        %v1812 = vmax.f32 %v1572, 0.0
        %v1813 = vmax.f32 %v1683, 0.0
        %v1814 = vmax.f32 %v1685, 0.0
        %v1815 = vmax.f32 %v1687, %v1695
        %v1816 = vmax.f32 %v1815, %v1703
        %v1817 = vmax.f32 %v1816, %v1711
        %v1818 = vmax.f32 %v1817, %v1719
        %v1819 = vmax.f32 %v1818, %v1727
        %v1820 = vmax.f32 %v1819, %v1735
        %v1821 = vmax.f32 %v1820, %v1743
        %v1822 = vmax.f32 %v1821, %v1751
        %v1823 = vmax.f32 %v1822, %v1759
        %v1824 = vmax.f32 %v1823, %v1767
        %v1825 = vmax.f32 %v1824, %v1775
        %v1826 = vmax.f32 %v1825, %v1783
        %v1827 = vmax.f32 %v1826, %v1791
        %v1828 = vmax.f32 %v1827, %v1799
        %v1829 = vmax.f32 %v1828, %v1807
        %v1830 = vrot.slane %v1829, 4
        %v1831 = vmax.f32 %v1829, %v1830
        %v1832 = vrot.slane %v1831, 2
        %v1833 = vmax.f32 %v1831, %v1832
        %v1834 = vrot.slane %v1833, 1
        %v1835 = vmax.f32 %v1833, %v1834
        %v1836 = vmax.f32 %v1688, %v1696
        %v1837 = vmax.f32 %v1836, %v1704
        %v1838 = vmax.f32 %v1837, %v1712
        %v1839 = vmax.f32 %v1838, %v1720
        %v1840 = vmax.f32 %v1839, %v1728
        %v1841 = vmax.f32 %v1840, %v1736
        %v1842 = vmax.f32 %v1841, %v1744
        %v1843 = vmax.f32 %v1842, %v1752
        %v1844 = vmax.f32 %v1843, %v1760
        %v1845 = vmax.f32 %v1844, %v1768
        %v1846 = vmax.f32 %v1845, %v1776
        %v1847 = vmax.f32 %v1846, %v1784
        %v1848 = vmax.f32 %v1847, %v1792
        %v1849 = vmax.f32 %v1848, %v1800
        %v1850 = vmax.f32 %v1849, %v1808
        %v1851 = vrot.slane %v1850, 4
        %v1852 = vmax.f32 %v1850, %v1851
        %v1853 = vrot.slane %v1852, 2
        %v1854 = vmax.f32 %v1852, %v1853
        %v1855 = vrot.slane %v1854, 1
        %v1856 = vmax.f32 %v1854, %v1855
        %v1857 = vmax.f32 %v1689, %v1697
        %v1858 = vmax.f32 %v1857, %v1705
        %v1859 = vmax.f32 %v1858, %v1713
        %v1860 = vmax.f32 %v1859, %v1721
        %v1861 = vmax.f32 %v1860, %v1729
        %v1862 = vmax.f32 %v1861, %v1737
        %v1863 = vmax.f32 %v1862, %v1745
        %v1864 = vmax.f32 %v1863, %v1753
        %v1865 = vmax.f32 %v1864, %v1761
        %v1866 = vmax.f32 %v1865, %v1769
        %v1867 = vmax.f32 %v1866, %v1777
        %v1868 = vmax.f32 %v1867, %v1785
        %v1869 = vmax.f32 %v1868, %v1793
        %v1870 = vmax.f32 %v1869, %v1801
        %v1871 = vmax.f32 %v1870, %v1809
        %v1872 = vrot.slane %v1871, 4
        %v1873 = vmax.f32 %v1871, %v1872
        %v1874 = vrot.slane %v1873, 2
        %v1875 = vmax.f32 %v1873, %v1874
        %v1876 = vrot.slane %v1875, 1
        %v1877 = vmax.f32 %v1875, %v1876
        %v1878 = vmax.f32 %v1690, %v1698
        %v1879 = vmax.f32 %v1878, %v1706
        %v1880 = vmax.f32 %v1879, %v1714
        %v1881 = vmax.f32 %v1880, %v1722
        %v1882 = vmax.f32 %v1881, %v1730
        %v1883 = vmax.f32 %v1882, %v1738
        %v1884 = vmax.f32 %v1883, %v1746
        %v1885 = vmax.f32 %v1884, %v1754
        %v1886 = vmax.f32 %v1885, %v1762
        %v1887 = vmax.f32 %v1886, %v1770
        %v1888 = vmax.f32 %v1887, %v1778
        %v1889 = vmax.f32 %v1888, %v1786
        %v1890 = vmax.f32 %v1889, %v1794
        %v1891 = vmax.f32 %v1890, %v1802
        %v1892 = vmax.f32 %v1891, %v1810
        %v1893 = vrot.slane %v1892, 4
        %v1894 = vmax.f32 %v1892, %v1893
        %v1895 = vrot.slane %v1894, 2
        %v1896 = vmax.f32 %v1894, %v1895
        %v1897 = vrot.slane %v1896, 1
        %v1898 = vmax.f32 %v1896, %v1897
        %v1899 = vmax.f32 %v1691, %v1699
        %v1900 = vmax.f32 %v1899, %v1707
        %v1901 = vmax.f32 %v1900, %v1715
        %v1902 = vmax.f32 %v1901, %v1723
        %v1903 = vmax.f32 %v1902, %v1731
        %v1904 = vmax.f32 %v1903, %v1739
        %v1905 = vmax.f32 %v1904, %v1747
        %v1906 = vmax.f32 %v1905, %v1755
        %v1907 = vmax.f32 %v1906, %v1763
        %v1908 = vmax.f32 %v1907, %v1771
        %v1909 = vmax.f32 %v1908, %v1779
        %v1910 = vmax.f32 %v1909, %v1787
        %v1911 = vmax.f32 %v1910, %v1795
        %v1912 = vmax.f32 %v1911, %v1803
        %v1913 = vmax.f32 %v1912, %v1811
        %v1914 = vrot.slane %v1913, 4
        %v1915 = vmax.f32 %v1913, %v1914
        %v1916 = vrot.slane %v1915, 2
        %v1917 = vmax.f32 %v1915, %v1916
        %v1918 = vrot.slane %v1917, 1
        %v1919 = vmax.f32 %v1917, %v1918
        %v1920 = vmax.f32 %v1692, %v1700
        %v1921 = vmax.f32 %v1920, %v1708
        %v1922 = vmax.f32 %v1921, %v1716
        %v1923 = vmax.f32 %v1922, %v1724
        %v1924 = vmax.f32 %v1923, %v1732
        %v1925 = vmax.f32 %v1924, %v1740
        %v1926 = vmax.f32 %v1925, %v1748
        %v1927 = vmax.f32 %v1926, %v1756
        %v1928 = vmax.f32 %v1927, %v1764
        %v1929 = vmax.f32 %v1928, %v1772
        %v1930 = vmax.f32 %v1929, %v1780
        %v1931 = vmax.f32 %v1930, %v1788
        %v1932 = vmax.f32 %v1931, %v1796
        %v1933 = vmax.f32 %v1932, %v1804
        %v1934 = vmax.f32 %v1933, %v1812
        %v1935 = vrot.slane %v1934, 4
        %v1936 = vmax.f32 %v1934, %v1935
        %v1937 = vrot.slane %v1936, 2
        %v1938 = vmax.f32 %v1936, %v1937
        %v1939 = vrot.slane %v1938, 1
        %v1940 = vmax.f32 %v1938, %v1939
        %v1941 = vmax.f32 %v1693, %v1701
        %v1942 = vmax.f32 %v1941, %v1709
        %v1943 = vmax.f32 %v1942, %v1717
        %v1944 = vmax.f32 %v1943, %v1725
        %v1945 = vmax.f32 %v1944, %v1733
        %v1946 = vmax.f32 %v1945, %v1741
        %v1947 = vmax.f32 %v1946, %v1749
        %v1948 = vmax.f32 %v1947, %v1757
        %v1949 = vmax.f32 %v1948, %v1765
        %v1950 = vmax.f32 %v1949, %v1773
        %v1951 = vmax.f32 %v1950, %v1781
        %v1952 = vmax.f32 %v1951, %v1789
        %v1953 = vmax.f32 %v1952, %v1797
        %v1954 = vmax.f32 %v1953, %v1805
        %v1955 = vmax.f32 %v1954, %v1813
        %v1956 = vrot.slane %v1955, 4
        %v1957 = vmax.f32 %v1955, %v1956
        %v1958 = vrot.slane %v1957, 2
        %v1959 = vmax.f32 %v1957, %v1958
        %v1960 = vrot.slane %v1959, 1
        %v1961 = vmax.f32 %v1959, %v1960
        %v1962 = vmax.f32 %v1694, %v1702
        %v1963 = vmax.f32 %v1962, %v1710
        %v1964 = vmax.f32 %v1963, %v1718
        %v1965 = vmax.f32 %v1964, %v1726
        %v1966 = vmax.f32 %v1965, %v1734
        %v1967 = vmax.f32 %v1966, %v1742
        %v1968 = vmax.f32 %v1967, %v1750
        %v1969 = vmax.f32 %v1968, %v1758
        %v1970 = vmax.f32 %v1969, %v1766
        %v1971 = vmax.f32 %v1970, %v1774
        %v1972 = vmax.f32 %v1971, %v1782
        %v1973 = vmax.f32 %v1972, %v1790
        %v1974 = vmax.f32 %v1973, %v1798
        %v1975 = vmax.f32 %v1974, %v1806
        %v1976 = vmax.f32 %v1975, %v1814
        %v1977 = vrot.slane %v1976, 4
        %v1978 = vmax.f32 %v1976, %v1977
        %v1979 = vrot.slane %v1978, 2
        %v1980 = vmax.f32 %v1978, %v1979
        %v1981 = vrot.slane %v1980, 1
        %v1982 = vmax.f32 %v1980, %v1981
        %v1983 = vld [vmem:[%s371] sm:$0xff]
        %v1992 = vcombine.low %v1835, %v1856
        %v1993 = vcombine.low %v1877, %v1898
        %v1994 = vcombine.low %v1919, %v1940
        %v1995 = vcombine.low %v1961, %v1982
        %v1997 = vunpack.c.l.s4 1966171168
        %v1998 = vunpack.c.0.s8 %v1997
        %v1999 = vlaneseq
        %v2000 = vshrl.u32 %v1999, 7
        %v2001 = vsub.s32 %v1998, %v2000
        %v2002 = vrot.slane %v1992, %v2001
        %v2004 = vunpack.c.l.s4 1966171168
        %v2005 = vunpack.c.0.s8 %v2004
        %v2006 = vlaneseq
        %v2007 = vshrl.u32 %v2006, 7
        %v2008 = vsub.s32 %v2005, %v2007
        %v2009 = vrot.slane %v1993, %v2008
        %v2011 = vunpack.c.l.s4 1966171168
        %v2012 = vunpack.c.0.s8 %v2011
        %v2013 = vlaneseq
        %v2014 = vshrl.u32 %v2013, 7
        %v2015 = vsub.s32 %v2012, %v2014
        %v2016 = vrot.slane %v1994, %v2015
        %v2018 = vunpack.c.l.s4 1966171168
        %v2019 = vunpack.c.0.s8 %v2018
        %v2020 = vlaneseq
        %v2021 = vshrl.u32 %v2020, 7
        %v2022 = vsub.s32 %v2019, %v2021
        %v2023 = vrot.slane %v1995, %v2022
        %v2024 = vcombine.low %v2002, %v2009
        %v2025 = vcombine.low %v2016, %v2023
        %v2027 = vunpack.c.l.s4 1966171168
        %v2028 = vunpack.c.0.s8 %v2027
        %v2029 = vlaneseq
        %v2030 = vshrl.u32 %v2029, 7
        %v2031 = vsub.s32 %v2028, %v2030
        %v2032 = vrot.slane %v2024, %v2031
        %v2034 = vunpack.c.l.s4 1966171168
        %v2035 = vunpack.c.0.s8 %v2034
        %v2036 = vlaneseq
        %v2037 = vshrl.u32 %v2036, 7
        %v2038 = vsub.s32 %v2035, %v2037
        %v2039 = vrot.slane %v2025, %v2038
        %v2040 = vcombine.low %v2032, %v2039
        %v2042 = vmax.f32 %v1983, %v2040
        %2043 = vst [vmem:[%s371] sm:$0xff] %v2042
        %p2044 = scmp.lt.s32.totalorder %s25, 1
        %s2045 = scalar_select %p2044, %s25, 1
        %s2046 = smul.addr %s2045, 8
        %s2047 = scalar_lea.vmem %s7, %s2046
        // Predicated region
        $region73: #{pointnet_cls_forward.4} parent=47 // pred_check
          %p2048 = pneg %p205
        $region74: #{pointnet_cls_forward.4} parent=47 // pred_check_branch
          %2050 = sbr.rel (%p2048) target = $region76
        $region75: #{pointnet_cls_forward.4} parent=47 // pred_region
          _
        $region76: #{pointnet_cls_forward.4} parent=47 // pred_fallthru
          _
      $region48: #{pointnet_cls_forward.4} parent=5 // pred_fallthru
        _
      %p2051 = scmp.le.s32.totalorder 2, %s16
      // Predicated region
      $region77: #{pointnet_cls_forward.4} parent=5 // pred_check
        %p2052 = pneg %p2051
      $region78: #{pointnet_cls_forward.4} parent=5 // pred_check_branch
        %2054 = sbr.rel (%p2052) target = $region80
      $region79: #{pointnet_cls_forward.4} parent=5 // pred_region
        %s2055 = ssub.s32 %s16, 2
        // Predicated region
        $region81: #{pointnet_cls_forward.4} parent=79 // pred_check
          %p2056 = pneg %p211
        $region82: #{pointnet_cls_forward.4} parent=79 // pred_check_branch
          %2058 = sbr.rel (%p2056) target = $region84
        $region83: #{pointnet_cls_forward.4} parent=79 // pred_region
          %p2059 = scmp.lt.s32.totalorder %s27, 1
          %s2060 = scalar_select %p2059, %s27, 1
          %s2061 = smul.addr %s2060, 8
          %s2062 = scalar_lea.vmem %s7, %s2061
        $region84: #{pointnet_cls_forward.4} parent=79 // pred_fallthru
          _
      $region80: #{pointnet_cls_forward.4} parent=5 // pred_fallthru
        _
    $region6: #{pointnet_cls_forward.4} parent=1 // loop_footer
      %s20 = sadd.s32 1, %s16
    $region7: #{pointnet_cls_forward.4} parent=1 // loop_footer_branch
      %15 = sbr.rel target = $region3
    $region8: #{pointnet_cls_forward.4} parent=1 // loop_exit
      _
    %2063 = vsyncpa [#allocation3], 1
    %s2064 = scalar_lea.sflag [#allocation3], 1
    %2065 = vsyncpa %s2064, 1
    %2066 = vsyncpa [#allocation5], 1
    %2067 = vsyncpa [#allocation8], 1

// kernel: pointnet_cls_forward.6
$region0: #{pointnet_cls_forward.6}
  #allocation0 [shape = 'u32[]', space=smem, size = 0x4, offset = 0x4, fixed_abs, tag = 'smem constant byte address 0x4 - core index']
  #allocation1 [shape = 'u32[144,128]{1,0:T(1,128)}', space=vmem, size = 0x12000, scoped, tag = 'internal scratch']
  %s0 = inlined_call_operand.vmem [shape: f32[2,128,3], index: 0, kind: input, shape index: {}]
  %s1 = inlined_call_operand.vmem [shape: f32[2,3,64], index: 1, kind: input, shape index: {}]
  %s2 = inlined_call_operand.vmem [shape: f32[1,64], index: 2, kind: input, shape index: {}]
  %s3 = inlined_call_operand.vmem [shape: bf16[64,128], index: 3, kind: input, shape index: {}]
  %s4 = inlined_call_operand.vmem [shape: f32[1,128], index: 4, kind: input, shape index: {}]
  %s5 = inlined_call_operand.vmem [shape: bf16[128,1024], index: 5, kind: input, shape index: {}]
  %s6 = inlined_call_operand.vmem [shape: f32[1,1024], index: 6, kind: input, shape index: {}]
  %s7 = inlined_call_operand.vmem [shape: f32[2,1,1024], index: 7, kind: output, shape index: {}]
  %s8 = sld [smem:[#allocation0]]
  $region65: #{pointnet_cls_forward.6} parent=0
    _
  %s10 = ssub.s32 1, %s8
  %s11 = scalar_select 0, %s10, %s8
  loop: start=0, step=1, limit=4
  $region2: #{pointnet_cls_forward.6} parent=0 // loop_pre_header
    _
  $region3: #{pointnet_cls_forward.6} parent=0 // loop_header
    %s13 = sphi 0, %s17
    %p14 = scmp.ge.s32.totalorder %s13, 4
    %s20 = sphi 0, %s32
    %s21 = sphi 0, %s28
    %s22 = sphi 0, %s20
    %s23 = sphi 0, %s21
    %s24 = sphi 0, %s22
    %s25 = sphi 0, %s23
    %s37 = sphi 0, %s39
    %s40 = sphi 0, %s37
    %s41 = sphi 0, %s40
    %s57 = sphi 0, %s41
    %s63 = sphi 0, %s65
    %s66 = sphi 0, %s63
    %s67 = sphi 0, %s66
    %s83 = sphi 0, %s67
    %s87 = sphi 0, %s87
    %s89 = sphi 0, %s87
    %s90 = sphi 0, %s89
    %s104 = sphi 0, %s90
    %s108 = sphi 0, %s108
    %s110 = sphi 0, %s108
    %s111 = sphi 0, %s110
    %s125 = sphi 0, %s111
    %s129 = sphi 0, %s129
    %s131 = sphi 0, %s129
    %s132 = sphi 0, %s131
    %s146 = sphi 0, %s132
    %s150 = sphi 0, %s150
    %s152 = sphi 0, %s150
    %s153 = sphi 0, %s152
    %s167 = sphi 0, %s153
    %s171 = sphi 0, %s171
    %s173 = sphi 0, %s171
    %s174 = sphi 0, %s173
    %s188 = sphi 0, %s174
    %s194 = sphi 0, %s196
    %s197 = sphi 0, %s194
    %s198 = sphi 0, %s197
    %s214 = sphi 0, %s198
  $region4: #{pointnet_cls_forward.6} parent=0 // loop_header_branch
    %16 = sbr.rel (%p14) target = $region8
  $region5: #{pointnet_cls_forward.6} parent=0 // loop_body
    %s18 = ssub.s32 %s13, 1
    %s19 = ssub.s32 %s13, 2
    %s26 = sadd.s32 1, %s21
    %p27 = scmp.ge.s32.totalorder %s26, 1
    %s28 = scalar_select %p27, 0, %s26
    %s29 = sadd.s32 1, %s20
    %s30 = scalar_select %p27, %s29, %s20
    %p31 = scmp.ge.s32.totalorder %s30, 2
    %s32 = scalar_select %p31, 0, %s30
    %s33 = ssub.s32 %s20, %s32
    %s34 = ssub.s32 %s21, %s28
    %s35 = sor.u32 %s33, %s34
    %p36 = scmp.eq.s32.totalorder %s35, 0
    %s38 = sadd.s32 %s37, 1
    %s39 = scalar_select %p36, %s37, %s38
    %p42 = pneg %p36
    %p43 = scmp.eq.s32.totalorder %s13, 1
    %p44 = por %p42, %p43
    %p45 = scmp.ne.s32.totalorder %s37, %s40
    %p46 = scmp.eq.s32.totalorder %s13, 0
    %p47 = por %p45, %p46
    %p48 = scmp.ne.s32.totalorder %s37, %s40
    %p49 = scmp.eq.s32.totalorder %s18, 1
    %p50 = por %p48, %p49
    %p51 = scmp.ne.s32.totalorder %s40, %s41
    %p52 = scmp.eq.s32.totalorder %s18, 0
    %p53 = por %p51, %p52
    %p54 = scmp.ne.s32.totalorder %s40, %s41
    %p55 = scmp.eq.s32.totalorder %s19, 1
    %p56 = por %p54, %p55
    %p58 = scmp.ne.s32.totalorder %s41, %s57
    %p59 = scmp.eq.s32.totalorder %s19, 0
    %p60 = por %p58, %p59
    %s61 = ssub.s32 %s20, %s32
    %p62 = scmp.eq.s32.totalorder %s61, 0
    %s64 = sadd.s32 %s63, 1
    %s65 = scalar_select %p62, %s63, %s64
    %p68 = pneg %p62
    %p69 = scmp.eq.s32.totalorder %s13, 1
    %p70 = por %p68, %p69
    %p71 = scmp.ne.s32.totalorder %s63, %s66
    %p72 = scmp.eq.s32.totalorder %s13, 0
    %p73 = por %p71, %p72
    %p74 = scmp.ne.s32.totalorder %s63, %s66
    %p75 = scmp.eq.s32.totalorder %s18, 1
    %p76 = por %p74, %p75
    %p77 = scmp.ne.s32.totalorder %s66, %s67
    %p78 = scmp.eq.s32.totalorder %s18, 0
    %p79 = por %p77, %p78
    %p80 = scmp.ne.s32.totalorder %s66, %s67
    %p81 = scmp.eq.s32.totalorder %s19, 1
    %p82 = por %p80, %p81
    %p84 = scmp.ne.s32.totalorder %s67, %s83
    %p85 = scmp.eq.s32.totalorder %s19, 0
    %p86 = por %p84, %p85
    %s88 = sadd.s32 %s87, 1
    %p91 = scmp.eq.s32.totalorder %s13, 1
    %p92 = scmp.ne.s32.totalorder %s87, %s89
    %p93 = scmp.eq.s32.totalorder %s13, 0
    %p94 = por %p92, %p93
    %p95 = scmp.ne.s32.totalorder %s87, %s89
    %p96 = scmp.eq.s32.totalorder %s18, 1
    %p97 = por %p95, %p96
    %p98 = scmp.ne.s32.totalorder %s89, %s90
    %p99 = scmp.eq.s32.totalorder %s18, 0
    %p100 = por %p98, %p99
    %p101 = scmp.ne.s32.totalorder %s89, %s90
    %p102 = scmp.eq.s32.totalorder %s19, 1
    %p103 = por %p101, %p102
    %p105 = scmp.ne.s32.totalorder %s90, %s104
    %p106 = scmp.eq.s32.totalorder %s19, 0
    %p107 = por %p105, %p106
    %s109 = sadd.s32 %s108, 1
    %p112 = scmp.eq.s32.totalorder %s13, 1
    %p113 = scmp.ne.s32.totalorder %s108, %s110
    %p114 = scmp.eq.s32.totalorder %s13, 0
    %p115 = por %p113, %p114
    %p116 = scmp.ne.s32.totalorder %s108, %s110
    %p117 = scmp.eq.s32.totalorder %s18, 1
    %p118 = por %p116, %p117
    %p119 = scmp.ne.s32.totalorder %s110, %s111
    %p120 = scmp.eq.s32.totalorder %s18, 0
    %p121 = por %p119, %p120
    %p122 = scmp.ne.s32.totalorder %s110, %s111
    %p123 = scmp.eq.s32.totalorder %s19, 1
    %p124 = por %p122, %p123
    %p126 = scmp.ne.s32.totalorder %s111, %s125
    %p127 = scmp.eq.s32.totalorder %s19, 0
    %p128 = por %p126, %p127
    %s130 = sadd.s32 %s129, 1
    %p133 = scmp.eq.s32.totalorder %s13, 1
    %p134 = scmp.ne.s32.totalorder %s129, %s131
    %p135 = scmp.eq.s32.totalorder %s13, 0
    %p136 = por %p134, %p135
    %p137 = scmp.ne.s32.totalorder %s129, %s131
    %p138 = scmp.eq.s32.totalorder %s18, 1
    %p139 = por %p137, %p138
    %p140 = scmp.ne.s32.totalorder %s131, %s132
    %p141 = scmp.eq.s32.totalorder %s18, 0
    %p142 = por %p140, %p141
    %p143 = scmp.ne.s32.totalorder %s131, %s132
    %p144 = scmp.eq.s32.totalorder %s19, 1
    %p145 = por %p143, %p144
    %p147 = scmp.ne.s32.totalorder %s132, %s146
    %p148 = scmp.eq.s32.totalorder %s19, 0
    %p149 = por %p147, %p148
    %s151 = sadd.s32 %s150, 1
    %p154 = scmp.eq.s32.totalorder %s13, 1
    %p155 = scmp.ne.s32.totalorder %s150, %s152
    %p156 = scmp.eq.s32.totalorder %s13, 0
    %p157 = por %p155, %p156
    %p158 = scmp.ne.s32.totalorder %s150, %s152
    %p159 = scmp.eq.s32.totalorder %s18, 1
    %p160 = por %p158, %p159
    %p161 = scmp.ne.s32.totalorder %s152, %s153
    %p162 = scmp.eq.s32.totalorder %s18, 0
    %p163 = por %p161, %p162
    %p164 = scmp.ne.s32.totalorder %s152, %s153
    %p165 = scmp.eq.s32.totalorder %s19, 1
    %p166 = por %p164, %p165
    %p168 = scmp.ne.s32.totalorder %s153, %s167
    %p169 = scmp.eq.s32.totalorder %s19, 0
    %p170 = por %p168, %p169
    %s172 = sadd.s32 %s171, 1
    %p175 = scmp.eq.s32.totalorder %s13, 1
    %p176 = scmp.ne.s32.totalorder %s171, %s173
    %p177 = scmp.eq.s32.totalorder %s13, 0
    %p178 = por %p176, %p177
    %p179 = scmp.ne.s32.totalorder %s171, %s173
    %p180 = scmp.eq.s32.totalorder %s18, 1
    %p181 = por %p179, %p180
    %p182 = scmp.ne.s32.totalorder %s173, %s174
    %p183 = scmp.eq.s32.totalorder %s18, 0
    %p184 = por %p182, %p183
    %p185 = scmp.ne.s32.totalorder %s173, %s174
    %p186 = scmp.eq.s32.totalorder %s19, 1
    %p187 = por %p185, %p186
    %p189 = scmp.ne.s32.totalorder %s174, %s188
    %p190 = scmp.eq.s32.totalorder %s19, 0
    %p191 = por %p189, %p190
    %s192 = ssub.s32 %s20, %s32
    %p193 = scmp.eq.s32.totalorder %s192, 0
    %s195 = sadd.s32 %s194, 1
    %s196 = scalar_select %p193, %s194, %s195
    %p199 = pneg %p193
    %p200 = scmp.eq.s32.totalorder %s13, 1
    %p201 = por %p199, %p200
    %p202 = scmp.ne.s32.totalorder %s194, %s197
    %p203 = scmp.eq.s32.totalorder %s13, 0
    %p204 = por %p202, %p203
    %p205 = scmp.ne.s32.totalorder %s194, %s197
    %p206 = scmp.eq.s32.totalorder %s18, 1
    %p207 = por %p205, %p206
    %p208 = scmp.ne.s32.totalorder %s197, %s198
    %p209 = scmp.eq.s32.totalorder %s18, 0
    %p210 = por %p208, %p209
    %p211 = scmp.ne.s32.totalorder %s197, %s198
    %p212 = scmp.eq.s32.totalorder %s19, 1
    %p213 = por %p211, %p212
    %p215 = scmp.ne.s32.totalorder %s198, %s214
    %p216 = scmp.eq.s32.totalorder %s19, 0
    %p217 = por %p215, %p216
    %p218 = scmp.le.s32.totalorder 1, %s13
    %p219 = scmp.lt.s32.totalorder %s13, 3
    %p220 = pnand %p218, %p219
    %p221 = pneg %p220
    // Predicated region
    $region9: #{pointnet_cls_forward.6} parent=5 // pred_check
      _
    $region10: #{pointnet_cls_forward.6} parent=5 // pred_check_branch
      %223 = sbr.rel (%p220) target = $region12
    $region11: #{pointnet_cls_forward.6} parent=5 // pred_region
      %s224 = ssub.s32 %s13, 1
      // Predicated region
      $region13: #{pointnet_cls_forward.6} parent=11 // pred_check
        %p225 = pneg %p100
      $region14: #{pointnet_cls_forward.6} parent=11 // pred_check_branch
        %227 = sbr.rel (%p225) target = $region16
      $region15: #{pointnet_cls_forward.6} parent=11 // pred_region
        _
      $region16: #{pointnet_cls_forward.6} parent=11 // pred_fallthru
        _
      // Predicated region
      $region17: #{pointnet_cls_forward.6} parent=11 // pred_check
        %p228 = pneg %p121
      $region18: #{pointnet_cls_forward.6} parent=11 // pred_check_branch
        %230 = sbr.rel (%p228) target = $region20
      $region19: #{pointnet_cls_forward.6} parent=11 // pred_region
        _
      $region20: #{pointnet_cls_forward.6} parent=11 // pred_fallthru
        _
      // Predicated region
      $region21: #{pointnet_cls_forward.6} parent=11 // pred_check
        %p231 = pneg %p142
      $region22: #{pointnet_cls_forward.6} parent=11 // pred_check_branch
        %233 = sbr.rel (%p231) target = $region24
      $region23: #{pointnet_cls_forward.6} parent=11 // pred_region
        _
      $region24: #{pointnet_cls_forward.6} parent=11 // pred_fallthru
        _
      // Predicated region
      $region25: #{pointnet_cls_forward.6} parent=11 // pred_check
        %p234 = pneg %p163
      $region26: #{pointnet_cls_forward.6} parent=11 // pred_check_branch
        %236 = sbr.rel (%p234) target = $region28
      $region27: #{pointnet_cls_forward.6} parent=11 // pred_region
        _
      $region28: #{pointnet_cls_forward.6} parent=11 // pred_fallthru
        _
      // Predicated region
      $region29: #{pointnet_cls_forward.6} parent=11 // pred_check
        %p237 = pneg %p184
      $region30: #{pointnet_cls_forward.6} parent=11 // pred_check_branch
        %239 = sbr.rel (%p237) target = $region32
      $region31: #{pointnet_cls_forward.6} parent=11 // pred_region
        _
      $region32: #{pointnet_cls_forward.6} parent=11 // pred_fallthru
        _
    $region12: #{pointnet_cls_forward.6} parent=5 // pred_fallthru
      _
    %p240 = scmp.lt.s32.totalorder %s13, 2
    // Predicated region
    $region33: #{pointnet_cls_forward.6} parent=5 // pred_check
      %p241 = pneg %p240
    $region34: #{pointnet_cls_forward.6} parent=5 // pred_check_branch
      %243 = sbr.rel (%p241) target = $region36
    $region35: #{pointnet_cls_forward.6} parent=5 // pred_region
      // Predicated region
      $region37: #{pointnet_cls_forward.6} parent=35 // pred_check
        %p244 = pneg %p47
      $region38: #{pointnet_cls_forward.6} parent=35 // pred_check_branch
        %246 = sbr.rel (%p244) target = $region40
      $region39: #{pointnet_cls_forward.6} parent=35 // pred_region
        %s247 = smul.u32 16, %s21
        %p248 = scmp.lt.s32.totalorder %s20, 1
        %s249 = scalar_select %p248, %s20, 1
        %p250 = scmp.lt.s32.totalorder %s247, 15
        %s251 = scalar_select %p250, %s247, 15
        %s252 = smul.addr %s249, 16
        %s253 = sadd.s32 %s251, %s252
        %s254 = smul.addr %s253, 8
        %s255 = scalar_lea.vmem %s0, %s254
        %s256 = smul.u32 16, %s21
      $region40: #{pointnet_cls_forward.6} parent=35 // pred_fallthru
        _
      // Predicated region
      $region41: #{pointnet_cls_forward.6} parent=35 // pred_check
        %p257 = pneg %p73
      $region42: #{pointnet_cls_forward.6} parent=35 // pred_check_branch
        %259 = sbr.rel (%p257) target = $region44
      $region43: #{pointnet_cls_forward.6} parent=35 // pred_region
        %p260 = scmp.lt.s32.totalorder %s20, 1
        %s261 = scalar_select %p260, %s20, 1
        %s262 = smul.addr %s261, 4
        %s263 = scalar_lea.vmem %s1, %s262
      $region44: #{pointnet_cls_forward.6} parent=35 // pred_fallthru
        _
    $region36: #{pointnet_cls_forward.6} parent=5 // pred_fallthru
      _
    %p264 = scmp.le.s32.totalorder 1, %s13
    %p265 = scmp.lt.s32.totalorder %s13, 3
    %p266 = pnand %p264, %p265
    %p267 = pneg %p266
    // Predicated region
    $region45: #{pointnet_cls_forward.6} parent=5 // pred_check
      _
    $region46: #{pointnet_cls_forward.6} parent=5 // pred_check_branch
      %269 = sbr.rel (%p266) target = $region48
    $region47: #{pointnet_cls_forward.6} parent=5 // pred_region
      %s270 = ssub.s32 %s13, 1
      %s271 = smul.u32 16, %s23
      %p272 = scmp.lt.s32.totalorder %s22, 1
      %s273 = scalar_select %p272, %s22, 1
      %p274 = scmp.lt.s32.totalorder %s271, 15
      %s275 = scalar_select %p274, %s271, 15
      %s276 = smul.addr %s273, 16
      %s277 = sadd.s32 %s275, %s276
      %s278 = smul.addr %s277, 8
      %s279 = scalar_lea.vmem %s0, %s278
      %p280 = pneg %p53
      %p281 = pneg %p50
      %p282 = scmp.lt.s32.totalorder %s22, 1
      %s283 = scalar_select %p282, %s22, 1
      %s284 = smul.addr %s283, 4
      %s285 = scalar_lea.vmem %s1, %s284
      %p286 = pneg %p79
      %p287 = pneg %p76
      %p288 = pneg %p100
      %p289 = pneg %p97
      %p290 = pneg %p121
      %p291 = pneg %p118
      %p292 = pneg %p142
      %p293 = pneg %p139
      %p294 = pneg %p163
      %p295 = pneg %p160
      %p296 = pneg %p184
      %p297 = pneg %p181
      %p298 = pneg %p210
      %p299 = pneg %p207
      %p300 = scmp.lt.s32.totalorder %s22, 1
      %s301 = scalar_select %p300, %s22, 1
      %s302 = smul.addr %s301, 8
      %s303 = scalar_lea.vmem %s7, %s302
      %s304 = smul.u32 16, %s23
      %p305 = scmp.lt.s32.totalorder %s22, 1
      %s306 = scalar_select %p305, %s22, 1
      %p307 = scmp.lt.s32.totalorder %s304, 15
      %s308 = scalar_select %p307, %s304, 15
      %s309 = smul.addr %s306, 16
      %s310 = sadd.s32 %s308, %s309
      %s311 = smul.addr %s310, 8
      %s312 = scalar_lea.vmem %s0, %s311
      %s313 = smul.u32 16, %s23
      %p314 = scmp.lt.s32.totalorder %s22, 1
      %s315 = scalar_select %p314, %s22, 1
      %s316 = smul.addr %s315, 4
      %s317 = scalar_lea.vmem %s1, %s316
      %p318 = scmp.lt.s32.totalorder %s22, 1
      %s319 = scalar_select %p318, %s22, 1
      %s320 = smul.addr %s319, 8
      %s321 = scalar_lea.vmem %s7, %s320
      %p323 = scmp.eq.s32.totalorder %s23, 0
      // Predicated region
      $region49: #{pointnet_cls_forward.6} parent=47 // pred_check
        %p324 = pneg %p323
      $region50: #{pointnet_cls_forward.6} parent=47 // pred_check_branch
        %326 = sbr.rel (%p324) target = $region52
      $region51: #{pointnet_cls_forward.6} parent=47 // pred_region
        %327 = vst [vmem:[%s321] sm:$0xff] -inf
      $region52: #{pointnet_cls_forward.6} parent=47 // pred_fallthru
        _
      %v328 = vld [vmem:[%s312] sm:$0xff]
      %v329 = vld [vmem:[%s312 + $0x8] sm:$0xff]
      %v330 = vld [vmem:[%s312 + $0x10] sm:$0xff]
      %v331 = vld [vmem:[%s312 + $0x18] sm:$0xff]
      %v332 = vld [vmem:[%s312 + $0x20] sm:$0xff]
      %v333 = vld [vmem:[%s312 + $0x28] sm:$0xff]
      %v334 = vld [vmem:[%s312 + $0x30] sm:$0xff]
      %v335 = vld [vmem:[%s312 + $0x38] sm:$0xff]
      %v336 = vld [vmem:[%s312 + $0x40] sm:$0xff]
      %v337 = vld [vmem:[%s312 + $0x48] sm:$0xff]
      %v338 = vld [vmem:[%s312 + $0x50] sm:$0xff]
      %v339 = vld [vmem:[%s312 + $0x58] sm:$0xff]
      %v340 = vld [vmem:[%s312 + $0x60] sm:$0xff]
      %v341 = vld [vmem:[%s312 + $0x68] sm:$0xff]
      %v342 = vld [vmem:[%s312 + $0x70] sm:$0xff]
      %v343 = vld [vmem:[%s312 + $0x78] sm:$0xff]
      %v344 = vld [vmem:[%s317] sm:$0x7]
      %v345 = vld [vmem:[%s2] sm:$0x1]
      %v347 = vlaneseq
      %v348 = vshrl.u32 %v347, 7
      %v349 = vsub.s32 0, %v348
      %v350 = vrot.slane %v345, %v349
      %vm352 = vcmask 23552
      %v354 = vsel %vm352, %v328, 0
      %v357 = vsel %vm352, %v329, 0
      %v360 = vsel %vm352, %v330, 0
      %v363 = vsel %vm352, %v331, 0
      %v366 = vsel %vm352, %v332, 0
      %v369 = vsel %vm352, %v333, 0
      %v372 = vsel %vm352, %v334, 0
      %v375 = vsel %vm352, %v335, 0
      %v378 = vsel %vm352, %v336, 0
      %v381 = vsel %vm352, %v337, 0
      %v384 = vsel %vm352, %v338, 0
      %v387 = vsel %vm352, %v339, 0
      %v390 = vsel %vm352, %v340, 0
      %v393 = vsel %vm352, %v341, 0
      %v396 = vsel %vm352, %v342, 0
      %v399 = vsel %vm352, %v343, 0
      %vm401 = vcmask 1042432
      %v403 = vsel %vm401, %v344, 0
      %405 = vmatprep.subr.mxu0 0.0
      %406 = vmatpush1.msra.mxu0 %v403
      %407 = vmatprep.subr.mxu0 0.0
      %408 = vmatpush1.msra.mxu0 0.0
      %409 = vmatprep.subr.mxu0 0.0
      %410 = vmatpush1.msra.mxu0 0.0
      %411 = vmatprep.subr.mxu0 0.0
      %412 = vmatpush1.msra.mxu0 0.0
      %413 = vmatprep.subr.mxu0 0.0
      %414 = vmatpush1.msra.mxu0 0.0
      %415 = vmatprep.subr.mxu0 0.0
      %416 = vmatpush1.msra.mxu0 0.0
      %417 = vmatprep.subr.mxu0 0.0
      %418 = vmatpush1.msra.mxu0 0.0
      %419 = vmatprep.subr.mxu0 0.0
      %420 = vmatpush1.msra.mxu0 0.0
      %421 = vmatprep.subr.mxu0 0.0
      %422 = vmatpush1.msra.mxu0 0.0
      %423 = vmatprep.subr.mxu0 0.0
      %424 = vmatpush1.msra.mxu0 0.0
      %425 = vmatprep.subr.mxu0 0.0
      %426 = vmatpush1.msra.mxu0 0.0
      %427 = vmatprep.subr.mxu0 0.0
      %428 = vmatpush1.msra.mxu0 0.0
      %429 = vmatprep.subr.mxu0 0.0
      %430 = vmatpush1.msra.mxu0 0.0
      %431 = vmatprep.subr.mxu0 0.0
      %432 = vmatpush1.msra.mxu0 0.0
      %433 = vmatprep.subr.mxu0 0.0
      %434 = vmatpush1.msra.mxu0 0.0
      %435 = vmatprep.subr.mxu0 0.0
      %436 = vmatpush1.msra.mxu0 0.0
      %437 = vmatprep.subr.mxu0 0.0
      %438 = vmatpush1.msra.mxu0 0.0
      %439 = vmatprep.subr.mxu0 0.0
      %440 = vmatpush1.msra.mxu0 0.0
      %441 = vmatprep.subr.mxu0 0.0
      %442 = vmatpush1.msra.mxu0 0.0
      %443 = vmatprep.subr.mxu0 0.0
      %444 = vmatpush1.msra.mxu0 0.0
      %445 = vmatprep.subr.mxu0 0.0
      %446 = vmatpush1.msra.mxu0 0.0
      %447 = vmatprep.subr.mxu0 0.0
      %448 = vmatpush1.msra.mxu0 0.0
      %449 = vmatprep.subr.mxu0 0.0
      %450 = vmatpush1.msra.mxu0 0.0
      %451 = vmatprep.subr.mxu0 0.0
      %452 = vmatpush1.msra.mxu0 0.0
      %453 = vmatprep.subr.mxu0 0.0
      %454 = vmatpush1.msra.mxu0 0.0
      %455 = vmatprep.subr.mxu0 0.0
      %456 = vmatpush1.msra.mxu0 0.0
      %457 = vmatprep.subr.mxu0 0.0
      %458 = vmatpush1.msra.mxu0 0.0
      %459 = vmatprep.subr.mxu0 0.0
      %460 = vmatpush1.msra.mxu0 0.0
      %461 = vmatprep.subr.mxu0 0.0
      %462 = vmatpush1.msra.mxu0 0.0
      %463 = vmatprep.subr.mxu0 0.0
      %464 = vmatpush1.msra.mxu0 0.0
      %465 = vmatprep.subr.mxu0 0.0
      %466 = vmatpush1.msra.mxu0 0.0
      %467 = vmatprep.subr.mxu0 0.0
      %468 = vmatpush1.msra.mxu0 0.0
      %469 = vmatprep.mubr.f32.mxu0 0.0
      %470 = vmatmul.mubr.f32.gmra.mrb[0].mxu0 %v354
      %v471 = vpop.f32.mrb[0].mxu0
      %v472 = vadd.f32 %v350, %v471
      %v473 = vpop.f32.mrb[0].mxu0
      %474 = vmatprep.mubr.f32.mxu0 0.0
      %475 = vmatmul.mubr.f32.gmra.mrb[0].mxu0 %v357
      %v476 = vpop.f32.mrb[0].mxu0
      %v477 = vadd.f32 %v350, %v476
      %v478 = vpop.f32.mrb[0].mxu0
      %479 = vmatprep.mubr.f32.mxu0 0.0
      %480 = vmatmul.mubr.f32.gmra.mrb[0].mxu0 %v360
      %v481 = vpop.f32.mrb[0].mxu0
      %v482 = vadd.f32 %v350, %v481
      %v483 = vpop.f32.mrb[0].mxu0
      %484 = vmatprep.mubr.f32.mxu0 0.0
      %485 = vmatmul.mubr.f32.gmra.mrb[0].mxu0 %v363
      %v486 = vpop.f32.mrb[0].mxu0
      %v487 = vadd.f32 %v350, %v486
      %v488 = vpop.f32.mrb[0].mxu0
      %489 = vmatprep.mubr.f32.mxu0 0.0
      %490 = vmatmul.mubr.f32.gmra.mrb[0].mxu0 %v366
      %v491 = vpop.f32.mrb[0].mxu0
      %v492 = vadd.f32 %v350, %v491
      %v493 = vpop.f32.mrb[0].mxu0
      %494 = vmatprep.mubr.f32.mxu0 0.0
      %495 = vmatmul.mubr.f32.gmra.mrb[0].mxu0 %v369
      %v496 = vpop.f32.mrb[0].mxu0
      %v497 = vadd.f32 %v350, %v496
      %v498 = vpop.f32.mrb[0].mxu0
      %499 = vmatprep.mubr.f32.mxu0 0.0
      %500 = vmatmul.mubr.f32.gmra.mrb[0].mxu0 %v372
      %v501 = vpop.f32.mrb[0].mxu0
      %v502 = vadd.f32 %v350, %v501
      %v503 = vpop.f32.mrb[0].mxu0
      %504 = vmatprep.mubr.f32.mxu0 0.0
      %505 = vmatmul.mubr.f32.gmra.mrb[0].mxu0 %v375
      %v506 = vpop.f32.mrb[0].mxu0
      %v507 = vadd.f32 %v350, %v506
      %v508 = vpop.f32.mrb[0].mxu0
      %509 = vmatprep.mubr.f32.mxu0 0.0
      %510 = vmatmul.mubr.f32.gmra.mrb[0].mxu0 %v378
      %v511 = vpop.f32.mrb[0].mxu0
      %v512 = vadd.f32 %v350, %v511
      %v513 = vpop.f32.mrb[0].mxu0
      %514 = vmatprep.mubr.f32.mxu0 0.0
      %515 = vmatmul.mubr.f32.gmra.mrb[0].mxu0 %v381
      %v516 = vpop.f32.mrb[0].mxu0
      %v517 = vadd.f32 %v350, %v516
      %v518 = vpop.f32.mrb[0].mxu0
      %519 = vmatprep.mubr.f32.mxu0 0.0
      %520 = vmatmul.mubr.f32.gmra.mrb[0].mxu0 %v384
      %v521 = vpop.f32.mrb[0].mxu0
      %v522 = vadd.f32 %v350, %v521
      %v523 = vpop.f32.mrb[0].mxu0
      %524 = vmatprep.mubr.f32.mxu0 0.0
      %525 = vmatmul.mubr.f32.gmra.mrb[0].mxu0 %v387
      %v526 = vpop.f32.mrb[0].mxu0
      %v527 = vadd.f32 %v350, %v526
      %v528 = vpop.f32.mrb[0].mxu0
      %529 = vmatprep.mubr.f32.mxu0 0.0
      %530 = vmatmul.mubr.f32.gmra.mrb[0].mxu0 %v390
      %v531 = vpop.f32.mrb[0].mxu0
      %v532 = vadd.f32 %v350, %v531
      %v533 = vpop.f32.mrb[0].mxu0
      %534 = vmatprep.mubr.f32.mxu0 0.0
      %535 = vmatmul.mubr.f32.gmra.mrb[0].mxu0 %v393
      %v536 = vpop.f32.mrb[0].mxu0
      %v537 = vadd.f32 %v350, %v536
      %v538 = vpop.f32.mrb[0].mxu0
      %539 = vmatprep.mubr.f32.mxu0 0.0
      %540 = vmatmul.mubr.f32.gmra.mrb[0].mxu0 %v396
      %v541 = vpop.f32.mrb[0].mxu0
      %v542 = vadd.f32 %v350, %v541
      %v543 = vpop.f32.mrb[0].mxu0
      %544 = vmatprep.mubr.f32.mxu0 0.0
      %545 = vmatmul.mubr.f32.gmra.mrb[0].mxu0 %v399
      %v546 = vpop.f32.mrb[0].mxu0
      %v547 = vadd.f32 %v350, %v546
      %v548 = vpop.f32.mrb[0].mxu0
      %549 = vdwg.mxu0
      %v550 = vmax.f32 %v472, 0.0
      %v551 = vmax.f32 %v477, 0.0
      %v552 = vmax.f32 %v482, 0.0
      %v553 = vmax.f32 %v487, 0.0
      %v554 = vmax.f32 %v492, 0.0
      %v555 = vmax.f32 %v497, 0.0
      %v556 = vmax.f32 %v502, 0.0
      %v557 = vmax.f32 %v507, 0.0
      %v558 = vmax.f32 %v512, 0.0
      %v559 = vmax.f32 %v517, 0.0
      %v560 = vmax.f32 %v522, 0.0
      %v561 = vmax.f32 %v527, 0.0
      %v562 = vmax.f32 %v532, 0.0
      %v563 = vmax.f32 %v537, 0.0
      %v564 = vmax.f32 %v542, 0.0
      %v565 = vmax.f32 %v547, 0.0
      %v566 = vpack.c.bf16 %v551, %v550
      %v567 = vpack.c.bf16 %v553, %v552
      %v568 = vpack.c.bf16 %v555, %v554
      %v569 = vpack.c.bf16 %v557, %v556
      %v570 = vpack.c.bf16 %v559, %v558
      %v571 = vpack.c.bf16 %v561, %v560
      %v572 = vpack.c.bf16 %v563, %v562
      %v573 = vpack.c.bf16 %v565, %v564
      %v574 = vld [vmem:[%s3] sm:$0xf]
      %v575 = vld [vmem:[%s3 + $0x4] sm:$0xf]
      %v576 = vld [vmem:[%s3 + $0x8] sm:$0xf]
      %v577 = vld [vmem:[%s3 + $0xc] sm:$0xf]
      %v578 = vld [vmem:[%s3 + $0x10] sm:$0xf]
      %v579 = vld [vmem:[%s3 + $0x14] sm:$0xf]
      %v580 = vld [vmem:[%s3 + $0x18] sm:$0xf]
      %v581 = vld [vmem:[%s3 + $0x1c] sm:$0xf]
      %v582 = vld [vmem:[%s4] sm:$0x1]
      %v584 = vlaneseq
      %v585 = vshrl.u32 %v584, 7
      %v586 = vsub.s32 0, %v585
      %v587 = vrot.slane %v582, %v586
      %v597 = vunpack.c.l.b16 %v574
      %v598 = vunpack.c.l.b16 %v575
      %v599 = vunpack.c.l.b16 %v576
      %v600 = vunpack.c.l.b16 %v577
      %v601 = vunpack.c.l.b16 %v578
      %v602 = vunpack.c.l.b16 %v579
      %v603 = vunpack.c.l.b16 %v580
      %v604 = vunpack.c.l.b16 %v581
      %v605 = vpack.c.b16 %v598, %v597
      %v606 = vpack.c.b16 %v600, %v599
      %v607 = vpack.c.b16 %v602, %v601
      %v608 = vpack.c.b16 %v604, %v603
      %vm613 = vcmask 523264
      %v615 = vsel %vm613, %v566, 0
      %v618 = vsel %vm613, %v567, 0
      %v621 = vsel %vm613, %v568, 0
      %v624 = vsel %vm613, %v569, 0
      %v627 = vsel %vm613, %v570, 0
      %v630 = vsel %vm613, %v571, 0
      %v633 = vsel %vm613, %v572, 0
      %v636 = vsel %vm613, %v573, 0
      %638 = vmatprep.subr.bf16.mxu0 0
      %639 = vmatpush1.bf16.msra.mxu0 %v605
      %640 = vmatprep.subr.bf16.mxu0 0
      %641 = vmatpush1.bf16.msra.mxu0 %v606
      %642 = vmatprep.subr.bf16.mxu0 0
      %643 = vmatpush1.bf16.msra.mxu0 %v607
      %644 = vmatprep.subr.bf16.mxu0 0
      %645 = vmatpush1.bf16.msra.mxu0 %v608
      %646 = vmatprep.subr.bf16.mxu0 0
      %647 = vmatpush1.bf16.msra.mxu0 0
      %648 = vmatprep.subr.bf16.mxu0 0
      %649 = vmatpush1.bf16.msra.mxu0 0
      %650 = vmatprep.subr.bf16.mxu0 0
      %651 = vmatpush1.bf16.msra.mxu0 0
      %652 = vmatprep.subr.bf16.mxu0 0
      %653 = vmatpush1.bf16.msra.mxu0 0
      %654 = vmatprep.subr.bf16.mxu0 0
      %655 = vmatpush1.bf16.msra.mxu0 0
      %656 = vmatprep.subr.bf16.mxu0 0
      %657 = vmatpush1.bf16.msra.mxu0 0
      %658 = vmatprep.subr.bf16.mxu0 0
      %659 = vmatpush1.bf16.msra.mxu0 0
      %660 = vmatprep.subr.bf16.mxu0 0
      %661 = vmatpush1.bf16.msra.mxu0 0
      %662 = vmatprep.subr.bf16.mxu0 0
      %663 = vmatpush1.bf16.msra.mxu0 0
      %664 = vmatprep.subr.bf16.mxu0 0
      %665 = vmatpush1.bf16.msra.mxu0 0
      %666 = vmatprep.subr.bf16.mxu0 0
      %667 = vmatpush1.bf16.msra.mxu0 0
      %668 = vmatprep.subr.bf16.mxu0 0
      %669 = vmatpush1.bf16.msra.mxu0 0
      %670 = vmatprep.mubr.bf16.mxu0 0
      %671 = vmatmul.mubr.bf16.gmra.mrb[0].mxu0 %v615
      %v672 = vpop.f32.mrb[0].mxu0
      %v673 = vadd.f32 %v587, %v672
      %v674 = vpop.f32.mrb[0].mxu0
      %v675 = vpop.f32.mrb[0].mxu0
      %v676 = vadd.f32 %v587, %v675
      %v677 = vpop.f32.mrb[0].mxu0
      %678 = vmatprep.mubr.bf16.mxu0 0
      %679 = vmatmul.mubr.bf16.gmra.mrb[0].mxu0 %v618
      %v680 = vpop.f32.mrb[0].mxu0
      %v681 = vadd.f32 %v587, %v680
      %v682 = vpop.f32.mrb[0].mxu0
      %v683 = vpop.f32.mrb[0].mxu0
      %v684 = vadd.f32 %v587, %v683
      %v685 = vpop.f32.mrb[0].mxu0
      %686 = vmatprep.mubr.bf16.mxu0 0
      %687 = vmatmul.mubr.bf16.gmra.mrb[0].mxu0 %v621
      %v688 = vpop.f32.mrb[0].mxu0
      %v689 = vadd.f32 %v587, %v688
      %v690 = vpop.f32.mrb[0].mxu0
      %v691 = vpop.f32.mrb[0].mxu0
      %v692 = vadd.f32 %v587, %v691
      %v693 = vpop.f32.mrb[0].mxu0
      %694 = vmatprep.mubr.bf16.mxu0 0
      %695 = vmatmul.mubr.bf16.gmra.mrb[0].mxu0 %v624
      %v696 = vpop.f32.mrb[0].mxu0
      %v697 = vadd.f32 %v587, %v696
      %v698 = vpop.f32.mrb[0].mxu0
      %v699 = vpop.f32.mrb[0].mxu0
      %v700 = vadd.f32 %v587, %v699
      %v701 = vpop.f32.mrb[0].mxu0
      %702 = vmatprep.mubr.bf16.mxu0 0
      %703 = vmatmul.mubr.bf16.gmra.mrb[0].mxu0 %v627
      %v704 = vpop.f32.mrb[0].mxu0
      %v705 = vadd.f32 %v587, %v704
      %v706 = vpop.f32.mrb[0].mxu0
      %v707 = vpop.f32.mrb[0].mxu0
      %v708 = vadd.f32 %v587, %v707
      %v709 = vpop.f32.mrb[0].mxu0
      %710 = vmatprep.mubr.bf16.mxu0 0
      %711 = vmatmul.mubr.bf16.gmra.mrb[0].mxu0 %v630
      %v712 = vpop.f32.mrb[0].mxu0
      %v713 = vadd.f32 %v587, %v712
      %v714 = vpop.f32.mrb[0].mxu0
      %v715 = vpop.f32.mrb[0].mxu0
      %v716 = vadd.f32 %v587, %v715
      %v717 = vpop.f32.mrb[0].mxu0
      %718 = vmatprep.mubr.bf16.mxu0 0
      %719 = vmatmul.mubr.bf16.gmra.mrb[0].mxu0 %v633
      %v720 = vpop.f32.mrb[0].mxu0
      %v721 = vadd.f32 %v587, %v720
      %v722 = vpop.f32.mrb[0].mxu0
      %v723 = vpop.f32.mrb[0].mxu0
      %v724 = vadd.f32 %v587, %v723
      %v725 = vpop.f32.mrb[0].mxu0
      %726 = vmatprep.mubr.bf16.mxu0 0
      %727 = vmatmul.mubr.bf16.gmra.mrb[0].mxu0 %v636
      %v728 = vpop.f32.mrb[0].mxu0
      %v729 = vadd.f32 %v587, %v728
      %v730 = vpop.f32.mrb[0].mxu0
      %v731 = vpop.f32.mrb[0].mxu0
      %v732 = vadd.f32 %v587, %v731
      %v733 = vpop.f32.mrb[0].mxu0
      %734 = vdwg.mxu0
      %v735 = vmax.f32 %v673, 0.0
      %v736 = vmax.f32 %v676, 0.0
      %v737 = vmax.f32 %v681, 0.0
      %v738 = vmax.f32 %v684, 0.0
      %v739 = vmax.f32 %v689, 0.0
      %v740 = vmax.f32 %v692, 0.0
      %v741 = vmax.f32 %v697, 0.0
      %v742 = vmax.f32 %v700, 0.0
      %v743 = vmax.f32 %v705, 0.0
      %v744 = vmax.f32 %v708, 0.0
      %v745 = vmax.f32 %v713, 0.0
      %v746 = vmax.f32 %v716, 0.0
      %v747 = vmax.f32 %v721, 0.0
      %v748 = vmax.f32 %v724, 0.0
      %v749 = vmax.f32 %v729, 0.0
      %v750 = vmax.f32 %v732, 0.0
      %v751 = vpack.c.bf16 %v736, %v735
      %v752 = vpack.c.bf16 %v738, %v737
      %v753 = vpack.c.bf16 %v740, %v739
      %v754 = vpack.c.bf16 %v742, %v741
      %v755 = vpack.c.bf16 %v744, %v743
      %v756 = vpack.c.bf16 %v746, %v745
      %v757 = vpack.c.bf16 %v748, %v747
      %v758 = vpack.c.bf16 %v750, %v749
      %v759 = vld [vmem:[%s5] sm:$0xff]
      %v760 = vld [vmem:[%s5 + $0x8] sm:$0xff]
      %v761 = vld [vmem:[%s5 + $0x10] sm:$0xff]
      %v762 = vld [vmem:[%s5 + $0x18] sm:$0xff]
      %v763 = vld [vmem:[%s5 + $0x20] sm:$0xff]
      %v764 = vld [vmem:[%s5 + $0x28] sm:$0xff]
      %v765 = vld [vmem:[%s5 + $0x30] sm:$0xff]
      %v766 = vld [vmem:[%s5 + $0x38] sm:$0xff]
      %v767 = vld [vmem:[%s5 + $0x40] sm:$0xff]
      %v768 = vld [vmem:[%s5 + $0x48] sm:$0xff]
      %v769 = vld [vmem:[%s5 + $0x50] sm:$0xff]
      %v770 = vld [vmem:[%s5 + $0x58] sm:$0xff]
      %v771 = vld [vmem:[%s5 + $0x60] sm:$0xff]
      %v772 = vld [vmem:[%s5 + $0x68] sm:$0xff]
      %v773 = vld [vmem:[%s5 + $0x70] sm:$0xff]
      %v774 = vld [vmem:[%s5 + $0x78] sm:$0xff]
      %v775 = vld [vmem:[%s5 + $0x80] sm:$0xff]
      %v776 = vld [vmem:[%s5 + $0x88] sm:$0xff]
      %v777 = vld [vmem:[%s5 + $0x90] sm:$0xff]
      %v778 = vld [vmem:[%s5 + $0x98] sm:$0xff]
      %v779 = vld [vmem:[%s5 + $0xa0] sm:$0xff]
      %v780 = vld [vmem:[%s5 + $0xa8] sm:$0xff]
      %v781 = vld [vmem:[%s5 + $0xb0] sm:$0xff]
      %v782 = vld [vmem:[%s5 + $0xb8] sm:$0xff]
      %v783 = vld [vmem:[%s5 + $0xc0] sm:$0xff]
      %v784 = vld [vmem:[%s5 + $0xc8] sm:$0xff]
      %v785 = vld [vmem:[%s5 + $0xd0] sm:$0xff]
      %v786 = vld [vmem:[%s5 + $0xd8] sm:$0xff]
      %v787 = vld [vmem:[%s5 + $0xe0] sm:$0xff]
      %v788 = vld [vmem:[%s5 + $0xe8] sm:$0xff]
      %v789 = vld [vmem:[%s5 + $0xf0] sm:$0xff]
      %v790 = vld [vmem:[%s5 + $0xf8] sm:$0xff]
      %v791 = vld [vmem:[%s5 + $0x100] sm:$0xff]
      %v792 = vld [vmem:[%s5 + $0x108] sm:$0xff]
      %v793 = vld [vmem:[%s5 + $0x110] sm:$0xff]
      %v794 = vld [vmem:[%s5 + $0x118] sm:$0xff]
      %v795 = vld [vmem:[%s5 + $0x120] sm:$0xff]
      %v796 = vld [vmem:[%s5 + $0x128] sm:$0xff]
      %v797 = vld [vmem:[%s5 + $0x130] sm:$0xff]
      %v798 = vld [vmem:[%s5 + $0x138] sm:$0xff]
      %v799 = vld [vmem:[%s5 + $0x140] sm:$0xff]
      %v800 = vld [vmem:[%s5 + $0x148] sm:$0xff]
      %v801 = vld [vmem:[%s5 + $0x150] sm:$0xff]
      %v802 = vld [vmem:[%s5 + $0x158] sm:$0xff]
      %v803 = vld [vmem:[%s5 + $0x160] sm:$0xff]
      %v804 = vld [vmem:[%s5 + $0x168] sm:$0xff]
      %v805 = vld [vmem:[%s5 + $0x170] sm:$0xff]
      %v806 = vld [vmem:[%s5 + $0x178] sm:$0xff]
      %v807 = vld [vmem:[%s5 + $0x180] sm:$0xff]
      %v808 = vld [vmem:[%s5 + $0x188] sm:$0xff]
      %v809 = vld [vmem:[%s5 + $0x190] sm:$0xff]
      %v810 = vld [vmem:[%s5 + $0x198] sm:$0xff]
      %v811 = vld [vmem:[%s5 + $0x1a0] sm:$0xff]
      %v812 = vld [vmem:[%s5 + $0x1a8] sm:$0xff]
      %v813 = vld [vmem:[%s5 + $0x1b0] sm:$0xff]
      %v814 = vld [vmem:[%s5 + $0x1b8] sm:$0xff]
      %v815 = vld [vmem:[%s5 + $0x1c0] sm:$0xff]
      %v816 = vld [vmem:[%s5 + $0x1c8] sm:$0xff]
      %v817 = vld [vmem:[%s5 + $0x1d0] sm:$0xff]
      %v818 = vld [vmem:[%s5 + $0x1d8] sm:$0xff]
      %v819 = vld [vmem:[%s5 + $0x1e0] sm:$0xff]
      %v820 = vld [vmem:[%s5 + $0x1e8] sm:$0xff]
      %v821 = vld [vmem:[%s5 + $0x1f0] sm:$0xff]
      %v822 = vld [vmem:[%s5 + $0x1f8] sm:$0xff]
      %v823 = vld [vmem:[%s6] sm:$0xff]
      %v825 = vlaneseq
      %v826 = vshrl.u32 %v825, 7
      %v827 = vsub.s32 0, %v826
      %v828 = vrot.slane %v823, %v827
      %v829 = vlaneseq
      %v830 = vshrl.u32 %v829, 7
      %v831 = vsub.s32 1, %v830
      %v832 = vrot.slane %v823, %v831
      %v833 = vlaneseq
      %v834 = vshrl.u32 %v833, 7
      %v835 = vsub.s32 2, %v834
      %v836 = vrot.slane %v823, %v835
      %v837 = vlaneseq
      %v838 = vshrl.u32 %v837, 7
      %v839 = vsub.s32 3, %v838
      %v840 = vrot.slane %v823, %v839
      %v841 = vlaneseq
      %v842 = vshrl.u32 %v841, 7
      %v843 = vsub.s32 4, %v842
      %v844 = vrot.slane %v823, %v843
      %v845 = vlaneseq
      %v846 = vshrl.u32 %v845, 7
      %v847 = vsub.s32 5, %v846
      %v848 = vrot.slane %v823, %v847
      %v849 = vlaneseq
      %v850 = vshrl.u32 %v849, 7
      %v851 = vsub.s32 6, %v850
      %v852 = vrot.slane %v823, %v851
      %v853 = vlaneseq
      %v854 = vshrl.u32 %v853, 7
      %v855 = vsub.s32 7, %v854
      %v856 = vrot.slane %v823, %v855
      %v929 = vunpack.c.l.b16 %v759
      %v930 = vunpack.c.h.b16 %v759
      %v931 = vunpack.c.l.b16 %v760
      %v932 = vunpack.c.h.b16 %v760
      %v933 = vunpack.c.l.b16 %v761
      %v934 = vunpack.c.h.b16 %v761
      %v935 = vunpack.c.l.b16 %v762
      %v936 = vunpack.c.h.b16 %v762
      %v937 = vunpack.c.l.b16 %v763
      %v938 = vunpack.c.h.b16 %v763
      %v939 = vunpack.c.l.b16 %v764
      %v940 = vunpack.c.h.b16 %v764
      %v941 = vunpack.c.l.b16 %v765
      %v942 = vunpack.c.h.b16 %v765
      %v943 = vunpack.c.l.b16 %v766
      %v944 = vunpack.c.h.b16 %v766
      %v945 = vunpack.c.l.b16 %v767
      %v946 = vunpack.c.h.b16 %v767
      %v947 = vunpack.c.l.b16 %v768
      %v948 = vunpack.c.h.b16 %v768
      %v949 = vunpack.c.l.b16 %v769
      %v950 = vunpack.c.h.b16 %v769
      %v951 = vunpack.c.l.b16 %v770
      %v952 = vunpack.c.h.b16 %v770
      %v953 = vunpack.c.l.b16 %v771
      %v954 = vunpack.c.h.b16 %v771
      %v955 = vunpack.c.l.b16 %v772
      %v956 = vunpack.c.h.b16 %v772
      %v957 = vunpack.c.l.b16 %v773
      %v958 = vunpack.c.h.b16 %v773
      %v959 = vunpack.c.l.b16 %v774
      %v960 = vunpack.c.h.b16 %v774
      %v961 = vunpack.c.l.b16 %v775
      %v962 = vunpack.c.h.b16 %v775
      %v963 = vunpack.c.l.b16 %v776
      %v964 = vunpack.c.h.b16 %v776
      %v965 = vunpack.c.l.b16 %v777
      %v966 = vunpack.c.h.b16 %v777
      %v967 = vunpack.c.l.b16 %v778
      %v968 = vunpack.c.h.b16 %v778
      %v969 = vunpack.c.l.b16 %v779
      %v970 = vunpack.c.h.b16 %v779
      %v971 = vunpack.c.l.b16 %v780
      %v972 = vunpack.c.h.b16 %v780
      %v973 = vunpack.c.l.b16 %v781
      %v974 = vunpack.c.h.b16 %v781
      %v975 = vunpack.c.l.b16 %v782
      %v976 = vunpack.c.h.b16 %v782
      %v977 = vunpack.c.l.b16 %v783
      %v978 = vunpack.c.h.b16 %v783
      %v979 = vunpack.c.l.b16 %v784
      %v980 = vunpack.c.h.b16 %v784
      %v981 = vunpack.c.l.b16 %v785
      %v982 = vunpack.c.h.b16 %v785
      %v983 = vunpack.c.l.b16 %v786
      %v984 = vunpack.c.h.b16 %v786
      %v985 = vunpack.c.l.b16 %v787
      %v986 = vunpack.c.h.b16 %v787
      %v987 = vunpack.c.l.b16 %v788
      %v988 = vunpack.c.h.b16 %v788
      %v989 = vunpack.c.l.b16 %v789
      %v990 = vunpack.c.h.b16 %v789
      %v991 = vunpack.c.l.b16 %v790
      %v992 = vunpack.c.h.b16 %v790
      %v993 = vunpack.c.l.b16 %v791
      %v994 = vunpack.c.h.b16 %v791
      %v995 = vunpack.c.l.b16 %v792
      %v996 = vunpack.c.h.b16 %v792
      %v997 = vunpack.c.l.b16 %v793
      %v998 = vunpack.c.h.b16 %v793
      %v999 = vunpack.c.l.b16 %v794
      %v1000 = vunpack.c.h.b16 %v794
      %v1001 = vunpack.c.l.b16 %v795
      %v1002 = vunpack.c.h.b16 %v795
      %v1003 = vunpack.c.l.b16 %v796
      %v1004 = vunpack.c.h.b16 %v796
      %v1005 = vunpack.c.l.b16 %v797
      %v1006 = vunpack.c.h.b16 %v797
      %v1007 = vunpack.c.l.b16 %v798
      %v1008 = vunpack.c.h.b16 %v798
      %v1009 = vunpack.c.l.b16 %v799
      %v1010 = vunpack.c.h.b16 %v799
      %v1011 = vunpack.c.l.b16 %v800
      %v1012 = vunpack.c.h.b16 %v800
      %v1013 = vunpack.c.l.b16 %v801
      %v1014 = vunpack.c.h.b16 %v801
      %v1015 = vunpack.c.l.b16 %v802
      %v1016 = vunpack.c.h.b16 %v802
      %v1017 = vunpack.c.l.b16 %v803
      %v1018 = vunpack.c.h.b16 %v803
      %v1019 = vunpack.c.l.b16 %v804
      %v1020 = vunpack.c.h.b16 %v804
      %v1021 = vunpack.c.l.b16 %v805
      %v1022 = vunpack.c.h.b16 %v805
      %v1023 = vunpack.c.l.b16 %v806
      %v1024 = vunpack.c.h.b16 %v806
      %v1025 = vunpack.c.l.b16 %v807
      %v1026 = vunpack.c.h.b16 %v807
      %v1027 = vunpack.c.l.b16 %v808
      %v1028 = vunpack.c.h.b16 %v808
      %v1029 = vunpack.c.l.b16 %v809
      %v1030 = vunpack.c.h.b16 %v809
      %v1031 = vunpack.c.l.b16 %v810
      %v1032 = vunpack.c.h.b16 %v810
      %v1033 = vunpack.c.l.b16 %v811
      %v1034 = vunpack.c.h.b16 %v811
      %v1035 = vunpack.c.l.b16 %v812
      %v1036 = vunpack.c.h.b16 %v812
      %v1037 = vunpack.c.l.b16 %v813
      %v1038 = vunpack.c.h.b16 %v813
      %v1039 = vunpack.c.l.b16 %v814
      %v1040 = vunpack.c.h.b16 %v814
      %v1041 = vunpack.c.l.b16 %v815
      %v1042 = vunpack.c.h.b16 %v815
      %v1043 = vunpack.c.l.b16 %v816
      %v1044 = vunpack.c.h.b16 %v816
      %v1045 = vunpack.c.l.b16 %v817
      %v1046 = vunpack.c.h.b16 %v817
      %v1047 = vunpack.c.l.b16 %v818
      %v1048 = vunpack.c.h.b16 %v818
      %v1049 = vunpack.c.l.b16 %v819
      %v1050 = vunpack.c.h.b16 %v819
      %v1051 = vunpack.c.l.b16 %v820
      %v1052 = vunpack.c.h.b16 %v820
      %v1053 = vunpack.c.l.b16 %v821
      %v1054 = vunpack.c.h.b16 %v821
      %v1055 = vunpack.c.l.b16 %v822
      %v1056 = vunpack.c.h.b16 %v822
      %v1057 = vpack.c.b16 %v937, %v929
      %v1058 = vpack.c.b16 %v938, %v930
      %v1059 = vpack.c.b16 %v939, %v931
      %v1060 = vpack.c.b16 %v940, %v932
      %v1061 = vpack.c.b16 %v941, %v933
      %v1062 = vpack.c.b16 %v942, %v934
      %v1063 = vpack.c.b16 %v943, %v935
      %v1064 = vpack.c.b16 %v944, %v936
      %v1065 = vpack.c.b16 %v953, %v945
      %v1066 = vpack.c.b16 %v954, %v946
      %v1067 = vpack.c.b16 %v955, %v947
      %v1068 = vpack.c.b16 %v956, %v948
      %v1069 = vpack.c.b16 %v957, %v949
      %v1070 = vpack.c.b16 %v958, %v950
      %v1071 = vpack.c.b16 %v959, %v951
      %v1072 = vpack.c.b16 %v960, %v952
      %v1073 = vpack.c.b16 %v969, %v961
      %v1074 = vpack.c.b16 %v970, %v962
      %v1075 = vpack.c.b16 %v971, %v963
      %v1076 = vpack.c.b16 %v972, %v964
      %v1077 = vpack.c.b16 %v973, %v965
      %v1078 = vpack.c.b16 %v974, %v966
      %v1079 = vpack.c.b16 %v975, %v967
      %v1080 = vpack.c.b16 %v976, %v968
      %v1081 = vpack.c.b16 %v985, %v977
      %v1082 = vpack.c.b16 %v986, %v978
      %v1083 = vpack.c.b16 %v987, %v979
      %v1084 = vpack.c.b16 %v988, %v980
      %v1085 = vpack.c.b16 %v989, %v981
      %v1086 = vpack.c.b16 %v990, %v982
      %v1087 = vpack.c.b16 %v991, %v983
      %v1088 = vpack.c.b16 %v992, %v984
      %v1089 = vpack.c.b16 %v1001, %v993
      %v1090 = vpack.c.b16 %v1002, %v994
      %v1091 = vpack.c.b16 %v1003, %v995
      %v1092 = vpack.c.b16 %v1004, %v996
      %v1093 = vpack.c.b16 %v1005, %v997
      %v1094 = vpack.c.b16 %v1006, %v998
      %v1095 = vpack.c.b16 %v1007, %v999
      %v1096 = vpack.c.b16 %v1008, %v1000
      %v1097 = vpack.c.b16 %v1017, %v1009
      %v1098 = vpack.c.b16 %v1018, %v1010
      %v1099 = vpack.c.b16 %v1019, %v1011
      %v1100 = vpack.c.b16 %v1020, %v1012
      %v1101 = vpack.c.b16 %v1021, %v1013
      %v1102 = vpack.c.b16 %v1022, %v1014
      %v1103 = vpack.c.b16 %v1023, %v1015
      %v1104 = vpack.c.b16 %v1024, %v1016
      %v1105 = vpack.c.b16 %v1033, %v1025
      %v1106 = vpack.c.b16 %v1034, %v1026
      %v1107 = vpack.c.b16 %v1035, %v1027
      %v1108 = vpack.c.b16 %v1036, %v1028
      %v1109 = vpack.c.b16 %v1037, %v1029
      %v1110 = vpack.c.b16 %v1038, %v1030
      %v1111 = vpack.c.b16 %v1039, %v1031
      %v1112 = vpack.c.b16 %v1040, %v1032
      %v1113 = vpack.c.b16 %v1049, %v1041
      %v1114 = vpack.c.b16 %v1050, %v1042
      %v1115 = vpack.c.b16 %v1051, %v1043
      %v1116 = vpack.c.b16 %v1052, %v1044
      %v1117 = vpack.c.b16 %v1053, %v1045
      %v1118 = vpack.c.b16 %v1054, %v1046
      %v1119 = vpack.c.b16 %v1055, %v1047
      %v1120 = vpack.c.b16 %v1056, %v1048
      %1185 = vmatprep.subr.bf16.mxu0 %v1058
      %1186 = vmatpush1.bf16.msra.mxu0 %v1057
      %1187 = vmatprep.subr.bf16.mxu0 %v1066
      %1188 = vmatpush1.bf16.msra.mxu0 %v1065
      %1189 = vmatprep.subr.bf16.mxu0 %v1074
      %1190 = vmatpush1.bf16.msra.mxu0 %v1073
      %1191 = vmatprep.subr.bf16.mxu0 %v1082
      %1192 = vmatpush1.bf16.msra.mxu0 %v1081
      %1193 = vmatprep.subr.bf16.mxu0 %v1090
      %1194 = vmatpush1.bf16.msra.mxu0 %v1089
      %1195 = vmatprep.subr.bf16.mxu0 %v1098
      %1196 = vmatpush1.bf16.msra.mxu0 %v1097
      %1197 = vmatprep.subr.bf16.mxu0 %v1106
      %1198 = vmatpush1.bf16.msra.mxu0 %v1105
      %1199 = vmatprep.subr.bf16.mxu0 %v1114
      %1200 = vmatpush1.bf16.msra.mxu0 %v1113
      %1201 = vmatprep.subr.bf16.mxu0 0
      %1202 = vmatpush1.bf16.msra.mxu0 0
      %1203 = vmatprep.subr.bf16.mxu0 0
      %1204 = vmatpush1.bf16.msra.mxu0 0
      %1205 = vmatprep.subr.bf16.mxu0 0
      %1206 = vmatpush1.bf16.msra.mxu0 0
      %1207 = vmatprep.subr.bf16.mxu0 0
      %1208 = vmatpush1.bf16.msra.mxu0 0
      %1209 = vmatprep.subr.bf16.mxu0 0
      %1210 = vmatpush1.bf16.msra.mxu0 0
      %1211 = vmatprep.subr.bf16.mxu0 0
      %1212 = vmatpush1.bf16.msra.mxu0 0
      %1213 = vmatprep.subr.bf16.mxu0 0
      %1214 = vmatpush1.bf16.msra.mxu0 0
      %1215 = vmatprep.subr.bf16.mxu0 0
      %1216 = vmatpush1.bf16.msra.mxu0 0
      %1217 = vmatprep.mubr.bf16.mxu0 0
      %1218 = vmatmul.mubr.bf16.gmra.mrb[0].mxu0 %v751
      %v1219 = vpop.f32.mrb[0].mxu0
      %v1220 = vadd.f32 %v828, %v1219
      %v1221 = vpop.f32.mrb[0].mxu0
      %v1222 = vadd.f32 %v832, %v1221
      %v1223 = vpop.f32.mrb[0].mxu0
      %v1224 = vadd.f32 %v828, %v1223
      %v1225 = vpop.f32.mrb[0].mxu0
      %v1226 = vadd.f32 %v832, %v1225
      %1227 = vmatprep.mubr.bf16.mxu0 0
      %1228 = vmatmul.mubr.bf16.gmra.mrb[0].mxu0 %v752
      %v1229 = vpop.f32.mrb[0].mxu0
      %v1230 = vadd.f32 %v828, %v1229
      %v1231 = vpop.f32.mrb[0].mxu0
      %v1232 = vadd.f32 %v832, %v1231
      %v1233 = vpop.f32.mrb[0].mxu0
      %v1234 = vadd.f32 %v828, %v1233
      %v1235 = vpop.f32.mrb[0].mxu0
      %v1236 = vadd.f32 %v832, %v1235
      %1237 = vmatprep.mubr.bf16.mxu0 0
      %1238 = vmatmul.mubr.bf16.gmra.mrb[0].mxu0 %v753
      %v1239 = vpop.f32.mrb[0].mxu0
      %v1240 = vadd.f32 %v828, %v1239
      %v1241 = vpop.f32.mrb[0].mxu0
      %v1242 = vadd.f32 %v832, %v1241
      %v1243 = vpop.f32.mrb[0].mxu0
      %v1244 = vadd.f32 %v828, %v1243
      %v1245 = vpop.f32.mrb[0].mxu0
      %v1246 = vadd.f32 %v832, %v1245
      %1247 = vmatprep.mubr.bf16.mxu0 0
      %1248 = vmatmul.mubr.bf16.gmra.mrb[0].mxu0 %v754
      %v1249 = vpop.f32.mrb[0].mxu0
      %v1250 = vadd.f32 %v828, %v1249
      %v1251 = vpop.f32.mrb[0].mxu0
      %v1252 = vadd.f32 %v832, %v1251
      %v1253 = vpop.f32.mrb[0].mxu0
      %v1254 = vadd.f32 %v828, %v1253
      %v1255 = vpop.f32.mrb[0].mxu0
      %v1256 = vadd.f32 %v832, %v1255
      %1257 = vmatprep.mubr.bf16.mxu0 0
      %1258 = vmatmul.mubr.bf16.gmra.mrb[0].mxu0 %v755
      %v1259 = vpop.f32.mrb[0].mxu0
      %v1260 = vadd.f32 %v828, %v1259
      %v1261 = vpop.f32.mrb[0].mxu0
      %v1262 = vadd.f32 %v832, %v1261
      %v1263 = vpop.f32.mrb[0].mxu0
      %v1264 = vadd.f32 %v828, %v1263
      %v1265 = vpop.f32.mrb[0].mxu0
      %v1266 = vadd.f32 %v832, %v1265
      %1267 = vmatprep.mubr.bf16.mxu0 0
      %1268 = vmatmul.mubr.bf16.gmra.mrb[0].mxu0 %v756
      %v1269 = vpop.f32.mrb[0].mxu0
      %v1270 = vadd.f32 %v828, %v1269
      %v1271 = vpop.f32.mrb[0].mxu0
      %v1272 = vadd.f32 %v832, %v1271
      %v1273 = vpop.f32.mrb[0].mxu0
      %v1274 = vadd.f32 %v828, %v1273
      %v1275 = vpop.f32.mrb[0].mxu0
      %v1276 = vadd.f32 %v832, %v1275
      %1277 = vmatprep.mubr.bf16.mxu0 0
      %1278 = vmatmul.mubr.bf16.gmra.mrb[0].mxu0 %v757
      %v1279 = vpop.f32.mrb[0].mxu0
      %v1280 = vadd.f32 %v828, %v1279
      %v1281 = vpop.f32.mrb[0].mxu0
      %v1282 = vadd.f32 %v832, %v1281
      %v1283 = vpop.f32.mrb[0].mxu0
      %v1284 = vadd.f32 %v828, %v1283
      %v1285 = vpop.f32.mrb[0].mxu0
      %v1286 = vadd.f32 %v832, %v1285
      %1287 = vmatprep.mubr.bf16.mxu0 0
      %1288 = vmatmul.mubr.bf16.gmra.mrb[0].mxu0 %v758
      %v1289 = vpop.f32.mrb[0].mxu0
      %v1290 = vadd.f32 %v828, %v1289
      %v1291 = vpop.f32.mrb[0].mxu0
      %v1292 = vadd.f32 %v832, %v1291
      %v1293 = vpop.f32.mrb[0].mxu0
      %v1294 = vadd.f32 %v828, %v1293
      %v1295 = vpop.f32.mrb[0].mxu0
      %v1296 = vadd.f32 %v832, %v1295
      %1297 = vdwg.mxu0
      %1298 = vmatprep.subr.bf16.mxu0 %v1060
      %1299 = vmatpush1.bf16.msra.mxu0 %v1059
      %1300 = vmatprep.subr.bf16.mxu0 %v1068
      %1301 = vmatpush1.bf16.msra.mxu0 %v1067
      %1302 = vmatprep.subr.bf16.mxu0 %v1076
      %1303 = vmatpush1.bf16.msra.mxu0 %v1075
      %1304 = vmatprep.subr.bf16.mxu0 %v1084
      %1305 = vmatpush1.bf16.msra.mxu0 %v1083
      %1306 = vmatprep.subr.bf16.mxu0 %v1092
      %1307 = vmatpush1.bf16.msra.mxu0 %v1091
      %1308 = vmatprep.subr.bf16.mxu0 %v1100
      %1309 = vmatpush1.bf16.msra.mxu0 %v1099
      %1310 = vmatprep.subr.bf16.mxu0 %v1108
      %1311 = vmatpush1.bf16.msra.mxu0 %v1107
      %1312 = vmatprep.subr.bf16.mxu0 %v1116
      %1313 = vmatpush1.bf16.msra.mxu0 %v1115
      %1314 = vmatprep.subr.bf16.mxu0 0
      %1315 = vmatpush1.bf16.msra.mxu0 0
      %1316 = vmatprep.subr.bf16.mxu0 0
      %1317 = vmatpush1.bf16.msra.mxu0 0
      %1318 = vmatprep.subr.bf16.mxu0 0
      %1319 = vmatpush1.bf16.msra.mxu0 0
      %1320 = vmatprep.subr.bf16.mxu0 0
      %1321 = vmatpush1.bf16.msra.mxu0 0
      %1322 = vmatprep.subr.bf16.mxu0 0
      %1323 = vmatpush1.bf16.msra.mxu0 0
      %1324 = vmatprep.subr.bf16.mxu0 0
      %1325 = vmatpush1.bf16.msra.mxu0 0
      %1326 = vmatprep.subr.bf16.mxu0 0
      %1327 = vmatpush1.bf16.msra.mxu0 0
      %1328 = vmatprep.subr.bf16.mxu0 0
      %1329 = vmatpush1.bf16.msra.mxu0 0
      %1330 = vmatprep.mubr.bf16.mxu0 0
      %1331 = vmatmul.mubr.bf16.gmra.mrb[0].mxu0 %v751
      %v1332 = vpop.f32.mrb[0].mxu0
      %v1333 = vadd.f32 %v836, %v1332
      %v1334 = vpop.f32.mrb[0].mxu0
      %v1335 = vadd.f32 %v840, %v1334
      %v1336 = vpop.f32.mrb[0].mxu0
      %v1337 = vadd.f32 %v836, %v1336
      %v1338 = vpop.f32.mrb[0].mxu0
      %v1339 = vadd.f32 %v840, %v1338
      %1340 = vmatprep.mubr.bf16.mxu0 0
      %1341 = vmatmul.mubr.bf16.gmra.mrb[0].mxu0 %v752
      %v1342 = vpop.f32.mrb[0].mxu0
      %v1343 = vadd.f32 %v836, %v1342
      %v1344 = vpop.f32.mrb[0].mxu0
      %v1345 = vadd.f32 %v840, %v1344
      %v1346 = vpop.f32.mrb[0].mxu0
      %v1347 = vadd.f32 %v836, %v1346
      %v1348 = vpop.f32.mrb[0].mxu0
      %v1349 = vadd.f32 %v840, %v1348
      %1350 = vmatprep.mubr.bf16.mxu0 0
      %1351 = vmatmul.mubr.bf16.gmra.mrb[0].mxu0 %v753
      %v1352 = vpop.f32.mrb[0].mxu0
      %v1353 = vadd.f32 %v836, %v1352
      %v1354 = vpop.f32.mrb[0].mxu0
      %v1355 = vadd.f32 %v840, %v1354
      %v1356 = vpop.f32.mrb[0].mxu0
      %v1357 = vadd.f32 %v836, %v1356
      %v1358 = vpop.f32.mrb[0].mxu0
      %v1359 = vadd.f32 %v840, %v1358
      %1360 = vmatprep.mubr.bf16.mxu0 0
      %1361 = vmatmul.mubr.bf16.gmra.mrb[0].mxu0 %v754
      %v1362 = vpop.f32.mrb[0].mxu0
      %v1363 = vadd.f32 %v836, %v1362
      %v1364 = vpop.f32.mrb[0].mxu0
      %v1365 = vadd.f32 %v840, %v1364
      %v1366 = vpop.f32.mrb[0].mxu0
      %v1367 = vadd.f32 %v836, %v1366
      %v1368 = vpop.f32.mrb[0].mxu0
      %v1369 = vadd.f32 %v840, %v1368
      %1370 = vmatprep.mubr.bf16.mxu0 0
      %1371 = vmatmul.mubr.bf16.gmra.mrb[0].mxu0 %v755
      %v1372 = vpop.f32.mrb[0].mxu0
      %v1373 = vadd.f32 %v836, %v1372
      %v1374 = vpop.f32.mrb[0].mxu0
      %v1375 = vadd.f32 %v840, %v1374
      %v1376 = vpop.f32.mrb[0].mxu0
      %v1377 = vadd.f32 %v836, %v1376
      %v1378 = vpop.f32.mrb[0].mxu0
      %v1379 = vadd.f32 %v840, %v1378
      %1380 = vmatprep.mubr.bf16.mxu0 0
      %1381 = vmatmul.mubr.bf16.gmra.mrb[0].mxu0 %v756
      %v1382 = vpop.f32.mrb[0].mxu0
      %v1383 = vadd.f32 %v836, %v1382
      %v1384 = vpop.f32.mrb[0].mxu0
      %v1385 = vadd.f32 %v840, %v1384
      %v1386 = vpop.f32.mrb[0].mxu0
      %v1387 = vadd.f32 %v836, %v1386
      %v1388 = vpop.f32.mrb[0].mxu0
      %v1389 = vadd.f32 %v840, %v1388
      %1390 = vmatprep.mubr.bf16.mxu0 0
      %1391 = vmatmul.mubr.bf16.gmra.mrb[0].mxu0 %v757
      %v1392 = vpop.f32.mrb[0].mxu0
      %v1393 = vadd.f32 %v836, %v1392
      %v1394 = vpop.f32.mrb[0].mxu0
      %v1395 = vadd.f32 %v840, %v1394
      %v1396 = vpop.f32.mrb[0].mxu0
      %v1397 = vadd.f32 %v836, %v1396
      %v1398 = vpop.f32.mrb[0].mxu0
      %v1399 = vadd.f32 %v840, %v1398
      %1400 = vmatprep.mubr.bf16.mxu0 0
      %1401 = vmatmul.mubr.bf16.gmra.mrb[0].mxu0 %v758
      %v1402 = vpop.f32.mrb[0].mxu0
      %v1403 = vadd.f32 %v836, %v1402
      %v1404 = vpop.f32.mrb[0].mxu0
      %v1405 = vadd.f32 %v840, %v1404
      %v1406 = vpop.f32.mrb[0].mxu0
      %v1407 = vadd.f32 %v836, %v1406
      %v1408 = vpop.f32.mrb[0].mxu0
      %v1409 = vadd.f32 %v840, %v1408
      %1410 = vdwg.mxu0
      %1411 = vmatprep.subr.bf16.mxu0 %v1062
      %1412 = vmatpush1.bf16.msra.mxu0 %v1061
      %1413 = vmatprep.subr.bf16.mxu0 %v1070
      %1414 = vmatpush1.bf16.msra.mxu0 %v1069
      %1415 = vmatprep.subr.bf16.mxu0 %v1078
      %1416 = vmatpush1.bf16.msra.mxu0 %v1077
      %1417 = vmatprep.subr.bf16.mxu0 %v1086
      %1418 = vmatpush1.bf16.msra.mxu0 %v1085
      %1419 = vmatprep.subr.bf16.mxu0 %v1094
      %1420 = vmatpush1.bf16.msra.mxu0 %v1093
      %1421 = vmatprep.subr.bf16.mxu0 %v1102
      %1422 = vmatpush1.bf16.msra.mxu0 %v1101
      %1423 = vmatprep.subr.bf16.mxu0 %v1110
      %1424 = vmatpush1.bf16.msra.mxu0 %v1109
      %1425 = vmatprep.subr.bf16.mxu0 %v1118
      %1426 = vmatpush1.bf16.msra.mxu0 %v1117
      %1427 = vmatprep.subr.bf16.mxu0 0
      %1428 = vmatpush1.bf16.msra.mxu0 0
      %1429 = vmatprep.subr.bf16.mxu0 0
      %1430 = vmatpush1.bf16.msra.mxu0 0
      %1431 = vmatprep.subr.bf16.mxu0 0
      %1432 = vmatpush1.bf16.msra.mxu0 0
      %1433 = vmatprep.subr.bf16.mxu0 0
      %1434 = vmatpush1.bf16.msra.mxu0 0
      %1435 = vmatprep.subr.bf16.mxu0 0
      %1436 = vmatpush1.bf16.msra.mxu0 0
      %1437 = vmatprep.subr.bf16.mxu0 0
      %1438 = vmatpush1.bf16.msra.mxu0 0
      %1439 = vmatprep.subr.bf16.mxu0 0
      %1440 = vmatpush1.bf16.msra.mxu0 0
      %1441 = vmatprep.subr.bf16.mxu0 0
      %1442 = vmatpush1.bf16.msra.mxu0 0
      %1443 = vmatprep.mubr.bf16.mxu0 0
      %1444 = vmatmul.mubr.bf16.gmra.mrb[0].mxu0 %v751
      %v1445 = vpop.f32.mrb[0].mxu0
      %v1446 = vadd.f32 %v844, %v1445
      %v1447 = vpop.f32.mrb[0].mxu0
      %v1448 = vadd.f32 %v848, %v1447
      %v1449 = vpop.f32.mrb[0].mxu0
      %v1450 = vadd.f32 %v844, %v1449
      %v1451 = vpop.f32.mrb[0].mxu0
      %v1452 = vadd.f32 %v848, %v1451
      %1453 = vmatprep.mubr.bf16.mxu0 0
      %1454 = vmatmul.mubr.bf16.gmra.mrb[0].mxu0 %v752
      %v1455 = vpop.f32.mrb[0].mxu0
      %v1456 = vadd.f32 %v844, %v1455
      %v1457 = vpop.f32.mrb[0].mxu0
      %v1458 = vadd.f32 %v848, %v1457
      %v1459 = vpop.f32.mrb[0].mxu0
      %v1460 = vadd.f32 %v844, %v1459
      %v1461 = vpop.f32.mrb[0].mxu0
      %v1462 = vadd.f32 %v848, %v1461
      %1463 = vmatprep.mubr.bf16.mxu0 0
      %1464 = vmatmul.mubr.bf16.gmra.mrb[0].mxu0 %v753
      %v1465 = vpop.f32.mrb[0].mxu0
      %v1466 = vadd.f32 %v844, %v1465
      %v1467 = vpop.f32.mrb[0].mxu0
      %v1468 = vadd.f32 %v848, %v1467
      %v1469 = vpop.f32.mrb[0].mxu0
      %v1470 = vadd.f32 %v844, %v1469
      %v1471 = vpop.f32.mrb[0].mxu0
      %v1472 = vadd.f32 %v848, %v1471
      %1473 = vmatprep.mubr.bf16.mxu0 0
      %1474 = vmatmul.mubr.bf16.gmra.mrb[0].mxu0 %v754
      %v1475 = vpop.f32.mrb[0].mxu0
      %v1476 = vadd.f32 %v844, %v1475
      %v1477 = vpop.f32.mrb[0].mxu0
      %v1478 = vadd.f32 %v848, %v1477
      %v1479 = vpop.f32.mrb[0].mxu0
      %v1480 = vadd.f32 %v844, %v1479
      %v1481 = vpop.f32.mrb[0].mxu0
      %v1482 = vadd.f32 %v848, %v1481
      %1483 = vmatprep.mubr.bf16.mxu0 0
      %1484 = vmatmul.mubr.bf16.gmra.mrb[0].mxu0 %v755
      %v1485 = vpop.f32.mrb[0].mxu0
      %v1486 = vadd.f32 %v844, %v1485
      %v1487 = vpop.f32.mrb[0].mxu0
      %v1488 = vadd.f32 %v848, %v1487
      %v1489 = vpop.f32.mrb[0].mxu0
      %v1490 = vadd.f32 %v844, %v1489
      %v1491 = vpop.f32.mrb[0].mxu0
      %v1492 = vadd.f32 %v848, %v1491
      %1493 = vmatprep.mubr.bf16.mxu0 0
      %1494 = vmatmul.mubr.bf16.gmra.mrb[0].mxu0 %v756
      %v1495 = vpop.f32.mrb[0].mxu0
      %v1496 = vadd.f32 %v844, %v1495
      %v1497 = vpop.f32.mrb[0].mxu0
      %v1498 = vadd.f32 %v848, %v1497
      %v1499 = vpop.f32.mrb[0].mxu0
      %v1500 = vadd.f32 %v844, %v1499
      %v1501 = vpop.f32.mrb[0].mxu0
      %v1502 = vadd.f32 %v848, %v1501
      %1503 = vmatprep.mubr.bf16.mxu0 0
      %1504 = vmatmul.mubr.bf16.gmra.mrb[0].mxu0 %v757
      %v1505 = vpop.f32.mrb[0].mxu0
      %v1506 = vadd.f32 %v844, %v1505
      %v1507 = vpop.f32.mrb[0].mxu0
      %v1508 = vadd.f32 %v848, %v1507
      %v1509 = vpop.f32.mrb[0].mxu0
      %v1510 = vadd.f32 %v844, %v1509
      %v1511 = vpop.f32.mrb[0].mxu0
      %v1512 = vadd.f32 %v848, %v1511
      %1513 = vmatprep.mubr.bf16.mxu0 0
      %1514 = vmatmul.mubr.bf16.gmra.mrb[0].mxu0 %v758
      %v1515 = vpop.f32.mrb[0].mxu0
      %v1516 = vadd.f32 %v844, %v1515
      %v1517 = vpop.f32.mrb[0].mxu0
      %v1518 = vadd.f32 %v848, %v1517
      %v1519 = vpop.f32.mrb[0].mxu0
      %v1520 = vadd.f32 %v844, %v1519
      %v1521 = vpop.f32.mrb[0].mxu0
      %v1522 = vadd.f32 %v848, %v1521
      %1523 = vdwg.mxu0
      %1524 = vmatprep.subr.bf16.mxu0 %v1064
      %1525 = vmatpush1.bf16.msra.mxu0 %v1063
      %1526 = vmatprep.subr.bf16.mxu0 %v1072
      %1527 = vmatpush1.bf16.msra.mxu0 %v1071
      %1528 = vmatprep.subr.bf16.mxu0 %v1080
      %1529 = vmatpush1.bf16.msra.mxu0 %v1079
      %1530 = vmatprep.subr.bf16.mxu0 %v1088
      %1531 = vmatpush1.bf16.msra.mxu0 %v1087
      %1532 = vmatprep.subr.bf16.mxu0 %v1096
      %1533 = vmatpush1.bf16.msra.mxu0 %v1095
      %1534 = vmatprep.subr.bf16.mxu0 %v1104
      %1535 = vmatpush1.bf16.msra.mxu0 %v1103
      %1536 = vmatprep.subr.bf16.mxu0 %v1112
      %1537 = vmatpush1.bf16.msra.mxu0 %v1111
      %1538 = vmatprep.subr.bf16.mxu0 %v1120
      %1539 = vmatpush1.bf16.msra.mxu0 %v1119
      %1540 = vmatprep.subr.bf16.mxu0 0
      %1541 = vmatpush1.bf16.msra.mxu0 0
      %1542 = vmatprep.subr.bf16.mxu0 0
      %1543 = vmatpush1.bf16.msra.mxu0 0
      %1544 = vmatprep.subr.bf16.mxu0 0
      %1545 = vmatpush1.bf16.msra.mxu0 0
      %1546 = vmatprep.subr.bf16.mxu0 0
      %1547 = vmatpush1.bf16.msra.mxu0 0
      %1548 = vmatprep.subr.bf16.mxu0 0
      %1549 = vmatpush1.bf16.msra.mxu0 0
      %1550 = vmatprep.subr.bf16.mxu0 0
      %1551 = vmatpush1.bf16.msra.mxu0 0
      %1552 = vmatprep.subr.bf16.mxu0 0
      %1553 = vmatpush1.bf16.msra.mxu0 0
      %1554 = vmatprep.subr.bf16.mxu0 0
      %1555 = vmatpush1.bf16.msra.mxu0 0
      %1556 = vmatprep.mubr.bf16.mxu0 0
      %1557 = vmatmul.mubr.bf16.gmra.mrb[0].mxu0 %v751
      %v1558 = vpop.f32.mrb[0].mxu0
      %v1559 = vadd.f32 %v852, %v1558
      %v1560 = vpop.f32.mrb[0].mxu0
      %v1561 = vadd.f32 %v856, %v1560
      %v1562 = vpop.f32.mrb[0].mxu0
      %v1563 = vadd.f32 %v852, %v1562
      %v1564 = vpop.f32.mrb[0].mxu0
      %v1565 = vadd.f32 %v856, %v1564
      %1566 = vmatprep.mubr.bf16.mxu0 0
      %1567 = vmatmul.mubr.bf16.gmra.mrb[0].mxu0 %v752
      %v1568 = vpop.f32.mrb[0].mxu0
      %v1569 = vadd.f32 %v852, %v1568
      %v1570 = vpop.f32.mrb[0].mxu0
      %v1571 = vadd.f32 %v856, %v1570
      %v1572 = vpop.f32.mrb[0].mxu0
      %v1573 = vadd.f32 %v852, %v1572
      %v1574 = vpop.f32.mrb[0].mxu0
      %v1575 = vadd.f32 %v856, %v1574
      %1576 = vmatprep.mubr.bf16.mxu0 0
      %1577 = vmatmul.mubr.bf16.gmra.mrb[0].mxu0 %v753
      %v1578 = vpop.f32.mrb[0].mxu0
      %v1579 = vadd.f32 %v852, %v1578
      %v1580 = vpop.f32.mrb[0].mxu0
      %v1581 = vadd.f32 %v856, %v1580
      %v1582 = vpop.f32.mrb[0].mxu0
      %v1583 = vadd.f32 %v852, %v1582
      %v1584 = vpop.f32.mrb[0].mxu0
      %v1585 = vadd.f32 %v856, %v1584
      %1586 = vmatprep.mubr.bf16.mxu0 0
      %1587 = vmatmul.mubr.bf16.gmra.mrb[0].mxu0 %v754
      %v1588 = vpop.f32.mrb[0].mxu0
      %v1589 = vadd.f32 %v852, %v1588
      %v1590 = vpop.f32.mrb[0].mxu0
      %v1591 = vadd.f32 %v856, %v1590
      %v1592 = vpop.f32.mrb[0].mxu0
      %v1593 = vadd.f32 %v852, %v1592
      %v1594 = vpop.f32.mrb[0].mxu0
      %v1595 = vadd.f32 %v856, %v1594
      %1596 = vmatprep.mubr.bf16.mxu0 0
      %1597 = vmatmul.mubr.bf16.gmra.mrb[0].mxu0 %v755
      %v1598 = vpop.f32.mrb[0].mxu0
      %v1599 = vadd.f32 %v852, %v1598
      %v1600 = vpop.f32.mrb[0].mxu0
      %v1601 = vadd.f32 %v856, %v1600
      %v1602 = vpop.f32.mrb[0].mxu0
      %v1603 = vadd.f32 %v852, %v1602
      %v1604 = vpop.f32.mrb[0].mxu0
      %v1605 = vadd.f32 %v856, %v1604
      %1606 = vmatprep.mubr.bf16.mxu0 0
      %1607 = vmatmul.mubr.bf16.gmra.mrb[0].mxu0 %v756
      %v1608 = vpop.f32.mrb[0].mxu0
      %v1609 = vadd.f32 %v852, %v1608
      %v1610 = vpop.f32.mrb[0].mxu0
      %v1611 = vadd.f32 %v856, %v1610
      %v1612 = vpop.f32.mrb[0].mxu0
      %v1613 = vadd.f32 %v852, %v1612
      %v1614 = vpop.f32.mrb[0].mxu0
      %v1615 = vadd.f32 %v856, %v1614
      %1616 = vmatprep.mubr.bf16.mxu0 0
      %1617 = vmatmul.mubr.bf16.gmra.mrb[0].mxu0 %v757
      %v1618 = vpop.f32.mrb[0].mxu0
      %v1619 = vadd.f32 %v852, %v1618
      %v1620 = vpop.f32.mrb[0].mxu0
      %v1621 = vadd.f32 %v856, %v1620
      %v1622 = vpop.f32.mrb[0].mxu0
      %v1623 = vadd.f32 %v852, %v1622
      %v1624 = vpop.f32.mrb[0].mxu0
      %v1625 = vadd.f32 %v856, %v1624
      %1626 = vmatprep.mubr.bf16.mxu0 0
      %1627 = vmatmul.mubr.bf16.gmra.mrb[0].mxu0 %v758
      %v1628 = vpop.f32.mrb[0].mxu0
      %v1629 = vadd.f32 %v852, %v1628
      %v1630 = vpop.f32.mrb[0].mxu0
      %v1631 = vadd.f32 %v856, %v1630
      %v1632 = vpop.f32.mrb[0].mxu0
      %v1633 = vadd.f32 %v852, %v1632
      %v1634 = vpop.f32.mrb[0].mxu0
      %v1635 = vadd.f32 %v856, %v1634
      %1636 = vdwg.mxu0
      %v1637 = vmax.f32 %v1220, %v1224
      %v1638 = vmax.f32 %v1637, %v1230
      %v1639 = vmax.f32 %v1638, %v1234
      %v1640 = vmax.f32 %v1639, %v1240
      %v1641 = vmax.f32 %v1640, %v1244
      %v1642 = vmax.f32 %v1641, %v1250
      %v1643 = vmax.f32 %v1642, %v1254
      %v1644 = vmax.f32 %v1643, %v1260
      %v1645 = vmax.f32 %v1644, %v1264
      %v1646 = vmax.f32 %v1645, %v1270
      %v1647 = vmax.f32 %v1646, %v1274
      %v1648 = vmax.f32 %v1647, %v1280
      %v1649 = vmax.f32 %v1648, %v1284
      %v1650 = vmax.f32 %v1649, %v1290
      %v1651 = vmax.f32 %v1650, %v1294
      %v1652 = vrot.slane %v1651, 4
      %v1653 = vmax.f32 %v1651, %v1652
      %v1654 = vrot.slane %v1653, 2
      %v1655 = vmax.f32 %v1653, %v1654
      %v1656 = vrot.slane %v1655, 1
      %v1657 = vmax.f32 %v1655, %v1656
      %v1658 = vmax.f32 %v1222, %v1226
      %v1659 = vmax.f32 %v1658, %v1232
      %v1660 = vmax.f32 %v1659, %v1236
      %v1661 = vmax.f32 %v1660, %v1242
      %v1662 = vmax.f32 %v1661, %v1246
      %v1663 = vmax.f32 %v1662, %v1252
      %v1664 = vmax.f32 %v1663, %v1256
      %v1665 = vmax.f32 %v1664, %v1262
      %v1666 = vmax.f32 %v1665, %v1266
      %v1667 = vmax.f32 %v1666, %v1272
      %v1668 = vmax.f32 %v1667, %v1276
      %v1669 = vmax.f32 %v1668, %v1282
      %v1670 = vmax.f32 %v1669, %v1286
      %v1671 = vmax.f32 %v1670, %v1292
      %v1672 = vmax.f32 %v1671, %v1296
      %v1673 = vrot.slane %v1672, 4
      %v1674 = vmax.f32 %v1672, %v1673
      %v1675 = vrot.slane %v1674, 2
      %v1676 = vmax.f32 %v1674, %v1675
      %v1677 = vrot.slane %v1676, 1
      %v1678 = vmax.f32 %v1676, %v1677
      %v1679 = vmax.f32 %v1333, %v1337
      %v1680 = vmax.f32 %v1679, %v1343
      %v1681 = vmax.f32 %v1680, %v1347
      %v1682 = vmax.f32 %v1681, %v1353
      %v1683 = vmax.f32 %v1682, %v1357
      %v1684 = vmax.f32 %v1683, %v1363
      %v1685 = vmax.f32 %v1684, %v1367
      %v1686 = vmax.f32 %v1685, %v1373
      %v1687 = vmax.f32 %v1686, %v1377
      %v1688 = vmax.f32 %v1687, %v1383
      %v1689 = vmax.f32 %v1688, %v1387
      %v1690 = vmax.f32 %v1689, %v1393
      %v1691 = vmax.f32 %v1690, %v1397
      %v1692 = vmax.f32 %v1691, %v1403
      %v1693 = vmax.f32 %v1692, %v1407
      %v1694 = vrot.slane %v1693, 4
      %v1695 = vmax.f32 %v1693, %v1694
      %v1696 = vrot.slane %v1695, 2
      %v1697 = vmax.f32 %v1695, %v1696
      %v1698 = vrot.slane %v1697, 1
      %v1699 = vmax.f32 %v1697, %v1698
      %v1700 = vmax.f32 %v1335, %v1339
      %v1701 = vmax.f32 %v1700, %v1345
      %v1702 = vmax.f32 %v1701, %v1349
      %v1703 = vmax.f32 %v1702, %v1355
      %v1704 = vmax.f32 %v1703, %v1359
      %v1705 = vmax.f32 %v1704, %v1365
      %v1706 = vmax.f32 %v1705, %v1369
      %v1707 = vmax.f32 %v1706, %v1375
      %v1708 = vmax.f32 %v1707, %v1379
      %v1709 = vmax.f32 %v1708, %v1385
      %v1710 = vmax.f32 %v1709, %v1389
      %v1711 = vmax.f32 %v1710, %v1395
      %v1712 = vmax.f32 %v1711, %v1399
      %v1713 = vmax.f32 %v1712, %v1405
      %v1714 = vmax.f32 %v1713, %v1409
      %v1715 = vrot.slane %v1714, 4
      %v1716 = vmax.f32 %v1714, %v1715
      %v1717 = vrot.slane %v1716, 2
      %v1718 = vmax.f32 %v1716, %v1717
      %v1719 = vrot.slane %v1718, 1
      %v1720 = vmax.f32 %v1718, %v1719
      %v1721 = vmax.f32 %v1446, %v1450
      %v1722 = vmax.f32 %v1721, %v1456
      %v1723 = vmax.f32 %v1722, %v1460
      %v1724 = vmax.f32 %v1723, %v1466
      %v1725 = vmax.f32 %v1724, %v1470
      %v1726 = vmax.f32 %v1725, %v1476
      %v1727 = vmax.f32 %v1726, %v1480
      %v1728 = vmax.f32 %v1727, %v1486
      %v1729 = vmax.f32 %v1728, %v1490
      %v1730 = vmax.f32 %v1729, %v1496
      %v1731 = vmax.f32 %v1730, %v1500
      %v1732 = vmax.f32 %v1731, %v1506
      %v1733 = vmax.f32 %v1732, %v1510
      %v1734 = vmax.f32 %v1733, %v1516
      %v1735 = vmax.f32 %v1734, %v1520
      %v1736 = vrot.slane %v1735, 4
      %v1737 = vmax.f32 %v1735, %v1736
      %v1738 = vrot.slane %v1737, 2
      %v1739 = vmax.f32 %v1737, %v1738
      %v1740 = vrot.slane %v1739, 1
      %v1741 = vmax.f32 %v1739, %v1740
      %v1742 = vmax.f32 %v1448, %v1452
      %v1743 = vmax.f32 %v1742, %v1458
      %v1744 = vmax.f32 %v1743, %v1462
      %v1745 = vmax.f32 %v1744, %v1468
      %v1746 = vmax.f32 %v1745, %v1472
      %v1747 = vmax.f32 %v1746, %v1478
      %v1748 = vmax.f32 %v1747, %v1482
      %v1749 = vmax.f32 %v1748, %v1488
      %v1750 = vmax.f32 %v1749, %v1492
      %v1751 = vmax.f32 %v1750, %v1498
      %v1752 = vmax.f32 %v1751, %v1502
      %v1753 = vmax.f32 %v1752, %v1508
      %v1754 = vmax.f32 %v1753, %v1512
      %v1755 = vmax.f32 %v1754, %v1518
      %v1756 = vmax.f32 %v1755, %v1522
      %v1757 = vrot.slane %v1756, 4
      %v1758 = vmax.f32 %v1756, %v1757
      %v1759 = vrot.slane %v1758, 2
      %v1760 = vmax.f32 %v1758, %v1759
      %v1761 = vrot.slane %v1760, 1
      %v1762 = vmax.f32 %v1760, %v1761
      %v1763 = vmax.f32 %v1559, %v1563
      %v1764 = vmax.f32 %v1763, %v1569
      %v1765 = vmax.f32 %v1764, %v1573
      %v1766 = vmax.f32 %v1765, %v1579
      %v1767 = vmax.f32 %v1766, %v1583
      %v1768 = vmax.f32 %v1767, %v1589
      %v1769 = vmax.f32 %v1768, %v1593
      %v1770 = vmax.f32 %v1769, %v1599
      %v1771 = vmax.f32 %v1770, %v1603
      %v1772 = vmax.f32 %v1771, %v1609
      %v1773 = vmax.f32 %v1772, %v1613
      %v1774 = vmax.f32 %v1773, %v1619
      %v1775 = vmax.f32 %v1774, %v1623
      %v1776 = vmax.f32 %v1775, %v1629
      %v1777 = vmax.f32 %v1776, %v1633
      %v1778 = vrot.slane %v1777, 4
      %v1779 = vmax.f32 %v1777, %v1778
      %v1780 = vrot.slane %v1779, 2
      %v1781 = vmax.f32 %v1779, %v1780
      %v1782 = vrot.slane %v1781, 1
      %v1783 = vmax.f32 %v1781, %v1782
      %v1784 = vmax.f32 %v1561, %v1565
      %v1785 = vmax.f32 %v1784, %v1571
      %v1786 = vmax.f32 %v1785, %v1575
      %v1787 = vmax.f32 %v1786, %v1581
      %v1788 = vmax.f32 %v1787, %v1585
      %v1789 = vmax.f32 %v1788, %v1591
      %v1790 = vmax.f32 %v1789, %v1595
      %v1791 = vmax.f32 %v1790, %v1601
      %v1792 = vmax.f32 %v1791, %v1605
      %v1793 = vmax.f32 %v1792, %v1611
      %v1794 = vmax.f32 %v1793, %v1615
      %v1795 = vmax.f32 %v1794, %v1621
      %v1796 = vmax.f32 %v1795, %v1625
      %v1797 = vmax.f32 %v1796, %v1631
      %v1798 = vmax.f32 %v1797, %v1635
      %v1799 = vrot.slane %v1798, 4
      %v1800 = vmax.f32 %v1798, %v1799
      %v1801 = vrot.slane %v1800, 2
      %v1802 = vmax.f32 %v1800, %v1801
      %v1803 = vrot.slane %v1802, 1
      %v1804 = vmax.f32 %v1802, %v1803
      %v1805 = vld [vmem:[%s321] sm:$0xff]
      %v1814 = vcombine.low %v1657, %v1678
      %v1815 = vcombine.low %v1699, %v1720
      %v1816 = vcombine.low %v1741, %v1762
      %v1817 = vcombine.low %v1783, %v1804
      %v1819 = vunpack.c.l.s4 1966171168
      %v1820 = vunpack.c.0.s8 %v1819
      %v1821 = vlaneseq
      %v1822 = vshrl.u32 %v1821, 7
      %v1823 = vsub.s32 %v1820, %v1822
      %v1824 = vrot.slane %v1814, %v1823
      %v1826 = vunpack.c.l.s4 1966171168
      %v1827 = vunpack.c.0.s8 %v1826
      %v1828 = vlaneseq
      %v1829 = vshrl.u32 %v1828, 7
      %v1830 = vsub.s32 %v1827, %v1829
      %v1831 = vrot.slane %v1815, %v1830
      %v1833 = vunpack.c.l.s4 1966171168
      %v1834 = vunpack.c.0.s8 %v1833
      %v1835 = vlaneseq
      %v1836 = vshrl.u32 %v1835, 7
      %v1837 = vsub.s32 %v1834, %v1836
      %v1838 = vrot.slane %v1816, %v1837
      %v1840 = vunpack.c.l.s4 1966171168
      %v1841 = vunpack.c.0.s8 %v1840
      %v1842 = vlaneseq
      %v1843 = vshrl.u32 %v1842, 7
      %v1844 = vsub.s32 %v1841, %v1843
      %v1845 = vrot.slane %v1817, %v1844
      %v1846 = vcombine.low %v1824, %v1831
      %v1847 = vcombine.low %v1838, %v1845
      %v1849 = vunpack.c.l.s4 1966171168
      %v1850 = vunpack.c.0.s8 %v1849
      %v1851 = vlaneseq
      %v1852 = vshrl.u32 %v1851, 7
      %v1853 = vsub.s32 %v1850, %v1852
      %v1854 = vrot.slane %v1846, %v1853
      %v1856 = vunpack.c.l.s4 1966171168
      %v1857 = vunpack.c.0.s8 %v1856
      %v1858 = vlaneseq
      %v1859 = vshrl.u32 %v1858, 7
      %v1860 = vsub.s32 %v1857, %v1859
      %v1861 = vrot.slane %v1847, %v1860
      %v1862 = vcombine.low %v1854, %v1861
      %v1864 = vmax.f32 %v1805, %v1862
      %1865 = vst [vmem:[%s321] sm:$0xff] %v1864
      %p1866 = scmp.lt.s32.totalorder %s22, 1
      %s1867 = scalar_select %p1866, %s22, 1
      %s1868 = smul.addr %s1867, 8
      %s1869 = scalar_lea.vmem %s7, %s1868
      // Predicated region
      $region53: #{pointnet_cls_forward.6} parent=47 // pred_check
        %p1870 = pneg %p207
      $region54: #{pointnet_cls_forward.6} parent=47 // pred_check_branch
        %1872 = sbr.rel (%p1870) target = $region56
      $region55: #{pointnet_cls_forward.6} parent=47 // pred_region
        _
      $region56: #{pointnet_cls_forward.6} parent=47 // pred_fallthru
        _
    $region48: #{pointnet_cls_forward.6} parent=5 // pred_fallthru
      _
    %p1873 = scmp.le.s32.totalorder 2, %s13
    // Predicated region
    $region57: #{pointnet_cls_forward.6} parent=5 // pred_check
      %p1874 = pneg %p1873
    $region58: #{pointnet_cls_forward.6} parent=5 // pred_check_branch
      %1876 = sbr.rel (%p1874) target = $region60
    $region59: #{pointnet_cls_forward.6} parent=5 // pred_region
      %s1877 = ssub.s32 %s13, 2
      // Predicated region
      $region61: #{pointnet_cls_forward.6} parent=59 // pred_check
        %p1878 = pneg %p213
      $region62: #{pointnet_cls_forward.6} parent=59 // pred_check_branch
        %1880 = sbr.rel (%p1878) target = $region64
      $region63: #{pointnet_cls_forward.6} parent=59 // pred_region
        %p1881 = scmp.lt.s32.totalorder %s24, 1
        %s1882 = scalar_select %p1881, %s24, 1
        %s1883 = smul.addr %s1882, 8
        %s1884 = scalar_lea.vmem %s7, %s1883
      $region64: #{pointnet_cls_forward.6} parent=59 // pred_fallthru
        _
    $region60: #{pointnet_cls_forward.6} parent=5 // pred_fallthru
      _
  $region6: #{pointnet_cls_forward.6} parent=0 // loop_footer
    %s17 = sadd.s32 1, %s13
  $region7: #{pointnet_cls_forward.6} parent=0 // loop_footer_branch
    %12 = sbr.rel target = $region3
  $region8: #{pointnet_cls_forward.6} parent=0 // loop_exit
    _

// kernel: pointnet_cls_forward.5
$region0: #{pointnet_cls_forward.5}
  #allocation0 [shape = 'u32[]', space=smem, size = 0x4, offset = 0x4, fixed_abs, tag = 'smem constant byte address 0x4 - core index']
  #allocation1 [shape = 'u32[144,128]{1,0:T(1,128)}', space=vmem, size = 0x12000, scoped, tag = 'internal scratch']
  %s0 = inlined_call_operand.vmem [shape: f32[2,1024], index: 0, kind: input, shape index: {}]
  %s1 = inlined_call_operand.hbm [shape: f32[1024,512], index: 1, kind: input, shape index: {}]
  %s2 = inlined_call_operand.hbm [shape: f32[1,512], index: 2, kind: input, shape index: {}]
  %s3 = inlined_call_operand.hbm [shape: f32[512,256], index: 3, kind: input, shape index: {}]
  %s4 = inlined_call_operand.hbm [shape: f32[1,256], index: 4, kind: input, shape index: {}]
  %s5 = inlined_call_operand.vmem [shape: f32[256,9], index: 5, kind: input, shape index: {}]
  %s6 = inlined_call_operand.hbm [shape: f32[1,9], index: 6, kind: input, shape index: {}]
  %s7 = inlined_call_operand.vmem [shape: f32[2,9], index: 7, kind: output, shape index: {}]
  %s8 = sld [smem:[#allocation0]]
  $region58: #{pointnet_cls_forward.5} parent=0
    _
  %s10 = ssub.s32 1, %s8
  %s11 = scalar_select 0, %s10, %s8
  $region1: #{pointnet_cls_forward.5} parent=0
    #allocation2 [shape = 'u8[2097152]{0}', space=vmem, size = 0x200000, scoped, tag = 'input window, operand 1, single buffered']
    #allocation3 [shape = 's32[1]{0}', space=sflag, size = 0x4, scoped, tag = 'scoped memory for pointnet_cls_forward.5']
    #allocation4 [shape = 'u8[2048]{0}', space=vmem, size = 0x800, scoped, tag = 'input window, operand 2, single buffered']
    #allocation5 [shape = 's32[1]{0}', space=sflag, size = 0x4, scoped, tag = 'scoped memory for pointnet_cls_forward.5']
    #allocation6 [shape = 'u8[524288]{0}', space=vmem, size = 0x80000, scoped, tag = 'input window, operand 3, single buffered']
    #allocation7 [shape = 'u8[1024]{0}', space=vmem, size = 0x400, scoped, tag = 'input window, operand 4, single buffered']
    #allocation8 [shape = 's32[1]{0}', space=sflag, size = 0x4, scoped, tag = 'scoped memory for pointnet_cls_forward.5']
    #allocation9 [shape = 'u8[512]{0}', space=vmem, size = 0x400, scoped, tag = 'input window, operand 6, single buffered']
    %12 = vsyncpa [#allocation3], 0
    %13 = vsyncpa [#allocation5], 0
    %14 = vsyncpa [#allocation8], 0
    // Predicated region
    $region2: #{pointnet_cls_forward.5} parent=1 // pred_check
      _
    $region3: #{pointnet_cls_forward.5} parent=1 // pred_check_branch
      %16 = sbr.rel (0) target = $region5
    $region4: #{pointnet_cls_forward.5} parent=1 // pred_region
      _
    $region5: #{pointnet_cls_forward.5} parent=1 // pred_fallthru
      _
    // Predicated region
    $region6: #{pointnet_cls_forward.5} parent=1 // pred_check
      _
    $region7: #{pointnet_cls_forward.5} parent=1 // pred_check_branch
      %18 = sbr.rel (0) target = $region9
    $region8: #{pointnet_cls_forward.5} parent=1 // pred_region
      %s20 = ssub.s32 65536, 65536
      %21 = vsyncadd [#allocation3], %s20
      %s22 = sshll.u32 [#allocation2], 4
      %s23 = int_to_ptr.vmem [resolvable:$true] %s22
      %28 = dma.hbm_to_vmem [thread:$0]  %s1, 65536, %s23, [#allocation3], 512, 512, 32
    $region9: #{pointnet_cls_forward.5} parent=1 // pred_fallthru
      _
    // Predicated region
    $region10: #{pointnet_cls_forward.5} parent=1 // pred_check
      _
    $region11: #{pointnet_cls_forward.5} parent=1 // pred_check_branch
      %30 = sbr.rel (0) target = $region13
    $region12: #{pointnet_cls_forward.5} parent=1 // pred_region
      %s32 = ssub.s32 64, 64
      %33 = vsyncadd [#allocation5], %s32
      %s35 = sshll.u32 [#allocation4], 4
      %s36 = int_to_ptr.vmem [resolvable:$true] %s35
      %38 = dma.hbm_to_vmem [thread:$0]  %s2, 64, %s36, [#allocation5]
    $region13: #{pointnet_cls_forward.5} parent=1 // pred_fallthru
      _
    // Predicated region
    $region14: #{pointnet_cls_forward.5} parent=1 // pred_check
      _
    $region15: #{pointnet_cls_forward.5} parent=1 // pred_check_branch
      %40 = sbr.rel (0) target = $region17
    $region16: #{pointnet_cls_forward.5} parent=1 // pred_region
      %s42 = ssub.s32 16384, 16384
      %43 = vsyncadd [#allocation5], %s42
      %s44 = sshll.u32 [#allocation6], 4
      %s45 = int_to_ptr.vmem [resolvable:$true] %s44
      %50 = dma.hbm_to_vmem [thread:$0]  %s3, 16384, %s45, [#allocation5], 256, 256, 16
    $region17: #{pointnet_cls_forward.5} parent=1 // pred_fallthru
      _
    // Predicated region
    $region18: #{pointnet_cls_forward.5} parent=1 // pred_check
      _
    $region19: #{pointnet_cls_forward.5} parent=1 // pred_check_branch
      %52 = sbr.rel (0) target = $region21
    $region20: #{pointnet_cls_forward.5} parent=1 // pred_region
      %s54 = ssub.s32 32, 32
      %55 = vsyncadd [#allocation8], %s54
      %s57 = sshll.u32 [#allocation7], 4
      %s58 = int_to_ptr.vmem [resolvable:$true] %s57
      %60 = dma.hbm_to_vmem [thread:$0]  %s4, 32, %s58, [#allocation8]
    $region21: #{pointnet_cls_forward.5} parent=1 // pred_fallthru
      _
    // Predicated region
    $region22: #{pointnet_cls_forward.5} parent=1 // pred_check
      _
    $region23: #{pointnet_cls_forward.5} parent=1 // pred_check_branch
      %62 = sbr.rel (0) target = $region25
    $region24: #{pointnet_cls_forward.5} parent=1 // pred_region
      _
    $region25: #{pointnet_cls_forward.5} parent=1 // pred_fallthru
      _
    // Predicated region
    $region26: #{pointnet_cls_forward.5} parent=1 // pred_check
      _
    $region27: #{pointnet_cls_forward.5} parent=1 // pred_check_branch
      %64 = sbr.rel (0) target = $region29
    $region28: #{pointnet_cls_forward.5} parent=1 // pred_region
      %s66 = ssub.s32 16, 16
      %67 = vsyncadd [#allocation8], %s66
      %s69 = sshll.u32 [#allocation9], 4
      %s70 = int_to_ptr.vmem [resolvable:$true] %s69
      %72 = dma.hbm_to_vmem [thread:$0]  %s6, 16, %s70, [#allocation8]
    $region29: #{pointnet_cls_forward.5} parent=1 // pred_fallthru
      _
    // Predicated region
    $region30: #{pointnet_cls_forward.5} parent=1 // pred_check
      _
    $region31: #{pointnet_cls_forward.5} parent=1 // pred_check_branch
      %74 = sbr.rel (0) target = $region33
    $region32: #{pointnet_cls_forward.5} parent=1 // pred_region
      %75 = dma.done [#allocation3], 65536
    $region33: #{pointnet_cls_forward.5} parent=1 // pred_fallthru
      _
    // Predicated region
    $region34: #{pointnet_cls_forward.5} parent=1 // pred_check
      _
    $region35: #{pointnet_cls_forward.5} parent=1 // pred_check_branch
      %77 = sbr.rel (0) target = $region37
    $region36: #{pointnet_cls_forward.5} parent=1 // pred_region
      %78 = dma.done [#allocation5], 64
    $region37: #{pointnet_cls_forward.5} parent=1 // pred_fallthru
      _
    // Predicated region
    $region38: #{pointnet_cls_forward.5} parent=1 // pred_check
      _
    $region39: #{pointnet_cls_forward.5} parent=1 // pred_check_branch
      %80 = sbr.rel (0) target = $region41
    $region40: #{pointnet_cls_forward.5} parent=1 // pred_region
      %81 = dma.done [#allocation5], 16384
    $region41: #{pointnet_cls_forward.5} parent=1 // pred_fallthru
      _
    // Predicated region
    $region42: #{pointnet_cls_forward.5} parent=1 // pred_check
      _
    $region43: #{pointnet_cls_forward.5} parent=1 // pred_check_branch
      %83 = sbr.rel (0) target = $region45
    $region44: #{pointnet_cls_forward.5} parent=1 // pred_region
      %84 = dma.done [#allocation8], 32
    $region45: #{pointnet_cls_forward.5} parent=1 // pred_fallthru
      _
    // Predicated region
    $region46: #{pointnet_cls_forward.5} parent=1 // pred_check
      _
    $region47: #{pointnet_cls_forward.5} parent=1 // pred_check_branch
      %86 = sbr.rel (0) target = $region49
    $region48: #{pointnet_cls_forward.5} parent=1 // pred_region
      %87 = dma.done [#allocation8], 16
    $region49: #{pointnet_cls_forward.5} parent=1 // pred_fallthru
      _
    %v88 = vld [vmem:[%s0] sm:$0xff]
    %v89 = vld [vmem:[%s0 + $0x8] sm:$0xff]
    %v90 = vld [vmem:[#allocation2] sm:$0xff]
    %v91 = vld [vmem:[#allocation2 + $0x8] sm:$0xff]
    %v92 = vld [vmem:[#allocation2 + $0x10] sm:$0xff]
    %v93 = vld [vmem:[#allocation2 + $0x18] sm:$0xff]
    %v94 = vld [vmem:[#allocation2 + $0x20] sm:$0xff]
    %v95 = vld [vmem:[#allocation2 + $0x28] sm:$0xff]
    %v96 = vld [vmem:[#allocation2 + $0x30] sm:$0xff]
    %v97 = vld [vmem:[#allocation2 + $0x38] sm:$0xff]
    %v98 = vld [vmem:[#allocation2 + $0x40] sm:$0xff]
    %v99 = vld [vmem:[#allocation2 + $0x48] sm:$0xff]
    %v100 = vld [vmem:[#allocation2 + $0x50] sm:$0xff]
    %v101 = vld [vmem:[#allocation2 + $0x58] sm:$0xff]
    %v102 = vld [vmem:[#allocation2 + $0x60] sm:$0xff]
    %v103 = vld [vmem:[#allocation2 + $0x68] sm:$0xff]
    %v104 = vld [vmem:[#allocation2 + $0x70] sm:$0xff]
    %v105 = vld [vmem:[#allocation2 + $0x78] sm:$0xff]
    %v106 = vld [vmem:[#allocation2 + $0x80] sm:$0xff]
    %v107 = vld [vmem:[#allocation2 + $0x88] sm:$0xff]
    %v108 = vld [vmem:[#allocation2 + $0x90] sm:$0xff]
    %v109 = vld [vmem:[#allocation2 + $0x98] sm:$0xff]
    %v110 = vld [vmem:[#allocation2 + $0xa0] sm:$0xff]
    %v111 = vld [vmem:[#allocation2 + $0xa8] sm:$0xff]
    %v112 = vld [vmem:[#allocation2 + $0xb0] sm:$0xff]
    %v113 = vld [vmem:[#allocation2 + $0xb8] sm:$0xff]
    %v114 = vld [vmem:[#allocation2 + $0xc0] sm:$0xff]
    %v115 = vld [vmem:[#allocation2 + $0xc8] sm:$0xff]
    %v116 = vld [vmem:[#allocation2 + $0xd0] sm:$0xff]
    %v117 = vld [vmem:[#allocation2 + $0xd8] sm:$0xff]
    %v118 = vld [vmem:[#allocation2 + $0xe0] sm:$0xff]
    %v119 = vld [vmem:[#allocation2 + $0xe8] sm:$0xff]
    %v120 = vld [vmem:[#allocation2 + $0xf0] sm:$0xff]
    %v121 = vld [vmem:[#allocation2 + $0xf8] sm:$0xff]
    %v122 = vld [vmem:[#allocation2 + $0x100] sm:$0xff]
    %v123 = vld [vmem:[#allocation2 + $0x108] sm:$0xff]
    %v124 = vld [vmem:[#allocation2 + $0x110] sm:$0xff]
    %v125 = vld [vmem:[#allocation2 + $0x118] sm:$0xff]
    %v126 = vld [vmem:[#allocation2 + $0x120] sm:$0xff]
    %v127 = vld [vmem:[#allocation2 + $0x128] sm:$0xff]
    %v128 = vld [vmem:[#allocation2 + $0x130] sm:$0xff]
    %v129 = vld [vmem:[#allocation2 + $0x138] sm:$0xff]
    %v130 = vld [vmem:[#allocation2 + $0x140] sm:$0xff]
    %v131 = vld [vmem:[#allocation2 + $0x148] sm:$0xff]
    %v132 = vld [vmem:[#allocation2 + $0x150] sm:$0xff]
    %v133 = vld [vmem:[#allocation2 + $0x158] sm:$0xff]
    %v134 = vld [vmem:[#allocation2 + $0x160] sm:$0xff]
    %v135 = vld [vmem:[#allocation2 + $0x168] sm:$0xff]
    %v136 = vld [vmem:[#allocation2 + $0x170] sm:$0xff]
    %v137 = vld [vmem:[#allocation2 + $0x178] sm:$0xff]
    %v138 = vld [vmem:[#allocation2 + $0x180] sm:$0xff]
    %v139 = vld [vmem:[#allocation2 + $0x188] sm:$0xff]
    %v140 = vld [vmem:[#allocation2 + $0x190] sm:$0xff]
    %v141 = vld [vmem:[#allocation2 + $0x198] sm:$0xff]
    %v142 = vld [vmem:[#allocation2 + $0x1a0] sm:$0xff]
    %v143 = vld [vmem:[#allocation2 + $0x1a8] sm:$0xff]
    %v144 = vld [vmem:[#allocation2 + $0x1b0] sm:$0xff]
    %v145 = vld [vmem:[#allocation2 + $0x1b8] sm:$0xff]
    %v146 = vld [vmem:[#allocation2 + $0x1c0] sm:$0xff]
    %v147 = vld [vmem:[#allocation2 + $0x1c8] sm:$0xff]
    %v148 = vld [vmem:[#allocation2 + $0x1d0] sm:$0xff]
    %v149 = vld [vmem:[#allocation2 + $0x1d8] sm:$0xff]
    %v150 = vld [vmem:[#allocation2 + $0x1e0] sm:$0xff]
    %v151 = vld [vmem:[#allocation2 + $0x1e8] sm:$0xff]
    %v152 = vld [vmem:[#allocation2 + $0x1f0] sm:$0xff]
    %v153 = vld [vmem:[#allocation2 + $0x1f8] sm:$0xff]
    %v154 = vld [vmem:[#allocation2 + $0x200] sm:$0xff]
    %v155 = vld [vmem:[#allocation2 + $0x208] sm:$0xff]
    %v156 = vld [vmem:[#allocation2 + $0x210] sm:$0xff]
    %v157 = vld [vmem:[#allocation2 + $0x218] sm:$0xff]
    %v158 = vld [vmem:[#allocation2 + $0x220] sm:$0xff]
    %v159 = vld [vmem:[#allocation2 + $0x228] sm:$0xff]
    %v160 = vld [vmem:[#allocation2 + $0x230] sm:$0xff]
    %v161 = vld [vmem:[#allocation2 + $0x238] sm:$0xff]
    %v162 = vld [vmem:[#allocation2 + $0x240] sm:$0xff]
    %v163 = vld [vmem:[#allocation2 + $0x248] sm:$0xff]
    %v164 = vld [vmem:[#allocation2 + $0x250] sm:$0xff]
    %v165 = vld [vmem:[#allocation2 + $0x258] sm:$0xff]
    %v166 = vld [vmem:[#allocation2 + $0x260] sm:$0xff]
    %v167 = vld [vmem:[#allocation2 + $0x268] sm:$0xff]
    %v168 = vld [vmem:[#allocation2 + $0x270] sm:$0xff]
    %v169 = vld [vmem:[#allocation2 + $0x278] sm:$0xff]
    %v170 = vld [vmem:[#allocation2 + $0x280] sm:$0xff]
    %v171 = vld [vmem:[#allocation2 + $0x288] sm:$0xff]
    %v172 = vld [vmem:[#allocation2 + $0x290] sm:$0xff]
    %v173 = vld [vmem:[#allocation2 + $0x298] sm:$0xff]
    %v174 = vld [vmem:[#allocation2 + $0x2a0] sm:$0xff]
    %v175 = vld [vmem:[#allocation2 + $0x2a8] sm:$0xff]
    %v176 = vld [vmem:[#allocation2 + $0x2b0] sm:$0xff]
    %v177 = vld [vmem:[#allocation2 + $0x2b8] sm:$0xff]
    %v178 = vld [vmem:[#allocation2 + $0x2c0] sm:$0xff]
    %v179 = vld [vmem:[#allocation2 + $0x2c8] sm:$0xff]
    %v180 = vld [vmem:[#allocation2 + $0x2d0] sm:$0xff]
    %v181 = vld [vmem:[#allocation2 + $0x2d8] sm:$0xff]
    %v182 = vld [vmem:[#allocation2 + $0x2e0] sm:$0xff]
    %v183 = vld [vmem:[#allocation2 + $0x2e8] sm:$0xff]
    %v184 = vld [vmem:[#allocation2 + $0x2f0] sm:$0xff]
    %v185 = vld [vmem:[#allocation2 + $0x2f8] sm:$0xff]
    %v186 = vld [vmem:[#allocation2 + $0x300] sm:$0xff]
    %v187 = vld [vmem:[#allocation2 + $0x308] sm:$0xff]
    %v188 = vld [vmem:[#allocation2 + $0x310] sm:$0xff]
    %v189 = vld [vmem:[#allocation2 + $0x318] sm:$0xff]
    %v190 = vld [vmem:[#allocation2 + $0x320] sm:$0xff]
    %v191 = vld [vmem:[#allocation2 + $0x328] sm:$0xff]
    %v192 = vld [vmem:[#allocation2 + $0x330] sm:$0xff]
    %v193 = vld [vmem:[#allocation2 + $0x338] sm:$0xff]
    %v194 = vld [vmem:[#allocation2 + $0x340] sm:$0xff]
    %v195 = vld [vmem:[#allocation2 + $0x348] sm:$0xff]
    %v196 = vld [vmem:[#allocation2 + $0x350] sm:$0xff]
    %v197 = vld [vmem:[#allocation2 + $0x358] sm:$0xff]
    %v198 = vld [vmem:[#allocation2 + $0x360] sm:$0xff]
    %v199 = vld [vmem:[#allocation2 + $0x368] sm:$0xff]
    %v200 = vld [vmem:[#allocation2 + $0x370] sm:$0xff]
    %v201 = vld [vmem:[#allocation2 + $0x378] sm:$0xff]
    %v202 = vld [vmem:[#allocation2 + $0x380] sm:$0xff]
    %v203 = vld [vmem:[#allocation2 + $0x388] sm:$0xff]
    %v204 = vld [vmem:[#allocation2 + $0x390] sm:$0xff]
    %v205 = vld [vmem:[#allocation2 + $0x398] sm:$0xff]
    %v206 = vld [vmem:[#allocation2 + $0x3a0] sm:$0xff]
    %v207 = vld [vmem:[#allocation2 + $0x3a8] sm:$0xff]
    %v208 = vld [vmem:[#allocation2 + $0x3b0] sm:$0xff]
    %v209 = vld [vmem:[#allocation2 + $0x3b8] sm:$0xff]
    %v210 = vld [vmem:[#allocation2 + $0x3c0] sm:$0xff]
    %v211 = vld [vmem:[#allocation2 + $0x3c8] sm:$0xff]
    %v212 = vld [vmem:[#allocation2 + $0x3d0] sm:$0xff]
    %v213 = vld [vmem:[#allocation2 + $0x3d8] sm:$0xff]
    %v214 = vld [vmem:[#allocation2 + $0x3e0] sm:$0xff]
    %v215 = vld [vmem:[#allocation2 + $0x3e8] sm:$0xff]
    %v216 = vld [vmem:[#allocation2 + $0x3f0] sm:$0xff]
    %v217 = vld [vmem:[#allocation2 + $0x3f8] sm:$0xff]
    %v218 = vld [vmem:[#allocation2 + $0x400] sm:$0xff]
    %v219 = vld [vmem:[#allocation2 + $0x408] sm:$0xff]
    %v220 = vld [vmem:[#allocation2 + $0x410] sm:$0xff]
    %v221 = vld [vmem:[#allocation2 + $0x418] sm:$0xff]
    %v222 = vld [vmem:[#allocation2 + $0x420] sm:$0xff]
    %v223 = vld [vmem:[#allocation2 + $0x428] sm:$0xff]
    %v224 = vld [vmem:[#allocation2 + $0x430] sm:$0xff]
    %v225 = vld [vmem:[#allocation2 + $0x438] sm:$0xff]
    %v226 = vld [vmem:[#allocation2 + $0x440] sm:$0xff]
    %v227 = vld [vmem:[#allocation2 + $0x448] sm:$0xff]
    %v228 = vld [vmem:[#allocation2 + $0x450] sm:$0xff]
    %v229 = vld [vmem:[#allocation2 + $0x458] sm:$0xff]
    %v230 = vld [vmem:[#allocation2 + $0x460] sm:$0xff]
    %v231 = vld [vmem:[#allocation2 + $0x468] sm:$0xff]
    %v232 = vld [vmem:[#allocation2 + $0x470] sm:$0xff]
    %v233 = vld [vmem:[#allocation2 + $0x478] sm:$0xff]
    %v234 = vld [vmem:[#allocation2 + $0x480] sm:$0xff]
    %v235 = vld [vmem:[#allocation2 + $0x488] sm:$0xff]
    %v236 = vld [vmem:[#allocation2 + $0x490] sm:$0xff]
    %v237 = vld [vmem:[#allocation2 + $0x498] sm:$0xff]
    %v238 = vld [vmem:[#allocation2 + $0x4a0] sm:$0xff]
    %v239 = vld [vmem:[#allocation2 + $0x4a8] sm:$0xff]
    %v240 = vld [vmem:[#allocation2 + $0x4b0] sm:$0xff]
    %v241 = vld [vmem:[#allocation2 + $0x4b8] sm:$0xff]
    %v242 = vld [vmem:[#allocation2 + $0x4c0] sm:$0xff]
    %v243 = vld [vmem:[#allocation2 + $0x4c8] sm:$0xff]
    %v244 = vld [vmem:[#allocation2 + $0x4d0] sm:$0xff]
    %v245 = vld [vmem:[#allocation2 + $0x4d8] sm:$0xff]
    %v246 = vld [vmem:[#allocation2 + $0x4e0] sm:$0xff]
    %v247 = vld [vmem:[#allocation2 + $0x4e8] sm:$0xff]
    %v248 = vld [vmem:[#allocation2 + $0x4f0] sm:$0xff]
    %v249 = vld [vmem:[#allocation2 + $0x4f8] sm:$0xff]
    %v250 = vld [vmem:[#allocation2 + $0x500] sm:$0xff]
    %v251 = vld [vmem:[#allocation2 + $0x508] sm:$0xff]
    %v252 = vld [vmem:[#allocation2 + $0x510] sm:$0xff]
    %v253 = vld [vmem:[#allocation2 + $0x518] sm:$0xff]
    %v254 = vld [vmem:[#allocation2 + $0x520] sm:$0xff]
    %v255 = vld [vmem:[#allocation2 + $0x528] sm:$0xff]
    %v256 = vld [vmem:[#allocation2 + $0x530] sm:$0xff]
    %v257 = vld [vmem:[#allocation2 + $0x538] sm:$0xff]
    %v258 = vld [vmem:[#allocation2 + $0x540] sm:$0xff]
    %v259 = vld [vmem:[#allocation2 + $0x548] sm:$0xff]
    %v260 = vld [vmem:[#allocation2 + $0x550] sm:$0xff]
    %v261 = vld [vmem:[#allocation2 + $0x558] sm:$0xff]
    %v262 = vld [vmem:[#allocation2 + $0x560] sm:$0xff]
    %v263 = vld [vmem:[#allocation2 + $0x568] sm:$0xff]
    %v264 = vld [vmem:[#allocation2 + $0x570] sm:$0xff]
    %v265 = vld [vmem:[#allocation2 + $0x578] sm:$0xff]
    %v266 = vld [vmem:[#allocation2 + $0x580] sm:$0xff]
    %v267 = vld [vmem:[#allocation2 + $0x588] sm:$0xff]
    %v268 = vld [vmem:[#allocation2 + $0x590] sm:$0xff]
    %v269 = vld [vmem:[#allocation2 + $0x598] sm:$0xff]
    %v270 = vld [vmem:[#allocation2 + $0x5a0] sm:$0xff]
    %v271 = vld [vmem:[#allocation2 + $0x5a8] sm:$0xff]
    %v272 = vld [vmem:[#allocation2 + $0x5b0] sm:$0xff]
    %v273 = vld [vmem:[#allocation2 + $0x5b8] sm:$0xff]
    %v274 = vld [vmem:[#allocation2 + $0x5c0] sm:$0xff]
    %v275 = vld [vmem:[#allocation2 + $0x5c8] sm:$0xff]
    %v276 = vld [vmem:[#allocation2 + $0x5d0] sm:$0xff]
    %v277 = vld [vmem:[#allocation2 + $0x5d8] sm:$0xff]
    %v278 = vld [vmem:[#allocation2 + $0x5e0] sm:$0xff]
    %v279 = vld [vmem:[#allocation2 + $0x5e8] sm:$0xff]
    %v280 = vld [vmem:[#allocation2 + $0x5f0] sm:$0xff]
    %v281 = vld [vmem:[#allocation2 + $0x5f8] sm:$0xff]
    %v282 = vld [vmem:[#allocation2 + $0x600] sm:$0xff]
    %v283 = vld [vmem:[#allocation2 + $0x608] sm:$0xff]
    %v284 = vld [vmem:[#allocation2 + $0x610] sm:$0xff]
    %v285 = vld [vmem:[#allocation2 + $0x618] sm:$0xff]
    %v286 = vld [vmem:[#allocation2 + $0x620] sm:$0xff]
    %v287 = vld [vmem:[#allocation2 + $0x628] sm:$0xff]
    %v288 = vld [vmem:[#allocation2 + $0x630] sm:$0xff]
    %v289 = vld [vmem:[#allocation2 + $0x638] sm:$0xff]
    %v290 = vld [vmem:[#allocation2 + $0x640] sm:$0xff]
    %v291 = vld [vmem:[#allocation2 + $0x648] sm:$0xff]
    %v292 = vld [vmem:[#allocation2 + $0x650] sm:$0xff]
    %v293 = vld [vmem:[#allocation2 + $0x658] sm:$0xff]
    %v294 = vld [vmem:[#allocation2 + $0x660] sm:$0xff]
    %v295 = vld [vmem:[#allocation2 + $0x668] sm:$0xff]
    %v296 = vld [vmem:[#allocation2 + $0x670] sm:$0xff]
    %v297 = vld [vmem:[#allocation2 + $0x678] sm:$0xff]
    %v298 = vld [vmem:[#allocation2 + $0x680] sm:$0xff]
    %v299 = vld [vmem:[#allocation2 + $0x688] sm:$0xff]
    %v300 = vld [vmem:[#allocation2 + $0x690] sm:$0xff]
    %v301 = vld [vmem:[#allocation2 + $0x698] sm:$0xff]
    %v302 = vld [vmem:[#allocation2 + $0x6a0] sm:$0xff]
    %v303 = vld [vmem:[#allocation2 + $0x6a8] sm:$0xff]
    %v304 = vld [vmem:[#allocation2 + $0x6b0] sm:$0xff]
    %v305 = vld [vmem:[#allocation2 + $0x6b8] sm:$0xff]
    %v306 = vld [vmem:[#allocation2 + $0x6c0] sm:$0xff]
    %v307 = vld [vmem:[#allocation2 + $0x6c8] sm:$0xff]
    %v308 = vld [vmem:[#allocation2 + $0x6d0] sm:$0xff]
    %v309 = vld [vmem:[#allocation2 + $0x6d8] sm:$0xff]
    %v310 = vld [vmem:[#allocation2 + $0x6e0] sm:$0xff]
    %v311 = vld [vmem:[#allocation2 + $0x6e8] sm:$0xff]
    %v312 = vld [vmem:[#allocation2 + $0x6f0] sm:$0xff]
    %v313 = vld [vmem:[#allocation2 + $0x6f8] sm:$0xff]
    %v314 = vld [vmem:[#allocation2 + $0x700] sm:$0xff]
    %v315 = vld [vmem:[#allocation2 + $0x708] sm:$0xff]
    %v316 = vld [vmem:[#allocation2 + $0x710] sm:$0xff]
    %v317 = vld [vmem:[#allocation2 + $0x718] sm:$0xff]
    %v318 = vld [vmem:[#allocation2 + $0x720] sm:$0xff]
    %v319 = vld [vmem:[#allocation2 + $0x728] sm:$0xff]
    %v320 = vld [vmem:[#allocation2 + $0x730] sm:$0xff]
    %v321 = vld [vmem:[#allocation2 + $0x738] sm:$0xff]
    %v322 = vld [vmem:[#allocation2 + $0x740] sm:$0xff]
    %v323 = vld [vmem:[#allocation2 + $0x748] sm:$0xff]
    %v324 = vld [vmem:[#allocation2 + $0x750] sm:$0xff]
    %v325 = vld [vmem:[#allocation2 + $0x758] sm:$0xff]
    %v326 = vld [vmem:[#allocation2 + $0x760] sm:$0xff]
    %v327 = vld [vmem:[#allocation2 + $0x768] sm:$0xff]
    %v328 = vld [vmem:[#allocation2 + $0x770] sm:$0xff]
    %v329 = vld [vmem:[#allocation2 + $0x778] sm:$0xff]
    %v330 = vld [vmem:[#allocation2 + $0x780] sm:$0xff]
    %v331 = vld [vmem:[#allocation2 + $0x788] sm:$0xff]
    %v332 = vld [vmem:[#allocation2 + $0x790] sm:$0xff]
    %v333 = vld [vmem:[#allocation2 + $0x798] sm:$0xff]
    %v334 = vld [vmem:[#allocation2 + $0x7a0] sm:$0xff]
    %v335 = vld [vmem:[#allocation2 + $0x7a8] sm:$0xff]
    %v336 = vld [vmem:[#allocation2 + $0x7b0] sm:$0xff]
    %v337 = vld [vmem:[#allocation2 + $0x7b8] sm:$0xff]
    %v338 = vld [vmem:[#allocation2 + $0x7c0] sm:$0xff]
    %v339 = vld [vmem:[#allocation2 + $0x7c8] sm:$0xff]
    %v340 = vld [vmem:[#allocation2 + $0x7d0] sm:$0xff]
    %v341 = vld [vmem:[#allocation2 + $0x7d8] sm:$0xff]
    %v342 = vld [vmem:[#allocation2 + $0x7e0] sm:$0xff]
    %v343 = vld [vmem:[#allocation2 + $0x7e8] sm:$0xff]
    %v344 = vld [vmem:[#allocation2 + $0x7f0] sm:$0xff]
    %v345 = vld [vmem:[#allocation2 + $0x7f8] sm:$0xff]
    %v346 = vld [vmem:[#allocation2 + $0x800] sm:$0xff]
    %v347 = vld [vmem:[#allocation2 + $0x808] sm:$0xff]
    %v348 = vld [vmem:[#allocation2 + $0x810] sm:$0xff]
    %v349 = vld [vmem:[#allocation2 + $0x818] sm:$0xff]
    %v350 = vld [vmem:[#allocation2 + $0x820] sm:$0xff]
    %v351 = vld [vmem:[#allocation2 + $0x828] sm:$0xff]
    %v352 = vld [vmem:[#allocation2 + $0x830] sm:$0xff]
    %v353 = vld [vmem:[#allocation2 + $0x838] sm:$0xff]
    %v354 = vld [vmem:[#allocation2 + $0x840] sm:$0xff]
    %v355 = vld [vmem:[#allocation2 + $0x848] sm:$0xff]
    %v356 = vld [vmem:[#allocation2 + $0x850] sm:$0xff]
    %v357 = vld [vmem:[#allocation2 + $0x858] sm:$0xff]
    %v358 = vld [vmem:[#allocation2 + $0x860] sm:$0xff]
    %v359 = vld [vmem:[#allocation2 + $0x868] sm:$0xff]
    %v360 = vld [vmem:[#allocation2 + $0x870] sm:$0xff]
    %v361 = vld [vmem:[#allocation2 + $0x878] sm:$0xff]
    %v362 = vld [vmem:[#allocation2 + $0x880] sm:$0xff]
    %v363 = vld [vmem:[#allocation2 + $0x888] sm:$0xff]
    %v364 = vld [vmem:[#allocation2 + $0x890] sm:$0xff]
    %v365 = vld [vmem:[#allocation2 + $0x898] sm:$0xff]
    %v366 = vld [vmem:[#allocation2 + $0x8a0] sm:$0xff]
    %v367 = vld [vmem:[#allocation2 + $0x8a8] sm:$0xff]
    %v368 = vld [vmem:[#allocation2 + $0x8b0] sm:$0xff]
    %v369 = vld [vmem:[#allocation2 + $0x8b8] sm:$0xff]
    %v370 = vld [vmem:[#allocation2 + $0x8c0] sm:$0xff]
    %v371 = vld [vmem:[#allocation2 + $0x8c8] sm:$0xff]
    %v372 = vld [vmem:[#allocation2 + $0x8d0] sm:$0xff]
    %v373 = vld [vmem:[#allocation2 + $0x8d8] sm:$0xff]
    %v374 = vld [vmem:[#allocation2 + $0x8e0] sm:$0xff]
    %v375 = vld [vmem:[#allocation2 + $0x8e8] sm:$0xff]
    %v376 = vld [vmem:[#allocation2 + $0x8f0] sm:$0xff]
    %v377 = vld [vmem:[#allocation2 + $0x8f8] sm:$0xff]
    %v378 = vld [vmem:[#allocation2 + $0x900] sm:$0xff]
    %v379 = vld [vmem:[#allocation2 + $0x908] sm:$0xff]
    %v380 = vld [vmem:[#allocation2 + $0x910] sm:$0xff]
    %v381 = vld [vmem:[#allocation2 + $0x918] sm:$0xff]
    %v382 = vld [vmem:[#allocation2 + $0x920] sm:$0xff]
    %v383 = vld [vmem:[#allocation2 + $0x928] sm:$0xff]
    %v384 = vld [vmem:[#allocation2 + $0x930] sm:$0xff]
    %v385 = vld [vmem:[#allocation2 + $0x938] sm:$0xff]
    %v386 = vld [vmem:[#allocation2 + $0x940] sm:$0xff]
    %v387 = vld [vmem:[#allocation2 + $0x948] sm:$0xff]
    %v388 = vld [vmem:[#allocation2 + $0x950] sm:$0xff]
    %v389 = vld [vmem:[#allocation2 + $0x958] sm:$0xff]
    %v390 = vld [vmem:[#allocation2 + $0x960] sm:$0xff]
    %v391 = vld [vmem:[#allocation2 + $0x968] sm:$0xff]
    %v392 = vld [vmem:[#allocation2 + $0x970] sm:$0xff]
    %v393 = vld [vmem:[#allocation2 + $0x978] sm:$0xff]
    %v394 = vld [vmem:[#allocation2 + $0x980] sm:$0xff]
    %v395 = vld [vmem:[#allocation2 + $0x988] sm:$0xff]
    %v396 = vld [vmem:[#allocation2 + $0x990] sm:$0xff]
    %v397 = vld [vmem:[#allocation2 + $0x998] sm:$0xff]
    %v398 = vld [vmem:[#allocation2 + $0x9a0] sm:$0xff]
    %v399 = vld [vmem:[#allocation2 + $0x9a8] sm:$0xff]
    %v400 = vld [vmem:[#allocation2 + $0x9b0] sm:$0xff]
    %v401 = vld [vmem:[#allocation2 + $0x9b8] sm:$0xff]
    %v402 = vld [vmem:[#allocation2 + $0x9c0] sm:$0xff]
    %v403 = vld [vmem:[#allocation2 + $0x9c8] sm:$0xff]
    %v404 = vld [vmem:[#allocation2 + $0x9d0] sm:$0xff]
    %v405 = vld [vmem:[#allocation2 + $0x9d8] sm:$0xff]
    %v406 = vld [vmem:[#allocation2 + $0x9e0] sm:$0xff]
    %v407 = vld [vmem:[#allocation2 + $0x9e8] sm:$0xff]
    %v408 = vld [vmem:[#allocation2 + $0x9f0] sm:$0xff]
    %v409 = vld [vmem:[#allocation2 + $0x9f8] sm:$0xff]
    %v410 = vld [vmem:[#allocation2 + $0xa00] sm:$0xff]
    %v411 = vld [vmem:[#allocation2 + $0xa08] sm:$0xff]
    %v412 = vld [vmem:[#allocation2 + $0xa10] sm:$0xff]
    %v413 = vld [vmem:[#allocation2 + $0xa18] sm:$0xff]
    %v414 = vld [vmem:[#allocation2 + $0xa20] sm:$0xff]
    %v415 = vld [vmem:[#allocation2 + $0xa28] sm:$0xff]
    %v416 = vld [vmem:[#allocation2 + $0xa30] sm:$0xff]
    %v417 = vld [vmem:[#allocation2 + $0xa38] sm:$0xff]
    %v418 = vld [vmem:[#allocation2 + $0xa40] sm:$0xff]
    %v419 = vld [vmem:[#allocation2 + $0xa48] sm:$0xff]
    %v420 = vld [vmem:[#allocation2 + $0xa50] sm:$0xff]
    %v421 = vld [vmem:[#allocation2 + $0xa58] sm:$0xff]
    %v422 = vld [vmem:[#allocation2 + $0xa60] sm:$0xff]
    %v423 = vld [vmem:[#allocation2 + $0xa68] sm:$0xff]
    %v424 = vld [vmem:[#allocation2 + $0xa70] sm:$0xff]
    %v425 = vld [vmem:[#allocation2 + $0xa78] sm:$0xff]
    %v426 = vld [vmem:[#allocation2 + $0xa80] sm:$0xff]
    %v427 = vld [vmem:[#allocation2 + $0xa88] sm:$0xff]
    %v428 = vld [vmem:[#allocation2 + $0xa90] sm:$0xff]
    %v429 = vld [vmem:[#allocation2 + $0xa98] sm:$0xff]
    %v430 = vld [vmem:[#allocation2 + $0xaa0] sm:$0xff]
    %v431 = vld [vmem:[#allocation2 + $0xaa8] sm:$0xff]
    %v432 = vld [vmem:[#allocation2 + $0xab0] sm:$0xff]
    %v433 = vld [vmem:[#allocation2 + $0xab8] sm:$0xff]
    %v434 = vld [vmem:[#allocation2 + $0xac0] sm:$0xff]
    %v435 = vld [vmem:[#allocation2 + $0xac8] sm:$0xff]
    %v436 = vld [vmem:[#allocation2 + $0xad0] sm:$0xff]
    %v437 = vld [vmem:[#allocation2 + $0xad8] sm:$0xff]
    %v438 = vld [vmem:[#allocation2 + $0xae0] sm:$0xff]
    %v439 = vld [vmem:[#allocation2 + $0xae8] sm:$0xff]
    %v440 = vld [vmem:[#allocation2 + $0xaf0] sm:$0xff]
    %v441 = vld [vmem:[#allocation2 + $0xaf8] sm:$0xff]
    %v442 = vld [vmem:[#allocation2 + $0xb00] sm:$0xff]
    %v443 = vld [vmem:[#allocation2 + $0xb08] sm:$0xff]
    %v444 = vld [vmem:[#allocation2 + $0xb10] sm:$0xff]
    %v445 = vld [vmem:[#allocation2 + $0xb18] sm:$0xff]
    %v446 = vld [vmem:[#allocation2 + $0xb20] sm:$0xff]
    %v447 = vld [vmem:[#allocation2 + $0xb28] sm:$0xff]
    %v448 = vld [vmem:[#allocation2 + $0xb30] sm:$0xff]
    %v449 = vld [vmem:[#allocation2 + $0xb38] sm:$0xff]
    %v450 = vld [vmem:[#allocation2 + $0xb40] sm:$0xff]
    %v451 = vld [vmem:[#allocation2 + $0xb48] sm:$0xff]
    %v452 = vld [vmem:[#allocation2 + $0xb50] sm:$0xff]
    %v453 = vld [vmem:[#allocation2 + $0xb58] sm:$0xff]
    %v454 = vld [vmem:[#allocation2 + $0xb60] sm:$0xff]
    %v455 = vld [vmem:[#allocation2 + $0xb68] sm:$0xff]
    %v456 = vld [vmem:[#allocation2 + $0xb70] sm:$0xff]
    %v457 = vld [vmem:[#allocation2 + $0xb78] sm:$0xff]
    %v458 = vld [vmem:[#allocation2 + $0xb80] sm:$0xff]
    %v459 = vld [vmem:[#allocation2 + $0xb88] sm:$0xff]
    %v460 = vld [vmem:[#allocation2 + $0xb90] sm:$0xff]
    %v461 = vld [vmem:[#allocation2 + $0xb98] sm:$0xff]
    %v462 = vld [vmem:[#allocation2 + $0xba0] sm:$0xff]
    %v463 = vld [vmem:[#allocation2 + $0xba8] sm:$0xff]
    %v464 = vld [vmem:[#allocation2 + $0xbb0] sm:$0xff]
    %v465 = vld [vmem:[#allocation2 + $0xbb8] sm:$0xff]
    %v466 = vld [vmem:[#allocation2 + $0xbc0] sm:$0xff]
    %v467 = vld [vmem:[#allocation2 + $0xbc8] sm:$0xff]
    %v468 = vld [vmem:[#allocation2 + $0xbd0] sm:$0xff]
    %v469 = vld [vmem:[#allocation2 + $0xbd8] sm:$0xff]
    %v470 = vld [vmem:[#allocation2 + $0xbe0] sm:$0xff]
    %v471 = vld [vmem:[#allocation2 + $0xbe8] sm:$0xff]
    %v472 = vld [vmem:[#allocation2 + $0xbf0] sm:$0xff]
    %v473 = vld [vmem:[#allocation2 + $0xbf8] sm:$0xff]
    %v474 = vld [vmem:[#allocation2 + $0xc00] sm:$0xff]
    %v475 = vld [vmem:[#allocation2 + $0xc08] sm:$0xff]
    %v476 = vld [vmem:[#allocation2 + $0xc10] sm:$0xff]
    %v477 = vld [vmem:[#allocation2 + $0xc18] sm:$0xff]
    %v478 = vld [vmem:[#allocation2 + $0xc20] sm:$0xff]
    %v479 = vld [vmem:[#allocation2 + $0xc28] sm:$0xff]
    %v480 = vld [vmem:[#allocation2 + $0xc30] sm:$0xff]
    %v481 = vld [vmem:[#allocation2 + $0xc38] sm:$0xff]
    %v482 = vld [vmem:[#allocation2 + $0xc40] sm:$0xff]
    %v483 = vld [vmem:[#allocation2 + $0xc48] sm:$0xff]
    %v484 = vld [vmem:[#allocation2 + $0xc50] sm:$0xff]
    %v485 = vld [vmem:[#allocation2 + $0xc58] sm:$0xff]
    %v486 = vld [vmem:[#allocation2 + $0xc60] sm:$0xff]
    %v487 = vld [vmem:[#allocation2 + $0xc68] sm:$0xff]
    %v488 = vld [vmem:[#allocation2 + $0xc70] sm:$0xff]
    %v489 = vld [vmem:[#allocation2 + $0xc78] sm:$0xff]
    %v490 = vld [vmem:[#allocation2 + $0xc80] sm:$0xff]
    %v491 = vld [vmem:[#allocation2 + $0xc88] sm:$0xff]
    %v492 = vld [vmem:[#allocation2 + $0xc90] sm:$0xff]
    %v493 = vld [vmem:[#allocation2 + $0xc98] sm:$0xff]
    %v494 = vld [vmem:[#allocation2 + $0xca0] sm:$0xff]
    %v495 = vld [vmem:[#allocation2 + $0xca8] sm:$0xff]
    %v496 = vld [vmem:[#allocation2 + $0xcb0] sm:$0xff]
    %v497 = vld [vmem:[#allocation2 + $0xcb8] sm:$0xff]
    %v498 = vld [vmem:[#allocation2 + $0xcc0] sm:$0xff]
    %v499 = vld [vmem:[#allocation2 + $0xcc8] sm:$0xff]
    %v500 = vld [vmem:[#allocation2 + $0xcd0] sm:$0xff]
    %v501 = vld [vmem:[#allocation2 + $0xcd8] sm:$0xff]
    %v502 = vld [vmem:[#allocation2 + $0xce0] sm:$0xff]
    %v503 = vld [vmem:[#allocation2 + $0xce8] sm:$0xff]
    %v504 = vld [vmem:[#allocation2 + $0xcf0] sm:$0xff]
    %v505 = vld [vmem:[#allocation2 + $0xcf8] sm:$0xff]
    %v506 = vld [vmem:[#allocation2 + $0xd00] sm:$0xff]
    %v507 = vld [vmem:[#allocation2 + $0xd08] sm:$0xff]
    %v508 = vld [vmem:[#allocation2 + $0xd10] sm:$0xff]
    %v509 = vld [vmem:[#allocation2 + $0xd18] sm:$0xff]
    %v510 = vld [vmem:[#allocation2 + $0xd20] sm:$0xff]
    %v511 = vld [vmem:[#allocation2 + $0xd28] sm:$0xff]
    %v512 = vld [vmem:[#allocation2 + $0xd30] sm:$0xff]
    %v513 = vld [vmem:[#allocation2 + $0xd38] sm:$0xff]
    %v514 = vld [vmem:[#allocation2 + $0xd40] sm:$0xff]
    %v515 = vld [vmem:[#allocation2 + $0xd48] sm:$0xff]
    %v516 = vld [vmem:[#allocation2 + $0xd50] sm:$0xff]
    %v517 = vld [vmem:[#allocation2 + $0xd58] sm:$0xff]
    %v518 = vld [vmem:[#allocation2 + $0xd60] sm:$0xff]
    %v519 = vld [vmem:[#allocation2 + $0xd68] sm:$0xff]
    %v520 = vld [vmem:[#allocation2 + $0xd70] sm:$0xff]
    %v521 = vld [vmem:[#allocation2 + $0xd78] sm:$0xff]
    %v522 = vld [vmem:[#allocation2 + $0xd80] sm:$0xff]
    %v523 = vld [vmem:[#allocation2 + $0xd88] sm:$0xff]
    %v524 = vld [vmem:[#allocation2 + $0xd90] sm:$0xff]
    %v525 = vld [vmem:[#allocation2 + $0xd98] sm:$0xff]
    %v526 = vld [vmem:[#allocation2 + $0xda0] sm:$0xff]
    %v527 = vld [vmem:[#allocation2 + $0xda8] sm:$0xff]
    %v528 = vld [vmem:[#allocation2 + $0xdb0] sm:$0xff]
    %v529 = vld [vmem:[#allocation2 + $0xdb8] sm:$0xff]
    %v530 = vld [vmem:[#allocation2 + $0xdc0] sm:$0xff]
    %v531 = vld [vmem:[#allocation2 + $0xdc8] sm:$0xff]
    %v532 = vld [vmem:[#allocation2 + $0xdd0] sm:$0xff]
    %v533 = vld [vmem:[#allocation2 + $0xdd8] sm:$0xff]
    %v534 = vld [vmem:[#allocation2 + $0xde0] sm:$0xff]
    %v535 = vld [vmem:[#allocation2 + $0xde8] sm:$0xff]
    %v536 = vld [vmem:[#allocation2 + $0xdf0] sm:$0xff]
    %v537 = vld [vmem:[#allocation2 + $0xdf8] sm:$0xff]
    %v538 = vld [vmem:[#allocation2 + $0xe00] sm:$0xff]
    %v539 = vld [vmem:[#allocation2 + $0xe08] sm:$0xff]
    %v540 = vld [vmem:[#allocation2 + $0xe10] sm:$0xff]
    %v541 = vld [vmem:[#allocation2 + $0xe18] sm:$0xff]
    %v542 = vld [vmem:[#allocation2 + $0xe20] sm:$0xff]
    %v543 = vld [vmem:[#allocation2 + $0xe28] sm:$0xff]
    %v544 = vld [vmem:[#allocation2 + $0xe30] sm:$0xff]
    %v545 = vld [vmem:[#allocation2 + $0xe38] sm:$0xff]
    %v546 = vld [vmem:[#allocation2 + $0xe40] sm:$0xff]
    %v547 = vld [vmem:[#allocation2 + $0xe48] sm:$0xff]
    %v548 = vld [vmem:[#allocation2 + $0xe50] sm:$0xff]
    %v549 = vld [vmem:[#allocation2 + $0xe58] sm:$0xff]
    %v550 = vld [vmem:[#allocation2 + $0xe60] sm:$0xff]
    %v551 = vld [vmem:[#allocation2 + $0xe68] sm:$0xff]
    %v552 = vld [vmem:[#allocation2 + $0xe70] sm:$0xff]
    %v553 = vld [vmem:[#allocation2 + $0xe78] sm:$0xff]
    %v554 = vld [vmem:[#allocation2 + $0xe80] sm:$0xff]
    %v555 = vld [vmem:[#allocation2 + $0xe88] sm:$0xff]
    %v556 = vld [vmem:[#allocation2 + $0xe90] sm:$0xff]
    %v557 = vld [vmem:[#allocation2 + $0xe98] sm:$0xff]
    %v558 = vld [vmem:[#allocation2 + $0xea0] sm:$0xff]
    %v559 = vld [vmem:[#allocation2 + $0xea8] sm:$0xff]
    %v560 = vld [vmem:[#allocation2 + $0xeb0] sm:$0xff]
    %v561 = vld [vmem:[#allocation2 + $0xeb8] sm:$0xff]
    %v562 = vld [vmem:[#allocation2 + $0xec0] sm:$0xff]
    %v563 = vld [vmem:[#allocation2 + $0xec8] sm:$0xff]
    %v564 = vld [vmem:[#allocation2 + $0xed0] sm:$0xff]
    %v565 = vld [vmem:[#allocation2 + $0xed8] sm:$0xff]
    %v566 = vld [vmem:[#allocation2 + $0xee0] sm:$0xff]
    %v567 = vld [vmem:[#allocation2 + $0xee8] sm:$0xff]
    %v568 = vld [vmem:[#allocation2 + $0xef0] sm:$0xff]
    %v569 = vld [vmem:[#allocation2 + $0xef8] sm:$0xff]
    %v570 = vld [vmem:[#allocation2 + $0xf00] sm:$0xff]
    %v571 = vld [vmem:[#allocation2 + $0xf08] sm:$0xff]
    %v572 = vld [vmem:[#allocation2 + $0xf10] sm:$0xff]
    %v573 = vld [vmem:[#allocation2 + $0xf18] sm:$0xff]
    %v574 = vld [vmem:[#allocation2 + $0xf20] sm:$0xff]
    %v575 = vld [vmem:[#allocation2 + $0xf28] sm:$0xff]
    %v576 = vld [vmem:[#allocation2 + $0xf30] sm:$0xff]
    %v577 = vld [vmem:[#allocation2 + $0xf38] sm:$0xff]
    %v578 = vld [vmem:[#allocation2 + $0xf40] sm:$0xff]
    %v579 = vld [vmem:[#allocation2 + $0xf48] sm:$0xff]
    %v580 = vld [vmem:[#allocation2 + $0xf50] sm:$0xff]
    %v581 = vld [vmem:[#allocation2 + $0xf58] sm:$0xff]
    %v582 = vld [vmem:[#allocation2 + $0xf60] sm:$0xff]
    %v583 = vld [vmem:[#allocation2 + $0xf68] sm:$0xff]
    %v584 = vld [vmem:[#allocation2 + $0xf70] sm:$0xff]
    %v585 = vld [vmem:[#allocation2 + $0xf78] sm:$0xff]
    %v586 = vld [vmem:[#allocation2 + $0xf80] sm:$0xff]
    %v587 = vld [vmem:[#allocation2 + $0xf88] sm:$0xff]
    %v588 = vld [vmem:[#allocation2 + $0xf90] sm:$0xff]
    %v589 = vld [vmem:[#allocation2 + $0xf98] sm:$0xff]
    %v590 = vld [vmem:[#allocation2 + $0xfa0] sm:$0xff]
    %v591 = vld [vmem:[#allocation2 + $0xfa8] sm:$0xff]
    %v592 = vld [vmem:[#allocation2 + $0xfb0] sm:$0xff]
    %v593 = vld [vmem:[#allocation2 + $0xfb8] sm:$0xff]
    %v594 = vld [vmem:[#allocation2 + $0xfc0] sm:$0xff]
    %v595 = vld [vmem:[#allocation2 + $0xfc8] sm:$0xff]
    %v596 = vld [vmem:[#allocation2 + $0xfd0] sm:$0xff]
    %v597 = vld [vmem:[#allocation2 + $0xfd8] sm:$0xff]
    %v598 = vld [vmem:[#allocation2 + $0xfe0] sm:$0xff]
    %v599 = vld [vmem:[#allocation2 + $0xfe8] sm:$0xff]
    %v600 = vld [vmem:[#allocation2 + $0xff0] sm:$0xff]
    %v601 = vld [vmem:[#allocation2 + $0xff8] sm:$0xff]
    %v602 = vld [vmem:[#allocation4] sm:$0xf]
    %v604 = vlaneseq
    %v605 = vshrl.u32 %v604, 7
    %v606 = vsub.s32 0, %v605
    %v607 = vrot.slane %v602, %v606
    %v608 = vlaneseq
    %v609 = vshrl.u32 %v608, 7
    %v610 = vsub.s32 1, %v609
    %v611 = vrot.slane %v602, %v610
    %v612 = vlaneseq
    %v613 = vshrl.u32 %v612, 7
    %v614 = vsub.s32 2, %v613
    %v615 = vrot.slane %v602, %v614
    %v616 = vlaneseq
    %v617 = vshrl.u32 %v616, 7
    %v618 = vsub.s32 3, %v617
    %v619 = vrot.slane %v602, %v618
    %v626 = vcombine.high %v88, %v88
    %v628 = vunpack.c.l.s4 1983009808
    %v629 = vunpack.c.0.s8 %v628
    %v630 = vlaneseq
    %v631 = vshrl.u32 %v630, 7
    %v632 = vsub.s32 %v629, %v631
    %v633 = vrot.slane %v88, %v632
    %v635 = vunpack.c.l.s4 1983009808
    %v636 = vunpack.c.0.s8 %v635
    %v637 = vlaneseq
    %v638 = vshrl.u32 %v637, 7
    %v639 = vsub.s32 %v636, %v638
    %v640 = vrot.slane %v626, %v639
    %v641 = vcombine.high %v633, %v633
    %v642 = vcombine.high %v640, %v640
    %v643 = vcombine.high %v89, %v89
    %v645 = vunpack.c.l.s4 1983009808
    %v646 = vunpack.c.0.s8 %v645
    %v647 = vlaneseq
    %v648 = vshrl.u32 %v647, 7
    %v649 = vsub.s32 %v646, %v648
    %v650 = vrot.slane %v89, %v649
    %v652 = vunpack.c.l.s4 1983009808
    %v653 = vunpack.c.0.s8 %v652
    %v654 = vlaneseq
    %v655 = vshrl.u32 %v654, 7
    %v656 = vsub.s32 %v653, %v655
    %v657 = vrot.slane %v643, %v656
    %v658 = vcombine.high %v650, %v650
    %v659 = vcombine.high %v657, %v657
    %668 = vmatprep.subr.mxu0 %v91
    %669 = vmatpush1.msra.mxu0 %v90
    %670 = vmatprep.subr.mxu0 %v95
    %671 = vmatpush1.msra.mxu0 %v94
    %672 = vmatprep.subr.mxu0 %v99
    %673 = vmatpush1.msra.mxu0 %v98
    %674 = vmatprep.subr.mxu0 %v103
    %675 = vmatpush1.msra.mxu0 %v102
    %676 = vmatprep.subr.mxu0 %v107
    %677 = vmatpush1.msra.mxu0 %v106
    %678 = vmatprep.subr.mxu0 %v111
    %679 = vmatpush1.msra.mxu0 %v110
    %680 = vmatprep.subr.mxu0 %v115
    %681 = vmatpush1.msra.mxu0 %v114
    %682 = vmatprep.subr.mxu0 %v119
    %683 = vmatpush1.msra.mxu0 %v118
    %684 = vmatprep.subr.mxu0 %v123
    %685 = vmatpush1.msra.mxu0 %v122
    %686 = vmatprep.subr.mxu0 %v127
    %687 = vmatpush1.msra.mxu0 %v126
    %688 = vmatprep.subr.mxu0 %v131
    %689 = vmatpush1.msra.mxu0 %v130
    %690 = vmatprep.subr.mxu0 %v135
    %691 = vmatpush1.msra.mxu0 %v134
    %692 = vmatprep.subr.mxu0 %v139
    %693 = vmatpush1.msra.mxu0 %v138
    %694 = vmatprep.subr.mxu0 %v143
    %695 = vmatpush1.msra.mxu0 %v142
    %696 = vmatprep.subr.mxu0 %v147
    %697 = vmatpush1.msra.mxu0 %v146
    %698 = vmatprep.subr.mxu0 %v151
    %699 = vmatpush1.msra.mxu0 %v150
    %700 = vmatprep.subr.mxu0 %v155
    %701 = vmatpush1.msra.mxu0 %v154
    %702 = vmatprep.subr.mxu0 %v159
    %703 = vmatpush1.msra.mxu0 %v158
    %704 = vmatprep.subr.mxu0 %v163
    %705 = vmatpush1.msra.mxu0 %v162
    %706 = vmatprep.subr.mxu0 %v167
    %707 = vmatpush1.msra.mxu0 %v166
    %708 = vmatprep.subr.mxu0 %v171
    %709 = vmatpush1.msra.mxu0 %v170
    %710 = vmatprep.subr.mxu0 %v175
    %711 = vmatpush1.msra.mxu0 %v174
    %712 = vmatprep.subr.mxu0 %v179
    %713 = vmatpush1.msra.mxu0 %v178
    %714 = vmatprep.subr.mxu0 %v183
    %715 = vmatpush1.msra.mxu0 %v182
    %716 = vmatprep.subr.mxu0 %v187
    %717 = vmatpush1.msra.mxu0 %v186
    %718 = vmatprep.subr.mxu0 %v191
    %719 = vmatpush1.msra.mxu0 %v190
    %720 = vmatprep.subr.mxu0 %v195
    %721 = vmatpush1.msra.mxu0 %v194
    %722 = vmatprep.subr.mxu0 %v199
    %723 = vmatpush1.msra.mxu0 %v198
    %724 = vmatprep.subr.mxu0 %v203
    %725 = vmatpush1.msra.mxu0 %v202
    %726 = vmatprep.subr.mxu0 %v207
    %727 = vmatpush1.msra.mxu0 %v206
    %728 = vmatprep.subr.mxu0 %v211
    %729 = vmatpush1.msra.mxu0 %v210
    %730 = vmatprep.subr.mxu0 %v215
    %731 = vmatpush1.msra.mxu0 %v214
    %732 = vmatprep.mubr.f32.mxu0 %v641
    %733 = vmatmul.mubr.f32.gmra.mrb[0].mxu0 %v633
    %v734 = vpop.f32.mrb[0].mxu0
    %v735 = vadd.f32 %v607, %v734
    %v736 = vpop.f32.mrb[0].mxu0
    %v737 = vadd.f32 %v611, %v736
    %738 = vdwg.mxu0
    %739 = vmatprep.subr.mxu0 %v219
    %740 = vmatpush1.msra.mxu0 %v218
    %741 = vmatprep.subr.mxu0 %v223
    %742 = vmatpush1.msra.mxu0 %v222
    %743 = vmatprep.subr.mxu0 %v227
    %744 = vmatpush1.msra.mxu0 %v226
    %745 = vmatprep.subr.mxu0 %v231
    %746 = vmatpush1.msra.mxu0 %v230
    %747 = vmatprep.subr.mxu0 %v235
    %748 = vmatpush1.msra.mxu0 %v234
    %749 = vmatprep.subr.mxu0 %v239
    %750 = vmatpush1.msra.mxu0 %v238
    %751 = vmatprep.subr.mxu0 %v243
    %752 = vmatpush1.msra.mxu0 %v242
    %753 = vmatprep.subr.mxu0 %v247
    %754 = vmatpush1.msra.mxu0 %v246
    %755 = vmatprep.subr.mxu0 %v251
    %756 = vmatpush1.msra.mxu0 %v250
    %757 = vmatprep.subr.mxu0 %v255
    %758 = vmatpush1.msra.mxu0 %v254
    %759 = vmatprep.subr.mxu0 %v259
    %760 = vmatpush1.msra.mxu0 %v258
    %761 = vmatprep.subr.mxu0 %v263
    %762 = vmatpush1.msra.mxu0 %v262
    %763 = vmatprep.subr.mxu0 %v267
    %764 = vmatpush1.msra.mxu0 %v266
    %765 = vmatprep.subr.mxu0 %v271
    %766 = vmatpush1.msra.mxu0 %v270
    %767 = vmatprep.subr.mxu0 %v275
    %768 = vmatpush1.msra.mxu0 %v274
    %769 = vmatprep.subr.mxu0 %v279
    %770 = vmatpush1.msra.mxu0 %v278
    %771 = vmatprep.subr.mxu0 %v283
    %772 = vmatpush1.msra.mxu0 %v282
    %773 = vmatprep.subr.mxu0 %v287
    %774 = vmatpush1.msra.mxu0 %v286
    %775 = vmatprep.subr.mxu0 %v291
    %776 = vmatpush1.msra.mxu0 %v290
    %777 = vmatprep.subr.mxu0 %v295
    %778 = vmatpush1.msra.mxu0 %v294
    %779 = vmatprep.subr.mxu0 %v299
    %780 = vmatpush1.msra.mxu0 %v298
    %781 = vmatprep.subr.mxu0 %v303
    %782 = vmatpush1.msra.mxu0 %v302
    %783 = vmatprep.subr.mxu0 %v307
    %784 = vmatpush1.msra.mxu0 %v306
    %785 = vmatprep.subr.mxu0 %v311
    %786 = vmatpush1.msra.mxu0 %v310
    %787 = vmatprep.subr.mxu0 %v315
    %788 = vmatpush1.msra.mxu0 %v314
    %789 = vmatprep.subr.mxu0 %v319
    %790 = vmatpush1.msra.mxu0 %v318
    %791 = vmatprep.subr.mxu0 %v323
    %792 = vmatpush1.msra.mxu0 %v322
    %793 = vmatprep.subr.mxu0 %v327
    %794 = vmatpush1.msra.mxu0 %v326
    %795 = vmatprep.subr.mxu0 %v331
    %796 = vmatpush1.msra.mxu0 %v330
    %797 = vmatprep.subr.mxu0 %v335
    %798 = vmatpush1.msra.mxu0 %v334
    %799 = vmatprep.subr.mxu0 %v339
    %800 = vmatpush1.msra.mxu0 %v338
    %801 = vmatprep.subr.mxu0 %v343
    %802 = vmatpush1.msra.mxu0 %v342
    %803 = vmatprep.mubr.f32.mxu0 %v642
    %804 = vmatmul.mubr.f32.gmra.mrb[0].mxu0 %v640
    %v805 = vpop.f32.mrb[0].mxu0
    %v806 = vadd.f32 %v735, %v805
    %v807 = vpop.f32.mrb[0].mxu0
    %v808 = vadd.f32 %v737, %v807
    %809 = vdwg.mxu0
    %810 = vmatprep.subr.mxu0 %v347
    %811 = vmatpush1.msra.mxu0 %v346
    %812 = vmatprep.subr.mxu0 %v351
    %813 = vmatpush1.msra.mxu0 %v350
    %814 = vmatprep.subr.mxu0 %v355
    %815 = vmatpush1.msra.mxu0 %v354
    %816 = vmatprep.subr.mxu0 %v359
    %817 = vmatpush1.msra.mxu0 %v358
    %818 = vmatprep.subr.mxu0 %v363
    %819 = vmatpush1.msra.mxu0 %v362
    %820 = vmatprep.subr.mxu0 %v367
    %821 = vmatpush1.msra.mxu0 %v366
    %822 = vmatprep.subr.mxu0 %v371
    %823 = vmatpush1.msra.mxu0 %v370
    %824 = vmatprep.subr.mxu0 %v375
    %825 = vmatpush1.msra.mxu0 %v374
    %826 = vmatprep.subr.mxu0 %v379
    %827 = vmatpush1.msra.mxu0 %v378
    %828 = vmatprep.subr.mxu0 %v383
    %829 = vmatpush1.msra.mxu0 %v382
    %830 = vmatprep.subr.mxu0 %v387
    %831 = vmatpush1.msra.mxu0 %v386
    %832 = vmatprep.subr.mxu0 %v391
    %833 = vmatpush1.msra.mxu0 %v390
    %834 = vmatprep.subr.mxu0 %v395
    %835 = vmatpush1.msra.mxu0 %v394
    %836 = vmatprep.subr.mxu0 %v399
    %837 = vmatpush1.msra.mxu0 %v398
    %838 = vmatprep.subr.mxu0 %v403
    %839 = vmatpush1.msra.mxu0 %v402
    %840 = vmatprep.subr.mxu0 %v407
    %841 = vmatpush1.msra.mxu0 %v406
    %842 = vmatprep.subr.mxu0 %v411
    %843 = vmatpush1.msra.mxu0 %v410
    %844 = vmatprep.subr.mxu0 %v415
    %845 = vmatpush1.msra.mxu0 %v414
    %846 = vmatprep.subr.mxu0 %v419
    %847 = vmatpush1.msra.mxu0 %v418
    %848 = vmatprep.subr.mxu0 %v423
    %849 = vmatpush1.msra.mxu0 %v422
    %850 = vmatprep.subr.mxu0 %v427
    %851 = vmatpush1.msra.mxu0 %v426
    %852 = vmatprep.subr.mxu0 %v431
    %853 = vmatpush1.msra.mxu0 %v430
    %854 = vmatprep.subr.mxu0 %v435
    %855 = vmatpush1.msra.mxu0 %v434
    %856 = vmatprep.subr.mxu0 %v439
    %857 = vmatpush1.msra.mxu0 %v438
    %858 = vmatprep.subr.mxu0 %v443
    %859 = vmatpush1.msra.mxu0 %v442
    %860 = vmatprep.subr.mxu0 %v447
    %861 = vmatpush1.msra.mxu0 %v446
    %862 = vmatprep.subr.mxu0 %v451
    %863 = vmatpush1.msra.mxu0 %v450
    %864 = vmatprep.subr.mxu0 %v455
    %865 = vmatpush1.msra.mxu0 %v454
    %866 = vmatprep.subr.mxu0 %v459
    %867 = vmatpush1.msra.mxu0 %v458
    %868 = vmatprep.subr.mxu0 %v463
    %869 = vmatpush1.msra.mxu0 %v462
    %870 = vmatprep.subr.mxu0 %v467
    %871 = vmatpush1.msra.mxu0 %v466
    %872 = vmatprep.subr.mxu0 %v471
    %873 = vmatpush1.msra.mxu0 %v470
    %874 = vmatprep.mubr.f32.mxu0 %v658
    %875 = vmatmul.mubr.f32.gmra.mrb[0].mxu0 %v650
    %v876 = vpop.f32.mrb[0].mxu0
    %v877 = vadd.f32 %v806, %v876
    %v878 = vpop.f32.mrb[0].mxu0
    %v879 = vadd.f32 %v808, %v878
    %880 = vdwg.mxu0
    %881 = vmatprep.subr.mxu0 %v475
    %882 = vmatpush1.msra.mxu0 %v474
    %883 = vmatprep.subr.mxu0 %v479
    %884 = vmatpush1.msra.mxu0 %v478
    %885 = vmatprep.subr.mxu0 %v483
    %886 = vmatpush1.msra.mxu0 %v482
    %887 = vmatprep.subr.mxu0 %v487
    %888 = vmatpush1.msra.mxu0 %v486
    %889 = vmatprep.subr.mxu0 %v491
    %890 = vmatpush1.msra.mxu0 %v490
    %891 = vmatprep.subr.mxu0 %v495
    %892 = vmatpush1.msra.mxu0 %v494
    %893 = vmatprep.subr.mxu0 %v499
    %894 = vmatpush1.msra.mxu0 %v498
    %895 = vmatprep.subr.mxu0 %v503
    %896 = vmatpush1.msra.mxu0 %v502
    %897 = vmatprep.subr.mxu0 %v507
    %898 = vmatpush1.msra.mxu0 %v506
    %899 = vmatprep.subr.mxu0 %v511
    %900 = vmatpush1.msra.mxu0 %v510
    %901 = vmatprep.subr.mxu0 %v515
    %902 = vmatpush1.msra.mxu0 %v514
    %903 = vmatprep.subr.mxu0 %v519
    %904 = vmatpush1.msra.mxu0 %v518
    %905 = vmatprep.subr.mxu0 %v523
    %906 = vmatpush1.msra.mxu0 %v522
    %907 = vmatprep.subr.mxu0 %v527
    %908 = vmatpush1.msra.mxu0 %v526
    %909 = vmatprep.subr.mxu0 %v531
    %910 = vmatpush1.msra.mxu0 %v530
    %911 = vmatprep.subr.mxu0 %v535
    %912 = vmatpush1.msra.mxu0 %v534
    %913 = vmatprep.subr.mxu0 %v539
    %914 = vmatpush1.msra.mxu0 %v538
    %915 = vmatprep.subr.mxu0 %v543
    %916 = vmatpush1.msra.mxu0 %v542
    %917 = vmatprep.subr.mxu0 %v547
    %918 = vmatpush1.msra.mxu0 %v546
    %919 = vmatprep.subr.mxu0 %v551
    %920 = vmatpush1.msra.mxu0 %v550
    %921 = vmatprep.subr.mxu0 %v555
    %922 = vmatpush1.msra.mxu0 %v554
    %923 = vmatprep.subr.mxu0 %v559
    %924 = vmatpush1.msra.mxu0 %v558
    %925 = vmatprep.subr.mxu0 %v563
    %926 = vmatpush1.msra.mxu0 %v562
    %927 = vmatprep.subr.mxu0 %v567
    %928 = vmatpush1.msra.mxu0 %v566
    %929 = vmatprep.subr.mxu0 %v571
    %930 = vmatpush1.msra.mxu0 %v570
    %931 = vmatprep.subr.mxu0 %v575
    %932 = vmatpush1.msra.mxu0 %v574
    %933 = vmatprep.subr.mxu0 %v579
    %934 = vmatpush1.msra.mxu0 %v578
    %935 = vmatprep.subr.mxu0 %v583
    %936 = vmatpush1.msra.mxu0 %v582
    %937 = vmatprep.subr.mxu0 %v587
    %938 = vmatpush1.msra.mxu0 %v586
    %939 = vmatprep.subr.mxu0 %v591
    %940 = vmatpush1.msra.mxu0 %v590
    %941 = vmatprep.subr.mxu0 %v595
    %942 = vmatpush1.msra.mxu0 %v594
    %943 = vmatprep.subr.mxu0 %v599
    %944 = vmatpush1.msra.mxu0 %v598
    %945 = vmatprep.mubr.f32.mxu0 %v659
    %946 = vmatmul.mubr.f32.gmra.mrb[0].mxu0 %v657
    %v947 = vpop.f32.mrb[0].mxu0
    %v948 = vadd.f32 %v877, %v947
    %v949 = vpop.f32.mrb[0].mxu0
    %v950 = vadd.f32 %v879, %v949
    %951 = vdwg.mxu0
    %952 = vmatprep.subr.mxu0 %v93
    %953 = vmatpush1.msra.mxu0 %v92
    %954 = vmatprep.subr.mxu0 %v97
    %955 = vmatpush1.msra.mxu0 %v96
    %956 = vmatprep.subr.mxu0 %v101
    %957 = vmatpush1.msra.mxu0 %v100
    %958 = vmatprep.subr.mxu0 %v105
    %959 = vmatpush1.msra.mxu0 %v104
    %960 = vmatprep.subr.mxu0 %v109
    %961 = vmatpush1.msra.mxu0 %v108
    %962 = vmatprep.subr.mxu0 %v113
    %963 = vmatpush1.msra.mxu0 %v112
    %964 = vmatprep.subr.mxu0 %v117
    %965 = vmatpush1.msra.mxu0 %v116
    %966 = vmatprep.subr.mxu0 %v121
    %967 = vmatpush1.msra.mxu0 %v120
    %968 = vmatprep.subr.mxu0 %v125
    %969 = vmatpush1.msra.mxu0 %v124
    %970 = vmatprep.subr.mxu0 %v129
    %971 = vmatpush1.msra.mxu0 %v128
    %972 = vmatprep.subr.mxu0 %v133
    %973 = vmatpush1.msra.mxu0 %v132
    %974 = vmatprep.subr.mxu0 %v137
    %975 = vmatpush1.msra.mxu0 %v136
    %976 = vmatprep.subr.mxu0 %v141
    %977 = vmatpush1.msra.mxu0 %v140
    %978 = vmatprep.subr.mxu0 %v145
    %979 = vmatpush1.msra.mxu0 %v144
    %980 = vmatprep.subr.mxu0 %v149
    %981 = vmatpush1.msra.mxu0 %v148
    %982 = vmatprep.subr.mxu0 %v153
    %983 = vmatpush1.msra.mxu0 %v152
    %984 = vmatprep.subr.mxu0 %v157
    %985 = vmatpush1.msra.mxu0 %v156
    %986 = vmatprep.subr.mxu0 %v161
    %987 = vmatpush1.msra.mxu0 %v160
    %988 = vmatprep.subr.mxu0 %v165
    %989 = vmatpush1.msra.mxu0 %v164
    %990 = vmatprep.subr.mxu0 %v169
    %991 = vmatpush1.msra.mxu0 %v168
    %992 = vmatprep.subr.mxu0 %v173
    %993 = vmatpush1.msra.mxu0 %v172
    %994 = vmatprep.subr.mxu0 %v177
    %995 = vmatpush1.msra.mxu0 %v176
    %996 = vmatprep.subr.mxu0 %v181
    %997 = vmatpush1.msra.mxu0 %v180
    %998 = vmatprep.subr.mxu0 %v185
    %999 = vmatpush1.msra.mxu0 %v184
    %1000 = vmatprep.subr.mxu0 %v189
    %1001 = vmatpush1.msra.mxu0 %v188
    %1002 = vmatprep.subr.mxu0 %v193
    %1003 = vmatpush1.msra.mxu0 %v192
    %1004 = vmatprep.subr.mxu0 %v197
    %1005 = vmatpush1.msra.mxu0 %v196
    %1006 = vmatprep.subr.mxu0 %v201
    %1007 = vmatpush1.msra.mxu0 %v200
    %1008 = vmatprep.subr.mxu0 %v205
    %1009 = vmatpush1.msra.mxu0 %v204
    %1010 = vmatprep.subr.mxu0 %v209
    %1011 = vmatpush1.msra.mxu0 %v208
    %1012 = vmatprep.subr.mxu0 %v213
    %1013 = vmatpush1.msra.mxu0 %v212
    %1014 = vmatprep.subr.mxu0 %v217
    %1015 = vmatpush1.msra.mxu0 %v216
    %1016 = vmatprep.mubr.f32.mxu0 %v641
    %1017 = vmatmul.mubr.f32.gmra.mrb[0].mxu0 %v633
    %v1018 = vpop.f32.mrb[0].mxu0
    %v1019 = vadd.f32 %v615, %v1018
    %v1020 = vpop.f32.mrb[0].mxu0
    %v1021 = vadd.f32 %v619, %v1020
    %1022 = vdwg.mxu0
    %1023 = vmatprep.subr.mxu0 %v221
    %1024 = vmatpush1.msra.mxu0 %v220
    %1025 = vmatprep.subr.mxu0 %v225
    %1026 = vmatpush1.msra.mxu0 %v224
    %1027 = vmatprep.subr.mxu0 %v229
    %1028 = vmatpush1.msra.mxu0 %v228
    %1029 = vmatprep.subr.mxu0 %v233
    %1030 = vmatpush1.msra.mxu0 %v232
    %1031 = vmatprep.subr.mxu0 %v237
    %1032 = vmatpush1.msra.mxu0 %v236
    %1033 = vmatprep.subr.mxu0 %v241
    %1034 = vmatpush1.msra.mxu0 %v240
    %1035 = vmatprep.subr.mxu0 %v245
    %1036 = vmatpush1.msra.mxu0 %v244
    %1037 = vmatprep.subr.mxu0 %v249
    %1038 = vmatpush1.msra.mxu0 %v248
    %1039 = vmatprep.subr.mxu0 %v253
    %1040 = vmatpush1.msra.mxu0 %v252
    %1041 = vmatprep.subr.mxu0 %v257
    %1042 = vmatpush1.msra.mxu0 %v256
    %1043 = vmatprep.subr.mxu0 %v261
    %1044 = vmatpush1.msra.mxu0 %v260
    %1045 = vmatprep.subr.mxu0 %v265
    %1046 = vmatpush1.msra.mxu0 %v264
    %1047 = vmatprep.subr.mxu0 %v269
    %1048 = vmatpush1.msra.mxu0 %v268
    %1049 = vmatprep.subr.mxu0 %v273
    %1050 = vmatpush1.msra.mxu0 %v272
    %1051 = vmatprep.subr.mxu0 %v277
    %1052 = vmatpush1.msra.mxu0 %v276
    %1053 = vmatprep.subr.mxu0 %v281
    %1054 = vmatpush1.msra.mxu0 %v280
    %1055 = vmatprep.subr.mxu0 %v285
    %1056 = vmatpush1.msra.mxu0 %v284
    %1057 = vmatprep.subr.mxu0 %v289
    %1058 = vmatpush1.msra.mxu0 %v288
    %1059 = vmatprep.subr.mxu0 %v293
    %1060 = vmatpush1.msra.mxu0 %v292
    %1061 = vmatprep.subr.mxu0 %v297
    %1062 = vmatpush1.msra.mxu0 %v296
    %1063 = vmatprep.subr.mxu0 %v301
    %1064 = vmatpush1.msra.mxu0 %v300
    %1065 = vmatprep.subr.mxu0 %v305
    %1066 = vmatpush1.msra.mxu0 %v304
    %1067 = vmatprep.subr.mxu0 %v309
    %1068 = vmatpush1.msra.mxu0 %v308
    %1069 = vmatprep.subr.mxu0 %v313
    %1070 = vmatpush1.msra.mxu0 %v312
    %1071 = vmatprep.subr.mxu0 %v317
    %1072 = vmatpush1.msra.mxu0 %v316
    %1073 = vmatprep.subr.mxu0 %v321
    %1074 = vmatpush1.msra.mxu0 %v320
    %1075 = vmatprep.subr.mxu0 %v325
    %1076 = vmatpush1.msra.mxu0 %v324
    %1077 = vmatprep.subr.mxu0 %v329
    %1078 = vmatpush1.msra.mxu0 %v328
    %1079 = vmatprep.subr.mxu0 %v333
    %1080 = vmatpush1.msra.mxu0 %v332
    %1081 = vmatprep.subr.mxu0 %v337
    %1082 = vmatpush1.msra.mxu0 %v336
    %1083 = vmatprep.subr.mxu0 %v341
    %1084 = vmatpush1.msra.mxu0 %v340
    %1085 = vmatprep.subr.mxu0 %v345
    %1086 = vmatpush1.msra.mxu0 %v344
    %1087 = vmatprep.mubr.f32.mxu0 %v642
    %1088 = vmatmul.mubr.f32.gmra.mrb[0].mxu0 %v640
    %v1089 = vpop.f32.mrb[0].mxu0
    %v1090 = vadd.f32 %v1019, %v1089
    %v1091 = vpop.f32.mrb[0].mxu0
    %v1092 = vadd.f32 %v1021, %v1091
    %1093 = vdwg.mxu0
    %1094 = vmatprep.subr.mxu0 %v349
    %1095 = vmatpush1.msra.mxu0 %v348
    %1096 = vmatprep.subr.mxu0 %v353
    %1097 = vmatpush1.msra.mxu0 %v352
    %1098 = vmatprep.subr.mxu0 %v357
    %1099 = vmatpush1.msra.mxu0 %v356
    %1100 = vmatprep.subr.mxu0 %v361
    %1101 = vmatpush1.msra.mxu0 %v360
    %1102 = vmatprep.subr.mxu0 %v365
    %1103 = vmatpush1.msra.mxu0 %v364
    %1104 = vmatprep.subr.mxu0 %v369
    %1105 = vmatpush1.msra.mxu0 %v368
    %1106 = vmatprep.subr.mxu0 %v373
    %1107 = vmatpush1.msra.mxu0 %v372
    %1108 = vmatprep.subr.mxu0 %v377
    %1109 = vmatpush1.msra.mxu0 %v376
    %1110 = vmatprep.subr.mxu0 %v381
    %1111 = vmatpush1.msra.mxu0 %v380
    %1112 = vmatprep.subr.mxu0 %v385
    %1113 = vmatpush1.msra.mxu0 %v384
    %1114 = vmatprep.subr.mxu0 %v389
    %1115 = vmatpush1.msra.mxu0 %v388
    %1116 = vmatprep.subr.mxu0 %v393
    %1117 = vmatpush1.msra.mxu0 %v392
    %1118 = vmatprep.subr.mxu0 %v397
    %1119 = vmatpush1.msra.mxu0 %v396
    %1120 = vmatprep.subr.mxu0 %v401
    %1121 = vmatpush1.msra.mxu0 %v400
    %1122 = vmatprep.subr.mxu0 %v405
    %1123 = vmatpush1.msra.mxu0 %v404
    %1124 = vmatprep.subr.mxu0 %v409
    %1125 = vmatpush1.msra.mxu0 %v408
    %1126 = vmatprep.subr.mxu0 %v413
    %1127 = vmatpush1.msra.mxu0 %v412
    %1128 = vmatprep.subr.mxu0 %v417
    %1129 = vmatpush1.msra.mxu0 %v416
    %1130 = vmatprep.subr.mxu0 %v421
    %1131 = vmatpush1.msra.mxu0 %v420
    %1132 = vmatprep.subr.mxu0 %v425
    %1133 = vmatpush1.msra.mxu0 %v424
    %1134 = vmatprep.subr.mxu0 %v429
    %1135 = vmatpush1.msra.mxu0 %v428
    %1136 = vmatprep.subr.mxu0 %v433
    %1137 = vmatpush1.msra.mxu0 %v432
    %1138 = vmatprep.subr.mxu0 %v437
    %1139 = vmatpush1.msra.mxu0 %v436
    %1140 = vmatprep.subr.mxu0 %v441
    %1141 = vmatpush1.msra.mxu0 %v440
    %1142 = vmatprep.subr.mxu0 %v445
    %1143 = vmatpush1.msra.mxu0 %v444
    %1144 = vmatprep.subr.mxu0 %v449
    %1145 = vmatpush1.msra.mxu0 %v448
    %1146 = vmatprep.subr.mxu0 %v453
    %1147 = vmatpush1.msra.mxu0 %v452
    %1148 = vmatprep.subr.mxu0 %v457
    %1149 = vmatpush1.msra.mxu0 %v456
    %1150 = vmatprep.subr.mxu0 %v461
    %1151 = vmatpush1.msra.mxu0 %v460
    %1152 = vmatprep.subr.mxu0 %v465
    %1153 = vmatpush1.msra.mxu0 %v464
    %1154 = vmatprep.subr.mxu0 %v469
    %1155 = vmatpush1.msra.mxu0 %v468
    %1156 = vmatprep.subr.mxu0 %v473
    %1157 = vmatpush1.msra.mxu0 %v472
    %1158 = vmatprep.mubr.f32.mxu0 %v658
    %1159 = vmatmul.mubr.f32.gmra.mrb[0].mxu0 %v650
    %v1160 = vpop.f32.mrb[0].mxu0
    %v1161 = vadd.f32 %v1090, %v1160
    %v1162 = vpop.f32.mrb[0].mxu0
    %v1163 = vadd.f32 %v1092, %v1162
    %1164 = vdwg.mxu0
    %1165 = vmatprep.subr.mxu0 %v477
    %1166 = vmatpush1.msra.mxu0 %v476
    %1167 = vmatprep.subr.mxu0 %v481
    %1168 = vmatpush1.msra.mxu0 %v480
    %1169 = vmatprep.subr.mxu0 %v485
    %1170 = vmatpush1.msra.mxu0 %v484
    %1171 = vmatprep.subr.mxu0 %v489
    %1172 = vmatpush1.msra.mxu0 %v488
    %1173 = vmatprep.subr.mxu0 %v493
    %1174 = vmatpush1.msra.mxu0 %v492
    %1175 = vmatprep.subr.mxu0 %v497
    %1176 = vmatpush1.msra.mxu0 %v496
    %1177 = vmatprep.subr.mxu0 %v501
    %1178 = vmatpush1.msra.mxu0 %v500
    %1179 = vmatprep.subr.mxu0 %v505
    %1180 = vmatpush1.msra.mxu0 %v504
    %1181 = vmatprep.subr.mxu0 %v509
    %1182 = vmatpush1.msra.mxu0 %v508
    %1183 = vmatprep.subr.mxu0 %v513
    %1184 = vmatpush1.msra.mxu0 %v512
    %1185 = vmatprep.subr.mxu0 %v517
    %1186 = vmatpush1.msra.mxu0 %v516
    %1187 = vmatprep.subr.mxu0 %v521
    %1188 = vmatpush1.msra.mxu0 %v520
    %1189 = vmatprep.subr.mxu0 %v525
    %1190 = vmatpush1.msra.mxu0 %v524
    %1191 = vmatprep.subr.mxu0 %v529
    %1192 = vmatpush1.msra.mxu0 %v528
    %1193 = vmatprep.subr.mxu0 %v533
    %1194 = vmatpush1.msra.mxu0 %v532
    %1195 = vmatprep.subr.mxu0 %v537
    %1196 = vmatpush1.msra.mxu0 %v536
    %1197 = vmatprep.subr.mxu0 %v541
    %1198 = vmatpush1.msra.mxu0 %v540
    %1199 = vmatprep.subr.mxu0 %v545
    %1200 = vmatpush1.msra.mxu0 %v544
    %1201 = vmatprep.subr.mxu0 %v549
    %1202 = vmatpush1.msra.mxu0 %v548
    %1203 = vmatprep.subr.mxu0 %v553
    %1204 = vmatpush1.msra.mxu0 %v552
    %1205 = vmatprep.subr.mxu0 %v557
    %1206 = vmatpush1.msra.mxu0 %v556
    %1207 = vmatprep.subr.mxu0 %v561
    %1208 = vmatpush1.msra.mxu0 %v560
    %1209 = vmatprep.subr.mxu0 %v565
    %1210 = vmatpush1.msra.mxu0 %v564
    %1211 = vmatprep.subr.mxu0 %v569
    %1212 = vmatpush1.msra.mxu0 %v568
    %1213 = vmatprep.subr.mxu0 %v573
    %1214 = vmatpush1.msra.mxu0 %v572
    %1215 = vmatprep.subr.mxu0 %v577
    %1216 = vmatpush1.msra.mxu0 %v576
    %1217 = vmatprep.subr.mxu0 %v581
    %1218 = vmatpush1.msra.mxu0 %v580
    %1219 = vmatprep.subr.mxu0 %v585
    %1220 = vmatpush1.msra.mxu0 %v584
    %1221 = vmatprep.subr.mxu0 %v589
    %1222 = vmatpush1.msra.mxu0 %v588
    %1223 = vmatprep.subr.mxu0 %v593
    %1224 = vmatpush1.msra.mxu0 %v592
    %1225 = vmatprep.subr.mxu0 %v597
    %1226 = vmatpush1.msra.mxu0 %v596
    %1227 = vmatprep.subr.mxu0 %v601
    %1228 = vmatpush1.msra.mxu0 %v600
    %1229 = vmatprep.mubr.f32.mxu0 %v659
    %1230 = vmatmul.mubr.f32.gmra.mrb[0].mxu0 %v657
    %v1231 = vpop.f32.mrb[0].mxu0
    %v1232 = vadd.f32 %v1161, %v1231
    %v1233 = vpop.f32.mrb[0].mxu0
    %v1234 = vadd.f32 %v1163, %v1233
    %1235 = vdwg.mxu0
    %v1236 = vmax.f32 %v948, 0.0
    %v1237 = vmax.f32 %v950, 0.0
    %v1238 = vmax.f32 %v1232, 0.0
    %v1239 = vmax.f32 %v1234, 0.0
    %v1240 = vld [vmem:[#allocation6] sm:$0xff]
    %v1241 = vld [vmem:[#allocation6 + $0x8] sm:$0xff]
    %v1242 = vld [vmem:[#allocation6 + $0x10] sm:$0xff]
    %v1243 = vld [vmem:[#allocation6 + $0x18] sm:$0xff]
    %v1244 = vld [vmem:[#allocation6 + $0x20] sm:$0xff]
    %v1245 = vld [vmem:[#allocation6 + $0x28] sm:$0xff]
    %v1246 = vld [vmem:[#allocation6 + $0x30] sm:$0xff]
    %v1247 = vld [vmem:[#allocation6 + $0x38] sm:$0xff]
    %v1248 = vld [vmem:[#allocation6 + $0x40] sm:$0xff]
    %v1249 = vld [vmem:[#allocation6 + $0x48] sm:$0xff]
    %v1250 = vld [vmem:[#allocation6 + $0x50] sm:$0xff]
    %v1251 = vld [vmem:[#allocation6 + $0x58] sm:$0xff]
    %v1252 = vld [vmem:[#allocation6 + $0x60] sm:$0xff]
    %v1253 = vld [vmem:[#allocation6 + $0x68] sm:$0xff]
    %v1254 = vld [vmem:[#allocation6 + $0x70] sm:$0xff]
    %v1255 = vld [vmem:[#allocation6 + $0x78] sm:$0xff]
    %v1256 = vld [vmem:[#allocation6 + $0x80] sm:$0xff]
    %v1257 = vld [vmem:[#allocation6 + $0x88] sm:$0xff]
    %v1258 = vld [vmem:[#allocation6 + $0x90] sm:$0xff]
    %v1259 = vld [vmem:[#allocation6 + $0x98] sm:$0xff]
    %v1260 = vld [vmem:[#allocation6 + $0xa0] sm:$0xff]
    %v1261 = vld [vmem:[#allocation6 + $0xa8] sm:$0xff]
    %v1262 = vld [vmem:[#allocation6 + $0xb0] sm:$0xff]
    %v1263 = vld [vmem:[#allocation6 + $0xb8] sm:$0xff]
    %v1264 = vld [vmem:[#allocation6 + $0xc0] sm:$0xff]
    %v1265 = vld [vmem:[#allocation6 + $0xc8] sm:$0xff]
    %v1266 = vld [vmem:[#allocation6 + $0xd0] sm:$0xff]
    %v1267 = vld [vmem:[#allocation6 + $0xd8] sm:$0xff]
    %v1268 = vld [vmem:[#allocation6 + $0xe0] sm:$0xff]
    %v1269 = vld [vmem:[#allocation6 + $0xe8] sm:$0xff]
    %v1270 = vld [vmem:[#allocation6 + $0xf0] sm:$0xff]
    %v1271 = vld [vmem:[#allocation6 + $0xf8] sm:$0xff]
    %v1272 = vld [vmem:[#allocation6 + $0x100] sm:$0xff]
    %v1273 = vld [vmem:[#allocation6 + $0x108] sm:$0xff]
    %v1274 = vld [vmem:[#allocation6 + $0x110] sm:$0xff]
    %v1275 = vld [vmem:[#allocation6 + $0x118] sm:$0xff]
    %v1276 = vld [vmem:[#allocation6 + $0x120] sm:$0xff]
    %v1277 = vld [vmem:[#allocation6 + $0x128] sm:$0xff]
    %v1278 = vld [vmem:[#allocation6 + $0x130] sm:$0xff]
    %v1279 = vld [vmem:[#allocation6 + $0x138] sm:$0xff]
    %v1280 = vld [vmem:[#allocation6 + $0x140] sm:$0xff]
    %v1281 = vld [vmem:[#allocation6 + $0x148] sm:$0xff]
    %v1282 = vld [vmem:[#allocation6 + $0x150] sm:$0xff]
    %v1283 = vld [vmem:[#allocation6 + $0x158] sm:$0xff]
    %v1284 = vld [vmem:[#allocation6 + $0x160] sm:$0xff]
    %v1285 = vld [vmem:[#allocation6 + $0x168] sm:$0xff]
    %v1286 = vld [vmem:[#allocation6 + $0x170] sm:$0xff]
    %v1287 = vld [vmem:[#allocation6 + $0x178] sm:$0xff]
    %v1288 = vld [vmem:[#allocation6 + $0x180] sm:$0xff]
    %v1289 = vld [vmem:[#allocation6 + $0x188] sm:$0xff]
    %v1290 = vld [vmem:[#allocation6 + $0x190] sm:$0xff]
    %v1291 = vld [vmem:[#allocation6 + $0x198] sm:$0xff]
    %v1292 = vld [vmem:[#allocation6 + $0x1a0] sm:$0xff]
    %v1293 = vld [vmem:[#allocation6 + $0x1a8] sm:$0xff]
    %v1294 = vld [vmem:[#allocation6 + $0x1b0] sm:$0xff]
    %v1295 = vld [vmem:[#allocation6 + $0x1b8] sm:$0xff]
    %v1296 = vld [vmem:[#allocation6 + $0x1c0] sm:$0xff]
    %v1297 = vld [vmem:[#allocation6 + $0x1c8] sm:$0xff]
    %v1298 = vld [vmem:[#allocation6 + $0x1d0] sm:$0xff]
    %v1299 = vld [vmem:[#allocation6 + $0x1d8] sm:$0xff]
    %v1300 = vld [vmem:[#allocation6 + $0x1e0] sm:$0xff]
    %v1301 = vld [vmem:[#allocation6 + $0x1e8] sm:$0xff]
    %v1302 = vld [vmem:[#allocation6 + $0x1f0] sm:$0xff]
    %v1303 = vld [vmem:[#allocation6 + $0x1f8] sm:$0xff]
    %v1304 = vld [vmem:[#allocation6 + $0x200] sm:$0xff]
    %v1305 = vld [vmem:[#allocation6 + $0x208] sm:$0xff]
    %v1306 = vld [vmem:[#allocation6 + $0x210] sm:$0xff]
    %v1307 = vld [vmem:[#allocation6 + $0x218] sm:$0xff]
    %v1308 = vld [vmem:[#allocation6 + $0x220] sm:$0xff]
    %v1309 = vld [vmem:[#allocation6 + $0x228] sm:$0xff]
    %v1310 = vld [vmem:[#allocation6 + $0x230] sm:$0xff]
    %v1311 = vld [vmem:[#allocation6 + $0x238] sm:$0xff]
    %v1312 = vld [vmem:[#allocation6 + $0x240] sm:$0xff]
    %v1313 = vld [vmem:[#allocation6 + $0x248] sm:$0xff]
    %v1314 = vld [vmem:[#allocation6 + $0x250] sm:$0xff]
    %v1315 = vld [vmem:[#allocation6 + $0x258] sm:$0xff]
    %v1316 = vld [vmem:[#allocation6 + $0x260] sm:$0xff]
    %v1317 = vld [vmem:[#allocation6 + $0x268] sm:$0xff]
    %v1318 = vld [vmem:[#allocation6 + $0x270] sm:$0xff]
    %v1319 = vld [vmem:[#allocation6 + $0x278] sm:$0xff]
    %v1320 = vld [vmem:[#allocation6 + $0x280] sm:$0xff]
    %v1321 = vld [vmem:[#allocation6 + $0x288] sm:$0xff]
    %v1322 = vld [vmem:[#allocation6 + $0x290] sm:$0xff]
    %v1323 = vld [vmem:[#allocation6 + $0x298] sm:$0xff]
    %v1324 = vld [vmem:[#allocation6 + $0x2a0] sm:$0xff]
    %v1325 = vld [vmem:[#allocation6 + $0x2a8] sm:$0xff]
    %v1326 = vld [vmem:[#allocation6 + $0x2b0] sm:$0xff]
    %v1327 = vld [vmem:[#allocation6 + $0x2b8] sm:$0xff]
    %v1328 = vld [vmem:[#allocation6 + $0x2c0] sm:$0xff]
    %v1329 = vld [vmem:[#allocation6 + $0x2c8] sm:$0xff]
    %v1330 = vld [vmem:[#allocation6 + $0x2d0] sm:$0xff]
    %v1331 = vld [vmem:[#allocation6 + $0x2d8] sm:$0xff]
    %v1332 = vld [vmem:[#allocation6 + $0x2e0] sm:$0xff]
    %v1333 = vld [vmem:[#allocation6 + $0x2e8] sm:$0xff]
    %v1334 = vld [vmem:[#allocation6 + $0x2f0] sm:$0xff]
    %v1335 = vld [vmem:[#allocation6 + $0x2f8] sm:$0xff]
    %v1336 = vld [vmem:[#allocation6 + $0x300] sm:$0xff]
    %v1337 = vld [vmem:[#allocation6 + $0x308] sm:$0xff]
    %v1338 = vld [vmem:[#allocation6 + $0x310] sm:$0xff]
    %v1339 = vld [vmem:[#allocation6 + $0x318] sm:$0xff]
    %v1340 = vld [vmem:[#allocation6 + $0x320] sm:$0xff]
    %v1341 = vld [vmem:[#allocation6 + $0x328] sm:$0xff]
    %v1342 = vld [vmem:[#allocation6 + $0x330] sm:$0xff]
    %v1343 = vld [vmem:[#allocation6 + $0x338] sm:$0xff]
    %v1344 = vld [vmem:[#allocation6 + $0x340] sm:$0xff]
    %v1345 = vld [vmem:[#allocation6 + $0x348] sm:$0xff]
    %v1346 = vld [vmem:[#allocation6 + $0x350] sm:$0xff]
    %v1347 = vld [vmem:[#allocation6 + $0x358] sm:$0xff]
    %v1348 = vld [vmem:[#allocation6 + $0x360] sm:$0xff]
    %v1349 = vld [vmem:[#allocation6 + $0x368] sm:$0xff]
    %v1350 = vld [vmem:[#allocation6 + $0x370] sm:$0xff]
    %v1351 = vld [vmem:[#allocation6 + $0x378] sm:$0xff]
    %v1352 = vld [vmem:[#allocation6 + $0x380] sm:$0xff]
    %v1353 = vld [vmem:[#allocation6 + $0x388] sm:$0xff]
    %v1354 = vld [vmem:[#allocation6 + $0x390] sm:$0xff]
    %v1355 = vld [vmem:[#allocation6 + $0x398] sm:$0xff]
    %v1356 = vld [vmem:[#allocation6 + $0x3a0] sm:$0xff]
    %v1357 = vld [vmem:[#allocation6 + $0x3a8] sm:$0xff]
    %v1358 = vld [vmem:[#allocation6 + $0x3b0] sm:$0xff]
    %v1359 = vld [vmem:[#allocation6 + $0x3b8] sm:$0xff]
    %v1360 = vld [vmem:[#allocation6 + $0x3c0] sm:$0xff]
    %v1361 = vld [vmem:[#allocation6 + $0x3c8] sm:$0xff]
    %v1362 = vld [vmem:[#allocation6 + $0x3d0] sm:$0xff]
    %v1363 = vld [vmem:[#allocation6 + $0x3d8] sm:$0xff]
    %v1364 = vld [vmem:[#allocation6 + $0x3e0] sm:$0xff]
    %v1365 = vld [vmem:[#allocation6 + $0x3e8] sm:$0xff]
    %v1366 = vld [vmem:[#allocation6 + $0x3f0] sm:$0xff]
    %v1367 = vld [vmem:[#allocation6 + $0x3f8] sm:$0xff]
    %v1368 = vld [vmem:[#allocation7] sm:$0x3]
    %v1370 = vlaneseq
    %v1371 = vshrl.u32 %v1370, 7
    %v1372 = vsub.s32 0, %v1371
    %v1373 = vrot.slane %v1368, %v1372
    %v1374 = vlaneseq
    %v1375 = vshrl.u32 %v1374, 7
    %v1376 = vsub.s32 1, %v1375
    %v1377 = vrot.slane %v1368, %v1376
    %1380 = vmatprep.subr.mxu0 %v1241
    %1381 = vmatpush1.msra.mxu0 %v1240
    %1382 = vmatprep.subr.mxu0 %v1243
    %1383 = vmatpush1.msra.mxu0 %v1242
    %1384 = vmatprep.subr.mxu0 %v1245
    %1385 = vmatpush1.msra.mxu0 %v1244
    %1386 = vmatprep.subr.mxu0 %v1247
    %1387 = vmatpush1.msra.mxu0 %v1246
    %1388 = vmatprep.subr.mxu0 %v1249
    %1389 = vmatpush1.msra.mxu0 %v1248
    %1390 = vmatprep.subr.mxu0 %v1251
    %1391 = vmatpush1.msra.mxu0 %v1250
    %1392 = vmatprep.subr.mxu0 %v1253
    %1393 = vmatpush1.msra.mxu0 %v1252
    %1394 = vmatprep.subr.mxu0 %v1255
    %1395 = vmatpush1.msra.mxu0 %v1254
    %1396 = vmatprep.subr.mxu0 %v1257
    %1397 = vmatpush1.msra.mxu0 %v1256
    %1398 = vmatprep.subr.mxu0 %v1259
    %1399 = vmatpush1.msra.mxu0 %v1258
    %1400 = vmatprep.subr.mxu0 %v1261
    %1401 = vmatpush1.msra.mxu0 %v1260
    %1402 = vmatprep.subr.mxu0 %v1263
    %1403 = vmatpush1.msra.mxu0 %v1262
    %1404 = vmatprep.subr.mxu0 %v1265
    %1405 = vmatpush1.msra.mxu0 %v1264
    %1406 = vmatprep.subr.mxu0 %v1267
    %1407 = vmatpush1.msra.mxu0 %v1266
    %1408 = vmatprep.subr.mxu0 %v1269
    %1409 = vmatpush1.msra.mxu0 %v1268
    %1410 = vmatprep.subr.mxu0 %v1271
    %1411 = vmatpush1.msra.mxu0 %v1270
    %1412 = vmatprep.subr.mxu0 %v1273
    %1413 = vmatpush1.msra.mxu0 %v1272
    %1414 = vmatprep.subr.mxu0 %v1275
    %1415 = vmatpush1.msra.mxu0 %v1274
    %1416 = vmatprep.subr.mxu0 %v1277
    %1417 = vmatpush1.msra.mxu0 %v1276
    %1418 = vmatprep.subr.mxu0 %v1279
    %1419 = vmatpush1.msra.mxu0 %v1278
    %1420 = vmatprep.subr.mxu0 %v1281
    %1421 = vmatpush1.msra.mxu0 %v1280
    %1422 = vmatprep.subr.mxu0 %v1283
    %1423 = vmatpush1.msra.mxu0 %v1282
    %1424 = vmatprep.subr.mxu0 %v1285
    %1425 = vmatpush1.msra.mxu0 %v1284
    %1426 = vmatprep.subr.mxu0 %v1287
    %1427 = vmatpush1.msra.mxu0 %v1286
    %1428 = vmatprep.subr.mxu0 %v1289
    %1429 = vmatpush1.msra.mxu0 %v1288
    %1430 = vmatprep.subr.mxu0 %v1291
    %1431 = vmatpush1.msra.mxu0 %v1290
    %1432 = vmatprep.subr.mxu0 %v1293
    %1433 = vmatpush1.msra.mxu0 %v1292
    %1434 = vmatprep.subr.mxu0 %v1295
    %1435 = vmatpush1.msra.mxu0 %v1294
    %1436 = vmatprep.subr.mxu0 %v1297
    %1437 = vmatpush1.msra.mxu0 %v1296
    %1438 = vmatprep.subr.mxu0 %v1299
    %1439 = vmatpush1.msra.mxu0 %v1298
    %1440 = vmatprep.subr.mxu0 %v1301
    %1441 = vmatpush1.msra.mxu0 %v1300
    %1442 = vmatprep.subr.mxu0 %v1303
    %1443 = vmatpush1.msra.mxu0 %v1302
    %1444 = vmatprep.mubr.f32.mxu0 %v1237
    %1445 = vmatmul.mubr.f32.gmra.mrb[0].mxu0 %v1236
    %v1446 = vpop.f32.mrb[0].mxu0
    %v1447 = vadd.f32 %v1373, %v1446
    %v1448 = vpop.f32.mrb[0].mxu0
    %v1449 = vadd.f32 %v1377, %v1448
    %1450 = vdwg.mxu0
    %1451 = vmatprep.subr.mxu0 %v1305
    %1452 = vmatpush1.msra.mxu0 %v1304
    %1453 = vmatprep.subr.mxu0 %v1307
    %1454 = vmatpush1.msra.mxu0 %v1306
    %1455 = vmatprep.subr.mxu0 %v1309
    %1456 = vmatpush1.msra.mxu0 %v1308
    %1457 = vmatprep.subr.mxu0 %v1311
    %1458 = vmatpush1.msra.mxu0 %v1310
    %1459 = vmatprep.subr.mxu0 %v1313
    %1460 = vmatpush1.msra.mxu0 %v1312
    %1461 = vmatprep.subr.mxu0 %v1315
    %1462 = vmatpush1.msra.mxu0 %v1314
    %1463 = vmatprep.subr.mxu0 %v1317
    %1464 = vmatpush1.msra.mxu0 %v1316
    %1465 = vmatprep.subr.mxu0 %v1319
    %1466 = vmatpush1.msra.mxu0 %v1318
    %1467 = vmatprep.subr.mxu0 %v1321
    %1468 = vmatpush1.msra.mxu0 %v1320
    %1469 = vmatprep.subr.mxu0 %v1323
    %1470 = vmatpush1.msra.mxu0 %v1322
    %1471 = vmatprep.subr.mxu0 %v1325
    %1472 = vmatpush1.msra.mxu0 %v1324
    %1473 = vmatprep.subr.mxu0 %v1327
    %1474 = vmatpush1.msra.mxu0 %v1326
    %1475 = vmatprep.subr.mxu0 %v1329
    %1476 = vmatpush1.msra.mxu0 %v1328
    %1477 = vmatprep.subr.mxu0 %v1331
    %1478 = vmatpush1.msra.mxu0 %v1330
    %1479 = vmatprep.subr.mxu0 %v1333
    %1480 = vmatpush1.msra.mxu0 %v1332
    %1481 = vmatprep.subr.mxu0 %v1335
    %1482 = vmatpush1.msra.mxu0 %v1334
    %1483 = vmatprep.subr.mxu0 %v1337
    %1484 = vmatpush1.msra.mxu0 %v1336
    %1485 = vmatprep.subr.mxu0 %v1339
    %1486 = vmatpush1.msra.mxu0 %v1338
    %1487 = vmatprep.subr.mxu0 %v1341
    %1488 = vmatpush1.msra.mxu0 %v1340
    %1489 = vmatprep.subr.mxu0 %v1343
    %1490 = vmatpush1.msra.mxu0 %v1342
    %1491 = vmatprep.subr.mxu0 %v1345
    %1492 = vmatpush1.msra.mxu0 %v1344
    %1493 = vmatprep.subr.mxu0 %v1347
    %1494 = vmatpush1.msra.mxu0 %v1346
    %1495 = vmatprep.subr.mxu0 %v1349
    %1496 = vmatpush1.msra.mxu0 %v1348
    %1497 = vmatprep.subr.mxu0 %v1351
    %1498 = vmatpush1.msra.mxu0 %v1350
    %1499 = vmatprep.subr.mxu0 %v1353
    %1500 = vmatpush1.msra.mxu0 %v1352
    %1501 = vmatprep.subr.mxu0 %v1355
    %1502 = vmatpush1.msra.mxu0 %v1354
    %1503 = vmatprep.subr.mxu0 %v1357
    %1504 = vmatpush1.msra.mxu0 %v1356
    %1505 = vmatprep.subr.mxu0 %v1359
    %1506 = vmatpush1.msra.mxu0 %v1358
    %1507 = vmatprep.subr.mxu0 %v1361
    %1508 = vmatpush1.msra.mxu0 %v1360
    %1509 = vmatprep.subr.mxu0 %v1363
    %1510 = vmatpush1.msra.mxu0 %v1362
    %1511 = vmatprep.subr.mxu0 %v1365
    %1512 = vmatpush1.msra.mxu0 %v1364
    %1513 = vmatprep.subr.mxu0 %v1367
    %1514 = vmatpush1.msra.mxu0 %v1366
    %1515 = vmatprep.mubr.f32.mxu0 %v1239
    %1516 = vmatmul.mubr.f32.gmra.mrb[0].mxu0 %v1238
    %v1517 = vpop.f32.mrb[0].mxu0
    %v1518 = vadd.f32 %v1447, %v1517
    %v1519 = vpop.f32.mrb[0].mxu0
    %v1520 = vadd.f32 %v1449, %v1519
    %1521 = vdwg.mxu0
    %v1522 = vmax.f32 %v1518, 0.0
    %v1523 = vmax.f32 %v1520, 0.0
    %v1524 = vld [vmem:[%s5] sm:$0xff]
    %v1525 = vld [vmem:[%s5 + $0x8] sm:$0xff]
    %v1526 = vld [vmem:[%s5 + $0x10] sm:$0xff]
    %v1527 = vld [vmem:[%s5 + $0x18] sm:$0xff]
    %v1528 = vld [vmem:[%s5 + $0x20] sm:$0xff]
    %v1529 = vld [vmem:[%s5 + $0x28] sm:$0xff]
    %v1530 = vld [vmem:[%s5 + $0x30] sm:$0xff]
    %v1531 = vld [vmem:[%s5 + $0x38] sm:$0xff]
    %v1532 = vld [vmem:[%s5 + $0x40] sm:$0xff]
    %v1533 = vld [vmem:[%s5 + $0x48] sm:$0xff]
    %v1534 = vld [vmem:[%s5 + $0x50] sm:$0xff]
    %v1535 = vld [vmem:[%s5 + $0x58] sm:$0xff]
    %v1536 = vld [vmem:[%s5 + $0x60] sm:$0xff]
    %v1537 = vld [vmem:[%s5 + $0x68] sm:$0xff]
    %v1538 = vld [vmem:[%s5 + $0x70] sm:$0xff]
    %v1539 = vld [vmem:[%s5 + $0x78] sm:$0xff]
    %v1540 = vld [vmem:[%s5 + $0x80] sm:$0xff]
    %v1541 = vld [vmem:[%s5 + $0x88] sm:$0xff]
    %v1542 = vld [vmem:[%s5 + $0x90] sm:$0xff]
    %v1543 = vld [vmem:[%s5 + $0x98] sm:$0xff]
    %v1544 = vld [vmem:[%s5 + $0xa0] sm:$0xff]
    %v1545 = vld [vmem:[%s5 + $0xa8] sm:$0xff]
    %v1546 = vld [vmem:[%s5 + $0xb0] sm:$0xff]
    %v1547 = vld [vmem:[%s5 + $0xb8] sm:$0xff]
    %v1548 = vld [vmem:[%s5 + $0xc0] sm:$0xff]
    %v1549 = vld [vmem:[%s5 + $0xc8] sm:$0xff]
    %v1550 = vld [vmem:[%s5 + $0xd0] sm:$0xff]
    %v1551 = vld [vmem:[%s5 + $0xd8] sm:$0xff]
    %v1552 = vld [vmem:[%s5 + $0xe0] sm:$0xff]
    %v1553 = vld [vmem:[%s5 + $0xe8] sm:$0xff]
    %v1554 = vld [vmem:[%s5 + $0xf0] sm:$0xff]
    %v1555 = vld [vmem:[%s5 + $0xf8] sm:$0xff]
    %v1556 = vld [vmem:[#allocation9] sm:$0x1]
    %v1558 = vlaneseq
    %v1559 = vshrl.u32 %v1558, 7
    %v1560 = vsub.s32 0, %v1559
    %v1561 = vrot.slane %v1556, %v1560
    %1563 = vmatprep.subr.mxu0 0.0
    %1564 = vmatpush1.msra.mxu0 %v1524
    %1565 = vmatprep.subr.mxu0 0.0
    %1566 = vmatpush1.msra.mxu0 %v1525
    %1567 = vmatprep.subr.mxu0 0.0
    %1568 = vmatpush1.msra.mxu0 %v1526
    %1569 = vmatprep.subr.mxu0 0.0
    %1570 = vmatpush1.msra.mxu0 %v1527
    %1571 = vmatprep.subr.mxu0 0.0
    %1572 = vmatpush1.msra.mxu0 %v1528
    %1573 = vmatprep.subr.mxu0 0.0
    %1574 = vmatpush1.msra.mxu0 %v1529
    %1575 = vmatprep.subr.mxu0 0.0
    %1576 = vmatpush1.msra.mxu0 %v1530
    %1577 = vmatprep.subr.mxu0 0.0
    %1578 = vmatpush1.msra.mxu0 %v1531
    %1579 = vmatprep.subr.mxu0 0.0
    %1580 = vmatpush1.msra.mxu0 %v1532
    %1581 = vmatprep.subr.mxu0 0.0
    %1582 = vmatpush1.msra.mxu0 %v1533
    %1583 = vmatprep.subr.mxu0 0.0
    %1584 = vmatpush1.msra.mxu0 %v1534
    %1585 = vmatprep.subr.mxu0 0.0
    %1586 = vmatpush1.msra.mxu0 %v1535
    %1587 = vmatprep.subr.mxu0 0.0
    %1588 = vmatpush1.msra.mxu0 %v1536
    %1589 = vmatprep.subr.mxu0 0.0
    %1590 = vmatpush1.msra.mxu0 %v1537
    %1591 = vmatprep.subr.mxu0 0.0
    %1592 = vmatpush1.msra.mxu0 %v1538
    %1593 = vmatprep.subr.mxu0 0.0
    %1594 = vmatpush1.msra.mxu0 %v1539
    %1595 = vmatprep.subr.mxu0 0.0
    %1596 = vmatpush1.msra.mxu0 %v1540
    %1597 = vmatprep.subr.mxu0 0.0
    %1598 = vmatpush1.msra.mxu0 %v1541
    %1599 = vmatprep.subr.mxu0 0.0
    %1600 = vmatpush1.msra.mxu0 %v1542
    %1601 = vmatprep.subr.mxu0 0.0
    %1602 = vmatpush1.msra.mxu0 %v1543
    %1603 = vmatprep.subr.mxu0 0.0
    %1604 = vmatpush1.msra.mxu0 %v1544
    %1605 = vmatprep.subr.mxu0 0.0
    %1606 = vmatpush1.msra.mxu0 %v1545
    %1607 = vmatprep.subr.mxu0 0.0
    %1608 = vmatpush1.msra.mxu0 %v1546
    %1609 = vmatprep.subr.mxu0 0.0
    %1610 = vmatpush1.msra.mxu0 %v1547
    %1611 = vmatprep.subr.mxu0 0.0
    %1612 = vmatpush1.msra.mxu0 %v1548
    %1613 = vmatprep.subr.mxu0 0.0
    %1614 = vmatpush1.msra.mxu0 %v1549
    %1615 = vmatprep.subr.mxu0 0.0
    %1616 = vmatpush1.msra.mxu0 %v1550
    %1617 = vmatprep.subr.mxu0 0.0
    %1618 = vmatpush1.msra.mxu0 %v1551
    %1619 = vmatprep.subr.mxu0 0.0
    %1620 = vmatpush1.msra.mxu0 %v1552
    %1621 = vmatprep.subr.mxu0 0.0
    %1622 = vmatpush1.msra.mxu0 %v1553
    %1623 = vmatprep.subr.mxu0 0.0
    %1624 = vmatpush1.msra.mxu0 %v1554
    %1625 = vmatprep.subr.mxu0 0.0
    %1626 = vmatpush1.msra.mxu0 %v1555
    %1627 = vmatprep.mubr.f32.mxu0 %v1523
    %1628 = vmatmul.mubr.f32.gmra.mrb[0].mxu0 %v1522
    %v1629 = vpop.f32.mrb[0].mxu0
    %v1630 = vadd.f32 %v1561, %v1629
    %v1631 = vpop.f32.mrb[0].mxu0
    %1632 = vdwg.mxu0
    %vm1633 = vcmask 66560
    %1634 = vst.msk [vmem:[%s7] sm:$0x3] %vm1633, %v1630
    // Predicated region
    $region50: #{pointnet_cls_forward.5} parent=1 // pred_check
      _
    $region51: #{pointnet_cls_forward.5} parent=1 // pred_check_branch
      %1636 = sbr.rel (0) target = $region53
    $region52: #{pointnet_cls_forward.5} parent=1 // pred_region
      _
    $region53: #{pointnet_cls_forward.5} parent=1 // pred_fallthru
      _
    // Predicated region
    $region54: #{pointnet_cls_forward.5} parent=1 // pred_check
      _
    $region55: #{pointnet_cls_forward.5} parent=1 // pred_check_branch
      %1638 = sbr.rel (0) target = $region57
    $region56: #{pointnet_cls_forward.5} parent=1 // pred_region
      _
    $region57: #{pointnet_cls_forward.5} parent=1 // pred_fallthru
      _
    %1639 = vsyncpa [#allocation3], 1
    %1640 = vsyncpa [#allocation5], 1
    %1641 = vsyncpa [#allocation8], 1

// kernel: pointnet_cls_forward.7
$region0: #{pointnet_cls_forward.7}
  #allocation0 [shape = 'u32[]', space=smem, size = 0x4, offset = 0x4, fixed_abs, tag = 'smem constant byte address 0x4 - core index']
  #allocation1 [shape = 'u32[144,128]{1,0:T(1,128)}', space=vmem, size = 0x12000, scoped, tag = 'internal scratch']
  %s0 = inlined_call_operand.vmem [shape: f32[2,1024], index: 0, kind: input, shape index: {}]
  %s1 = inlined_call_operand.vmem [shape: f32[1024,512], index: 1, kind: input, shape index: {}]
  %s2 = inlined_call_operand.vmem [shape: f32[1,512], index: 2, kind: input, shape index: {}]
  %s3 = inlined_call_operand.vmem [shape: f32[512,256], index: 3, kind: input, shape index: {}]
  %s4 = inlined_call_operand.vmem [shape: f32[1,256], index: 4, kind: input, shape index: {}]
  %s5 = inlined_call_operand.vmem [shape: f32[256,2], index: 5, kind: input, shape index: {}]
  %s6 = inlined_call_operand.vmem [shape: f32[1,2], index: 6, kind: input, shape index: {}]
  %s7 = inlined_call_operand.hbm [shape: f32[2,2], index: 7, kind: output, shape index: {}]
  %s8 = sld [smem:[#allocation0]]
  $region38: #{pointnet_cls_forward.7} parent=0
    _
  %s10 = ssub.s32 1, %s8
  %s11 = scalar_select 0, %s10, %s8
  $region1: #{pointnet_cls_forward.7} parent=0
    #allocation2 [shape = 'u8[1024]{0}', space=vmem, size = 0x400, scoped, tag = 'output window, operand 0, single buffered']
    #allocation3 [shape = 's32[1]{0}', space=sflag, size = 0x4, scoped, tag = 'scoped memory for pointnet_cls_forward.7']
    %12 = vsyncpa [#allocation3], 0
    // Predicated region
    $region2: #{pointnet_cls_forward.7} parent=1 // pred_check
      _
    $region3: #{pointnet_cls_forward.7} parent=1 // pred_check_branch
      %14 = sbr.rel (0) target = $region5
    $region4: #{pointnet_cls_forward.7} parent=1 // pred_region
      _
    $region5: #{pointnet_cls_forward.7} parent=1 // pred_fallthru
      _
    // Predicated region
    $region6: #{pointnet_cls_forward.7} parent=1 // pred_check
      _
    $region7: #{pointnet_cls_forward.7} parent=1 // pred_check_branch
      %16 = sbr.rel (0) target = $region9
    $region8: #{pointnet_cls_forward.7} parent=1 // pred_region
      _
    $region9: #{pointnet_cls_forward.7} parent=1 // pred_fallthru
      _
    // Predicated region
    $region10: #{pointnet_cls_forward.7} parent=1 // pred_check
      _
    $region11: #{pointnet_cls_forward.7} parent=1 // pred_check_branch
      %18 = sbr.rel (0) target = $region13
    $region12: #{pointnet_cls_forward.7} parent=1 // pred_region
      _
    $region13: #{pointnet_cls_forward.7} parent=1 // pred_fallthru
      _
    // Predicated region
    $region14: #{pointnet_cls_forward.7} parent=1 // pred_check
      _
    $region15: #{pointnet_cls_forward.7} parent=1 // pred_check_branch
      %20 = sbr.rel (0) target = $region17
    $region16: #{pointnet_cls_forward.7} parent=1 // pred_region
      _
    $region17: #{pointnet_cls_forward.7} parent=1 // pred_fallthru
      _
    // Predicated region
    $region18: #{pointnet_cls_forward.7} parent=1 // pred_check
      _
    $region19: #{pointnet_cls_forward.7} parent=1 // pred_check_branch
      %22 = sbr.rel (0) target = $region21
    $region20: #{pointnet_cls_forward.7} parent=1 // pred_region
      _
    $region21: #{pointnet_cls_forward.7} parent=1 // pred_fallthru
      _
    // Predicated region
    $region22: #{pointnet_cls_forward.7} parent=1 // pred_check
      _
    $region23: #{pointnet_cls_forward.7} parent=1 // pred_check_branch
      %24 = sbr.rel (0) target = $region25
    $region24: #{pointnet_cls_forward.7} parent=1 // pred_region
      _
    $region25: #{pointnet_cls_forward.7} parent=1 // pred_fallthru
      _
    // Predicated region
    $region26: #{pointnet_cls_forward.7} parent=1 // pred_check
      _
    $region27: #{pointnet_cls_forward.7} parent=1 // pred_check_branch
      %26 = sbr.rel (0) target = $region29
    $region28: #{pointnet_cls_forward.7} parent=1 // pred_region
      _
    $region29: #{pointnet_cls_forward.7} parent=1 // pred_fallthru
      _
    %v27 = vld [vmem:[%s0] sm:$0xff]
    %v28 = vld [vmem:[%s0 + $0x8] sm:$0xff]
    %v29 = vld [vmem:[%s1] sm:$0xff]
    %v30 = vld [vmem:[%s1 + $0x8] sm:$0xff]
    %v31 = vld [vmem:[%s1 + $0x10] sm:$0xff]
    %v32 = vld [vmem:[%s1 + $0x18] sm:$0xff]
    %v33 = vld [vmem:[%s1 + $0x20] sm:$0xff]
    %v34 = vld [vmem:[%s1 + $0x28] sm:$0xff]
    %v35 = vld [vmem:[%s1 + $0x30] sm:$0xff]
    %v36 = vld [vmem:[%s1 + $0x38] sm:$0xff]
    %v37 = vld [vmem:[%s1 + $0x40] sm:$0xff]
    %v38 = vld [vmem:[%s1 + $0x48] sm:$0xff]
    %v39 = vld [vmem:[%s1 + $0x50] sm:$0xff]
    %v40 = vld [vmem:[%s1 + $0x58] sm:$0xff]
    %v41 = vld [vmem:[%s1 + $0x60] sm:$0xff]
    %v42 = vld [vmem:[%s1 + $0x68] sm:$0xff]
    %v43 = vld [vmem:[%s1 + $0x70] sm:$0xff]
    %v44 = vld [vmem:[%s1 + $0x78] sm:$0xff]
    %v45 = vld [vmem:[%s1 + $0x80] sm:$0xff]
    %v46 = vld [vmem:[%s1 + $0x88] sm:$0xff]
    %v47 = vld [vmem:[%s1 + $0x90] sm:$0xff]
    %v48 = vld [vmem:[%s1 + $0x98] sm:$0xff]
    %v49 = vld [vmem:[%s1 + $0xa0] sm:$0xff]
    %v50 = vld [vmem:[%s1 + $0xa8] sm:$0xff]
    %v51 = vld [vmem:[%s1 + $0xb0] sm:$0xff]
    %v52 = vld [vmem:[%s1 + $0xb8] sm:$0xff]
    %v53 = vld [vmem:[%s1 + $0xc0] sm:$0xff]
    %v54 = vld [vmem:[%s1 + $0xc8] sm:$0xff]
    %v55 = vld [vmem:[%s1 + $0xd0] sm:$0xff]
    %v56 = vld [vmem:[%s1 + $0xd8] sm:$0xff]
    %v57 = vld [vmem:[%s1 + $0xe0] sm:$0xff]
    %v58 = vld [vmem:[%s1 + $0xe8] sm:$0xff]
    %v59 = vld [vmem:[%s1 + $0xf0] sm:$0xff]
    %v60 = vld [vmem:[%s1 + $0xf8] sm:$0xff]
    %v61 = vld [vmem:[%s1 + $0x100] sm:$0xff]
    %v62 = vld [vmem:[%s1 + $0x108] sm:$0xff]
    %v63 = vld [vmem:[%s1 + $0x110] sm:$0xff]
    %v64 = vld [vmem:[%s1 + $0x118] sm:$0xff]
    %v65 = vld [vmem:[%s1 + $0x120] sm:$0xff]
    %v66 = vld [vmem:[%s1 + $0x128] sm:$0xff]
    %v67 = vld [vmem:[%s1 + $0x130] sm:$0xff]
    %v68 = vld [vmem:[%s1 + $0x138] sm:$0xff]
    %v69 = vld [vmem:[%s1 + $0x140] sm:$0xff]
    %v70 = vld [vmem:[%s1 + $0x148] sm:$0xff]
    %v71 = vld [vmem:[%s1 + $0x150] sm:$0xff]
    %v72 = vld [vmem:[%s1 + $0x158] sm:$0xff]
    %v73 = vld [vmem:[%s1 + $0x160] sm:$0xff]
    %v74 = vld [vmem:[%s1 + $0x168] sm:$0xff]
    %v75 = vld [vmem:[%s1 + $0x170] sm:$0xff]
    %v76 = vld [vmem:[%s1 + $0x178] sm:$0xff]
    %v77 = vld [vmem:[%s1 + $0x180] sm:$0xff]
    %v78 = vld [vmem:[%s1 + $0x188] sm:$0xff]
    %v79 = vld [vmem:[%s1 + $0x190] sm:$0xff]
    %v80 = vld [vmem:[%s1 + $0x198] sm:$0xff]
    %v81 = vld [vmem:[%s1 + $0x1a0] sm:$0xff]
    %v82 = vld [vmem:[%s1 + $0x1a8] sm:$0xff]
    %v83 = vld [vmem:[%s1 + $0x1b0] sm:$0xff]
    %v84 = vld [vmem:[%s1 + $0x1b8] sm:$0xff]
    %v85 = vld [vmem:[%s1 + $0x1c0] sm:$0xff]
    %v86 = vld [vmem:[%s1 + $0x1c8] sm:$0xff]
    %v87 = vld [vmem:[%s1 + $0x1d0] sm:$0xff]
    %v88 = vld [vmem:[%s1 + $0x1d8] sm:$0xff]
    %v89 = vld [vmem:[%s1 + $0x1e0] sm:$0xff]
    %v90 = vld [vmem:[%s1 + $0x1e8] sm:$0xff]
    %v91 = vld [vmem:[%s1 + $0x1f0] sm:$0xff]
    %v92 = vld [vmem:[%s1 + $0x1f8] sm:$0xff]
    %v93 = vld [vmem:[%s1 + $0x200] sm:$0xff]
    %v94 = vld [vmem:[%s1 + $0x208] sm:$0xff]
    %v95 = vld [vmem:[%s1 + $0x210] sm:$0xff]
    %v96 = vld [vmem:[%s1 + $0x218] sm:$0xff]
    %v97 = vld [vmem:[%s1 + $0x220] sm:$0xff]
    %v98 = vld [vmem:[%s1 + $0x228] sm:$0xff]
    %v99 = vld [vmem:[%s1 + $0x230] sm:$0xff]
    %v100 = vld [vmem:[%s1 + $0x238] sm:$0xff]
    %v101 = vld [vmem:[%s1 + $0x240] sm:$0xff]
    %v102 = vld [vmem:[%s1 + $0x248] sm:$0xff]
    %v103 = vld [vmem:[%s1 + $0x250] sm:$0xff]
    %v104 = vld [vmem:[%s1 + $0x258] sm:$0xff]
    %v105 = vld [vmem:[%s1 + $0x260] sm:$0xff]
    %v106 = vld [vmem:[%s1 + $0x268] sm:$0xff]
    %v107 = vld [vmem:[%s1 + $0x270] sm:$0xff]
    %v108 = vld [vmem:[%s1 + $0x278] sm:$0xff]
    %v109 = vld [vmem:[%s1 + $0x280] sm:$0xff]
    %v110 = vld [vmem:[%s1 + $0x288] sm:$0xff]
    %v111 = vld [vmem:[%s1 + $0x290] sm:$0xff]
    %v112 = vld [vmem:[%s1 + $0x298] sm:$0xff]
    %v113 = vld [vmem:[%s1 + $0x2a0] sm:$0xff]
    %v114 = vld [vmem:[%s1 + $0x2a8] sm:$0xff]
    %v115 = vld [vmem:[%s1 + $0x2b0] sm:$0xff]
    %v116 = vld [vmem:[%s1 + $0x2b8] sm:$0xff]
    %v117 = vld [vmem:[%s1 + $0x2c0] sm:$0xff]
    %v118 = vld [vmem:[%s1 + $0x2c8] sm:$0xff]
    %v119 = vld [vmem:[%s1 + $0x2d0] sm:$0xff]
    %v120 = vld [vmem:[%s1 + $0x2d8] sm:$0xff]
    %v121 = vld [vmem:[%s1 + $0x2e0] sm:$0xff]
    %v122 = vld [vmem:[%s1 + $0x2e8] sm:$0xff]
    %v123 = vld [vmem:[%s1 + $0x2f0] sm:$0xff]
    %v124 = vld [vmem:[%s1 + $0x2f8] sm:$0xff]
    %v125 = vld [vmem:[%s1 + $0x300] sm:$0xff]
    %v126 = vld [vmem:[%s1 + $0x308] sm:$0xff]
    %v127 = vld [vmem:[%s1 + $0x310] sm:$0xff]
    %v128 = vld [vmem:[%s1 + $0x318] sm:$0xff]
    %v129 = vld [vmem:[%s1 + $0x320] sm:$0xff]
    %v130 = vld [vmem:[%s1 + $0x328] sm:$0xff]
    %v131 = vld [vmem:[%s1 + $0x330] sm:$0xff]
    %v132 = vld [vmem:[%s1 + $0x338] sm:$0xff]
    %v133 = vld [vmem:[%s1 + $0x340] sm:$0xff]
    %v134 = vld [vmem:[%s1 + $0x348] sm:$0xff]
    %v135 = vld [vmem:[%s1 + $0x350] sm:$0xff]
    %v136 = vld [vmem:[%s1 + $0x358] sm:$0xff]
    %v137 = vld [vmem:[%s1 + $0x360] sm:$0xff]
    %v138 = vld [vmem:[%s1 + $0x368] sm:$0xff]
    %v139 = vld [vmem:[%s1 + $0x370] sm:$0xff]
    %v140 = vld [vmem:[%s1 + $0x378] sm:$0xff]
    %v141 = vld [vmem:[%s1 + $0x380] sm:$0xff]
    %v142 = vld [vmem:[%s1 + $0x388] sm:$0xff]
    %v143 = vld [vmem:[%s1 + $0x390] sm:$0xff]
    %v144 = vld [vmem:[%s1 + $0x398] sm:$0xff]
    %v145 = vld [vmem:[%s1 + $0x3a0] sm:$0xff]
    %v146 = vld [vmem:[%s1 + $0x3a8] sm:$0xff]
    %v147 = vld [vmem:[%s1 + $0x3b0] sm:$0xff]
    %v148 = vld [vmem:[%s1 + $0x3b8] sm:$0xff]
    %v149 = vld [vmem:[%s1 + $0x3c0] sm:$0xff]
    %v150 = vld [vmem:[%s1 + $0x3c8] sm:$0xff]
    %v151 = vld [vmem:[%s1 + $0x3d0] sm:$0xff]
    %v152 = vld [vmem:[%s1 + $0x3d8] sm:$0xff]
    %v153 = vld [vmem:[%s1 + $0x3e0] sm:$0xff]
    %v154 = vld [vmem:[%s1 + $0x3e8] sm:$0xff]
    %v155 = vld [vmem:[%s1 + $0x3f0] sm:$0xff]
    %v156 = vld [vmem:[%s1 + $0x3f8] sm:$0xff]
    %v157 = vld [vmem:[%s1 + $0x400] sm:$0xff]
    %v158 = vld [vmem:[%s1 + $0x408] sm:$0xff]
    %v159 = vld [vmem:[%s1 + $0x410] sm:$0xff]
    %v160 = vld [vmem:[%s1 + $0x418] sm:$0xff]
    %v161 = vld [vmem:[%s1 + $0x420] sm:$0xff]
    %v162 = vld [vmem:[%s1 + $0x428] sm:$0xff]
    %v163 = vld [vmem:[%s1 + $0x430] sm:$0xff]
    %v164 = vld [vmem:[%s1 + $0x438] sm:$0xff]
    %v165 = vld [vmem:[%s1 + $0x440] sm:$0xff]
    %v166 = vld [vmem:[%s1 + $0x448] sm:$0xff]
    %v167 = vld [vmem:[%s1 + $0x450] sm:$0xff]
    %v168 = vld [vmem:[%s1 + $0x458] sm:$0xff]
    %v169 = vld [vmem:[%s1 + $0x460] sm:$0xff]
    %v170 = vld [vmem:[%s1 + $0x468] sm:$0xff]
    %v171 = vld [vmem:[%s1 + $0x470] sm:$0xff]
    %v172 = vld [vmem:[%s1 + $0x478] sm:$0xff]
    %v173 = vld [vmem:[%s1 + $0x480] sm:$0xff]
    %v174 = vld [vmem:[%s1 + $0x488] sm:$0xff]
    %v175 = vld [vmem:[%s1 + $0x490] sm:$0xff]
    %v176 = vld [vmem:[%s1 + $0x498] sm:$0xff]
    %v177 = vld [vmem:[%s1 + $0x4a0] sm:$0xff]
    %v178 = vld [vmem:[%s1 + $0x4a8] sm:$0xff]
    %v179 = vld [vmem:[%s1 + $0x4b0] sm:$0xff]
    %v180 = vld [vmem:[%s1 + $0x4b8] sm:$0xff]
    %v181 = vld [vmem:[%s1 + $0x4c0] sm:$0xff]
    %v182 = vld [vmem:[%s1 + $0x4c8] sm:$0xff]
    %v183 = vld [vmem:[%s1 + $0x4d0] sm:$0xff]
    %v184 = vld [vmem:[%s1 + $0x4d8] sm:$0xff]
    %v185 = vld [vmem:[%s1 + $0x4e0] sm:$0xff]
    %v186 = vld [vmem:[%s1 + $0x4e8] sm:$0xff]
    %v187 = vld [vmem:[%s1 + $0x4f0] sm:$0xff]
    %v188 = vld [vmem:[%s1 + $0x4f8] sm:$0xff]
    %v189 = vld [vmem:[%s1 + $0x500] sm:$0xff]
    %v190 = vld [vmem:[%s1 + $0x508] sm:$0xff]
    %v191 = vld [vmem:[%s1 + $0x510] sm:$0xff]
    %v192 = vld [vmem:[%s1 + $0x518] sm:$0xff]
    %v193 = vld [vmem:[%s1 + $0x520] sm:$0xff]
    %v194 = vld [vmem:[%s1 + $0x528] sm:$0xff]
    %v195 = vld [vmem:[%s1 + $0x530] sm:$0xff]
    %v196 = vld [vmem:[%s1 + $0x538] sm:$0xff]
    %v197 = vld [vmem:[%s1 + $0x540] sm:$0xff]
    %v198 = vld [vmem:[%s1 + $0x548] sm:$0xff]
    %v199 = vld [vmem:[%s1 + $0x550] sm:$0xff]
    %v200 = vld [vmem:[%s1 + $0x558] sm:$0xff]
    %v201 = vld [vmem:[%s1 + $0x560] sm:$0xff]
    %v202 = vld [vmem:[%s1 + $0x568] sm:$0xff]
    %v203 = vld [vmem:[%s1 + $0x570] sm:$0xff]
    %v204 = vld [vmem:[%s1 + $0x578] sm:$0xff]
    %v205 = vld [vmem:[%s1 + $0x580] sm:$0xff]
    %v206 = vld [vmem:[%s1 + $0x588] sm:$0xff]
    %v207 = vld [vmem:[%s1 + $0x590] sm:$0xff]
    %v208 = vld [vmem:[%s1 + $0x598] sm:$0xff]
    %v209 = vld [vmem:[%s1 + $0x5a0] sm:$0xff]
    %v210 = vld [vmem:[%s1 + $0x5a8] sm:$0xff]
    %v211 = vld [vmem:[%s1 + $0x5b0] sm:$0xff]
    %v212 = vld [vmem:[%s1 + $0x5b8] sm:$0xff]
    %v213 = vld [vmem:[%s1 + $0x5c0] sm:$0xff]
    %v214 = vld [vmem:[%s1 + $0x5c8] sm:$0xff]
    %v215 = vld [vmem:[%s1 + $0x5d0] sm:$0xff]
    %v216 = vld [vmem:[%s1 + $0x5d8] sm:$0xff]
    %v217 = vld [vmem:[%s1 + $0x5e0] sm:$0xff]
    %v218 = vld [vmem:[%s1 + $0x5e8] sm:$0xff]
    %v219 = vld [vmem:[%s1 + $0x5f0] sm:$0xff]
    %v220 = vld [vmem:[%s1 + $0x5f8] sm:$0xff]
    %v221 = vld [vmem:[%s1 + $0x600] sm:$0xff]
    %v222 = vld [vmem:[%s1 + $0x608] sm:$0xff]
    %v223 = vld [vmem:[%s1 + $0x610] sm:$0xff]
    %v224 = vld [vmem:[%s1 + $0x618] sm:$0xff]
    %v225 = vld [vmem:[%s1 + $0x620] sm:$0xff]
    %v226 = vld [vmem:[%s1 + $0x628] sm:$0xff]
    %v227 = vld [vmem:[%s1 + $0x630] sm:$0xff]
    %v228 = vld [vmem:[%s1 + $0x638] sm:$0xff]
    %v229 = vld [vmem:[%s1 + $0x640] sm:$0xff]
    %v230 = vld [vmem:[%s1 + $0x648] sm:$0xff]
    %v231 = vld [vmem:[%s1 + $0x650] sm:$0xff]
    %v232 = vld [vmem:[%s1 + $0x658] sm:$0xff]
    %v233 = vld [vmem:[%s1 + $0x660] sm:$0xff]
    %v234 = vld [vmem:[%s1 + $0x668] sm:$0xff]
    %v235 = vld [vmem:[%s1 + $0x670] sm:$0xff]
    %v236 = vld [vmem:[%s1 + $0x678] sm:$0xff]
    %v237 = vld [vmem:[%s1 + $0x680] sm:$0xff]
    %v238 = vld [vmem:[%s1 + $0x688] sm:$0xff]
    %v239 = vld [vmem:[%s1 + $0x690] sm:$0xff]
    %v240 = vld [vmem:[%s1 + $0x698] sm:$0xff]
    %v241 = vld [vmem:[%s1 + $0x6a0] sm:$0xff]
    %v242 = vld [vmem:[%s1 + $0x6a8] sm:$0xff]
    %v243 = vld [vmem:[%s1 + $0x6b0] sm:$0xff]
    %v244 = vld [vmem:[%s1 + $0x6b8] sm:$0xff]
    %v245 = vld [vmem:[%s1 + $0x6c0] sm:$0xff]
    %v246 = vld [vmem:[%s1 + $0x6c8] sm:$0xff]
    %v247 = vld [vmem:[%s1 + $0x6d0] sm:$0xff]
    %v248 = vld [vmem:[%s1 + $0x6d8] sm:$0xff]
    %v249 = vld [vmem:[%s1 + $0x6e0] sm:$0xff]
    %v250 = vld [vmem:[%s1 + $0x6e8] sm:$0xff]
    %v251 = vld [vmem:[%s1 + $0x6f0] sm:$0xff]
    %v252 = vld [vmem:[%s1 + $0x6f8] sm:$0xff]
    %v253 = vld [vmem:[%s1 + $0x700] sm:$0xff]
    %v254 = vld [vmem:[%s1 + $0x708] sm:$0xff]
    %v255 = vld [vmem:[%s1 + $0x710] sm:$0xff]
    %v256 = vld [vmem:[%s1 + $0x718] sm:$0xff]
    %v257 = vld [vmem:[%s1 + $0x720] sm:$0xff]
    %v258 = vld [vmem:[%s1 + $0x728] sm:$0xff]
    %v259 = vld [vmem:[%s1 + $0x730] sm:$0xff]
    %v260 = vld [vmem:[%s1 + $0x738] sm:$0xff]
    %v261 = vld [vmem:[%s1 + $0x740] sm:$0xff]
    %v262 = vld [vmem:[%s1 + $0x748] sm:$0xff]
    %v263 = vld [vmem:[%s1 + $0x750] sm:$0xff]
    %v264 = vld [vmem:[%s1 + $0x758] sm:$0xff]
    %v265 = vld [vmem:[%s1 + $0x760] sm:$0xff]
    %v266 = vld [vmem:[%s1 + $0x768] sm:$0xff]
    %v267 = vld [vmem:[%s1 + $0x770] sm:$0xff]
    %v268 = vld [vmem:[%s1 + $0x778] sm:$0xff]
    %v269 = vld [vmem:[%s1 + $0x780] sm:$0xff]
    %v270 = vld [vmem:[%s1 + $0x788] sm:$0xff]
    %v271 = vld [vmem:[%s1 + $0x790] sm:$0xff]
    %v272 = vld [vmem:[%s1 + $0x798] sm:$0xff]
    %v273 = vld [vmem:[%s1 + $0x7a0] sm:$0xff]
    %v274 = vld [vmem:[%s1 + $0x7a8] sm:$0xff]
    %v275 = vld [vmem:[%s1 + $0x7b0] sm:$0xff]
    %v276 = vld [vmem:[%s1 + $0x7b8] sm:$0xff]
    %v277 = vld [vmem:[%s1 + $0x7c0] sm:$0xff]
    %v278 = vld [vmem:[%s1 + $0x7c8] sm:$0xff]
    %v279 = vld [vmem:[%s1 + $0x7d0] sm:$0xff]
    %v280 = vld [vmem:[%s1 + $0x7d8] sm:$0xff]
    %v281 = vld [vmem:[%s1 + $0x7e0] sm:$0xff]
    %v282 = vld [vmem:[%s1 + $0x7e8] sm:$0xff]
    %v283 = vld [vmem:[%s1 + $0x7f0] sm:$0xff]
    %v284 = vld [vmem:[%s1 + $0x7f8] sm:$0xff]
    %v285 = vld [vmem:[%s1 + $0x800] sm:$0xff]
    %v286 = vld [vmem:[%s1 + $0x808] sm:$0xff]
    %v287 = vld [vmem:[%s1 + $0x810] sm:$0xff]
    %v288 = vld [vmem:[%s1 + $0x818] sm:$0xff]
    %v289 = vld [vmem:[%s1 + $0x820] sm:$0xff]
    %v290 = vld [vmem:[%s1 + $0x828] sm:$0xff]
    %v291 = vld [vmem:[%s1 + $0x830] sm:$0xff]
    %v292 = vld [vmem:[%s1 + $0x838] sm:$0xff]
    %v293 = vld [vmem:[%s1 + $0x840] sm:$0xff]
    %v294 = vld [vmem:[%s1 + $0x848] sm:$0xff]
    %v295 = vld [vmem:[%s1 + $0x850] sm:$0xff]
    %v296 = vld [vmem:[%s1 + $0x858] sm:$0xff]
    %v297 = vld [vmem:[%s1 + $0x860] sm:$0xff]
    %v298 = vld [vmem:[%s1 + $0x868] sm:$0xff]
    %v299 = vld [vmem:[%s1 + $0x870] sm:$0xff]
    %v300 = vld [vmem:[%s1 + $0x878] sm:$0xff]
    %v301 = vld [vmem:[%s1 + $0x880] sm:$0xff]
    %v302 = vld [vmem:[%s1 + $0x888] sm:$0xff]
    %v303 = vld [vmem:[%s1 + $0x890] sm:$0xff]
    %v304 = vld [vmem:[%s1 + $0x898] sm:$0xff]
    %v305 = vld [vmem:[%s1 + $0x8a0] sm:$0xff]
    %v306 = vld [vmem:[%s1 + $0x8a8] sm:$0xff]
    %v307 = vld [vmem:[%s1 + $0x8b0] sm:$0xff]
    %v308 = vld [vmem:[%s1 + $0x8b8] sm:$0xff]
    %v309 = vld [vmem:[%s1 + $0x8c0] sm:$0xff]
    %v310 = vld [vmem:[%s1 + $0x8c8] sm:$0xff]
    %v311 = vld [vmem:[%s1 + $0x8d0] sm:$0xff]
    %v312 = vld [vmem:[%s1 + $0x8d8] sm:$0xff]
    %v313 = vld [vmem:[%s1 + $0x8e0] sm:$0xff]
    %v314 = vld [vmem:[%s1 + $0x8e8] sm:$0xff]
    %v315 = vld [vmem:[%s1 + $0x8f0] sm:$0xff]
    %v316 = vld [vmem:[%s1 + $0x8f8] sm:$0xff]
    %v317 = vld [vmem:[%s1 + $0x900] sm:$0xff]
    %v318 = vld [vmem:[%s1 + $0x908] sm:$0xff]
    %v319 = vld [vmem:[%s1 + $0x910] sm:$0xff]
    %v320 = vld [vmem:[%s1 + $0x918] sm:$0xff]
    %v321 = vld [vmem:[%s1 + $0x920] sm:$0xff]
    %v322 = vld [vmem:[%s1 + $0x928] sm:$0xff]
    %v323 = vld [vmem:[%s1 + $0x930] sm:$0xff]
    %v324 = vld [vmem:[%s1 + $0x938] sm:$0xff]
    %v325 = vld [vmem:[%s1 + $0x940] sm:$0xff]
    %v326 = vld [vmem:[%s1 + $0x948] sm:$0xff]
    %v327 = vld [vmem:[%s1 + $0x950] sm:$0xff]
    %v328 = vld [vmem:[%s1 + $0x958] sm:$0xff]
    %v329 = vld [vmem:[%s1 + $0x960] sm:$0xff]
    %v330 = vld [vmem:[%s1 + $0x968] sm:$0xff]
    %v331 = vld [vmem:[%s1 + $0x970] sm:$0xff]
    %v332 = vld [vmem:[%s1 + $0x978] sm:$0xff]
    %v333 = vld [vmem:[%s1 + $0x980] sm:$0xff]
    %v334 = vld [vmem:[%s1 + $0x988] sm:$0xff]
    %v335 = vld [vmem:[%s1 + $0x990] sm:$0xff]
    %v336 = vld [vmem:[%s1 + $0x998] sm:$0xff]
    %v337 = vld [vmem:[%s1 + $0x9a0] sm:$0xff]
    %v338 = vld [vmem:[%s1 + $0x9a8] sm:$0xff]
    %v339 = vld [vmem:[%s1 + $0x9b0] sm:$0xff]
    %v340 = vld [vmem:[%s1 + $0x9b8] sm:$0xff]
    %v341 = vld [vmem:[%s1 + $0x9c0] sm:$0xff]
    %v342 = vld [vmem:[%s1 + $0x9c8] sm:$0xff]
    %v343 = vld [vmem:[%s1 + $0x9d0] sm:$0xff]
    %v344 = vld [vmem:[%s1 + $0x9d8] sm:$0xff]
    %v345 = vld [vmem:[%s1 + $0x9e0] sm:$0xff]
    %v346 = vld [vmem:[%s1 + $0x9e8] sm:$0xff]
    %v347 = vld [vmem:[%s1 + $0x9f0] sm:$0xff]
    %v348 = vld [vmem:[%s1 + $0x9f8] sm:$0xff]
    %v349 = vld [vmem:[%s1 + $0xa00] sm:$0xff]
    %v350 = vld [vmem:[%s1 + $0xa08] sm:$0xff]
    %v351 = vld [vmem:[%s1 + $0xa10] sm:$0xff]
    %v352 = vld [vmem:[%s1 + $0xa18] sm:$0xff]
    %v353 = vld [vmem:[%s1 + $0xa20] sm:$0xff]
    %v354 = vld [vmem:[%s1 + $0xa28] sm:$0xff]
    %v355 = vld [vmem:[%s1 + $0xa30] sm:$0xff]
    %v356 = vld [vmem:[%s1 + $0xa38] sm:$0xff]
    %v357 = vld [vmem:[%s1 + $0xa40] sm:$0xff]
    %v358 = vld [vmem:[%s1 + $0xa48] sm:$0xff]
    %v359 = vld [vmem:[%s1 + $0xa50] sm:$0xff]
    %v360 = vld [vmem:[%s1 + $0xa58] sm:$0xff]
    %v361 = vld [vmem:[%s1 + $0xa60] sm:$0xff]
    %v362 = vld [vmem:[%s1 + $0xa68] sm:$0xff]
    %v363 = vld [vmem:[%s1 + $0xa70] sm:$0xff]
    %v364 = vld [vmem:[%s1 + $0xa78] sm:$0xff]
    %v365 = vld [vmem:[%s1 + $0xa80] sm:$0xff]
    %v366 = vld [vmem:[%s1 + $0xa88] sm:$0xff]
    %v367 = vld [vmem:[%s1 + $0xa90] sm:$0xff]
    %v368 = vld [vmem:[%s1 + $0xa98] sm:$0xff]
    %v369 = vld [vmem:[%s1 + $0xaa0] sm:$0xff]
    %v370 = vld [vmem:[%s1 + $0xaa8] sm:$0xff]
    %v371 = vld [vmem:[%s1 + $0xab0] sm:$0xff]
    %v372 = vld [vmem:[%s1 + $0xab8] sm:$0xff]
    %v373 = vld [vmem:[%s1 + $0xac0] sm:$0xff]
    %v374 = vld [vmem:[%s1 + $0xac8] sm:$0xff]
    %v375 = vld [vmem:[%s1 + $0xad0] sm:$0xff]
    %v376 = vld [vmem:[%s1 + $0xad8] sm:$0xff]
    %v377 = vld [vmem:[%s1 + $0xae0] sm:$0xff]
    %v378 = vld [vmem:[%s1 + $0xae8] sm:$0xff]
    %v379 = vld [vmem:[%s1 + $0xaf0] sm:$0xff]
    %v380 = vld [vmem:[%s1 + $0xaf8] sm:$0xff]
    %v381 = vld [vmem:[%s1 + $0xb00] sm:$0xff]
    %v382 = vld [vmem:[%s1 + $0xb08] sm:$0xff]
    %v383 = vld [vmem:[%s1 + $0xb10] sm:$0xff]
    %v384 = vld [vmem:[%s1 + $0xb18] sm:$0xff]
    %v385 = vld [vmem:[%s1 + $0xb20] sm:$0xff]
    %v386 = vld [vmem:[%s1 + $0xb28] sm:$0xff]
    %v387 = vld [vmem:[%s1 + $0xb30] sm:$0xff]
    %v388 = vld [vmem:[%s1 + $0xb38] sm:$0xff]
    %v389 = vld [vmem:[%s1 + $0xb40] sm:$0xff]
    %v390 = vld [vmem:[%s1 + $0xb48] sm:$0xff]
    %v391 = vld [vmem:[%s1 + $0xb50] sm:$0xff]
    %v392 = vld [vmem:[%s1 + $0xb58] sm:$0xff]
    %v393 = vld [vmem:[%s1 + $0xb60] sm:$0xff]
    %v394 = vld [vmem:[%s1 + $0xb68] sm:$0xff]
    %v395 = vld [vmem:[%s1 + $0xb70] sm:$0xff]
    %v396 = vld [vmem:[%s1 + $0xb78] sm:$0xff]
    %v397 = vld [vmem:[%s1 + $0xb80] sm:$0xff]
    %v398 = vld [vmem:[%s1 + $0xb88] sm:$0xff]
    %v399 = vld [vmem:[%s1 + $0xb90] sm:$0xff]
    %v400 = vld [vmem:[%s1 + $0xb98] sm:$0xff]
    %v401 = vld [vmem:[%s1 + $0xba0] sm:$0xff]
    %v402 = vld [vmem:[%s1 + $0xba8] sm:$0xff]
    %v403 = vld [vmem:[%s1 + $0xbb0] sm:$0xff]
    %v404 = vld [vmem:[%s1 + $0xbb8] sm:$0xff]
    %v405 = vld [vmem:[%s1 + $0xbc0] sm:$0xff]
    %v406 = vld [vmem:[%s1 + $0xbc8] sm:$0xff]
    %v407 = vld [vmem:[%s1 + $0xbd0] sm:$0xff]
    %v408 = vld [vmem:[%s1 + $0xbd8] sm:$0xff]
    %v409 = vld [vmem:[%s1 + $0xbe0] sm:$0xff]
    %v410 = vld [vmem:[%s1 + $0xbe8] sm:$0xff]
    %v411 = vld [vmem:[%s1 + $0xbf0] sm:$0xff]
    %v412 = vld [vmem:[%s1 + $0xbf8] sm:$0xff]
    %v413 = vld [vmem:[%s1 + $0xc00] sm:$0xff]
    %v414 = vld [vmem:[%s1 + $0xc08] sm:$0xff]
    %v415 = vld [vmem:[%s1 + $0xc10] sm:$0xff]
    %v416 = vld [vmem:[%s1 + $0xc18] sm:$0xff]
    %v417 = vld [vmem:[%s1 + $0xc20] sm:$0xff]
    %v418 = vld [vmem:[%s1 + $0xc28] sm:$0xff]
    %v419 = vld [vmem:[%s1 + $0xc30] sm:$0xff]
    %v420 = vld [vmem:[%s1 + $0xc38] sm:$0xff]
    %v421 = vld [vmem:[%s1 + $0xc40] sm:$0xff]
    %v422 = vld [vmem:[%s1 + $0xc48] sm:$0xff]
    %v423 = vld [vmem:[%s1 + $0xc50] sm:$0xff]
    %v424 = vld [vmem:[%s1 + $0xc58] sm:$0xff]
    %v425 = vld [vmem:[%s1 + $0xc60] sm:$0xff]
    %v426 = vld [vmem:[%s1 + $0xc68] sm:$0xff]
    %v427 = vld [vmem:[%s1 + $0xc70] sm:$0xff]
    %v428 = vld [vmem:[%s1 + $0xc78] sm:$0xff]
    %v429 = vld [vmem:[%s1 + $0xc80] sm:$0xff]
    %v430 = vld [vmem:[%s1 + $0xc88] sm:$0xff]
    %v431 = vld [vmem:[%s1 + $0xc90] sm:$0xff]
    %v432 = vld [vmem:[%s1 + $0xc98] sm:$0xff]
    %v433 = vld [vmem:[%s1 + $0xca0] sm:$0xff]
    %v434 = vld [vmem:[%s1 + $0xca8] sm:$0xff]
    %v435 = vld [vmem:[%s1 + $0xcb0] sm:$0xff]
    %v436 = vld [vmem:[%s1 + $0xcb8] sm:$0xff]
    %v437 = vld [vmem:[%s1 + $0xcc0] sm:$0xff]
    %v438 = vld [vmem:[%s1 + $0xcc8] sm:$0xff]
    %v439 = vld [vmem:[%s1 + $0xcd0] sm:$0xff]
    %v440 = vld [vmem:[%s1 + $0xcd8] sm:$0xff]
    %v441 = vld [vmem:[%s1 + $0xce0] sm:$0xff]
    %v442 = vld [vmem:[%s1 + $0xce8] sm:$0xff]
    %v443 = vld [vmem:[%s1 + $0xcf0] sm:$0xff]
    %v444 = vld [vmem:[%s1 + $0xcf8] sm:$0xff]
    %v445 = vld [vmem:[%s1 + $0xd00] sm:$0xff]
    %v446 = vld [vmem:[%s1 + $0xd08] sm:$0xff]
    %v447 = vld [vmem:[%s1 + $0xd10] sm:$0xff]
    %v448 = vld [vmem:[%s1 + $0xd18] sm:$0xff]
    %v449 = vld [vmem:[%s1 + $0xd20] sm:$0xff]
    %v450 = vld [vmem:[%s1 + $0xd28] sm:$0xff]
    %v451 = vld [vmem:[%s1 + $0xd30] sm:$0xff]
    %v452 = vld [vmem:[%s1 + $0xd38] sm:$0xff]
    %v453 = vld [vmem:[%s1 + $0xd40] sm:$0xff]
    %v454 = vld [vmem:[%s1 + $0xd48] sm:$0xff]
    %v455 = vld [vmem:[%s1 + $0xd50] sm:$0xff]
    %v456 = vld [vmem:[%s1 + $0xd58] sm:$0xff]
    %v457 = vld [vmem:[%s1 + $0xd60] sm:$0xff]
    %v458 = vld [vmem:[%s1 + $0xd68] sm:$0xff]
    %v459 = vld [vmem:[%s1 + $0xd70] sm:$0xff]
    %v460 = vld [vmem:[%s1 + $0xd78] sm:$0xff]
    %v461 = vld [vmem:[%s1 + $0xd80] sm:$0xff]
    %v462 = vld [vmem:[%s1 + $0xd88] sm:$0xff]
    %v463 = vld [vmem:[%s1 + $0xd90] sm:$0xff]
    %v464 = vld [vmem:[%s1 + $0xd98] sm:$0xff]
    %v465 = vld [vmem:[%s1 + $0xda0] sm:$0xff]
    %v466 = vld [vmem:[%s1 + $0xda8] sm:$0xff]
    %v467 = vld [vmem:[%s1 + $0xdb0] sm:$0xff]
    %v468 = vld [vmem:[%s1 + $0xdb8] sm:$0xff]
    %v469 = vld [vmem:[%s1 + $0xdc0] sm:$0xff]
    %v470 = vld [vmem:[%s1 + $0xdc8] sm:$0xff]
    %v471 = vld [vmem:[%s1 + $0xdd0] sm:$0xff]
    %v472 = vld [vmem:[%s1 + $0xdd8] sm:$0xff]
    %v473 = vld [vmem:[%s1 + $0xde0] sm:$0xff]
    %v474 = vld [vmem:[%s1 + $0xde8] sm:$0xff]
    %v475 = vld [vmem:[%s1 + $0xdf0] sm:$0xff]
    %v476 = vld [vmem:[%s1 + $0xdf8] sm:$0xff]
    %v477 = vld [vmem:[%s1 + $0xe00] sm:$0xff]
    %v478 = vld [vmem:[%s1 + $0xe08] sm:$0xff]
    %v479 = vld [vmem:[%s1 + $0xe10] sm:$0xff]
    %v480 = vld [vmem:[%s1 + $0xe18] sm:$0xff]
    %v481 = vld [vmem:[%s1 + $0xe20] sm:$0xff]
    %v482 = vld [vmem:[%s1 + $0xe28] sm:$0xff]
    %v483 = vld [vmem:[%s1 + $0xe30] sm:$0xff]
    %v484 = vld [vmem:[%s1 + $0xe38] sm:$0xff]
    %v485 = vld [vmem:[%s1 + $0xe40] sm:$0xff]
    %v486 = vld [vmem:[%s1 + $0xe48] sm:$0xff]
    %v487 = vld [vmem:[%s1 + $0xe50] sm:$0xff]
    %v488 = vld [vmem:[%s1 + $0xe58] sm:$0xff]
    %v489 = vld [vmem:[%s1 + $0xe60] sm:$0xff]
    %v490 = vld [vmem:[%s1 + $0xe68] sm:$0xff]
    %v491 = vld [vmem:[%s1 + $0xe70] sm:$0xff]
    %v492 = vld [vmem:[%s1 + $0xe78] sm:$0xff]
    %v493 = vld [vmem:[%s1 + $0xe80] sm:$0xff]
    %v494 = vld [vmem:[%s1 + $0xe88] sm:$0xff]
    %v495 = vld [vmem:[%s1 + $0xe90] sm:$0xff]
    %v496 = vld [vmem:[%s1 + $0xe98] sm:$0xff]
    %v497 = vld [vmem:[%s1 + $0xea0] sm:$0xff]
    %v498 = vld [vmem:[%s1 + $0xea8] sm:$0xff]
    %v499 = vld [vmem:[%s1 + $0xeb0] sm:$0xff]
    %v500 = vld [vmem:[%s1 + $0xeb8] sm:$0xff]
    %v501 = vld [vmem:[%s1 + $0xec0] sm:$0xff]
    %v502 = vld [vmem:[%s1 + $0xec8] sm:$0xff]
    %v503 = vld [vmem:[%s1 + $0xed0] sm:$0xff]
    %v504 = vld [vmem:[%s1 + $0xed8] sm:$0xff]
    %v505 = vld [vmem:[%s1 + $0xee0] sm:$0xff]
    %v506 = vld [vmem:[%s1 + $0xee8] sm:$0xff]
    %v507 = vld [vmem:[%s1 + $0xef0] sm:$0xff]
    %v508 = vld [vmem:[%s1 + $0xef8] sm:$0xff]
    %v509 = vld [vmem:[%s1 + $0xf00] sm:$0xff]
    %v510 = vld [vmem:[%s1 + $0xf08] sm:$0xff]
    %v511 = vld [vmem:[%s1 + $0xf10] sm:$0xff]
    %v512 = vld [vmem:[%s1 + $0xf18] sm:$0xff]
    %v513 = vld [vmem:[%s1 + $0xf20] sm:$0xff]
    %v514 = vld [vmem:[%s1 + $0xf28] sm:$0xff]
    %v515 = vld [vmem:[%s1 + $0xf30] sm:$0xff]
    %v516 = vld [vmem:[%s1 + $0xf38] sm:$0xff]
    %v517 = vld [vmem:[%s1 + $0xf40] sm:$0xff]
    %v518 = vld [vmem:[%s1 + $0xf48] sm:$0xff]
    %v519 = vld [vmem:[%s1 + $0xf50] sm:$0xff]
    %v520 = vld [vmem:[%s1 + $0xf58] sm:$0xff]
    %v521 = vld [vmem:[%s1 + $0xf60] sm:$0xff]
    %v522 = vld [vmem:[%s1 + $0xf68] sm:$0xff]
    %v523 = vld [vmem:[%s1 + $0xf70] sm:$0xff]
    %v524 = vld [vmem:[%s1 + $0xf78] sm:$0xff]
    %v525 = vld [vmem:[%s1 + $0xf80] sm:$0xff]
    %v526 = vld [vmem:[%s1 + $0xf88] sm:$0xff]
    %v527 = vld [vmem:[%s1 + $0xf90] sm:$0xff]
    %v528 = vld [vmem:[%s1 + $0xf98] sm:$0xff]
    %v529 = vld [vmem:[%s1 + $0xfa0] sm:$0xff]
    %v530 = vld [vmem:[%s1 + $0xfa8] sm:$0xff]
    %v531 = vld [vmem:[%s1 + $0xfb0] sm:$0xff]
    %v532 = vld [vmem:[%s1 + $0xfb8] sm:$0xff]
    %v533 = vld [vmem:[%s1 + $0xfc0] sm:$0xff]
    %v534 = vld [vmem:[%s1 + $0xfc8] sm:$0xff]
    %v535 = vld [vmem:[%s1 + $0xfd0] sm:$0xff]
    %v536 = vld [vmem:[%s1 + $0xfd8] sm:$0xff]
    %v537 = vld [vmem:[%s1 + $0xfe0] sm:$0xff]
    %v538 = vld [vmem:[%s1 + $0xfe8] sm:$0xff]
    %v539 = vld [vmem:[%s1 + $0xff0] sm:$0xff]
    %v540 = vld [vmem:[%s1 + $0xff8] sm:$0xff]
    %v541 = vld [vmem:[%s2] sm:$0xf]
    %v543 = vlaneseq
    %v544 = vshrl.u32 %v543, 7
    %v545 = vsub.s32 0, %v544
    %v546 = vrot.slane %v541, %v545
    %v547 = vlaneseq
    %v548 = vshrl.u32 %v547, 7
    %v549 = vsub.s32 1, %v548
    %v550 = vrot.slane %v541, %v549
    %v551 = vlaneseq
    %v552 = vshrl.u32 %v551, 7
    %v553 = vsub.s32 2, %v552
    %v554 = vrot.slane %v541, %v553
    %v555 = vlaneseq
    %v556 = vshrl.u32 %v555, 7
    %v557 = vsub.s32 3, %v556
    %v558 = vrot.slane %v541, %v557
    %v565 = vcombine.high %v27, %v27
    %v567 = vunpack.c.l.s4 1983009808
    %v568 = vunpack.c.0.s8 %v567
    %v569 = vlaneseq
    %v570 = vshrl.u32 %v569, 7
    %v571 = vsub.s32 %v568, %v570
    %v572 = vrot.slane %v27, %v571
    %v574 = vunpack.c.l.s4 1983009808
    %v575 = vunpack.c.0.s8 %v574
    %v576 = vlaneseq
    %v577 = vshrl.u32 %v576, 7
    %v578 = vsub.s32 %v575, %v577
    %v579 = vrot.slane %v565, %v578
    %v580 = vcombine.high %v572, %v572
    %v581 = vcombine.high %v579, %v579
    %v582 = vcombine.high %v28, %v28
    %v584 = vunpack.c.l.s4 1983009808
    %v585 = vunpack.c.0.s8 %v584
    %v586 = vlaneseq
    %v587 = vshrl.u32 %v586, 7
    %v588 = vsub.s32 %v585, %v587
    %v589 = vrot.slane %v28, %v588
    %v591 = vunpack.c.l.s4 1983009808
    %v592 = vunpack.c.0.s8 %v591
    %v593 = vlaneseq
    %v594 = vshrl.u32 %v593, 7
    %v595 = vsub.s32 %v592, %v594
    %v596 = vrot.slane %v582, %v595
    %v597 = vcombine.high %v589, %v589
    %v598 = vcombine.high %v596, %v596
    %607 = vmatprep.subr.mxu0 %v30
    %608 = vmatpush1.msra.mxu0 %v29
    %609 = vmatprep.subr.mxu0 %v34
    %610 = vmatpush1.msra.mxu0 %v33
    %611 = vmatprep.subr.mxu0 %v38
    %612 = vmatpush1.msra.mxu0 %v37
    %613 = vmatprep.subr.mxu0 %v42
    %614 = vmatpush1.msra.mxu0 %v41
    %615 = vmatprep.subr.mxu0 %v46
    %616 = vmatpush1.msra.mxu0 %v45
    %617 = vmatprep.subr.mxu0 %v50
    %618 = vmatpush1.msra.mxu0 %v49
    %619 = vmatprep.subr.mxu0 %v54
    %620 = vmatpush1.msra.mxu0 %v53
    %621 = vmatprep.subr.mxu0 %v58
    %622 = vmatpush1.msra.mxu0 %v57
    %623 = vmatprep.subr.mxu0 %v62
    %624 = vmatpush1.msra.mxu0 %v61
    %625 = vmatprep.subr.mxu0 %v66
    %626 = vmatpush1.msra.mxu0 %v65
    %627 = vmatprep.subr.mxu0 %v70
    %628 = vmatpush1.msra.mxu0 %v69
    %629 = vmatprep.subr.mxu0 %v74
    %630 = vmatpush1.msra.mxu0 %v73
    %631 = vmatprep.subr.mxu0 %v78
    %632 = vmatpush1.msra.mxu0 %v77
    %633 = vmatprep.subr.mxu0 %v82
    %634 = vmatpush1.msra.mxu0 %v81
    %635 = vmatprep.subr.mxu0 %v86
    %636 = vmatpush1.msra.mxu0 %v85
    %637 = vmatprep.subr.mxu0 %v90
    %638 = vmatpush1.msra.mxu0 %v89
    %639 = vmatprep.subr.mxu0 %v94
    %640 = vmatpush1.msra.mxu0 %v93
    %641 = vmatprep.subr.mxu0 %v98
    %642 = vmatpush1.msra.mxu0 %v97
    %643 = vmatprep.subr.mxu0 %v102
    %644 = vmatpush1.msra.mxu0 %v101
    %645 = vmatprep.subr.mxu0 %v106
    %646 = vmatpush1.msra.mxu0 %v105
    %647 = vmatprep.subr.mxu0 %v110
    %648 = vmatpush1.msra.mxu0 %v109
    %649 = vmatprep.subr.mxu0 %v114
    %650 = vmatpush1.msra.mxu0 %v113
    %651 = vmatprep.subr.mxu0 %v118
    %652 = vmatpush1.msra.mxu0 %v117
    %653 = vmatprep.subr.mxu0 %v122
    %654 = vmatpush1.msra.mxu0 %v121
    %655 = vmatprep.subr.mxu0 %v126
    %656 = vmatpush1.msra.mxu0 %v125
    %657 = vmatprep.subr.mxu0 %v130
    %658 = vmatpush1.msra.mxu0 %v129
    %659 = vmatprep.subr.mxu0 %v134
    %660 = vmatpush1.msra.mxu0 %v133
    %661 = vmatprep.subr.mxu0 %v138
    %662 = vmatpush1.msra.mxu0 %v137
    %663 = vmatprep.subr.mxu0 %v142
    %664 = vmatpush1.msra.mxu0 %v141
    %665 = vmatprep.subr.mxu0 %v146
    %666 = vmatpush1.msra.mxu0 %v145
    %667 = vmatprep.subr.mxu0 %v150
    %668 = vmatpush1.msra.mxu0 %v149
    %669 = vmatprep.subr.mxu0 %v154
    %670 = vmatpush1.msra.mxu0 %v153
    %671 = vmatprep.mubr.f32.mxu0 %v580
    %672 = vmatmul.mubr.f32.gmra.mrb[0].mxu0 %v572
    %v673 = vpop.f32.mrb[0].mxu0
    %v674 = vadd.f32 %v546, %v673
    %v675 = vpop.f32.mrb[0].mxu0
    %v676 = vadd.f32 %v550, %v675
    %677 = vdwg.mxu0
    %678 = vmatprep.subr.mxu0 %v158
    %679 = vmatpush1.msra.mxu0 %v157
    %680 = vmatprep.subr.mxu0 %v162
    %681 = vmatpush1.msra.mxu0 %v161
    %682 = vmatprep.subr.mxu0 %v166
    %683 = vmatpush1.msra.mxu0 %v165
    %684 = vmatprep.subr.mxu0 %v170
    %685 = vmatpush1.msra.mxu0 %v169
    %686 = vmatprep.subr.mxu0 %v174
    %687 = vmatpush1.msra.mxu0 %v173
    %688 = vmatprep.subr.mxu0 %v178
    %689 = vmatpush1.msra.mxu0 %v177
    %690 = vmatprep.subr.mxu0 %v182
    %691 = vmatpush1.msra.mxu0 %v181
    %692 = vmatprep.subr.mxu0 %v186
    %693 = vmatpush1.msra.mxu0 %v185
    %694 = vmatprep.subr.mxu0 %v190
    %695 = vmatpush1.msra.mxu0 %v189
    %696 = vmatprep.subr.mxu0 %v194
    %697 = vmatpush1.msra.mxu0 %v193
    %698 = vmatprep.subr.mxu0 %v198
    %699 = vmatpush1.msra.mxu0 %v197
    %700 = vmatprep.subr.mxu0 %v202
    %701 = vmatpush1.msra.mxu0 %v201
    %702 = vmatprep.subr.mxu0 %v206
    %703 = vmatpush1.msra.mxu0 %v205
    %704 = vmatprep.subr.mxu0 %v210
    %705 = vmatpush1.msra.mxu0 %v209
    %706 = vmatprep.subr.mxu0 %v214
    %707 = vmatpush1.msra.mxu0 %v213
    %708 = vmatprep.subr.mxu0 %v218
    %709 = vmatpush1.msra.mxu0 %v217
    %710 = vmatprep.subr.mxu0 %v222
    %711 = vmatpush1.msra.mxu0 %v221
    %712 = vmatprep.subr.mxu0 %v226
    %713 = vmatpush1.msra.mxu0 %v225
    %714 = vmatprep.subr.mxu0 %v230
    %715 = vmatpush1.msra.mxu0 %v229
    %716 = vmatprep.subr.mxu0 %v234
    %717 = vmatpush1.msra.mxu0 %v233
    %718 = vmatprep.subr.mxu0 %v238
    %719 = vmatpush1.msra.mxu0 %v237
    %720 = vmatprep.subr.mxu0 %v242
    %721 = vmatpush1.msra.mxu0 %v241
    %722 = vmatprep.subr.mxu0 %v246
    %723 = vmatpush1.msra.mxu0 %v245
    %724 = vmatprep.subr.mxu0 %v250
    %725 = vmatpush1.msra.mxu0 %v249
    %726 = vmatprep.subr.mxu0 %v254
    %727 = vmatpush1.msra.mxu0 %v253
    %728 = vmatprep.subr.mxu0 %v258
    %729 = vmatpush1.msra.mxu0 %v257
    %730 = vmatprep.subr.mxu0 %v262
    %731 = vmatpush1.msra.mxu0 %v261
    %732 = vmatprep.subr.mxu0 %v266
    %733 = vmatpush1.msra.mxu0 %v265
    %734 = vmatprep.subr.mxu0 %v270
    %735 = vmatpush1.msra.mxu0 %v269
    %736 = vmatprep.subr.mxu0 %v274
    %737 = vmatpush1.msra.mxu0 %v273
    %738 = vmatprep.subr.mxu0 %v278
    %739 = vmatpush1.msra.mxu0 %v277
    %740 = vmatprep.subr.mxu0 %v282
    %741 = vmatpush1.msra.mxu0 %v281
    %742 = vmatprep.mubr.f32.mxu0 %v581
    %743 = vmatmul.mubr.f32.gmra.mrb[0].mxu0 %v579
    %v744 = vpop.f32.mrb[0].mxu0
    %v745 = vadd.f32 %v674, %v744
    %v746 = vpop.f32.mrb[0].mxu0
    %v747 = vadd.f32 %v676, %v746
    %748 = vdwg.mxu0
    %749 = vmatprep.subr.mxu0 %v286
    %750 = vmatpush1.msra.mxu0 %v285
    %751 = vmatprep.subr.mxu0 %v290
    %752 = vmatpush1.msra.mxu0 %v289
    %753 = vmatprep.subr.mxu0 %v294
    %754 = vmatpush1.msra.mxu0 %v293
    %755 = vmatprep.subr.mxu0 %v298
    %756 = vmatpush1.msra.mxu0 %v297
    %757 = vmatprep.subr.mxu0 %v302
    %758 = vmatpush1.msra.mxu0 %v301
    %759 = vmatprep.subr.mxu0 %v306
    %760 = vmatpush1.msra.mxu0 %v305
    %761 = vmatprep.subr.mxu0 %v310
    %762 = vmatpush1.msra.mxu0 %v309
    %763 = vmatprep.subr.mxu0 %v314
    %764 = vmatpush1.msra.mxu0 %v313
    %765 = vmatprep.subr.mxu0 %v318
    %766 = vmatpush1.msra.mxu0 %v317
    %767 = vmatprep.subr.mxu0 %v322
    %768 = vmatpush1.msra.mxu0 %v321
    %769 = vmatprep.subr.mxu0 %v326
    %770 = vmatpush1.msra.mxu0 %v325
    %771 = vmatprep.subr.mxu0 %v330
    %772 = vmatpush1.msra.mxu0 %v329
    %773 = vmatprep.subr.mxu0 %v334
    %774 = vmatpush1.msra.mxu0 %v333
    %775 = vmatprep.subr.mxu0 %v338
    %776 = vmatpush1.msra.mxu0 %v337
    %777 = vmatprep.subr.mxu0 %v342
    %778 = vmatpush1.msra.mxu0 %v341
    %779 = vmatprep.subr.mxu0 %v346
    %780 = vmatpush1.msra.mxu0 %v345
    %781 = vmatprep.subr.mxu0 %v350
    %782 = vmatpush1.msra.mxu0 %v349
    %783 = vmatprep.subr.mxu0 %v354
    %784 = vmatpush1.msra.mxu0 %v353
    %785 = vmatprep.subr.mxu0 %v358
    %786 = vmatpush1.msra.mxu0 %v357
    %787 = vmatprep.subr.mxu0 %v362
    %788 = vmatpush1.msra.mxu0 %v361
    %789 = vmatprep.subr.mxu0 %v366
    %790 = vmatpush1.msra.mxu0 %v365
    %791 = vmatprep.subr.mxu0 %v370
    %792 = vmatpush1.msra.mxu0 %v369
    %793 = vmatprep.subr.mxu0 %v374
    %794 = vmatpush1.msra.mxu0 %v373
    %795 = vmatprep.subr.mxu0 %v378
    %796 = vmatpush1.msra.mxu0 %v377
    %797 = vmatprep.subr.mxu0 %v382
    %798 = vmatpush1.msra.mxu0 %v381
    %799 = vmatprep.subr.mxu0 %v386
    %800 = vmatpush1.msra.mxu0 %v385
    %801 = vmatprep.subr.mxu0 %v390
    %802 = vmatpush1.msra.mxu0 %v389
    %803 = vmatprep.subr.mxu0 %v394
    %804 = vmatpush1.msra.mxu0 %v393
    %805 = vmatprep.subr.mxu0 %v398
    %806 = vmatpush1.msra.mxu0 %v397
    %807 = vmatprep.subr.mxu0 %v402
    %808 = vmatpush1.msra.mxu0 %v401
    %809 = vmatprep.subr.mxu0 %v406
    %810 = vmatpush1.msra.mxu0 %v405
    %811 = vmatprep.subr.mxu0 %v410
    %812 = vmatpush1.msra.mxu0 %v409
    %813 = vmatprep.mubr.f32.mxu0 %v597
    %814 = vmatmul.mubr.f32.gmra.mrb[0].mxu0 %v589
    %v815 = vpop.f32.mrb[0].mxu0
    %v816 = vadd.f32 %v745, %v815
    %v817 = vpop.f32.mrb[0].mxu0
    %v818 = vadd.f32 %v747, %v817
    %819 = vdwg.mxu0
    %820 = vmatprep.subr.mxu0 %v414
    %821 = vmatpush1.msra.mxu0 %v413
    %822 = vmatprep.subr.mxu0 %v418
    %823 = vmatpush1.msra.mxu0 %v417
    %824 = vmatprep.subr.mxu0 %v422
    %825 = vmatpush1.msra.mxu0 %v421
    %826 = vmatprep.subr.mxu0 %v426
    %827 = vmatpush1.msra.mxu0 %v425
    %828 = vmatprep.subr.mxu0 %v430
    %829 = vmatpush1.msra.mxu0 %v429
    %830 = vmatprep.subr.mxu0 %v434
    %831 = vmatpush1.msra.mxu0 %v433
    %832 = vmatprep.subr.mxu0 %v438
    %833 = vmatpush1.msra.mxu0 %v437
    %834 = vmatprep.subr.mxu0 %v442
    %835 = vmatpush1.msra.mxu0 %v441
    %836 = vmatprep.subr.mxu0 %v446
    %837 = vmatpush1.msra.mxu0 %v445
    %838 = vmatprep.subr.mxu0 %v450
    %839 = vmatpush1.msra.mxu0 %v449
    %840 = vmatprep.subr.mxu0 %v454
    %841 = vmatpush1.msra.mxu0 %v453
    %842 = vmatprep.subr.mxu0 %v458
    %843 = vmatpush1.msra.mxu0 %v457
    %844 = vmatprep.subr.mxu0 %v462
    %845 = vmatpush1.msra.mxu0 %v461
    %846 = vmatprep.subr.mxu0 %v466
    %847 = vmatpush1.msra.mxu0 %v465
    %848 = vmatprep.subr.mxu0 %v470
    %849 = vmatpush1.msra.mxu0 %v469
    %850 = vmatprep.subr.mxu0 %v474
    %851 = vmatpush1.msra.mxu0 %v473
    %852 = vmatprep.subr.mxu0 %v478
    %853 = vmatpush1.msra.mxu0 %v477
    %854 = vmatprep.subr.mxu0 %v482
    %855 = vmatpush1.msra.mxu0 %v481
    %856 = vmatprep.subr.mxu0 %v486
    %857 = vmatpush1.msra.mxu0 %v485
    %858 = vmatprep.subr.mxu0 %v490
    %859 = vmatpush1.msra.mxu0 %v489
    %860 = vmatprep.subr.mxu0 %v494
    %861 = vmatpush1.msra.mxu0 %v493
    %862 = vmatprep.subr.mxu0 %v498
    %863 = vmatpush1.msra.mxu0 %v497
    %864 = vmatprep.subr.mxu0 %v502
    %865 = vmatpush1.msra.mxu0 %v501
    %866 = vmatprep.subr.mxu0 %v506
    %867 = vmatpush1.msra.mxu0 %v505
    %868 = vmatprep.subr.mxu0 %v510
    %869 = vmatpush1.msra.mxu0 %v509
    %870 = vmatprep.subr.mxu0 %v514
    %871 = vmatpush1.msra.mxu0 %v513
    %872 = vmatprep.subr.mxu0 %v518
    %873 = vmatpush1.msra.mxu0 %v517
    %874 = vmatprep.subr.mxu0 %v522
    %875 = vmatpush1.msra.mxu0 %v521
    %876 = vmatprep.subr.mxu0 %v526
    %877 = vmatpush1.msra.mxu0 %v525
    %878 = vmatprep.subr.mxu0 %v530
    %879 = vmatpush1.msra.mxu0 %v529
    %880 = vmatprep.subr.mxu0 %v534
    %881 = vmatpush1.msra.mxu0 %v533
    %882 = vmatprep.subr.mxu0 %v538
    %883 = vmatpush1.msra.mxu0 %v537
    %884 = vmatprep.mubr.f32.mxu0 %v598
    %885 = vmatmul.mubr.f32.gmra.mrb[0].mxu0 %v596
    %v886 = vpop.f32.mrb[0].mxu0
    %v887 = vadd.f32 %v816, %v886
    %v888 = vpop.f32.mrb[0].mxu0
    %v889 = vadd.f32 %v818, %v888
    %890 = vdwg.mxu0
    %891 = vmatprep.subr.mxu0 %v32
    %892 = vmatpush1.msra.mxu0 %v31
    %893 = vmatprep.subr.mxu0 %v36
    %894 = vmatpush1.msra.mxu0 %v35
    %895 = vmatprep.subr.mxu0 %v40
    %896 = vmatpush1.msra.mxu0 %v39
    %897 = vmatprep.subr.mxu0 %v44
    %898 = vmatpush1.msra.mxu0 %v43
    %899 = vmatprep.subr.mxu0 %v48
    %900 = vmatpush1.msra.mxu0 %v47
    %901 = vmatprep.subr.mxu0 %v52
    %902 = vmatpush1.msra.mxu0 %v51
    %903 = vmatprep.subr.mxu0 %v56
    %904 = vmatpush1.msra.mxu0 %v55
    %905 = vmatprep.subr.mxu0 %v60
    %906 = vmatpush1.msra.mxu0 %v59
    %907 = vmatprep.subr.mxu0 %v64
    %908 = vmatpush1.msra.mxu0 %v63
    %909 = vmatprep.subr.mxu0 %v68
    %910 = vmatpush1.msra.mxu0 %v67
    %911 = vmatprep.subr.mxu0 %v72
    %912 = vmatpush1.msra.mxu0 %v71
    %913 = vmatprep.subr.mxu0 %v76
    %914 = vmatpush1.msra.mxu0 %v75
    %915 = vmatprep.subr.mxu0 %v80
    %916 = vmatpush1.msra.mxu0 %v79
    %917 = vmatprep.subr.mxu0 %v84
    %918 = vmatpush1.msra.mxu0 %v83
    %919 = vmatprep.subr.mxu0 %v88
    %920 = vmatpush1.msra.mxu0 %v87
    %921 = vmatprep.subr.mxu0 %v92
    %922 = vmatpush1.msra.mxu0 %v91
    %923 = vmatprep.subr.mxu0 %v96
    %924 = vmatpush1.msra.mxu0 %v95
    %925 = vmatprep.subr.mxu0 %v100
    %926 = vmatpush1.msra.mxu0 %v99
    %927 = vmatprep.subr.mxu0 %v104
    %928 = vmatpush1.msra.mxu0 %v103
    %929 = vmatprep.subr.mxu0 %v108
    %930 = vmatpush1.msra.mxu0 %v107
    %931 = vmatprep.subr.mxu0 %v112
    %932 = vmatpush1.msra.mxu0 %v111
    %933 = vmatprep.subr.mxu0 %v116
    %934 = vmatpush1.msra.mxu0 %v115
    %935 = vmatprep.subr.mxu0 %v120
    %936 = vmatpush1.msra.mxu0 %v119
    %937 = vmatprep.subr.mxu0 %v124
    %938 = vmatpush1.msra.mxu0 %v123
    %939 = vmatprep.subr.mxu0 %v128
    %940 = vmatpush1.msra.mxu0 %v127
    %941 = vmatprep.subr.mxu0 %v132
    %942 = vmatpush1.msra.mxu0 %v131
    %943 = vmatprep.subr.mxu0 %v136
    %944 = vmatpush1.msra.mxu0 %v135
    %945 = vmatprep.subr.mxu0 %v140
    %946 = vmatpush1.msra.mxu0 %v139
    %947 = vmatprep.subr.mxu0 %v144
    %948 = vmatpush1.msra.mxu0 %v143
    %949 = vmatprep.subr.mxu0 %v148
    %950 = vmatpush1.msra.mxu0 %v147
    %951 = vmatprep.subr.mxu0 %v152
    %952 = vmatpush1.msra.mxu0 %v151
    %953 = vmatprep.subr.mxu0 %v156
    %954 = vmatpush1.msra.mxu0 %v155
    %955 = vmatprep.mubr.f32.mxu0 %v580
    %956 = vmatmul.mubr.f32.gmra.mrb[0].mxu0 %v572
    %v957 = vpop.f32.mrb[0].mxu0
    %v958 = vadd.f32 %v554, %v957
    %v959 = vpop.f32.mrb[0].mxu0
    %v960 = vadd.f32 %v558, %v959
    %961 = vdwg.mxu0
    %962 = vmatprep.subr.mxu0 %v160
    %963 = vmatpush1.msra.mxu0 %v159
    %964 = vmatprep.subr.mxu0 %v164
    %965 = vmatpush1.msra.mxu0 %v163
    %966 = vmatprep.subr.mxu0 %v168
    %967 = vmatpush1.msra.mxu0 %v167
    %968 = vmatprep.subr.mxu0 %v172
    %969 = vmatpush1.msra.mxu0 %v171
    %970 = vmatprep.subr.mxu0 %v176
    %971 = vmatpush1.msra.mxu0 %v175
    %972 = vmatprep.subr.mxu0 %v180
    %973 = vmatpush1.msra.mxu0 %v179
    %974 = vmatprep.subr.mxu0 %v184
    %975 = vmatpush1.msra.mxu0 %v183
    %976 = vmatprep.subr.mxu0 %v188
    %977 = vmatpush1.msra.mxu0 %v187
    %978 = vmatprep.subr.mxu0 %v192
    %979 = vmatpush1.msra.mxu0 %v191
    %980 = vmatprep.subr.mxu0 %v196
    %981 = vmatpush1.msra.mxu0 %v195
    %982 = vmatprep.subr.mxu0 %v200
    %983 = vmatpush1.msra.mxu0 %v199
    %984 = vmatprep.subr.mxu0 %v204
    %985 = vmatpush1.msra.mxu0 %v203
    %986 = vmatprep.subr.mxu0 %v208
    %987 = vmatpush1.msra.mxu0 %v207
    %988 = vmatprep.subr.mxu0 %v212
    %989 = vmatpush1.msra.mxu0 %v211
    %990 = vmatprep.subr.mxu0 %v216
    %991 = vmatpush1.msra.mxu0 %v215
    %992 = vmatprep.subr.mxu0 %v220
    %993 = vmatpush1.msra.mxu0 %v219
    %994 = vmatprep.subr.mxu0 %v224
    %995 = vmatpush1.msra.mxu0 %v223
    %996 = vmatprep.subr.mxu0 %v228
    %997 = vmatpush1.msra.mxu0 %v227
    %998 = vmatprep.subr.mxu0 %v232
    %999 = vmatpush1.msra.mxu0 %v231
    %1000 = vmatprep.subr.mxu0 %v236
    %1001 = vmatpush1.msra.mxu0 %v235
    %1002 = vmatprep.subr.mxu0 %v240
    %1003 = vmatpush1.msra.mxu0 %v239
    %1004 = vmatprep.subr.mxu0 %v244
    %1005 = vmatpush1.msra.mxu0 %v243
    %1006 = vmatprep.subr.mxu0 %v248
    %1007 = vmatpush1.msra.mxu0 %v247
    %1008 = vmatprep.subr.mxu0 %v252
    %1009 = vmatpush1.msra.mxu0 %v251
    %1010 = vmatprep.subr.mxu0 %v256
    %1011 = vmatpush1.msra.mxu0 %v255
    %1012 = vmatprep.subr.mxu0 %v260
    %1013 = vmatpush1.msra.mxu0 %v259
    %1014 = vmatprep.subr.mxu0 %v264
    %1015 = vmatpush1.msra.mxu0 %v263
    %1016 = vmatprep.subr.mxu0 %v268
    %1017 = vmatpush1.msra.mxu0 %v267
    %1018 = vmatprep.subr.mxu0 %v272
    %1019 = vmatpush1.msra.mxu0 %v271
    %1020 = vmatprep.subr.mxu0 %v276
    %1021 = vmatpush1.msra.mxu0 %v275
    %1022 = vmatprep.subr.mxu0 %v280
    %1023 = vmatpush1.msra.mxu0 %v279
    %1024 = vmatprep.subr.mxu0 %v284
    %1025 = vmatpush1.msra.mxu0 %v283
    %1026 = vmatprep.mubr.f32.mxu0 %v581
    %1027 = vmatmul.mubr.f32.gmra.mrb[0].mxu0 %v579
    %v1028 = vpop.f32.mrb[0].mxu0
    %v1029 = vadd.f32 %v958, %v1028
    %v1030 = vpop.f32.mrb[0].mxu0
    %v1031 = vadd.f32 %v960, %v1030
    %1032 = vdwg.mxu0
    %1033 = vmatprep.subr.mxu0 %v288
    %1034 = vmatpush1.msra.mxu0 %v287
    %1035 = vmatprep.subr.mxu0 %v292
    %1036 = vmatpush1.msra.mxu0 %v291
    %1037 = vmatprep.subr.mxu0 %v296
    %1038 = vmatpush1.msra.mxu0 %v295
    %1039 = vmatprep.subr.mxu0 %v300
    %1040 = vmatpush1.msra.mxu0 %v299
    %1041 = vmatprep.subr.mxu0 %v304
    %1042 = vmatpush1.msra.mxu0 %v303
    %1043 = vmatprep.subr.mxu0 %v308
    %1044 = vmatpush1.msra.mxu0 %v307
    %1045 = vmatprep.subr.mxu0 %v312
    %1046 = vmatpush1.msra.mxu0 %v311
    %1047 = vmatprep.subr.mxu0 %v316
    %1048 = vmatpush1.msra.mxu0 %v315
    %1049 = vmatprep.subr.mxu0 %v320
    %1050 = vmatpush1.msra.mxu0 %v319
    %1051 = vmatprep.subr.mxu0 %v324
    %1052 = vmatpush1.msra.mxu0 %v323
    %1053 = vmatprep.subr.mxu0 %v328
    %1054 = vmatpush1.msra.mxu0 %v327
    %1055 = vmatprep.subr.mxu0 %v332
    %1056 = vmatpush1.msra.mxu0 %v331
    %1057 = vmatprep.subr.mxu0 %v336
    %1058 = vmatpush1.msra.mxu0 %v335
    %1059 = vmatprep.subr.mxu0 %v340
    %1060 = vmatpush1.msra.mxu0 %v339
    %1061 = vmatprep.subr.mxu0 %v344
    %1062 = vmatpush1.msra.mxu0 %v343
    %1063 = vmatprep.subr.mxu0 %v348
    %1064 = vmatpush1.msra.mxu0 %v347
    %1065 = vmatprep.subr.mxu0 %v352
    %1066 = vmatpush1.msra.mxu0 %v351
    %1067 = vmatprep.subr.mxu0 %v356
    %1068 = vmatpush1.msra.mxu0 %v355
    %1069 = vmatprep.subr.mxu0 %v360
    %1070 = vmatpush1.msra.mxu0 %v359
    %1071 = vmatprep.subr.mxu0 %v364
    %1072 = vmatpush1.msra.mxu0 %v363
    %1073 = vmatprep.subr.mxu0 %v368
    %1074 = vmatpush1.msra.mxu0 %v367
    %1075 = vmatprep.subr.mxu0 %v372
    %1076 = vmatpush1.msra.mxu0 %v371
    %1077 = vmatprep.subr.mxu0 %v376
    %1078 = vmatpush1.msra.mxu0 %v375
    %1079 = vmatprep.subr.mxu0 %v380
    %1080 = vmatpush1.msra.mxu0 %v379
    %1081 = vmatprep.subr.mxu0 %v384
    %1082 = vmatpush1.msra.mxu0 %v383
    %1083 = vmatprep.subr.mxu0 %v388
    %1084 = vmatpush1.msra.mxu0 %v387
    %1085 = vmatprep.subr.mxu0 %v392
    %1086 = vmatpush1.msra.mxu0 %v391
    %1087 = vmatprep.subr.mxu0 %v396
    %1088 = vmatpush1.msra.mxu0 %v395
    %1089 = vmatprep.subr.mxu0 %v400
    %1090 = vmatpush1.msra.mxu0 %v399
    %1091 = vmatprep.subr.mxu0 %v404
    %1092 = vmatpush1.msra.mxu0 %v403
    %1093 = vmatprep.subr.mxu0 %v408
    %1094 = vmatpush1.msra.mxu0 %v407
    %1095 = vmatprep.subr.mxu0 %v412
    %1096 = vmatpush1.msra.mxu0 %v411
    %1097 = vmatprep.mubr.f32.mxu0 %v597
    %1098 = vmatmul.mubr.f32.gmra.mrb[0].mxu0 %v589
    %v1099 = vpop.f32.mrb[0].mxu0
    %v1100 = vadd.f32 %v1029, %v1099
    %v1101 = vpop.f32.mrb[0].mxu0
    %v1102 = vadd.f32 %v1031, %v1101
    %1103 = vdwg.mxu0
    %1104 = vmatprep.subr.mxu0 %v416
    %1105 = vmatpush1.msra.mxu0 %v415
    %1106 = vmatprep.subr.mxu0 %v420
    %1107 = vmatpush1.msra.mxu0 %v419
    %1108 = vmatprep.subr.mxu0 %v424
    %1109 = vmatpush1.msra.mxu0 %v423
    %1110 = vmatprep.subr.mxu0 %v428
    %1111 = vmatpush1.msra.mxu0 %v427
    %1112 = vmatprep.subr.mxu0 %v432
    %1113 = vmatpush1.msra.mxu0 %v431
    %1114 = vmatprep.subr.mxu0 %v436
    %1115 = vmatpush1.msra.mxu0 %v435
    %1116 = vmatprep.subr.mxu0 %v440
    %1117 = vmatpush1.msra.mxu0 %v439
    %1118 = vmatprep.subr.mxu0 %v444
    %1119 = vmatpush1.msra.mxu0 %v443
    %1120 = vmatprep.subr.mxu0 %v448
    %1121 = vmatpush1.msra.mxu0 %v447
    %1122 = vmatprep.subr.mxu0 %v452
    %1123 = vmatpush1.msra.mxu0 %v451
    %1124 = vmatprep.subr.mxu0 %v456
    %1125 = vmatpush1.msra.mxu0 %v455
    %1126 = vmatprep.subr.mxu0 %v460
    %1127 = vmatpush1.msra.mxu0 %v459
    %1128 = vmatprep.subr.mxu0 %v464
    %1129 = vmatpush1.msra.mxu0 %v463
    %1130 = vmatprep.subr.mxu0 %v468
    %1131 = vmatpush1.msra.mxu0 %v467
    %1132 = vmatprep.subr.mxu0 %v472
    %1133 = vmatpush1.msra.mxu0 %v471
    %1134 = vmatprep.subr.mxu0 %v476
    %1135 = vmatpush1.msra.mxu0 %v475
    %1136 = vmatprep.subr.mxu0 %v480
    %1137 = vmatpush1.msra.mxu0 %v479
    %1138 = vmatprep.subr.mxu0 %v484
    %1139 = vmatpush1.msra.mxu0 %v483
    %1140 = vmatprep.subr.mxu0 %v488
    %1141 = vmatpush1.msra.mxu0 %v487
    %1142 = vmatprep.subr.mxu0 %v492
    %1143 = vmatpush1.msra.mxu0 %v491
    %1144 = vmatprep.subr.mxu0 %v496
    %1145 = vmatpush1.msra.mxu0 %v495
    %1146 = vmatprep.subr.mxu0 %v500
    %1147 = vmatpush1.msra.mxu0 %v499
    %1148 = vmatprep.subr.mxu0 %v504
    %1149 = vmatpush1.msra.mxu0 %v503
    %1150 = vmatprep.subr.mxu0 %v508
    %1151 = vmatpush1.msra.mxu0 %v507
    %1152 = vmatprep.subr.mxu0 %v512
    %1153 = vmatpush1.msra.mxu0 %v511
    %1154 = vmatprep.subr.mxu0 %v516
    %1155 = vmatpush1.msra.mxu0 %v515
    %1156 = vmatprep.subr.mxu0 %v520
    %1157 = vmatpush1.msra.mxu0 %v519
    %1158 = vmatprep.subr.mxu0 %v524
    %1159 = vmatpush1.msra.mxu0 %v523
    %1160 = vmatprep.subr.mxu0 %v528
    %1161 = vmatpush1.msra.mxu0 %v527
    %1162 = vmatprep.subr.mxu0 %v532
    %1163 = vmatpush1.msra.mxu0 %v531
    %1164 = vmatprep.subr.mxu0 %v536
    %1165 = vmatpush1.msra.mxu0 %v535
    %1166 = vmatprep.subr.mxu0 %v540
    %1167 = vmatpush1.msra.mxu0 %v539
    %1168 = vmatprep.mubr.f32.mxu0 %v598
    %1169 = vmatmul.mubr.f32.gmra.mrb[0].mxu0 %v596
    %v1170 = vpop.f32.mrb[0].mxu0
    %v1171 = vadd.f32 %v1100, %v1170
    %v1172 = vpop.f32.mrb[0].mxu0
    %v1173 = vadd.f32 %v1102, %v1172
    %1174 = vdwg.mxu0
    %v1175 = vmax.f32 %v887, 0.0
    %v1176 = vmax.f32 %v889, 0.0
    %v1177 = vmax.f32 %v1171, 0.0
    %v1178 = vmax.f32 %v1173, 0.0
    %v1179 = vld [vmem:[%s3] sm:$0xff]
    %v1180 = vld [vmem:[%s3 + $0x8] sm:$0xff]
    %v1181 = vld [vmem:[%s3 + $0x10] sm:$0xff]
    %v1182 = vld [vmem:[%s3 + $0x18] sm:$0xff]
    %v1183 = vld [vmem:[%s3 + $0x20] sm:$0xff]
    %v1184 = vld [vmem:[%s3 + $0x28] sm:$0xff]
    %v1185 = vld [vmem:[%s3 + $0x30] sm:$0xff]
    %v1186 = vld [vmem:[%s3 + $0x38] sm:$0xff]
    %v1187 = vld [vmem:[%s3 + $0x40] sm:$0xff]
    %v1188 = vld [vmem:[%s3 + $0x48] sm:$0xff]
    %v1189 = vld [vmem:[%s3 + $0x50] sm:$0xff]
    %v1190 = vld [vmem:[%s3 + $0x58] sm:$0xff]
    %v1191 = vld [vmem:[%s3 + $0x60] sm:$0xff]
    %v1192 = vld [vmem:[%s3 + $0x68] sm:$0xff]
    %v1193 = vld [vmem:[%s3 + $0x70] sm:$0xff]
    %v1194 = vld [vmem:[%s3 + $0x78] sm:$0xff]
    %v1195 = vld [vmem:[%s3 + $0x80] sm:$0xff]
    %v1196 = vld [vmem:[%s3 + $0x88] sm:$0xff]
    %v1197 = vld [vmem:[%s3 + $0x90] sm:$0xff]
    %v1198 = vld [vmem:[%s3 + $0x98] sm:$0xff]
    %v1199 = vld [vmem:[%s3 + $0xa0] sm:$0xff]
    %v1200 = vld [vmem:[%s3 + $0xa8] sm:$0xff]
    %v1201 = vld [vmem:[%s3 + $0xb0] sm:$0xff]
    %v1202 = vld [vmem:[%s3 + $0xb8] sm:$0xff]
    %v1203 = vld [vmem:[%s3 + $0xc0] sm:$0xff]
    %v1204 = vld [vmem:[%s3 + $0xc8] sm:$0xff]
    %v1205 = vld [vmem:[%s3 + $0xd0] sm:$0xff]
    %v1206 = vld [vmem:[%s3 + $0xd8] sm:$0xff]
    %v1207 = vld [vmem:[%s3 + $0xe0] sm:$0xff]
    %v1208 = vld [vmem:[%s3 + $0xe8] sm:$0xff]
    %v1209 = vld [vmem:[%s3 + $0xf0] sm:$0xff]
    %v1210 = vld [vmem:[%s3 + $0xf8] sm:$0xff]
    %v1211 = vld [vmem:[%s3 + $0x100] sm:$0xff]
    %v1212 = vld [vmem:[%s3 + $0x108] sm:$0xff]
    %v1213 = vld [vmem:[%s3 + $0x110] sm:$0xff]
    %v1214 = vld [vmem:[%s3 + $0x118] sm:$0xff]
    %v1215 = vld [vmem:[%s3 + $0x120] sm:$0xff]
    %v1216 = vld [vmem:[%s3 + $0x128] sm:$0xff]
    %v1217 = vld [vmem:[%s3 + $0x130] sm:$0xff]
    %v1218 = vld [vmem:[%s3 + $0x138] sm:$0xff]
    %v1219 = vld [vmem:[%s3 + $0x140] sm:$0xff]
    %v1220 = vld [vmem:[%s3 + $0x148] sm:$0xff]
    %v1221 = vld [vmem:[%s3 + $0x150] sm:$0xff]
    %v1222 = vld [vmem:[%s3 + $0x158] sm:$0xff]
    %v1223 = vld [vmem:[%s3 + $0x160] sm:$0xff]
    %v1224 = vld [vmem:[%s3 + $0x168] sm:$0xff]
    %v1225 = vld [vmem:[%s3 + $0x170] sm:$0xff]
    %v1226 = vld [vmem:[%s3 + $0x178] sm:$0xff]
    %v1227 = vld [vmem:[%s3 + $0x180] sm:$0xff]
    %v1228 = vld [vmem:[%s3 + $0x188] sm:$0xff]
    %v1229 = vld [vmem:[%s3 + $0x190] sm:$0xff]
    %v1230 = vld [vmem:[%s3 + $0x198] sm:$0xff]
    %v1231 = vld [vmem:[%s3 + $0x1a0] sm:$0xff]
    %v1232 = vld [vmem:[%s3 + $0x1a8] sm:$0xff]
    %v1233 = vld [vmem:[%s3 + $0x1b0] sm:$0xff]
    %v1234 = vld [vmem:[%s3 + $0x1b8] sm:$0xff]
    %v1235 = vld [vmem:[%s3 + $0x1c0] sm:$0xff]
    %v1236 = vld [vmem:[%s3 + $0x1c8] sm:$0xff]
    %v1237 = vld [vmem:[%s3 + $0x1d0] sm:$0xff]
    %v1238 = vld [vmem:[%s3 + $0x1d8] sm:$0xff]
    %v1239 = vld [vmem:[%s3 + $0x1e0] sm:$0xff]
    %v1240 = vld [vmem:[%s3 + $0x1e8] sm:$0xff]
    %v1241 = vld [vmem:[%s3 + $0x1f0] sm:$0xff]
    %v1242 = vld [vmem:[%s3 + $0x1f8] sm:$0xff]
    %v1243 = vld [vmem:[%s3 + $0x200] sm:$0xff]
    %v1244 = vld [vmem:[%s3 + $0x208] sm:$0xff]
    %v1245 = vld [vmem:[%s3 + $0x210] sm:$0xff]
    %v1246 = vld [vmem:[%s3 + $0x218] sm:$0xff]
    %v1247 = vld [vmem:[%s3 + $0x220] sm:$0xff]
    %v1248 = vld [vmem:[%s3 + $0x228] sm:$0xff]
    %v1249 = vld [vmem:[%s3 + $0x230] sm:$0xff]
    %v1250 = vld [vmem:[%s3 + $0x238] sm:$0xff]
    %v1251 = vld [vmem:[%s3 + $0x240] sm:$0xff]
    %v1252 = vld [vmem:[%s3 + $0x248] sm:$0xff]
    %v1253 = vld [vmem:[%s3 + $0x250] sm:$0xff]
    %v1254 = vld [vmem:[%s3 + $0x258] sm:$0xff]
    %v1255 = vld [vmem:[%s3 + $0x260] sm:$0xff]
    %v1256 = vld [vmem:[%s3 + $0x268] sm:$0xff]
    %v1257 = vld [vmem:[%s3 + $0x270] sm:$0xff]
    %v1258 = vld [vmem:[%s3 + $0x278] sm:$0xff]
    %v1259 = vld [vmem:[%s3 + $0x280] sm:$0xff]
    %v1260 = vld [vmem:[%s3 + $0x288] sm:$0xff]
    %v1261 = vld [vmem:[%s3 + $0x290] sm:$0xff]
    %v1262 = vld [vmem:[%s3 + $0x298] sm:$0xff]
    %v1263 = vld [vmem:[%s3 + $0x2a0] sm:$0xff]
    %v1264 = vld [vmem:[%s3 + $0x2a8] sm:$0xff]
    %v1265 = vld [vmem:[%s3 + $0x2b0] sm:$0xff]
    %v1266 = vld [vmem:[%s3 + $0x2b8] sm:$0xff]
    %v1267 = vld [vmem:[%s3 + $0x2c0] sm:$0xff]
    %v1268 = vld [vmem:[%s3 + $0x2c8] sm:$0xff]
    %v1269 = vld [vmem:[%s3 + $0x2d0] sm:$0xff]
    %v1270 = vld [vmem:[%s3 + $0x2d8] sm:$0xff]
    %v1271 = vld [vmem:[%s3 + $0x2e0] sm:$0xff]
    %v1272 = vld [vmem:[%s3 + $0x2e8] sm:$0xff]
    %v1273 = vld [vmem:[%s3 + $0x2f0] sm:$0xff]
    %v1274 = vld [vmem:[%s3 + $0x2f8] sm:$0xff]
    %v1275 = vld [vmem:[%s3 + $0x300] sm:$0xff]
    %v1276 = vld [vmem:[%s3 + $0x308] sm:$0xff]
    %v1277 = vld [vmem:[%s3 + $0x310] sm:$0xff]
    %v1278 = vld [vmem:[%s3 + $0x318] sm:$0xff]
    %v1279 = vld [vmem:[%s3 + $0x320] sm:$0xff]
    %v1280 = vld [vmem:[%s3 + $0x328] sm:$0xff]
    %v1281 = vld [vmem:[%s3 + $0x330] sm:$0xff]
    %v1282 = vld [vmem:[%s3 + $0x338] sm:$0xff]
    %v1283 = vld [vmem:[%s3 + $0x340] sm:$0xff]
    %v1284 = vld [vmem:[%s3 + $0x348] sm:$0xff]
    %v1285 = vld [vmem:[%s3 + $0x350] sm:$0xff]
    %v1286 = vld [vmem:[%s3 + $0x358] sm:$0xff]
    %v1287 = vld [vmem:[%s3 + $0x360] sm:$0xff]
    %v1288 = vld [vmem:[%s3 + $0x368] sm:$0xff]
    %v1289 = vld [vmem:[%s3 + $0x370] sm:$0xff]
    %v1290 = vld [vmem:[%s3 + $0x378] sm:$0xff]
    %v1291 = vld [vmem:[%s3 + $0x380] sm:$0xff]
    %v1292 = vld [vmem:[%s3 + $0x388] sm:$0xff]
    %v1293 = vld [vmem:[%s3 + $0x390] sm:$0xff]
    %v1294 = vld [vmem:[%s3 + $0x398] sm:$0xff]
    %v1295 = vld [vmem:[%s3 + $0x3a0] sm:$0xff]
    %v1296 = vld [vmem:[%s3 + $0x3a8] sm:$0xff]
    %v1297 = vld [vmem:[%s3 + $0x3b0] sm:$0xff]
    %v1298 = vld [vmem:[%s3 + $0x3b8] sm:$0xff]
    %v1299 = vld [vmem:[%s3 + $0x3c0] sm:$0xff]
    %v1300 = vld [vmem:[%s3 + $0x3c8] sm:$0xff]
    %v1301 = vld [vmem:[%s3 + $0x3d0] sm:$0xff]
    %v1302 = vld [vmem:[%s3 + $0x3d8] sm:$0xff]
    %v1303 = vld [vmem:[%s3 + $0x3e0] sm:$0xff]
    %v1304 = vld [vmem:[%s3 + $0x3e8] sm:$0xff]
    %v1305 = vld [vmem:[%s3 + $0x3f0] sm:$0xff]
    %v1306 = vld [vmem:[%s3 + $0x3f8] sm:$0xff]
    %v1307 = vld [vmem:[%s4] sm:$0x3]
    %v1309 = vlaneseq
    %v1310 = vshrl.u32 %v1309, 7
    %v1311 = vsub.s32 0, %v1310
    %v1312 = vrot.slane %v1307, %v1311
    %v1313 = vlaneseq
    %v1314 = vshrl.u32 %v1313, 7
    %v1315 = vsub.s32 1, %v1314
    %v1316 = vrot.slane %v1307, %v1315
    %1319 = vmatprep.subr.mxu0 %v1180
    %1320 = vmatpush1.msra.mxu0 %v1179
    %1321 = vmatprep.subr.mxu0 %v1182
    %1322 = vmatpush1.msra.mxu0 %v1181
    %1323 = vmatprep.subr.mxu0 %v1184
    %1324 = vmatpush1.msra.mxu0 %v1183
    %1325 = vmatprep.subr.mxu0 %v1186
    %1326 = vmatpush1.msra.mxu0 %v1185
    %1327 = vmatprep.subr.mxu0 %v1188
    %1328 = vmatpush1.msra.mxu0 %v1187
    %1329 = vmatprep.subr.mxu0 %v1190
    %1330 = vmatpush1.msra.mxu0 %v1189
    %1331 = vmatprep.subr.mxu0 %v1192
    %1332 = vmatpush1.msra.mxu0 %v1191
    %1333 = vmatprep.subr.mxu0 %v1194
    %1334 = vmatpush1.msra.mxu0 %v1193
    %1335 = vmatprep.subr.mxu0 %v1196
    %1336 = vmatpush1.msra.mxu0 %v1195
    %1337 = vmatprep.subr.mxu0 %v1198
    %1338 = vmatpush1.msra.mxu0 %v1197
    %1339 = vmatprep.subr.mxu0 %v1200
    %1340 = vmatpush1.msra.mxu0 %v1199
    %1341 = vmatprep.subr.mxu0 %v1202
    %1342 = vmatpush1.msra.mxu0 %v1201
    %1343 = vmatprep.subr.mxu0 %v1204
    %1344 = vmatpush1.msra.mxu0 %v1203
    %1345 = vmatprep.subr.mxu0 %v1206
    %1346 = vmatpush1.msra.mxu0 %v1205
    %1347 = vmatprep.subr.mxu0 %v1208
    %1348 = vmatpush1.msra.mxu0 %v1207
    %1349 = vmatprep.subr.mxu0 %v1210
    %1350 = vmatpush1.msra.mxu0 %v1209
    %1351 = vmatprep.subr.mxu0 %v1212
    %1352 = vmatpush1.msra.mxu0 %v1211
    %1353 = vmatprep.subr.mxu0 %v1214
    %1354 = vmatpush1.msra.mxu0 %v1213
    %1355 = vmatprep.subr.mxu0 %v1216
    %1356 = vmatpush1.msra.mxu0 %v1215
    %1357 = vmatprep.subr.mxu0 %v1218
    %1358 = vmatpush1.msra.mxu0 %v1217
    %1359 = vmatprep.subr.mxu0 %v1220
    %1360 = vmatpush1.msra.mxu0 %v1219
    %1361 = vmatprep.subr.mxu0 %v1222
    %1362 = vmatpush1.msra.mxu0 %v1221
    %1363 = vmatprep.subr.mxu0 %v1224
    %1364 = vmatpush1.msra.mxu0 %v1223
    %1365 = vmatprep.subr.mxu0 %v1226
    %1366 = vmatpush1.msra.mxu0 %v1225
    %1367 = vmatprep.subr.mxu0 %v1228
    %1368 = vmatpush1.msra.mxu0 %v1227
    %1369 = vmatprep.subr.mxu0 %v1230
    %1370 = vmatpush1.msra.mxu0 %v1229
    %1371 = vmatprep.subr.mxu0 %v1232
    %1372 = vmatpush1.msra.mxu0 %v1231
    %1373 = vmatprep.subr.mxu0 %v1234
    %1374 = vmatpush1.msra.mxu0 %v1233
    %1375 = vmatprep.subr.mxu0 %v1236
    %1376 = vmatpush1.msra.mxu0 %v1235
    %1377 = vmatprep.subr.mxu0 %v1238
    %1378 = vmatpush1.msra.mxu0 %v1237
    %1379 = vmatprep.subr.mxu0 %v1240
    %1380 = vmatpush1.msra.mxu0 %v1239
    %1381 = vmatprep.subr.mxu0 %v1242
    %1382 = vmatpush1.msra.mxu0 %v1241
    %1383 = vmatprep.mubr.f32.mxu0 %v1176
    %1384 = vmatmul.mubr.f32.gmra.mrb[0].mxu0 %v1175
    %v1385 = vpop.f32.mrb[0].mxu0
    %v1386 = vadd.f32 %v1312, %v1385
    %v1387 = vpop.f32.mrb[0].mxu0
    %v1388 = vadd.f32 %v1316, %v1387
    %1389 = vdwg.mxu0
    %1390 = vmatprep.subr.mxu0 %v1244
    %1391 = vmatpush1.msra.mxu0 %v1243
    %1392 = vmatprep.subr.mxu0 %v1246
    %1393 = vmatpush1.msra.mxu0 %v1245
    %1394 = vmatprep.subr.mxu0 %v1248
    %1395 = vmatpush1.msra.mxu0 %v1247
    %1396 = vmatprep.subr.mxu0 %v1250
    %1397 = vmatpush1.msra.mxu0 %v1249
    %1398 = vmatprep.subr.mxu0 %v1252
    %1399 = vmatpush1.msra.mxu0 %v1251
    %1400 = vmatprep.subr.mxu0 %v1254
    %1401 = vmatpush1.msra.mxu0 %v1253
    %1402 = vmatprep.subr.mxu0 %v1256
    %1403 = vmatpush1.msra.mxu0 %v1255
    %1404 = vmatprep.subr.mxu0 %v1258
    %1405 = vmatpush1.msra.mxu0 %v1257
    %1406 = vmatprep.subr.mxu0 %v1260
    %1407 = vmatpush1.msra.mxu0 %v1259
    %1408 = vmatprep.subr.mxu0 %v1262
    %1409 = vmatpush1.msra.mxu0 %v1261
    %1410 = vmatprep.subr.mxu0 %v1264
    %1411 = vmatpush1.msra.mxu0 %v1263
    %1412 = vmatprep.subr.mxu0 %v1266
    %1413 = vmatpush1.msra.mxu0 %v1265
    %1414 = vmatprep.subr.mxu0 %v1268
    %1415 = vmatpush1.msra.mxu0 %v1267
    %1416 = vmatprep.subr.mxu0 %v1270
    %1417 = vmatpush1.msra.mxu0 %v1269
    %1418 = vmatprep.subr.mxu0 %v1272
    %1419 = vmatpush1.msra.mxu0 %v1271
    %1420 = vmatprep.subr.mxu0 %v1274
    %1421 = vmatpush1.msra.mxu0 %v1273
    %1422 = vmatprep.subr.mxu0 %v1276
    %1423 = vmatpush1.msra.mxu0 %v1275
    %1424 = vmatprep.subr.mxu0 %v1278
    %1425 = vmatpush1.msra.mxu0 %v1277
    %1426 = vmatprep.subr.mxu0 %v1280
    %1427 = vmatpush1.msra.mxu0 %v1279
    %1428 = vmatprep.subr.mxu0 %v1282
    %1429 = vmatpush1.msra.mxu0 %v1281
    %1430 = vmatprep.subr.mxu0 %v1284
    %1431 = vmatpush1.msra.mxu0 %v1283
    %1432 = vmatprep.subr.mxu0 %v1286
    %1433 = vmatpush1.msra.mxu0 %v1285
    %1434 = vmatprep.subr.mxu0 %v1288
    %1435 = vmatpush1.msra.mxu0 %v1287
    %1436 = vmatprep.subr.mxu0 %v1290
    %1437 = vmatpush1.msra.mxu0 %v1289
    %1438 = vmatprep.subr.mxu0 %v1292
    %1439 = vmatpush1.msra.mxu0 %v1291
    %1440 = vmatprep.subr.mxu0 %v1294
    %1441 = vmatpush1.msra.mxu0 %v1293
    %1442 = vmatprep.subr.mxu0 %v1296
    %1443 = vmatpush1.msra.mxu0 %v1295
    %1444 = vmatprep.subr.mxu0 %v1298
    %1445 = vmatpush1.msra.mxu0 %v1297
    %1446 = vmatprep.subr.mxu0 %v1300
    %1447 = vmatpush1.msra.mxu0 %v1299
    %1448 = vmatprep.subr.mxu0 %v1302
    %1449 = vmatpush1.msra.mxu0 %v1301
    %1450 = vmatprep.subr.mxu0 %v1304
    %1451 = vmatpush1.msra.mxu0 %v1303
    %1452 = vmatprep.subr.mxu0 %v1306
    %1453 = vmatpush1.msra.mxu0 %v1305
    %1454 = vmatprep.mubr.f32.mxu0 %v1178
    %1455 = vmatmul.mubr.f32.gmra.mrb[0].mxu0 %v1177
    %v1456 = vpop.f32.mrb[0].mxu0
    %v1457 = vadd.f32 %v1386, %v1456
    %v1458 = vpop.f32.mrb[0].mxu0
    %v1459 = vadd.f32 %v1388, %v1458
    %1460 = vdwg.mxu0
    %v1461 = vmax.f32 %v1457, 0.0
    %v1462 = vmax.f32 %v1459, 0.0
    %v1463 = vld [vmem:[%s5] sm:$0xff]
    %v1464 = vld [vmem:[%s5 + $0x8] sm:$0xff]
    %v1465 = vld [vmem:[%s5 + $0x10] sm:$0xff]
    %v1466 = vld [vmem:[%s5 + $0x18] sm:$0xff]
    %v1467 = vld [vmem:[%s5 + $0x20] sm:$0xff]
    %v1468 = vld [vmem:[%s5 + $0x28] sm:$0xff]
    %v1469 = vld [vmem:[%s5 + $0x30] sm:$0xff]
    %v1470 = vld [vmem:[%s5 + $0x38] sm:$0xff]
    %v1471 = vld [vmem:[%s5 + $0x40] sm:$0xff]
    %v1472 = vld [vmem:[%s5 + $0x48] sm:$0xff]
    %v1473 = vld [vmem:[%s5 + $0x50] sm:$0xff]
    %v1474 = vld [vmem:[%s5 + $0x58] sm:$0xff]
    %v1475 = vld [vmem:[%s5 + $0x60] sm:$0xff]
    %v1476 = vld [vmem:[%s5 + $0x68] sm:$0xff]
    %v1477 = vld [vmem:[%s5 + $0x70] sm:$0xff]
    %v1478 = vld [vmem:[%s5 + $0x78] sm:$0xff]
    %v1479 = vld [vmem:[%s5 + $0x80] sm:$0xff]
    %v1480 = vld [vmem:[%s5 + $0x88] sm:$0xff]
    %v1481 = vld [vmem:[%s5 + $0x90] sm:$0xff]
    %v1482 = vld [vmem:[%s5 + $0x98] sm:$0xff]
    %v1483 = vld [vmem:[%s5 + $0xa0] sm:$0xff]
    %v1484 = vld [vmem:[%s5 + $0xa8] sm:$0xff]
    %v1485 = vld [vmem:[%s5 + $0xb0] sm:$0xff]
    %v1486 = vld [vmem:[%s5 + $0xb8] sm:$0xff]
    %v1487 = vld [vmem:[%s5 + $0xc0] sm:$0xff]
    %v1488 = vld [vmem:[%s5 + $0xc8] sm:$0xff]
    %v1489 = vld [vmem:[%s5 + $0xd0] sm:$0xff]
    %v1490 = vld [vmem:[%s5 + $0xd8] sm:$0xff]
    %v1491 = vld [vmem:[%s5 + $0xe0] sm:$0xff]
    %v1492 = vld [vmem:[%s5 + $0xe8] sm:$0xff]
    %v1493 = vld [vmem:[%s5 + $0xf0] sm:$0xff]
    %v1494 = vld [vmem:[%s5 + $0xf8] sm:$0xff]
    %v1495 = vld [vmem:[%s6] sm:$0x1]
    %v1497 = vlaneseq
    %v1498 = vshrl.u32 %v1497, 7
    %v1499 = vsub.s32 0, %v1498
    %v1500 = vrot.slane %v1495, %v1499
    %1502 = vmatprep.subr.mxu0 0.0
    %1503 = vmatpush1.msra.mxu0 %v1463
    %1504 = vmatprep.subr.mxu0 0.0
    %1505 = vmatpush1.msra.mxu0 %v1464
    %1506 = vmatprep.subr.mxu0 0.0
    %1507 = vmatpush1.msra.mxu0 %v1465
    %1508 = vmatprep.subr.mxu0 0.0
    %1509 = vmatpush1.msra.mxu0 %v1466
    %1510 = vmatprep.subr.mxu0 0.0
    %1511 = vmatpush1.msra.mxu0 %v1467
    %1512 = vmatprep.subr.mxu0 0.0
    %1513 = vmatpush1.msra.mxu0 %v1468
    %1514 = vmatprep.subr.mxu0 0.0
    %1515 = vmatpush1.msra.mxu0 %v1469
    %1516 = vmatprep.subr.mxu0 0.0
    %1517 = vmatpush1.msra.mxu0 %v1470
    %1518 = vmatprep.subr.mxu0 0.0
    %1519 = vmatpush1.msra.mxu0 %v1471
    %1520 = vmatprep.subr.mxu0 0.0
    %1521 = vmatpush1.msra.mxu0 %v1472
    %1522 = vmatprep.subr.mxu0 0.0
    %1523 = vmatpush1.msra.mxu0 %v1473
    %1524 = vmatprep.subr.mxu0 0.0
    %1525 = vmatpush1.msra.mxu0 %v1474
    %1526 = vmatprep.subr.mxu0 0.0
    %1527 = vmatpush1.msra.mxu0 %v1475
    %1528 = vmatprep.subr.mxu0 0.0
    %1529 = vmatpush1.msra.mxu0 %v1476
    %1530 = vmatprep.subr.mxu0 0.0
    %1531 = vmatpush1.msra.mxu0 %v1477
    %1532 = vmatprep.subr.mxu0 0.0
    %1533 = vmatpush1.msra.mxu0 %v1478
    %1534 = vmatprep.subr.mxu0 0.0
    %1535 = vmatpush1.msra.mxu0 %v1479
    %1536 = vmatprep.subr.mxu0 0.0
    %1537 = vmatpush1.msra.mxu0 %v1480
    %1538 = vmatprep.subr.mxu0 0.0
    %1539 = vmatpush1.msra.mxu0 %v1481
    %1540 = vmatprep.subr.mxu0 0.0
    %1541 = vmatpush1.msra.mxu0 %v1482
    %1542 = vmatprep.subr.mxu0 0.0
    %1543 = vmatpush1.msra.mxu0 %v1483
    %1544 = vmatprep.subr.mxu0 0.0
    %1545 = vmatpush1.msra.mxu0 %v1484
    %1546 = vmatprep.subr.mxu0 0.0
    %1547 = vmatpush1.msra.mxu0 %v1485
    %1548 = vmatprep.subr.mxu0 0.0
    %1549 = vmatpush1.msra.mxu0 %v1486
    %1550 = vmatprep.subr.mxu0 0.0
    %1551 = vmatpush1.msra.mxu0 %v1487
    %1552 = vmatprep.subr.mxu0 0.0
    %1553 = vmatpush1.msra.mxu0 %v1488
    %1554 = vmatprep.subr.mxu0 0.0
    %1555 = vmatpush1.msra.mxu0 %v1489
    %1556 = vmatprep.subr.mxu0 0.0
    %1557 = vmatpush1.msra.mxu0 %v1490
    %1558 = vmatprep.subr.mxu0 0.0
    %1559 = vmatpush1.msra.mxu0 %v1491
    %1560 = vmatprep.subr.mxu0 0.0
    %1561 = vmatpush1.msra.mxu0 %v1492
    %1562 = vmatprep.subr.mxu0 0.0
    %1563 = vmatpush1.msra.mxu0 %v1493
    %1564 = vmatprep.subr.mxu0 0.0
    %1565 = vmatpush1.msra.mxu0 %v1494
    %1566 = vmatprep.mubr.f32.mxu0 %v1462
    %1567 = vmatmul.mubr.f32.gmra.mrb[0].mxu0 %v1461
    %v1568 = vpop.f32.mrb[0].mxu0
    %v1569 = vadd.f32 %v1500, %v1568
    %v1570 = vpop.f32.mrb[0].mxu0
    %1571 = vdwg.mxu0
    %vm1572 = vcmask 9216
    %v1573 = vsel %vm1572, %v1569, -inf
    %1574 = vmax.xlane.f32.xlu0 %v1573
    %v1575 = vpop.xlane.xlu0 %1574
    %v1576 = vsub.f32 %v1569, %v1575
    %v1577 = vmul.f32 %v1576, 1.442695
    %v1578 = vpow.pop %v1577
    %v1579 = vsel %vm1572, %v1578, 0.0
    %1580 = vadd.xlane.f32.xlu0 %v1579
    %v1581 = vpop.xlane.xlu0 %1580
    %v1582 = vlog2.pop %v1581
    %v1583 = vmul.f32 %v1582, 0.6931472
    %v1584 = vsub.f32 %v1576, %v1583
    %1585 = vst.msk [vmem:[#allocation2] sm:$0x3] %vm1572, %v1584
    // Predicated region
    $region30: #{pointnet_cls_forward.7} parent=1 // pred_check
      _
    $region31: #{pointnet_cls_forward.7} parent=1 // pred_check_branch
      %1587 = sbr.rel (0) target = $region33
    $region32: #{pointnet_cls_forward.7} parent=1 // pred_region
      %s1589 = ssub.s32 32, 32
      %1590 = vsyncadd [#allocation3], %s1589
      %s1592 = sshll.u32 [#allocation2], 4
      %s1593 = int_to_ptr.vmem [resolvable:$true] %s1592
      %1595 = dma.vmem_to_hbm [thread:$0]  %s1593, 32, %s7, [#allocation3]
    $region33: #{pointnet_cls_forward.7} parent=1 // pred_fallthru
      _
    // Predicated region
    $region34: #{pointnet_cls_forward.7} parent=1 // pred_check
      _
    $region35: #{pointnet_cls_forward.7} parent=1 // pred_check_branch
      %1597 = sbr.rel (0) target = $region37
    $region36: #{pointnet_cls_forward.7} parent=1 // pred_region
      %1598 = dma.done [#allocation3], 32
    $region37: #{pointnet_cls_forward.7} parent=1 // pred_fallthru
      _
    %1599 = vsyncpa [#allocation3], 1

</llo_original>
